<compile_context>
chip_gen: v5e
topology: v5e:2x2
jax: 0.10.0
libtpu: 0.0.40
codegen_flags: <defaults>
</compile_context>

<pallas_src>
import functools

import jax
import jax.numpy as jnp
from jax import lax
from jax.experimental import pallas as pl
from jax.experimental.pallas import tpu as pltpu

SAMPLE_RATE = 16000

# ---------------- synthetic (small) wav2vec2 config ----------------
CONV_DIM = 32
CONV_KERNELS = (10, 3, 3, 3, 3, 2, 2)
CONV_STRIDES = (5, 2, 2, 2, 2, 2, 2)      # overall downsample rate = 320
HIDDEN = 32
NUM_HEADS = 2
FFN = 64
NUM_LAYERS = 2
POS_KERNEL = 4                            # real model: 128 (kept even so SamePad path is exercised)
POS_GROUPS = 2                            # real model: 16
LN_EPS = 1e-5
GN_EPS = 1e-5
NEG_INF = -1e9

_PARALLEL = pltpu.CompilerParams(dimension_semantics=("parallel",))


def get_downsample_rates(key=None) -> int:
    return 320


def _conv_out_len(length: int) -> int:
    for k, s in zip(CONV_KERNELS, CONV_STRIDES):
        length = (length - k) // s + 1
    return length


def _gelu(x):
    # TODO(synk): HF wav2vec2 uses exact (erf) GELU; tanh approximation used here
    # because erf is not guaranteed to lower in Mosaic.
    return jax.nn.gelu(x, approximate=True)


def _ln(x, g, b, eps):
    mean = jnp.mean(x, axis=-1, keepdims=True)
    var = jnp.mean(jnp.square(x - mean), axis=-1, keepdims=True)
    return (x - mean) * jax.lax.rsqrt(var + eps) * g + b


def _bf16(x):
    return x.astype(jnp.bfloat16)


# ---------------- kernel 1: wav norm + full conv feature encoder ----------------

def _feature_kernel(xr_ref, mr_ref, w0_ref, gng_ref, gnb_ref,
                    w3a_ref, w3b_ref, w2a_ref, o_ref, scr,
                    *, lout0, stage_dims, tp, gn_eps):
    x = xr_ref[0]                                  # (rows, s0) raw padded waveform, f32
    m = mr_ref[0]                                  # (rows, s0) sample-valid mask

    # Wav2Vec2Processor: per-utterance zero-mean / unit-var over valid samples,
    # padded samples forced back to 0.
    cnt = jnp.maximum(
        jnp.sum(jnp.sum(m, axis=-1, keepdims=True), axis=0, keepdims=True), 1.0)
    mean = jnp.sum(jnp.sum(x * m, axis=-1, keepdims=True), axis=0, keepdims=True) / cnt
    d = (x - mean) * m
    var = jnp.sum(jnp.sum(d * d, axis=-1, keepdims=True), axis=0, keepdims=True) / cnt
    xn = d * jax.lax.rsqrt(var + 1e-7)

    # conv0 (Cin=1, K=10, stride=5) as one (lout0, 10) @ (10, C) matmul:
    # row i of xn holds samples 5i..5i+4; row i+1 holds taps 5..9.
    op0 = jnp.concatenate([xn[:lout0], xn[1:lout0 + 1]], axis=-1)
    acc = jnp.dot(_bf16(op0), w0_ref[...], preferred_element_type=jnp.float32)
    # GroupNorm(num_groups == num_channels): per-channel stats over time, then GELU.
    mu = jnp.mean(acc, axis=0, keepdims=True)
    va = jnp.mean(jnp.square(acc - mu), axis=0, keepdims=True)
    h = _gelu((acc - mu) * jax.lax.rsqrt(va + gn_eps) * gng_ref[...] + gnb_ref[...])

    # Remaining stride-2 conv stages fused: store current features into the VMEM
    # scratch, read taps back as sublane-strided slices; taps 0/1 merged into a
    # single (2*Cin, C) matmul, tap 2 (k==3) as one extra matmul.
    i3 = i2 = 0
    for lin, k in stage_dims:
        lout = (lin - k) // 2 + 1
        scr[pl.ds(0, lin), :] = h
        e0 = scr[pl.ds(0, lout, stride=2), :]      # rows 0,2,4,...
        e1 = scr[pl.ds(1, lout, stride=2), :]      # rows 1,3,5,...
        x01 = _bf16(jnp.concatenate([e0, e1], axis=-1))
        if k == 3:
            acc = jnp.dot(x01, w3a_ref[i3], preferred_element_type=jnp.float32)
            e2 = _bf16(scr[pl.ds(2, lout, stride=2), :])
            acc = acc + jnp.dot(e2, w3b_ref[i3], preferred_element_type=jnp.float32)
            i3 += 1
        else:
            acc = jnp.dot(x01, w2a_ref[i2], preferred_element_type=jnp.float32)
            i2 += 1
        h = _gelu(acc)

    t = h.shape[0]
    if tp > t:
        h = jnp.concatenate([h, jnp.zeros((tp - t, h.shape[1]), h.dtype)], axis=0)
    o_ref[0] = h.astype(o_ref.dtype)


def run_feature_extractor(xr, mr, kp, *, lout0, stage_dims, tp, scr_rows):
    B, rows, s0 = xr.shape
    C = CONV_DIM
    n3 = kp["w3a"].shape[0]
    n2 = kp["w2a"].shape[0]
    return pl.pallas_call(
        functools.partial(_feature_kernel, lout0=lout0, stage_dims=stage_dims,
                          tp=tp, gn_eps=GN_EPS),
        grid=(B,),
        in_specs=[
            pl.BlockSpec((1, rows, s0), lambda b: (b, 0, 0)),
            pl.BlockSpec((1, rows, s0), lambda b: (b, 0, 0)),
            pl.BlockSpec((CONV_KERNELS[0], C), lambda b: (0, 0)),
            pl.BlockSpec((1, C), lambda b: (0, 0)),
            pl.BlockSpec((1, C), lambda b: (0, 0)),
            pl.BlockSpec((n3, 2 * C, C), lambda b: (0, 0, 0)),
            pl.BlockSpec((n3, C, C), lambda b: (0, 0, 0)),
            pl.BlockSpec((n2, 2 * C, C), lambda b: (0, 0, 0)),
        ],
        out_specs=pl.BlockSpec((1, tp, C), lambda b: (b, 0, 0)),
        out_shape=jax.ShapeDtypeStruct((B, tp, C), jnp.float32),
        scratch_shapes=[pltpu.VMEM((scr_rows, C), jnp.float32)],
        compiler_params=_PARALLEL,
    )(xr, mr, kp["conv0_w"], kp["gn_g"], kp["gn_b"], kp["w3a"], kp["w3b"], kp["w2a"])


# ---------------- kernel 2: feat-proj + pos-conv + all encoder layers ----------------

def _encoder_kernel(f_ref, mcol_ref, bias_ref,
                    flng_ref, flnb_ref, fpw_ref, fpb_ref,
                    posw_ref, posb_ref, elng_ref, elnb_ref,
                    wqkv_ref, bqkv_ref, wo_ref, bo_ref,
                    ln1g_ref, ln1b_ref, w1_ref, b1_ref, w2_ref, b2_ref,
                    ln2g_ref, ln2b_ref,
                    o_ref, attn_scr,
                    *, num_layers, num_heads, kpos, eps):
    f = f_ref[0]                                   # (Tp, C) f32 conv features
    mcol = mcol_ref[0]                             # (Tp, 1) frame-valid mask
    bias = bias_ref[0]                             # (1, Tp) additive key-padding mask
    tp = f.shape[0]

    # feature projection: LN + linear; zero padded frames (HF masks hidden states).
    fn = _ln(f, flng_ref[...], flnb_ref[...], eps)
    h = jnp.dot(_bf16(fn), fpw_ref[...], preferred_element_type=jnp.float32) + fpb_ref[...]
    h = h * mcol
    hsz = h.shape[1]

    # grouped positional conv (SamePad) as ONE lane-dense (Tp, kpos*H) @ (kpos*H, H)
    # matmul over a shifted-concat operand.
    pad = kpos // 2
    pieces = [jnp.zeros((pad, hsz), jnp.float32), h]
    if kpos - 1 - pad > 0:
        pieces.append(jnp.zeros((kpos - 1 - pad, hsz), jnp.float32))
    hp = jnp.concatenate(pieces, axis=0)           # (Tp + kpos - 1, H)
    op = jnp.concatenate([hp[t:t + tp] for t in range(kpos)], axis=-1)
    pos = _gelu(jnp.dot(_bf16(op), posw_ref[...], preferred_element_type=jnp.float32)
                + posb_ref[...])
    x = _ln(h + pos, elng_ref[...], elnb_ref[...], eps)

    hs = [x]
    dh = hsz // num_heads
    for l in range(num_layers):
        xb = _bf16(x)
        qkv = jnp.dot(xb, wqkv_ref[l], preferred_element_type=jnp.float32) + bqkv_ref[l]
        qkvb = _bf16(qkv)                          # single cast shared by all heads
        for hd in range(num_heads):
            q = qkvb[:, hd * dh:(hd + 1) * dh]
            k = qkvb[:, hsz + hd * dh:hsz + (hd + 1) * dh]
            v = qkvb[:, 2 * hsz + hd * dh:2 * hsz + (hd + 1) * dh]
            s = lax.dot_general(q, k, (((1,), (1,)), ((), ())),
                                preferred_element_type=jnp.float32) + bias
            s = s - jnp.max(s, axis=-1, keepdims=True)
            p = jnp.exp(s)
            p = p * pl.reciprocal(jnp.sum(p, axis=-1, keepdims=True), approx=True)
            attn_scr[:, hd * dh:(hd + 1) * dh] = jnp.dot(
                _bf16(p), v, preferred_element_type=jnp.float32)
        attn = jnp.dot(_bf16(attn_scr[...]), wo_ref[l],
                       preferred_element_type=jnp.float32) + bo_ref[l]
        y = _ln(x + attn, ln1g_ref[l], ln1b_ref[l], eps)
        ff = _gelu(jnp.dot(_bf16(y), w1_ref[l], preferred_element_type=jnp.float32)
                   + b1_ref[l])
        ff = jnp.dot(_bf16(ff), w2_ref[l], preferred_element_type=jnp.float32) + b2_ref[l]
        x = _ln(y + ff, ln2g_ref[l], ln2b_ref[l], eps)
        hs.append(x)

    # All hidden states written once as a single lane-dense (Tp, (L+1)*H) slab.
    o_ref[0] = jnp.concatenate(hs, axis=-1).astype(o_ref.dtype)


def run_encoder(feats, mcol, bias, kp):
    B, Tp, C = feats.shape
    H, F, L = HIDDEN, FFN, NUM_LAYERS
    nout = (L + 1) * H
    return pl.pallas_call(
        functools.partial(_encoder_kernel, num_layers=L, num_heads=NUM_HEADS,
                          kpos=POS_KERNEL, eps=LN_EPS),
        grid=(B,),
        in_specs=[
            pl.BlockSpec((1, Tp, C), lambda b: (b, 0, 0)),
            pl.BlockSpec((1, Tp, 1), lambda b: (b, 0, 0)),
            pl.BlockSpec((1, 1, Tp), lambda b: (b, 0, 0)),
            pl.BlockSpec((1, C), lambda b: (0, 0)),
            pl.BlockSpec((1, C), lambda b: (0, 0)),
            pl.BlockSpec((C, H), lambda b: (0, 0)),
            pl.BlockSpec((1, H), lambda b: (0, 0)),
            pl.BlockSpec((POS_KERNEL * H, H), lambda b: (0, 0)),
            pl.BlockSpec((1, H), lambda b: (0, 0)),
            pl.BlockSpec((1, H), lambda b: (0, 0)),
            pl.BlockSpec((1, H), lambda b: (0, 0)),
            pl.BlockSpec((L, H, 3 * H), lambda b: (0, 0, 0)),
            pl.BlockSpec((L, 1, 3 * H), lambda b: (0, 0, 0)),
            pl.BlockSpec((L, H, H), lambda b: (0, 0, 0)),
            pl.BlockSpec((L, 1, H), lambda b: (0, 0, 0)),
            pl.BlockSpec((L, 1, H), lambda b: (0, 0, 0)),
            pl.BlockSpec((L, 1, H), lambda b: (0, 0, 0)),
            pl.BlockSpec((L, H, F), lambda b: (0, 0, 0)),
            pl.BlockSpec((L, 1, F), lambda b: (0, 0, 0)),
            pl.BlockSpec((L, F, H), lambda b: (0, 0, 0)),
            pl.BlockSpec((L, 1, H), lambda b: (0, 0, 0)),
            pl.BlockSpec((L, 1, H), lambda b: (0, 0, 0)),
            pl.BlockSpec((L, 1, H), lambda b: (0, 0, 0)),
        ],
        out_specs=pl.BlockSpec((1, Tp, nout), lambda b: (b, 0, 0)),
        out_shape=jax.ShapeDtypeStruct((B, Tp, nout), jnp.float32),
        scratch_shapes=[pltpu.VMEM((Tp, H), jnp.float32)],
        compiler_params=_PARALLEL,
    )(feats, mcol, bias,
      kp["fp_ln_g"], kp["fp_ln_b"], kp["fp_w"], kp["fp_b"],
      kp["pos_w"], kp["pos_b"], kp["enc_ln_g"], kp["enc_ln_b"],
      kp["wqkv"], kp["bqkv"], kp["wo"], kp["bo"],
      kp["ln1_g"], kp["ln1_b"], kp["w1"], kp["b1"], kp["w2"], kp["b2"],
      kp["ln2_g"], kp["ln2_b"])


# ---------------- forward pass (torch UpstreamExpert.forward equivalent) ----------------

def upstream_expert_forward(wavs, kp):
    """wavs: list of 1-D float32 waveforms (like the torch module's input list)."""
    lengths = [int(w.shape[0]) for w in wavs]
    B, L = len(wavs), max(lengths)
    padded = jnp.stack([jnp.pad(w, (0, L - w.shape[0])) for w in wavs]).astype(jnp.float32)
    smask = (jnp.arange(L)[None, :] < jnp.array(lengths)[:, None]).astype(jnp.float32)

    # reshape waveform so row i holds samples [s0*i : s0*i + s0] (conv0 stride layout)
    k0, s0 = CONV_KERNELS[0], CONV_STRIDES[0]
    lout0 = (L - k0) // s0 + 1
    rows = ((-(-L // s0) + 7) // 8) * 8
    padL = rows * s0
    xr = jnp.pad(padded, ((0, 0), (0, padL - L))).reshape(B, rows, s0)
    mr = jnp.pad(smask, ((0, 0), (0, padL - L))).reshape(B, rows, s0)

    # static per-stage lengths of the stride-2 conv chain
    stage_dims, cur = [], lout0
    for k_ in CONV_KERNELS[1:]:
        stage_dims.append((cur, k_))
        cur = (cur - k_) // 2 + 1
    T = cur
    Tp = max(8, ((T + 7) // 8) * 8)
    scr_rows = ((max(d[0] for d in stage_dims) + 7) // 8) * 8

    feats = run_feature_extractor(xr, mr, kp, lout0=lout0,
                                  stage_dims=tuple(stage_dims), tp=Tp,
                                  scr_rows=scr_rows)              # (B, Tp, CONV_DIM)

    frame_lens = jnp.array([_conv_out_len(l) for l in lengths])
    fmask = (jnp.arange(Tp)[None, :] < frame_lens[:, None]).astype(jnp.float32)
    mcol = fmask.reshape(B, Tp, 1)
    bias = ((1.0 - fmask) * NEG_INF).reshape(B, 1, Tp)

    out = run_encoder(feats, mcol, bias, kp)                      # (B, Tp, (L+1)*H)
    hidden_states = tuple(out[:, :T, l * HIDDEN:(l + 1) * HIDDEN]
                          for l in range(NUM_LAYERS + 1))
    return {"hidden_states": hidden_states}


# ---------------- deterministic parameter init + kernel-layout packing ----------------

def init_params(key):
    keys = iter(jax.random.split(key, 128))

    def nrm(shape, scale=0.02):
        return scale * jax.random.normal(next(keys), shape, jnp.float32)

    params = {}
    conv_w = []
    cin = 1
    for k_ in CONV_KERNELS:
        conv_w.append(nrm((CONV_DIM, cin, k_), scale=0.1))
        cin = CONV_DIM
    params["conv_w"] = conv_w
    params["gn_g"] = jnp.ones((CONV_DIM,), jnp.float32)
    params["gn_b"] = jnp.zeros((CONV_DIM,), jnp.float32)
    params["feat_proj"] = dict(
        ln_g=jnp.ones((CONV_DIM,), jnp.float32), ln_b=jnp.zeros((CONV_DIM,), jnp.float32),
        w=nrm((CONV_DIM, HIDDEN)), b=nrm((HIDDEN,)))

    enc = dict(
        # TODO(synk): real pos-conv uses weight_norm; at eval it folds to a plain weight.
        pos_conv=dict(w=nrm((HIDDEN, HIDDEN // POS_GROUPS, POS_KERNEL), scale=0.05),
                      b=nrm((HIDDEN,))),
        ln_g=jnp.ones((HIDDEN,), jnp.float32), ln_b=jnp.zeros((HIDDEN,), jnp.float32),
        layers=[])
    for _ in range(NUM_LAYERS):
        enc["layers"].append(dict(
            attn=dict(wq=nrm((HIDDEN, HIDDEN)), bq=nrm((HIDDEN,)),
                      wk=nrm((HIDDEN, HIDDEN)), bk=jnp.zeros((HIDDEN,), jnp.float32),
                      wv=nrm((HIDDEN, HIDDEN)), bv=nrm((HIDDEN,)),
                      wo=nrm((HIDDEN, HIDDEN)), bo=nrm((HIDDEN,))),
            ln1_g=jnp.ones((HIDDEN,), jnp.float32), ln1_b=jnp.zeros((HIDDEN,), jnp.float32),
            ff_w1=nrm((HIDDEN, FFN)), ff_b1=nrm((FFN,)),
            ff_w2=nrm((FFN, HIDDEN)), ff_b2=nrm((HIDDEN,)),
            ln2_g=jnp.ones((HIDDEN,), jnp.float32), ln2_b=jnp.zeros((HIDDEN,), jnp.float32)))
    params["encoder"] = enc
    return params


def pack_params(p):
    """Repack reference-layout params into kernel-ready (bf16, fused, stacked) arrays."""
    kp = {}
    C, H, F, K = CONV_DIM, HIDDEN, FFN, POS_KERNEL

    # conv0: torch (C, 1, 10) -> tap-major (10, C) weight
    kp["conv0_w"] = jnp.transpose(p["conv_w"][0][:, 0, :], (1, 0)).astype(jnp.bfloat16)
    kp["gn_g"] = p["gn_g"].reshape(1, C)
    kp["gn_b"] = p["gn_b"].reshape(1, C)

    # stride-2 convs: taps 0,1 merged into one (2*Cin, C) weight; tap 2 kept separate.
    w3a, w3b, w2a = [], [], []
    for w in p["conv_w"][1:]:
        taps = [jnp.transpose(w[:, :, t], (1, 0)) for t in range(w.shape[-1])]
        if w.shape[-1] == 3:
            w3a.append(jnp.concatenate(taps[:2], axis=0))
            w3b.append(taps[2])
        else:
            w2a.append(jnp.concatenate(taps[:2], axis=0))
    kp["w3a"] = jnp.stack(w3a).astype(jnp.bfloat16)
    kp["w3b"] = jnp.stack(w3b).astype(jnp.bfloat16)
    kp["w2a"] = jnp.stack(w2a).astype(jnp.bfloat16)

    fp = p["feat_proj"]
    kp["fp_ln_g"] = fp["ln_g"].reshape(1, C)
    kp["fp_ln_b"] = fp["ln_b"].reshape(1, C)
    kp["fp_w"] = fp["w"].astype(jnp.bfloat16)
    kp["fp_b"] = fp["b"].reshape(1, H)

    enc = p["encoder"]
    cg = H // POS_GROUPS
    pw = enc["pos_conv"]["w"]                      # (H, H//G, K) torch layout
    posw = jnp.zeros((K, H, H), jnp.float32)
    for g in range(POS_GROUPS):                    # block-diagonal per-tap weights
        blk = jnp.transpose(pw[g * cg:(g + 1) * cg], (2, 1, 0))   # (K, cin_g, cout_g)
        posw = posw.at[:, g * cg:(g + 1) * cg, g * cg:(g + 1) * cg].set(blk)
    kp["pos_w"] = posw.reshape(K * H, H).astype(jnp.bfloat16)     # taps flattened into rows
    kp["pos_b"] = enc["pos_conv"]["b"].reshape(1, H)
    kp["enc_ln_g"] = enc["ln_g"].reshape(1, H)
    kp["enc_ln_b"] = enc["ln_b"].reshape(1, H)

    dh = H // NUM_HEADS
    scale = dh ** -0.5
    st = {k_: [] for k_ in ("wqkv", "bqkv", "wo", "bo", "ln1_g", "ln1_b",
                            "w1", "b1", "w2", "b2", "ln2_g", "ln2_b")}
    for lp in enc["layers"]:
        a = lp["attn"]
        st["wqkv"].append(jnp.concatenate([a["wq"] * scale, a["wk"], a["wv"]], axis=1))
        st["bqkv"].append(jnp.concatenate([a["bq"] * scale, a["bk"], a["bv"]]).reshape(1, 3 * H))
        st["wo"].append(a["wo"]); st["bo"].append(a["bo"].reshape(1, H))
        st["ln1_g"].append(lp["ln1_g"].reshape(1, H)); st["ln1_b"].append(lp["ln1_b"].reshape(1, H))
        st["w1"].append(lp["ff_w1"]); st["b1"].append(lp["ff_b1"].reshape(1, F))
        st["w2"].append(lp["ff_w2"]); st["b2"].append(lp["ff_b2"].reshape(1, H))
        st["ln2_g"].append(lp["ln2_g"].reshape(1, H)); st["ln2_b"].append(lp["ln2_b"].reshape(1, H))
    bf = ("wqkv", "wo", "w1", "w2")
    for k_, v in st.items():
        arr = jnp.stack(v)
        kp[k_] = arr.astype(jnp.bfloat16) if k_ in bf else arr.astype(jnp.float32)
    return kp


if __name__ == "__main__":
    key = jax.random.PRNGKey(0)
    pkey, k1, k2 = jax.random.split(key, 3)
    params = init_params(pkey)
    kparams = pack_params(params)

    # two "utterances" of different length (list input, like the torch module)
    wav1 = jax.random.normal(k1, (4000,), jnp.float32)
    wav2 = jax.random.normal(k2, (3200,), jnp.float32)

    out = upstream_expert_forward([wav1, wav2], kparams)
    hs = jax.block_until_ready(out["hidden_states"])

    assert len(hs) == NUM_LAYERS + 1
    for h in hs:
        assert h.shape == (2, 12, HIDDEN), h.shape
        assert bool(jnp.all(jnp.isfinite(h)))
    assert get_downsample_rates() == 320
    print("KERNEL_OK")
</pallas_src>

<mosaic_0001>
module attributes {stable_mosaic.version = 11 : i64} {
  func.func @_feature_kernel(%arg0: i32, %arg1: memref<1x800x5xf32, #tpu.memory_space<vmem>>, %arg2: memref<1x800x5xf32, #tpu.memory_space<vmem>>, %arg3: memref<10x32xbf16, #tpu.memory_space<vmem>>, %arg4: memref<1x32xf32, #tpu.memory_space<vmem>>, %arg5: memref<1x32xf32, #tpu.memory_space<vmem>>, %arg6: memref<4x64x32xbf16, #tpu.memory_space<vmem>>, %arg7: memref<4x32x32xbf16, #tpu.memory_space<vmem>>, %arg8: memref<2x64x32xbf16, #tpu.memory_space<vmem>>, %arg9: memref<1x16x32xf32, #tpu.memory_space<vmem>>, %arg10: memref<800x32xf32, #tpu.memory_space<vmem>>) attributes {dimension_semantics = [#tpu.dimension_semantics<parallel>], iteration_bounds = array<i64: 2>, scalar_prefetch = 0 : i64, scratch_operands = 1 : i64, tpu.core_type = #tpu.core_type<tc>, window_params = [{transform_indices = @transform_0, window_bounds = array<i64: 1, 800, 5>}, {transform_indices = @transform_1, window_bounds = array<i64: 1, 800, 5>}, {pipeline_mode = #tpu.pipeline_mode<synchronous>, transform_indices = @transform_2, window_bounds = array<i64: 10, 32>}, {pipeline_mode = #tpu.pipeline_mode<synchronous>, transform_indices = @transform_3, window_bounds = array<i64: 1, 32>}, {pipeline_mode = #tpu.pipeline_mode<synchronous>, transform_indices = @transform_4, window_bounds = array<i64: 1, 32>}, {pipeline_mode = #tpu.pipeline_mode<synchronous>, transform_indices = @transform_5, window_bounds = array<i64: 4, 64, 32>}, {pipeline_mode = #tpu.pipeline_mode<synchronous>, transform_indices = @transform_6, window_bounds = array<i64: 4, 32, 32>}, {pipeline_mode = #tpu.pipeline_mode<synchronous>, transform_indices = @transform_7, window_bounds = array<i64: 2, 64, 32>}, {transform_indices = @transform_8, window_bounds = array<i64: 1, 16, 32>}]} {
    %c0 = arith.constant 0 : index
    %c0_0 = arith.constant 0 : index
    %c0_1 = arith.constant 0 : index
    %0 = vector.load %arg1[%c0, %c0_0, %c0_1] : memref<1x800x5xf32, #tpu.memory_space<vmem>>, vector<1x800x5xf32>
    %1 = vector.shape_cast %0 : vector<1x800x5xf32> to vector<800x5xf32>
    %c0_2 = arith.constant 0 : index
    %c0_3 = arith.constant 0 : index
    %c0_4 = arith.constant 0 : index
    %2 = vector.load %arg2[%c0_2, %c0_3, %c0_4] : memref<1x800x5xf32, #tpu.memory_space<vmem>>, vector<1x800x5xf32>
    %3 = vector.shape_cast %2 : vector<1x800x5xf32> to vector<800x5xf32>
    %cst = arith.constant dense<0.000000e+00> : vector<800xf32>
    %4 = vector.multi_reduction <add>, %3, %cst [1] : vector<800x5xf32> to vector<800xf32>
    %5 = vector.shape_cast %4 : vector<800xf32> to vector<800x1xf32>
    %cst_5 = arith.constant dense<0.000000e+00> : vector<1xf32>
    %6 = vector.multi_reduction <add>, %5, %cst_5 [0] : vector<800x1xf32> to vector<1xf32>
    %7 = vector.shape_cast %6 : vector<1xf32> to vector<1x1xf32>
    %cst_6 = arith.constant 1.000000e+00 : f32
    %8 = vector.broadcast %cst_6 : f32 to vector<1x1xf32>
    %9 = arith.maximumf %7, %8 : vector<1x1xf32>
    %10 = arith.mulf %1, %3 : vector<800x5xf32>
    %cst_7 = arith.constant dense<0.000000e+00> : vector<800xf32>
    %11 = vector.multi_reduction <add>, %10, %cst_7 [1] : vector<800x5xf32> to vector<800xf32>
    %12 = vector.shape_cast %11 : vector<800xf32> to vector<800x1xf32>
    %cst_8 = arith.constant dense<0.000000e+00> : vector<1xf32>
    %13 = vector.multi_reduction <add>, %12, %cst_8 [0] : vector<800x1xf32> to vector<1xf32>
    %14 = vector.shape_cast %13 : vector<1xf32> to vector<1x1xf32>
    %15 = arith.divf %14, %9 : vector<1x1xf32>
    %16 = vector.broadcast %15 : vector<1x1xf32> to vector<800x5xf32>
    %17 = arith.subf %1, %16 : vector<800x5xf32>
    %18 = arith.mulf %17, %3 : vector<800x5xf32>
    %19 = arith.mulf %18, %18 : vector<800x5xf32>
    %cst_9 = arith.constant dense<0.000000e+00> : vector<800xf32>
    %20 = vector.multi_reduction <add>, %19, %cst_9 [1] : vector<800x5xf32> to vector<800xf32>
    %21 = vector.shape_cast %20 : vector<800xf32> to vector<800x1xf32>
    %cst_10 = arith.constant dense<0.000000e+00> : vector<1xf32>
    %22 = vector.multi_reduction <add>, %21, %cst_10 [0] : vector<800x1xf32> to vector<1xf32>
    %23 = vector.shape_cast %22 : vector<1xf32> to vector<1x1xf32>
    %24 = arith.divf %23, %9 : vector<1x1xf32>
    %cst_11 = arith.constant 1.000000e-07 : f32
    %25 = vector.broadcast %cst_11 : f32 to vector<1x1xf32>
    %26 = arith.addf %24, %25 : vector<1x1xf32>
    %27 = math.rsqrt %26 : vector<1x1xf32>
    %28 = vector.broadcast %27 : vector<1x1xf32> to vector<800x5xf32>
    %29 = arith.mulf %18, %28 : vector<800x5xf32>
    %30 = vector.extract_strided_slice %29 {offsets = [0, 0], sizes = [799, 5], strides = [1, 1]} : vector<800x5xf32> to vector<799x5xf32>
    %31 = vector.extract_strided_slice %29 {offsets = [1, 0], sizes = [799, 5], strides = [1, 1]} : vector<800x5xf32> to vector<799x5xf32>
    %32 = tpu.concatenate %30, %31 in 1 : vector<799x5xf32>, vector<799x5xf32> -> vector<799x10xf32>
    %33 = arith.truncf %32 : vector<799x10xf32> to vector<799x10xbf16>
    %c0_12 = arith.constant 0 : index
    %c0_13 = arith.constant 0 : index
    %34 = vector.load %arg3[%c0_12, %c0_13] : memref<10x32xbf16, #tpu.memory_space<vmem>>, vector<10x32xbf16>
    %cst_14 = arith.constant dense<0.000000e+00> : vector<799x32xf32>
    %35 = tpu.matmul %33, %34, %cst_14 {dimension_numbers = #tpu.dot_dimension_numbers<[1], [0], [0], [1], [0, 0, 1, 1], [], []>} : vector<799x10xbf16>, vector<10x32xbf16>, vector<799x32xf32> -> vector<799x32xf32>
    %cst_15 = arith.constant dense<0.000000e+00> : vector<32xf32>
    %36 = vector.multi_reduction <add>, %35, %cst_15 [0] : vector<799x32xf32> to vector<32xf32>
    %37 = vector.shape_cast %36 : vector<32xf32> to vector<1x32xf32>
    %cst_16 = arith.constant 7.990000e+02 : f32
    %38 = vector.broadcast %cst_16 : f32 to vector<1x32xf32>
    %39 = arith.divf %37, %38 : vector<1x32xf32>
    %40 = vector.broadcast %39 : vector<1x32xf32> to vector<799x32xf32>
    %41 = arith.subf %35, %40 : vector<799x32xf32>
    %42 = arith.mulf %41, %41 : vector<799x32xf32>
    %cst_17 = arith.constant dense<0.000000e+00> : vector<32xf32>
    %43 = vector.multi_reduction <add>, %42, %cst_17 [0] : vector<799x32xf32> to vector<32xf32>
    %44 = vector.shape_cast %43 : vector<32xf32> to vector<1x32xf32>
    %cst_18 = arith.constant 7.990000e+02 : f32
    %45 = vector.broadcast %cst_18 : f32 to vector<1x32xf32>
    %46 = arith.divf %44, %45 : vector<1x32xf32>
    %47 = vector.broadcast %39 : vector<1x32xf32> to vector<799x32xf32>
    %48 = arith.subf %35, %47 : vector<799x32xf32>
    %cst_19 = arith.constant 9.99999974E-6 : f32
    %49 = vector.broadcast %cst_19 : f32 to vector<1x32xf32>
    %50 = arith.addf %46, %49 : vector<1x32xf32>
    %51 = math.rsqrt %50 : vector<1x32xf32>
    %52 = vector.broadcast %51 : vector<1x32xf32> to vector<799x32xf32>
    %53 = arith.mulf %48, %52 : vector<799x32xf32>
    %c0_20 = arith.constant 0 : index
    %c0_21 = arith.constant 0 : index
    %54 = vector.load %arg4[%c0_20, %c0_21] : memref<1x32xf32, #tpu.memory_space<vmem>>, vector<1x32xf32>
    %55 = vector.broadcast %54 : vector<1x32xf32> to vector<799x32xf32>
    %56 = arith.mulf %53, %55 : vector<799x32xf32>
    %c0_22 = arith.constant 0 : index
    %c0_23 = arith.constant 0 : index
    %57 = vector.load %arg5[%c0_22, %c0_23] : memref<1x32xf32, #tpu.memory_space<vmem>>, vector<1x32xf32>
    %58 = vector.broadcast %57 : vector<1x32xf32> to vector<799x32xf32>
    %59 = arith.addf %56, %58 : vector<799x32xf32>
    %60 = arith.mulf %59, %59 : vector<799x32xf32>
    %61 = arith.mulf %59, %60 : vector<799x32xf32>
    %cst_24 = arith.constant 4.471500e-02 : f32
    %62 = vector.broadcast %cst_24 : f32 to vector<799x32xf32>
    %63 = arith.mulf %62, %61 : vector<799x32xf32>
    %64 = arith.addf %59, %63 : vector<799x32xf32>
    %cst_25 = arith.constant 0.797884583 : f32
    %65 = vector.broadcast %cst_25 : f32 to vector<799x32xf32>
    %66 = arith.mulf %65, %64 : vector<799x32xf32>
    %67 = math.tanh %66 : vector<799x32xf32>
    %cst_26 = arith.constant 1.000000e+00 : f32
    %68 = vector.broadcast %cst_26 : f32 to vector<799x32xf32>
    %69 = arith.addf %68, %67 : vector<799x32xf32>
    %cst_27 = arith.constant 5.000000e-01 : f32
    %70 = vector.broadcast %cst_27 : f32 to vector<799x32xf32>
    %71 = arith.mulf %70, %69 : vector<799x32xf32>
    %72 = arith.mulf %59, %71 : vector<799x32xf32>
    %c0_28 = arith.constant 0 : index
    %c0_29 = arith.constant 0 : index
    %73 = vector.load %arg10[%c0_28, %c0_29] : memref<800x32xf32, #tpu.memory_space<vmem>>, vector<799x32xf32>
    tpu.vector_store %arg10[%c0_28, %c0_29], %72 {strides = array<i32>} : memref<800x32xf32, #tpu.memory_space<vmem>>, vector<799x32xf32>,
    %c0_30 = arith.constant 0 : index
    %c0_31 = arith.constant 0 : index
    %74 = tpu.strided_load %arg10[%c0_30, %c0_31] {strides = array<i32: 2, 1>} : memref<800x32xf32, #tpu.memory_space<vmem>>, vector<399x32xf32>
    %c1 = arith.constant 1 : index
    %c0_32 = arith.constant 0 : index
    %75 = tpu.strided_load %arg10[%c1, %c0_32] {strides = array<i32: 2, 1>} : memref<800x32xf32, #tpu.memory_space<vmem>>, vector<399x32xf32>
    %76 = tpu.concatenate %74, %75 in 1 : vector<399x32xf32>, vector<399x32xf32> -> vector<399x64xf32>
    %77 = arith.truncf %76 : vector<399x64xf32> to vector<399x64xbf16>
    %c0_33 = arith.constant 0 : index
    %c0_34 = arith.constant 0 : index
    %c0_35 = arith.constant 0 : index
    %78 = vector.load %arg6[%c0_33, %c0_34, %c0_35] : memref<4x64x32xbf16, #tpu.memory_space<vmem>>, vector<1x64x32xbf16>
    %79 = vector.shape_cast %78 : vector<1x64x32xbf16> to vector<64x32xbf16>
    %cst_36 = arith.constant dense<0.000000e+00> : vector<399x32xf32>
    %80 = tpu.matmul %77, %79, %cst_36 {dimension_numbers = #tpu.dot_dimension_numbers<[1], [0], [0], [1], [0, 0, 1, 1], [], []>} : vector<399x64xbf16>, vector<64x32xbf16>, vector<399x32xf32> -> vector<399x32xf32>
    %c2 = arith.constant 2 : index
    %c0_37 = arith.constant 0 : index
    %81 = tpu.strided_load %arg10[%c2, %c0_37] {strides = array<i32: 2, 1>} : memref<800x32xf32, #tpu.memory_space<vmem>>, vector<399x32xf32>
    %82 = arith.truncf %81 : vector<399x32xf32> to vector<399x32xbf16>
    %c0_38 = arith.constant 0 : index
    %c0_39 = arith.constant 0 : index
    %c0_40 = arith.constant 0 : index
    %83 = vector.load %arg7[%c0_38, %c0_39, %c0_40] : memref<4x32x32xbf16, #tpu.memory_space<vmem>>, vector<1x32x32xbf16>
    %84 = vector.shape_cast %83 : vector<1x32x32xbf16> to vector<32x32xbf16>
    %cst_41 = arith.constant dense<0.000000e+00> : vector<399x32xf32>
    %85 = tpu.matmul %82, %84, %cst_41 {dimension_numbers = #tpu.dot_dimension_numbers<[1], [0], [0], [1], [0, 0, 1, 1], [], []>} : vector<399x32xbf16>, vector<32x32xbf16>, vector<399x32xf32> -> vector<399x32xf32>
    %86 = arith.addf %80, %85 : vector<399x32xf32>
    %87 = arith.mulf %86, %86 : vector<399x32xf32>
    %88 = arith.mulf %86, %87 : vector<399x32xf32>
    %cst_42 = arith.constant 4.471500e-02 : f32
    %89 = vector.broadcast %cst_42 : f32 to vector<399x32xf32>
    %90 = arith.mulf %89, %88 : vector<399x32xf32>
    %91 = arith.addf %86, %90 : vector<399x32xf32>
    %cst_43 = arith.constant 0.797884583 : f32
    %92 = vector.broadcast %cst_43 : f32 to vector<399x32xf32>
    %93 = arith.mulf %92, %91 : vector<399x32xf32>
    %94 = math.tanh %93 : vector<399x32xf32>
    %cst_44 = arith.constant 1.000000e+00 : f32
    %95 = vector.broadcast %cst_44 : f32 to vector<399x32xf32>
    %96 = arith.addf %95, %94 : vector<399x32xf32>
    %cst_45 = arith.constant 5.000000e-01 : f32
    %97 = vector.broadcast %cst_45 : f32 to vector<399x32xf32>
    %98 = arith.mulf %97, %96 : vector<399x32xf32>
    %99 = arith.mulf %86, %98 : vector<399x32xf32>
    %c0_46 = arith.constant 0 : index
    %c0_47 = arith.constant 0 : index
    %100 = vector.load %arg10[%c0_46, %c0_47] : memref<800x32xf32, #tpu.memory_space<vmem>>, vector<399x32xf32>
    tpu.vector_store %arg10[%c0_46, %c0_47], %99 {strides = array<i32>} : memref<800x32xf32, #tpu.memory_space<vmem>>, vector<399x32xf32>,
    %c0_48 = arith.constant 0 : index
    %c0_49 = arith.constant 0 : index
    %101 = tpu.strided_load %arg10[%c0_48, %c0_49] {strides = array<i32: 2, 1>} : memref<800x32xf32, #tpu.memory_space<vmem>>, vector<199x32xf32>
    %c1_50 = arith.constant 1 : index
    %c0_51 = arith.constant 0 : index
    %102 = tpu.strided_load %arg10[%c1_50, %c0_51] {strides = array<i32: 2, 1>} : memref<800x32xf32, #tpu.memory_space<vmem>>, vector<199x32xf32>
    %103 = tpu.concatenate %101, %102 in 1 : vector<199x32xf32>, vector<199x32xf32> -> vector<199x64xf32>
    %104 = arith.truncf %103 : vector<199x64xf32> to vector<199x64xbf16>
    %c1_52 = arith.constant 1 : index
    %c0_53 = arith.constant 0 : index
    %c0_54 = arith.constant 0 : index
    %105 = vector.load %arg6[%c1_52, %c0_53, %c0_54] : memref<4x64x32xbf16, #tpu.memory_space<vmem>>, vector<1x64x32xbf16>
    %106 = vector.shape_cast %105 : vector<1x64x32xbf16> to vector<64x32xbf16>
    %cst_55 = arith.constant dense<0.000000e+00> : vector<199x32xf32>
    %107 = tpu.matmul %104, %106, %cst_55 {dimension_numbers = #tpu.dot_dimension_numbers<[1], [0], [0], [1], [0, 0, 1, 1], [], []>} : vector<199x64xbf16>, vector<64x32xbf16>, vector<199x32xf32> -> vector<199x32xf32>
    %c2_56 = arith.constant 2 : index
    %c0_57 = arith.constant 0 : index
    %108 = tpu.strided_load %arg10[%c2_56, %c0_57] {strides = array<i32: 2, 1>} : memref<800x32xf32, #tpu.memory_space<vmem>>, vector<199x32xf32>
    %109 = arith.truncf %108 : vector<199x32xf32> to vector<199x32xbf16>
    %c1_58 = arith.constant 1 : index
    %c0_59 = arith.constant 0 : index
    %c0_60 = arith.constant 0 : index
    %110 = vector.load %arg7[%c1_58, %c0_59, %c0_60] : memref<4x32x32xbf16, #tpu.memory_space<vmem>>, vector<1x32x32xbf16>
    %111 = vector.shape_cast %110 : vector<1x32x32xbf16> to vector<32x32xbf16>
    %cst_61 = arith.constant dense<0.000000e+00> : vector<199x32xf32>
    %112 = tpu.matmul %109, %111, %cst_61 {dimension_numbers = #tpu.dot_dimension_numbers<[1], [0], [0], [1], [0, 0, 1, 1], [], []>} : vector<199x32xbf16>, vector<32x32xbf16>, vector<199x32xf32> -> vector<199x32xf32>
    %113 = arith.addf %107, %112 : vector<199x32xf32>
    %114 = arith.mulf %113, %113 : vector<199x32xf32>
    %115 = arith.mulf %113, %114 : vector<199x32xf32>
    %cst_62 = arith.constant 4.471500e-02 : f32
    %116 = vector.broadcast %cst_62 : f32 to vector<199x32xf32>
    %117 = arith.mulf %116, %115 : vector<199x32xf32>
    %118 = arith.addf %113, %117 : vector<199x32xf32>
    %cst_63 = arith.constant 0.797884583 : f32
    %119 = vector.broadcast %cst_63 : f32 to vector<199x32xf32>
    %120 = arith.mulf %119, %118 : vector<199x32xf32>
    %121 = math.tanh %120 : vector<199x32xf32>
    %cst_64 = arith.constant 1.000000e+00 : f32
    %122 = vector.broadcast %cst_64 : f32 to vector<199x32xf32>
    %123 = arith.addf %122, %121 : vector<199x32xf32>
    %cst_65 = arith.constant 5.000000e-01 : f32
    %124 = vector.broadcast %cst_65 : f32 to vector<199x32xf32>
    %125 = arith.mulf %124, %123 : vector<199x32xf32>
    %126 = arith.mulf %113, %125 : vector<199x32xf32>
    %c0_66 = arith.constant 0 : index
    %c0_67 = arith.constant 0 : index
    %127 = vector.load %arg10[%c0_66, %c0_67] : memref<800x32xf32, #tpu.memory_space<vmem>>, vector<199x32xf32>
    tpu.vector_store %arg10[%c0_66, %c0_67], %126 {strides = array<i32>} : memref<800x32xf32, #tpu.memory_space<vmem>>, vector<199x32xf32>,
    %c0_68 = arith.constant 0 : index
    %c0_69 = arith.constant 0 : index
    %128 = tpu.strided_load %arg10[%c0_68, %c0_69] {strides = array<i32: 2, 1>} : memref<800x32xf32, #tpu.memory_space<vmem>>, vector<99x32xf32>
    %c1_70 = arith.constant 1 : index
    %c0_71 = arith.constant 0 : index
    %129 = tpu.strided_load %arg10[%c1_70, %c0_71] {strides = array<i32: 2, 1>} : memref<800x32xf32, #tpu.memory_space<vmem>>, vector<99x32xf32>
    %130 = tpu.concatenate %128, %129 in 1 : vector<99x32xf32>, vector<99x32xf32> -> vector<99x64xf32>
    %131 = arith.truncf %130 : vector<99x64xf32> to vector<99x64xbf16>
    %c2_72 = arith.constant 2 : index
    %c0_73 = arith.constant 0 : index
    %c0_74 = arith.constant 0 : index
    %132 = vector.load %arg6[%c2_72, %c0_73, %c0_74] : memref<4x64x32xbf16, #tpu.memory_space<vmem>>, vector<1x64x32xbf16>
    %133 = vector.shape_cast %132 : vector<1x64x32xbf16> to vector<64x32xbf16>
    %cst_75 = arith.constant dense<0.000000e+00> : vector<99x32xf32>
    %134 = tpu.matmul %131, %133, %cst_75 {dimension_numbers = #tpu.dot_dimension_numbers<[1], [0], [0], [1], [0, 0, 1, 1], [], []>} : vector<99x64xbf16>, vector<64x32xbf16>, vector<99x32xf32> -> vector<99x32xf32>
    %c2_76 = arith.constant 2 : index
    %c0_77 = arith.constant 0 : index
    %135 = tpu.strided_load %arg10[%c2_76, %c0_77] {strides = array<i32: 2, 1>} : memref<800x32xf32, #tpu.memory_space<vmem>>, vector<99x32xf32>
    %136 = arith.truncf %135 : vector<99x32xf32> to vector<99x32xbf16>
    %c2_78 = arith.constant 2 : index
    %c0_79 = arith.constant 0 : index
    %c0_80 = arith.constant 0 : index
    %137 = vector.load %arg7[%c2_78, %c0_79, %c0_80] : memref<4x32x32xbf16, #tpu.memory_space<vmem>>, vector<1x32x32xbf16>
    %138 = vector.shape_cast %137 : vector<1x32x32xbf16> to vector<32x32xbf16>
    %cst_81 = arith.constant dense<0.000000e+00> : vector<99x32xf32>
    %139 = tpu.matmul %136, %138, %cst_81 {dimension_numbers = #tpu.dot_dimension_numbers<[1], [0], [0], [1], [0, 0, 1, 1], [], []>} : vector<99x32xbf16>, vector<32x32xbf16>, vector<99x32xf32> -> vector<99x32xf32>
    %140 = arith.addf %134, %139 : vector<99x32xf32>
    %141 = arith.mulf %140, %140 : vector<99x32xf32>
    %142 = arith.mulf %140, %141 : vector<99x32xf32>
    %cst_82 = arith.constant 4.471500e-02 : f32
    %143 = vector.broadcast %cst_82 : f32 to vector<99x32xf32>
    %144 = arith.mulf %143, %142 : vector<99x32xf32>
    %145 = arith.addf %140, %144 : vector<99x32xf32>
    %cst_83 = arith.constant 0.797884583 : f32
    %146 = vector.broadcast %cst_83 : f32 to vector<99x32xf32>
    %147 = arith.mulf %146, %145 : vector<99x32xf32>
    %148 = math.tanh %147 : vector<99x32xf32>
    %cst_84 = arith.constant 1.000000e+00 : f32
    %149 = vector.broadcast %cst_84 : f32 to vector<99x32xf32>
    %150 = arith.addf %149, %148 : vector<99x32xf32>
    %cst_85 = arith.constant 5.000000e-01 : f32
    %151 = vector.broadcast %cst_85 : f32 to vector<99x32xf32>
    %152 = arith.mulf %151, %150 : vector<99x32xf32>
    %153 = arith.mulf %140, %152 : vector<99x32xf32>
    %c0_86 = arith.constant 0 : index
    %c0_87 = arith.constant 0 : index
    %154 = vector.load %arg10[%c0_86, %c0_87] : memref<800x32xf32, #tpu.memory_space<vmem>>, vector<99x32xf32>
    tpu.vector_store %arg10[%c0_86, %c0_87], %153 {strides = array<i32>} : memref<800x32xf32, #tpu.memory_space<vmem>>, vector<99x32xf32>,
    %c0_88 = arith.constant 0 : index
    %c0_89 = arith.constant 0 : index
    %155 = tpu.strided_load %arg10[%c0_88, %c0_89] {strides = array<i32: 2, 1>} : memref<800x32xf32, #tpu.memory_space<vmem>>, vector<49x32xf32>
    %c1_90 = arith.constant 1 : index
    %c0_91 = arith.constant 0 : index
    %156 = tpu.strided_load %arg10[%c1_90, %c0_91] {strides = array<i32: 2, 1>} : memref<800x32xf32, #tpu.memory_space<vmem>>, vector<49x32xf32>
    %157 = tpu.concatenate %155, %156 in 1 : vector<49x32xf32>, vector<49x32xf32> -> vector<49x64xf32>
    %158 = arith.truncf %157 : vector<49x64xf32> to vector<49x64xbf16>
    %c3 = arith.constant 3 : index
    %c0_92 = arith.constant 0 : index
    %c0_93 = arith.constant 0 : index
    %159 = vector.load %arg6[%c3, %c0_92, %c0_93] : memref<4x64x32xbf16, #tpu.memory_space<vmem>>, vector<1x64x32xbf16>
    %160 = vector.shape_cast %159 : vector<1x64x32xbf16> to vector<64x32xbf16>
    %cst_94 = arith.constant dense<0.000000e+00> : vector<49x32xf32>
    %161 = tpu.matmul %158, %160, %cst_94 {dimension_numbers = #tpu.dot_dimension_numbers<[1], [0], [0], [1], [0, 0, 1, 1], [], []>} : vector<49x64xbf16>, vector<64x32xbf16>, vector<49x32xf32> -> vector<49x32xf32>
    %c2_95 = arith.constant 2 : index
    %c0_96 = arith.constant 0 : index
    %162 = tpu.strided_load %arg10[%c2_95, %c0_96] {strides = array<i32: 2, 1>} : memref<800x32xf32, #tpu.memory_space<vmem>>, vector<49x32xf32>
    %163 = arith.truncf %162 : vector<49x32xf32> to vector<49x32xbf16>
    %c3_97 = arith.constant 3 : index
    %c0_98 = arith.constant 0 : index
    %c0_99 = arith.constant 0 : index
    %164 = vector.load %arg7[%c3_97, %c0_98, %c0_99] : memref<4x32x32xbf16, #tpu.memory_space<vmem>>, vector<1x32x32xbf16>
    %165 = vector.shape_cast %164 : vector<1x32x32xbf16> to vector<32x32xbf16>
    %cst_100 = arith.constant dense<0.000000e+00> : vector<49x32xf32>
    %166 = tpu.matmul %163, %165, %cst_100 {dimension_numbers = #tpu.dot_dimension_numbers<[1], [0], [0], [1], [0, 0, 1, 1], [], []>} : vector<49x32xbf16>, vector<32x32xbf16>, vector<49x32xf32> -> vector<49x32xf32>
    %167 = arith.addf %161, %166 : vector<49x32xf32>
    %168 = arith.mulf %167, %167 : vector<49x32xf32>
    %169 = arith.mulf %167, %168 : vector<49x32xf32>
    %cst_101 = arith.constant 4.471500e-02 : f32
    %170 = vector.broadcast %cst_101 : f32 to vector<49x32xf32>
    %171 = arith.mulf %170, %169 : vector<49x32xf32>
    %172 = arith.addf %167, %171 : vector<49x32xf32>
    %cst_102 = arith.constant 0.797884583 : f32
    %173 = vector.broadcast %cst_102 : f32 to vector<49x32xf32>
    %174 = arith.mulf %173, %172 : vector<49x32xf32>
    %175 = math.tanh %174 : vector<49x32xf32>
    %cst_103 = arith.constant 1.000000e+00 : f32
    %176 = vector.broadcast %cst_103 : f32 to vector<49x32xf32>
    %177 = arith.addf %176, %175 : vector<49x32xf32>
    %cst_104 = arith.constant 5.000000e-01 : f32
    %178 = vector.broadcast %cst_104 : f32 to vector<49x32xf32>
    %179 = arith.mulf %178, %177 : vector<49x32xf32>
    %180 = arith.mulf %167, %179 : vector<49x32xf32>
    %c0_105 = arith.constant 0 : index
    %c0_106 = arith.constant 0 : index
    %181 = vector.load %arg10[%c0_105, %c0_106] : memref<800x32xf32, #tpu.memory_space<vmem>>, vector<49x32xf32>
    tpu.vector_store %arg10[%c0_105, %c0_106], %180 {strides = array<i32>} : memref<800x32xf32, #tpu.memory_space<vmem>>, vector<49x32xf32>,
    %c0_107 = arith.constant 0 : index
    %c0_108 = arith.constant 0 : index
    %182 = tpu.strided_load %arg10[%c0_107, %c0_108] {strides = array<i32: 2, 1>} : memref<800x32xf32, #tpu.memory_space<vmem>>, vector<24x32xf32>
    %c1_109 = arith.constant 1 : index
    %c0_110 = arith.constant 0 : index
    %183 = tpu.strided_load %arg10[%c1_109, %c0_110] {strides = array<i32: 2, 1>} : memref<800x32xf32, #tpu.memory_space<vmem>>, vector<24x32xf32>
    %184 = tpu.concatenate %182, %183 in 1 : vector<24x32xf32>, vector<24x32xf32> -> vector<24x64xf32>
    %185 = arith.truncf %184 : vector<24x64xf32> to vector<24x64xbf16>
    %c0_111 = arith.constant 0 : index
    %c0_112 = arith.constant 0 : index
    %c0_113 = arith.constant 0 : index
    %186 = vector.load %arg8[%c0_111, %c0_112, %c0_113] : memref<2x64x32xbf16, #tpu.memory_space<vmem>>, vector<1x64x32xbf16>
    %187 = vector.shape_cast %186 : vector<1x64x32xbf16> to vector<64x32xbf16>
    %cst_114 = arith.constant dense<0.000000e+00> : vector<24x32xf32>
    %188 = tpu.matmul %185, %187, %cst_114 {dimension_numbers = #tpu.dot_dimension_numbers<[1], [0], [0], [1], [0, 0, 1, 1], [], []>} : vector<24x64xbf16>, vector<64x32xbf16>, vector<24x32xf32> -> vector<24x32xf32>
    %189 = arith.mulf %188, %188 : vector<24x32xf32>
    %190 = arith.mulf %188, %189 : vector<24x32xf32>
    %cst_115 = arith.constant 4.471500e-02 : f32
    %191 = vector.broadcast %cst_115 : f32 to vector<24x32xf32>
    %192 = arith.mulf %191, %190 : vector<24x32xf32>
    %193 = arith.addf %188, %192 : vector<24x32xf32>
    %cst_116 = arith.constant 0.797884583 : f32
    %194 = vector.broadcast %cst_116 : f32 to vector<24x32xf32>
    %195 = arith.mulf %194, %193 : vector<24x32xf32>
    %196 = math.tanh %195 : vector<24x32xf32>
    %cst_117 = arith.constant 1.000000e+00 : f32
    %197 = vector.broadcast %cst_117 : f32 to vector<24x32xf32>
    %198 = arith.addf %197, %196 : vector<24x32xf32>
    %cst_118 = arith.constant 5.000000e-01 : f32
    %199 = vector.broadcast %cst_118 : f32 to vector<24x32xf32>
    %200 = arith.mulf %199, %198 : vector<24x32xf32>
    %201 = arith.mulf %188, %200 : vector<24x32xf32>
    %c0_119 = arith.constant 0 : index
    %c0_120 = arith.constant 0 : index
    %202 = vector.load %arg10[%c0_119, %c0_120] : memref<800x32xf32, #tpu.memory_space<vmem>>, vector<24x32xf32>
    tpu.vector_store %arg10[%c0_119, %c0_120], %201 {strides = array<i32>} : memref<800x32xf32, #tpu.memory_space<vmem>>, vector<24x32xf32>,
    %c0_121 = arith.constant 0 : index
    %c0_122 = arith.constant 0 : index
    %203 = tpu.strided_load %arg10[%c0_121, %c0_122] {strides = array<i32: 2, 1>} : memref<800x32xf32, #tpu.memory_space<vmem>>, vector<12x32xf32>
    %c1_123 = arith.constant 1 : index
    %c0_124 = arith.constant 0 : index
    %204 = tpu.strided_load %arg10[%c1_123, %c0_124] {strides = array<i32: 2, 1>} : memref<800x32xf32, #tpu.memory_space<vmem>>, vector<12x32xf32>
    %205 = tpu.concatenate %203, %204 in 1 : vector<12x32xf32>, vector<12x32xf32> -> vector<12x64xf32>
    %206 = arith.truncf %205 : vector<12x64xf32> to vector<12x64xbf16>
    %c1_125 = arith.constant 1 : index
    %c0_126 = arith.constant 0 : index
    %c0_127 = arith.constant 0 : index
    %207 = vector.load %arg8[%c1_125, %c0_126, %c0_127] : memref<2x64x32xbf16, #tpu.memory_space<vmem>>, vector<1x64x32xbf16>
    %208 = vector.shape_cast %207 : vector<1x64x32xbf16> to vector<64x32xbf16>
    %cst_128 = arith.constant dense<0.000000e+00> : vector<12x32xf32>
    %209 = tpu.matmul %206, %208, %cst_128 {dimension_numbers = #tpu.dot_dimension_numbers<[1], [0], [0], [1], [0, 0, 1, 1], [], []>} : vector<12x64xbf16>, vector<64x32xbf16>, vector<12x32xf32> -> vector<12x32xf32>
    %210 = arith.mulf %209, %209 : vector<12x32xf32>
    %211 = arith.mulf %209, %210 : vector<12x32xf32>
    %cst_129 = arith.constant 4.471500e-02 : f32
    %212 = vector.broadcast %cst_129 : f32 to vector<12x32xf32>
    %213 = arith.mulf %212, %211 : vector<12x32xf32>
    %214 = arith.addf %209, %213 : vector<12x32xf32>
    %cst_130 = arith.constant 0.797884583 : f32
    %215 = vector.broadcast %cst_130 : f32 to vector<12x32xf32>
    %216 = arith.mulf %215, %214 : vector<12x32xf32>
    %217 = math.tanh %216 : vector<12x32xf32>
    %cst_131 = arith.constant 1.000000e+00 : f32
    %218 = vector.broadcast %cst_131 : f32 to vector<12x32xf32>
    %219 = arith.addf %218, %217 : vector<12x32xf32>
    %cst_132 = arith.constant 5.000000e-01 : f32
    %220 = vector.broadcast %cst_132 : f32 to vector<12x32xf32>
    %221 = arith.mulf %220, %219 : vector<12x32xf32>
    %222 = arith.mulf %209, %221 : vector<12x32xf32>
    %cst_133 = arith.constant 0.000000e+00 : f32
    %223 = vector.broadcast %cst_133 : f32 to vector<4x32xf32>
    %224 = tpu.concatenate %222, %223 in 0 : vector<12x32xf32>, vector<4x32xf32> -> vector<16x32xf32>
    %c0_134 = arith.constant 0 : index
    %c0_135 = arith.constant 0 : index
    %c0_136 = arith.constant 0 : index
    %225 = vector.load %arg9[%c0_134, %c0_135, %c0_136] : memref<1x16x32xf32, #tpu.memory_space<vmem>>, vector<1x16x32xf32>
    %226 = vector.shape_cast %225 : vector<1x16x32xf32> to vector<16x32xf32>
    %227 = vector.shape_cast %224 : vector<16x32xf32> to vector<1x16x32xf32>
    tpu.vector_store %arg9[%c0_134, %c0_135, %c0_136], %227 {strides = array<i32>} : memref<1x16x32xf32, #tpu.memory_space<vmem>>, vector<1x16x32xf32>,
    return
  }
  func.func @transform_0(%arg0: i32) -> (i32, i32, i32) {
    %c0_i32 = arith.constant 0 : i32
    %c0_i32_0 = arith.constant 0 : i32
    %c0_i32_1 = arith.constant 0 : i32
    return %arg0, %c0_i32, %c0_i32_0 : i32, i32, i32
  }
  func.func @transform_1(%arg0: i32) -> (i32, i32, i32) {
    %c0_i32 = arith.constant 0 : i32
    %c0_i32_0 = arith.constant 0 : i32
    %c0_i32_1 = arith.constant 0 : i32
    return %arg0, %c0_i32, %c0_i32_0 : i32, i32, i32
  }
  func.func @transform_2(%arg0: i32) -> (i32, i32) {
    %c0_i32 = arith.constant 0 : i32
    %c0_i32_0 = arith.constant 0 : i32
    %c0_i32_1 = arith.constant 0 : i32
    return %c0_i32, %c0_i32_0 : i32, i32
  }
  func.func @transform_3(%arg0: i32) -> (i32, i32) {
    %c0_i32 = arith.constant 0 : i32
    %c0_i32_0 = arith.constant 0 : i32
    %c0_i32_1 = arith.constant 0 : i32
    return %c0_i32, %c0_i32_0 : i32, i32
  }
  func.func @transform_4(%arg0: i32) -> (i32, i32) {
    %c0_i32 = arith.constant 0 : i32
    %c0_i32_0 = arith.constant 0 : i32
    %c0_i32_1 = arith.constant 0 : i32
    return %c0_i32, %c0_i32_0 : i32, i32
  }
  func.func @transform_5(%arg0: i32) -> (i32, i32, i32) {
    %c0_i32 = arith.constant 0 : i32
    %c0_i32_0 = arith.constant 0 : i32
    %c0_i32_1 = arith.constant 0 : i32
    %c0_i32_2 = arith.constant 0 : i32
    return %c0_i32, %c0_i32_0, %c0_i32_1 : i32, i32, i32
  }
  func.func @transform_6(%arg0: i32) -> (i32, i32, i32) {
    %c0_i32 = arith.constant 0 : i32
    %c0_i32_0 = arith.constant 0 : i32
    %c0_i32_1 = arith.constant 0 : i32
    %c0_i32_2 = arith.constant 0 : i32
    return %c0_i32, %c0_i32_0, %c0_i32_1 : i32, i32, i32
  }
  func.func @transform_7(%arg0: i32) -> (i32, i32, i32) {
    %c0_i32 = arith.constant 0 : i32
    %c0_i32_0 = arith.constant 0 : i32
    %c0_i32_1 = arith.constant 0 : i32
    %c0_i32_2 = arith.constant 0 : i32
    return %c0_i32, %c0_i32_0, %c0_i32_1 : i32, i32, i32
  }
  func.func @transform_8(%arg0: i32) -> (i32, i32, i32) {
    %c0_i32 = arith.constant 0 : i32
    %c0_i32_0 = arith.constant 0 : i32
    %c0_i32_1 = arith.constant 0 : i32
    return %arg0, %c0_i32, %c0_i32_0 : i32, i32, i32
  }
}

</mosaic_0001>

<llo_original>
// kernel: tpu_custom_call.1
$region0: #{tpu_custom_call.1}
  #allocation0 [shape = 'u32[]', space=smem, size = 0x4, offset = 0x4, fixed_abs, tag = 'smem constant byte address 0x4 - core index']
  #allocation1 [shape = 'u32[72,128]{1,0:T(1,128)}', space=vmem, size = 0x9000, scoped, tag = 'internal scratch']
  #allocation2 [shape = 'f32[800,32]{1,0:T(8,128)}', space=vmem, size = 0x64000, scoped, tag = 'scratch operand']
  %s0 = inlined_call_operand.vmem [shape: f32[2,800,5], index: 0, kind: input, shape index: {}]
  %s1 = inlined_call_operand.vmem [shape: f32[2,800,5], index: 1, kind: input, shape index: {}]
  %s2 = inlined_call_operand.vmem [shape: bf16[10,32], index: 2, kind: input, shape index: {}]
  %s3 = inlined_call_operand.vmem [shape: f32[1,32], index: 3, kind: input, shape index: {}]
  %s4 = inlined_call_operand.vmem [shape: f32[1,32], index: 4, kind: input, shape index: {}]
  %s5 = inlined_call_operand.vmem [shape: bf16[4,64,32], index: 5, kind: input, shape index: {}]
  %s6 = inlined_call_operand.vmem [shape: bf16[4,32,32], index: 6, kind: input, shape index: {}]
  %s7 = inlined_call_operand.vmem [shape: bf16[2,64,32], index: 7, kind: input, shape index: {}]
  %s8 = inlined_call_operand.hbm [shape: f32[2,16,32], index: 8, kind: output, shape index: {}]
  %s9 = sld [smem:[#allocation0]]
  $region65: #{tpu_custom_call.1} parent=0
    _
  %s11 = ssub.s32 1, %s9
  %s12 = scalar_select 0, %s11, %s9
  $region1: #{tpu_custom_call.1} parent=0
    #allocation3 [shape = 'u8[16384]{0}', space=vmem, size = 0x4000, scoped, tag = 'output window, operand 0']
    #allocation4 [shape = 's32[2]{0}', space=sflag, size = 0x8, scoped, tag = 'scoped memory for tpu_custom_call.1']
    %13 = vsyncpa [#allocation4], 0
    %s14 = scalar_lea.sflag [#allocation4], 1
    %15 = vsyncpa %s14, 0
    loop: start=0, step=1, limit=4
    $region2: #{tpu_custom_call.1} parent=1 // loop_pre_header
      _
    $region3: #{tpu_custom_call.1} parent=1 // loop_header
      %s17 = sphi 0, %s21
      %p18 = scmp.ge.s32.totalorder %s17, 4
      %s27 = sphi 0, %s29
      %s30 = sphi 0, %s27
      %s31 = sphi 0, %s30
      %s47 = sphi 0, %s31
      %s53 = sphi 0, %s55
      %s56 = sphi 0, %s53
      %s57 = sphi 0, %s56
      %s73 = sphi 0, %s57
      %s77 = sphi 0, %s77
      %s79 = sphi 0, %s77
      %s80 = sphi 0, %s79
      %s94 = sphi 0, %s80
      %s98 = sphi 0, %s98
      %s100 = sphi 0, %s98
      %s101 = sphi 0, %s100
      %s115 = sphi 0, %s101
      %s119 = sphi 0, %s119
      %s121 = sphi 0, %s119
      %s122 = sphi 0, %s121
      %s136 = sphi 0, %s122
      %s140 = sphi 0, %s140
      %s142 = sphi 0, %s140
      %s143 = sphi 0, %s142
      %s157 = sphi 0, %s143
      %s161 = sphi 0, %s161
      %s163 = sphi 0, %s161
      %s164 = sphi 0, %s163
      %s178 = sphi 0, %s164
      %s182 = sphi 0, %s182
      %s184 = sphi 0, %s182
      %s185 = sphi 0, %s184
      %s199 = sphi 0, %s185
      %s205 = sphi 0, %s207
      %s208 = sphi 0, %s205
      %s209 = sphi 0, %s208
      %s225 = sphi 0, %s209
    $region4: #{tpu_custom_call.1} parent=1 // loop_header_branch
      %20 = sbr.rel (%p18) target = $region8
    $region5: #{tpu_custom_call.1} parent=1 // loop_body
      %s22 = ssub.s32 %s17, 1
      %s23 = ssub.s32 %s17, 2
      %s24 = sadd.s32 %s17, 1
      %s25 = ssub.s32 %s17, %s24
      %p26 = scmp.eq.s32.totalorder %s25, 0
      %s28 = sadd.s32 %s27, 1
      %s29 = scalar_select %p26, %s27, %s28
      %p32 = pneg %p26
      %p33 = scmp.eq.s32.totalorder %s17, 1
      %p34 = por %p32, %p33
      %p35 = scmp.ne.s32.totalorder %s27, %s30
      %p36 = scmp.eq.s32.totalorder %s17, 0
      %p37 = por %p35, %p36
      %p38 = scmp.ne.s32.totalorder %s27, %s30
      %p39 = scmp.eq.s32.totalorder %s22, 1
      %p40 = por %p38, %p39
      %p41 = scmp.ne.s32.totalorder %s30, %s31
      %p42 = scmp.eq.s32.totalorder %s22, 0
      %p43 = por %p41, %p42
      %p44 = scmp.ne.s32.totalorder %s30, %s31
      %p45 = scmp.eq.s32.totalorder %s23, 1
      %p46 = por %p44, %p45
      %p48 = scmp.ne.s32.totalorder %s31, %s47
      %p49 = scmp.eq.s32.totalorder %s23, 0
      %p50 = por %p48, %p49
      %s51 = ssub.s32 %s17, %s24
      %p52 = scmp.eq.s32.totalorder %s51, 0
      %s54 = sadd.s32 %s53, 1
      %s55 = scalar_select %p52, %s53, %s54
      %p58 = pneg %p52
      %p59 = scmp.eq.s32.totalorder %s17, 1
      %p60 = por %p58, %p59
      %p61 = scmp.ne.s32.totalorder %s53, %s56
      %p62 = scmp.eq.s32.totalorder %s17, 0
      %p63 = por %p61, %p62
      %p64 = scmp.ne.s32.totalorder %s53, %s56
      %p65 = scmp.eq.s32.totalorder %s22, 1
      %p66 = por %p64, %p65
      %p67 = scmp.ne.s32.totalorder %s56, %s57
      %p68 = scmp.eq.s32.totalorder %s22, 0
      %p69 = por %p67, %p68
      %p70 = scmp.ne.s32.totalorder %s56, %s57
      %p71 = scmp.eq.s32.totalorder %s23, 1
      %p72 = por %p70, %p71
      %p74 = scmp.ne.s32.totalorder %s57, %s73
      %p75 = scmp.eq.s32.totalorder %s23, 0
      %p76 = por %p74, %p75
      %s78 = sadd.s32 %s77, 1
      %p81 = scmp.eq.s32.totalorder %s17, 1
      %p82 = scmp.ne.s32.totalorder %s77, %s79
      %p83 = scmp.eq.s32.totalorder %s17, 0
      %p84 = por %p82, %p83
      %p85 = scmp.ne.s32.totalorder %s77, %s79
      %p86 = scmp.eq.s32.totalorder %s22, 1
      %p87 = por %p85, %p86
      %p88 = scmp.ne.s32.totalorder %s79, %s80
      %p89 = scmp.eq.s32.totalorder %s22, 0
      %p90 = por %p88, %p89
      %p91 = scmp.ne.s32.totalorder %s79, %s80
      %p92 = scmp.eq.s32.totalorder %s23, 1
      %p93 = por %p91, %p92
      %p95 = scmp.ne.s32.totalorder %s80, %s94
      %p96 = scmp.eq.s32.totalorder %s23, 0
      %p97 = por %p95, %p96
      %s99 = sadd.s32 %s98, 1
      %p102 = scmp.eq.s32.totalorder %s17, 1
      %p103 = scmp.ne.s32.totalorder %s98, %s100
      %p104 = scmp.eq.s32.totalorder %s17, 0
      %p105 = por %p103, %p104
      %p106 = scmp.ne.s32.totalorder %s98, %s100
      %p107 = scmp.eq.s32.totalorder %s22, 1
      %p108 = por %p106, %p107
      %p109 = scmp.ne.s32.totalorder %s100, %s101
      %p110 = scmp.eq.s32.totalorder %s22, 0
      %p111 = por %p109, %p110
      %p112 = scmp.ne.s32.totalorder %s100, %s101
      %p113 = scmp.eq.s32.totalorder %s23, 1
      %p114 = por %p112, %p113
      %p116 = scmp.ne.s32.totalorder %s101, %s115
      %p117 = scmp.eq.s32.totalorder %s23, 0
      %p118 = por %p116, %p117
      %s120 = sadd.s32 %s119, 1
      %p123 = scmp.eq.s32.totalorder %s17, 1
      %p124 = scmp.ne.s32.totalorder %s119, %s121
      %p125 = scmp.eq.s32.totalorder %s17, 0
      %p126 = por %p124, %p125
      %p127 = scmp.ne.s32.totalorder %s119, %s121
      %p128 = scmp.eq.s32.totalorder %s22, 1
      %p129 = por %p127, %p128
      %p130 = scmp.ne.s32.totalorder %s121, %s122
      %p131 = scmp.eq.s32.totalorder %s22, 0
      %p132 = por %p130, %p131
      %p133 = scmp.ne.s32.totalorder %s121, %s122
      %p134 = scmp.eq.s32.totalorder %s23, 1
      %p135 = por %p133, %p134
      %p137 = scmp.ne.s32.totalorder %s122, %s136
      %p138 = scmp.eq.s32.totalorder %s23, 0
      %p139 = por %p137, %p138
      %s141 = sadd.s32 %s140, 1
      %p144 = scmp.eq.s32.totalorder %s17, 1
      %p145 = scmp.ne.s32.totalorder %s140, %s142
      %p146 = scmp.eq.s32.totalorder %s17, 0
      %p147 = por %p145, %p146
      %p148 = scmp.ne.s32.totalorder %s140, %s142
      %p149 = scmp.eq.s32.totalorder %s22, 1
      %p150 = por %p148, %p149
      %p151 = scmp.ne.s32.totalorder %s142, %s143
      %p152 = scmp.eq.s32.totalorder %s22, 0
      %p153 = por %p151, %p152
      %p154 = scmp.ne.s32.totalorder %s142, %s143
      %p155 = scmp.eq.s32.totalorder %s23, 1
      %p156 = por %p154, %p155
      %p158 = scmp.ne.s32.totalorder %s143, %s157
      %p159 = scmp.eq.s32.totalorder %s23, 0
      %p160 = por %p158, %p159
      %s162 = sadd.s32 %s161, 1
      %p165 = scmp.eq.s32.totalorder %s17, 1
      %p166 = scmp.ne.s32.totalorder %s161, %s163
      %p167 = scmp.eq.s32.totalorder %s17, 0
      %p168 = por %p166, %p167
      %p169 = scmp.ne.s32.totalorder %s161, %s163
      %p170 = scmp.eq.s32.totalorder %s22, 1
      %p171 = por %p169, %p170
      %p172 = scmp.ne.s32.totalorder %s163, %s164
      %p173 = scmp.eq.s32.totalorder %s22, 0
      %p174 = por %p172, %p173
      %p175 = scmp.ne.s32.totalorder %s163, %s164
      %p176 = scmp.eq.s32.totalorder %s23, 1
      %p177 = por %p175, %p176
      %p179 = scmp.ne.s32.totalorder %s164, %s178
      %p180 = scmp.eq.s32.totalorder %s23, 0
      %p181 = por %p179, %p180
      %s183 = sadd.s32 %s182, 1
      %p186 = scmp.eq.s32.totalorder %s17, 1
      %p187 = scmp.ne.s32.totalorder %s182, %s184
      %p188 = scmp.eq.s32.totalorder %s17, 0
      %p189 = por %p187, %p188
      %p190 = scmp.ne.s32.totalorder %s182, %s184
      %p191 = scmp.eq.s32.totalorder %s22, 1
      %p192 = por %p190, %p191
      %p193 = scmp.ne.s32.totalorder %s184, %s185
      %p194 = scmp.eq.s32.totalorder %s22, 0
      %p195 = por %p193, %p194
      %p196 = scmp.ne.s32.totalorder %s184, %s185
      %p197 = scmp.eq.s32.totalorder %s23, 1
      %p198 = por %p196, %p197
      %p200 = scmp.ne.s32.totalorder %s185, %s199
      %p201 = scmp.eq.s32.totalorder %s23, 0
      %p202 = por %p200, %p201
      %s203 = ssub.s32 %s17, %s24
      %p204 = scmp.eq.s32.totalorder %s203, 0
      %s206 = sadd.s32 %s205, 1
      %s207 = scalar_select %p204, %s205, %s206
      %p210 = pneg %p204
      %p211 = scmp.eq.s32.totalorder %s17, 1
      %p212 = por %p210, %p211
      %p213 = scmp.ne.s32.totalorder %s205, %s208
      %p214 = scmp.eq.s32.totalorder %s17, 0
      %p215 = por %p213, %p214
      %p216 = scmp.ne.s32.totalorder %s205, %s208
      %p217 = scmp.eq.s32.totalorder %s22, 1
      %p218 = por %p216, %p217
      %p219 = scmp.ne.s32.totalorder %s208, %s209
      %p220 = scmp.eq.s32.totalorder %s22, 0
      %p221 = por %p219, %p220
      %p222 = scmp.ne.s32.totalorder %s208, %s209
      %p223 = scmp.eq.s32.totalorder %s23, 1
      %p224 = por %p222, %p223
      %p226 = scmp.ne.s32.totalorder %s209, %s225
      %p227 = scmp.eq.s32.totalorder %s23, 0
      %p228 = por %p226, %p227
      %p229 = scmp.le.s32.totalorder 1, %s17
      %p230 = scmp.lt.s32.totalorder %s17, 3
      %p231 = pnand %p229, %p230
      %p232 = pneg %p231
      // Predicated region
      $region9: #{tpu_custom_call.1} parent=5 // pred_check
        _
      $region10: #{tpu_custom_call.1} parent=5 // pred_check_branch
        %234 = sbr.rel (%p231) target = $region12
      $region11: #{tpu_custom_call.1} parent=5 // pred_region
        %s235 = ssub.s32 %s17, 1
        // Predicated region
        $region13: #{tpu_custom_call.1} parent=11 // pred_check
          %p236 = pneg %p90
        $region14: #{tpu_custom_call.1} parent=11 // pred_check_branch
          %238 = sbr.rel (%p236) target = $region16
        $region15: #{tpu_custom_call.1} parent=11 // pred_region
          _
        $region16: #{tpu_custom_call.1} parent=11 // pred_fallthru
          _
        // Predicated region
        $region17: #{tpu_custom_call.1} parent=11 // pred_check
          %p239 = pneg %p111
        $region18: #{tpu_custom_call.1} parent=11 // pred_check_branch
          %241 = sbr.rel (%p239) target = $region20
        $region19: #{tpu_custom_call.1} parent=11 // pred_region
          _
        $region20: #{tpu_custom_call.1} parent=11 // pred_fallthru
          _
        // Predicated region
        $region21: #{tpu_custom_call.1} parent=11 // pred_check
          %p242 = pneg %p132
        $region22: #{tpu_custom_call.1} parent=11 // pred_check_branch
          %244 = sbr.rel (%p242) target = $region24
        $region23: #{tpu_custom_call.1} parent=11 // pred_region
          _
        $region24: #{tpu_custom_call.1} parent=11 // pred_fallthru
          _
        // Predicated region
        $region25: #{tpu_custom_call.1} parent=11 // pred_check
          %p245 = pneg %p153
        $region26: #{tpu_custom_call.1} parent=11 // pred_check_branch
          %247 = sbr.rel (%p245) target = $region28
        $region27: #{tpu_custom_call.1} parent=11 // pred_region
          _
        $region28: #{tpu_custom_call.1} parent=11 // pred_fallthru
          _
        // Predicated region
        $region29: #{tpu_custom_call.1} parent=11 // pred_check
          %p248 = pneg %p174
        $region30: #{tpu_custom_call.1} parent=11 // pred_check_branch
          %250 = sbr.rel (%p248) target = $region32
        $region31: #{tpu_custom_call.1} parent=11 // pred_region
          _
        $region32: #{tpu_custom_call.1} parent=11 // pred_fallthru
          _
        // Predicated region
        $region33: #{tpu_custom_call.1} parent=11 // pred_check
          %p251 = pneg %p195
        $region34: #{tpu_custom_call.1} parent=11 // pred_check_branch
          %253 = sbr.rel (%p251) target = $region36
        $region35: #{tpu_custom_call.1} parent=11 // pred_region
          _
        $region36: #{tpu_custom_call.1} parent=11 // pred_fallthru
          _
      $region12: #{tpu_custom_call.1} parent=5 // pred_fallthru
        _
      %p254 = scmp.lt.s32.totalorder %s17, 2
      // Predicated region
      $region37: #{tpu_custom_call.1} parent=5 // pred_check
        %p255 = pneg %p254
      $region38: #{tpu_custom_call.1} parent=5 // pred_check_branch
        %257 = sbr.rel (%p255) target = $region40
      $region39: #{tpu_custom_call.1} parent=5 // pred_region
        // Predicated region
        $region41: #{tpu_custom_call.1} parent=39 // pred_check
          %p258 = pneg %p37
        $region42: #{tpu_custom_call.1} parent=39 // pred_check_branch
          %260 = sbr.rel (%p258) target = $region44
        $region43: #{tpu_custom_call.1} parent=39 // pred_region
          %p261 = scmp.lt.s32.totalorder %s17, 1
          %s262 = scalar_select %p261, %s17, 1
          %s263 = smul.addr %s262, 100
          %s264 = smul.addr %s263, 8
          %s265 = scalar_lea.vmem %s0, %s264
        $region44: #{tpu_custom_call.1} parent=39 // pred_fallthru
          _
        // Predicated region
        $region45: #{tpu_custom_call.1} parent=39 // pred_check
          %p266 = pneg %p63
        $region46: #{tpu_custom_call.1} parent=39 // pred_check_branch
          %268 = sbr.rel (%p266) target = $region48
        $region47: #{tpu_custom_call.1} parent=39 // pred_region
          %p269 = scmp.lt.s32.totalorder %s17, 1
          %s270 = scalar_select %p269, %s17, 1
          %s271 = smul.addr %s270, 100
          %s272 = smul.addr %s271, 8
          %s273 = scalar_lea.vmem %s1, %s272
        $region48: #{tpu_custom_call.1} parent=39 // pred_fallthru
          _
      $region40: #{tpu_custom_call.1} parent=5 // pred_fallthru
        _
      %p274 = scmp.le.s32.totalorder 1, %s17
      %p275 = scmp.lt.s32.totalorder %s17, 3
      %p276 = pnand %p274, %p275
      %p277 = pneg %p276
      // Predicated region
      $region49: #{tpu_custom_call.1} parent=5 // pred_check
        _
      $region50: #{tpu_custom_call.1} parent=5 // pred_check_branch
        %279 = sbr.rel (%p276) target = $region52
      $region51: #{tpu_custom_call.1} parent=5 // pred_region
        %s280 = ssub.s32 %s17, 1
        %p281 = scmp.lt.s32.totalorder %s22, 1
        %s282 = scalar_select %p281, %s22, 1
        %s283 = smul.addr %s282, 100
        %s284 = smul.addr %s283, 8
        %s285 = scalar_lea.vmem %s0, %s284
        %p286 = pneg %p43
        %p287 = pneg %p40
        %p288 = scmp.lt.s32.totalorder %s22, 1
        %s289 = scalar_select %p288, %s22, 1
        %s290 = smul.addr %s289, 100
        %s291 = smul.addr %s290, 8
        %s292 = scalar_lea.vmem %s1, %s291
        %p293 = pneg %p69
        %p294 = pneg %p66
        %p295 = pneg %p90
        %p296 = pneg %p87
        %p297 = pneg %p111
        %p298 = pneg %p108
        %p299 = pneg %p132
        %p300 = pneg %p129
        %p301 = pneg %p153
        %p302 = pneg %p150
        %p303 = pneg %p174
        %p304 = pneg %p171
        %p305 = pneg %p195
        %p306 = pneg %p192
        %p307 = pneg %p221
        %p308 = pneg %p218
        %s309 = sand.u32 %s208, 1
        %s310 = scalar_lea.sflag [#allocation4], %s309
        %s311 = sand.u32 %s208, 1
        %s312 = smul.addr %s311, 16
        %s313 = scalar_lea.vmem [#allocation3], %s312
        %p314 = scmp.lt.s32.totalorder %s22, 1
        %s315 = scalar_select %p314, %s22, 1
        %s316 = smul.addr %s315, 100
        %s317 = smul.addr %s316, 8
        %s318 = scalar_lea.vmem %s0, %s317
        %p319 = scmp.lt.s32.totalorder %s22, 1
        %s320 = scalar_select %p319, %s22, 1
        %s321 = smul.addr %s320, 100
        %s322 = smul.addr %s321, 8
        %s323 = scalar_lea.vmem %s1, %s322
        %v325 = vld [vmem:[%s318] sm:$0xff]
        %v326 = vld [vmem:[%s318 + $0x8] sm:$0xff]
        %v327 = vld [vmem:[%s318 + $0x10] sm:$0xff]
        %v328 = vld [vmem:[%s318 + $0x18] sm:$0xff]
        %v329 = vld [vmem:[%s318 + $0x20] sm:$0xff]
        %v330 = vld [vmem:[%s318 + $0x28] sm:$0xff]
        %v331 = vld [vmem:[%s318 + $0x30] sm:$0xff]
        %v332 = vld [vmem:[%s318 + $0x38] sm:$0xff]
        %v333 = vld [vmem:[%s318 + $0x40] sm:$0xff]
        %v334 = vld [vmem:[%s318 + $0x48] sm:$0xff]
        %v335 = vld [vmem:[%s318 + $0x50] sm:$0xff]
        %v336 = vld [vmem:[%s318 + $0x58] sm:$0xff]
        %v337 = vld [vmem:[%s318 + $0x60] sm:$0xff]
        %v338 = vld [vmem:[%s318 + $0x68] sm:$0xff]
        %v339 = vld [vmem:[%s318 + $0x70] sm:$0xff]
        %v340 = vld [vmem:[%s318 + $0x78] sm:$0xff]
        %v341 = vld [vmem:[%s318 + $0x80] sm:$0xff]
        %v342 = vld [vmem:[%s318 + $0x88] sm:$0xff]
        %v343 = vld [vmem:[%s318 + $0x90] sm:$0xff]
        %v344 = vld [vmem:[%s318 + $0x98] sm:$0xff]
        %v345 = vld [vmem:[%s318 + $0xa0] sm:$0xff]
        %v346 = vld [vmem:[%s318 + $0xa8] sm:$0xff]
        %v347 = vld [vmem:[%s318 + $0xb0] sm:$0xff]
        %v348 = vld [vmem:[%s318 + $0xb8] sm:$0xff]
        %v349 = vld [vmem:[%s318 + $0xc0] sm:$0xff]
        %v350 = vld [vmem:[%s318 + $0xc8] sm:$0xff]
        %v351 = vld [vmem:[%s318 + $0xd0] sm:$0xff]
        %v352 = vld [vmem:[%s318 + $0xd8] sm:$0xff]
        %v353 = vld [vmem:[%s318 + $0xe0] sm:$0xff]
        %v354 = vld [vmem:[%s318 + $0xe8] sm:$0xff]
        %v355 = vld [vmem:[%s318 + $0xf0] sm:$0xff]
        %v356 = vld [vmem:[%s318 + $0xf8] sm:$0xff]
        %v357 = vld [vmem:[%s318 + $0x100] sm:$0xff]
        %v358 = vld [vmem:[%s318 + $0x108] sm:$0xff]
        %v359 = vld [vmem:[%s318 + $0x110] sm:$0xff]
        %v360 = vld [vmem:[%s318 + $0x118] sm:$0xff]
        %v361 = vld [vmem:[%s318 + $0x120] sm:$0xff]
        %v362 = vld [vmem:[%s318 + $0x128] sm:$0xff]
        %v363 = vld [vmem:[%s318 + $0x130] sm:$0xff]
        %v364 = vld [vmem:[%s318 + $0x138] sm:$0xff]
        %v365 = vld [vmem:[%s318 + $0x140] sm:$0xff]
        %v366 = vld [vmem:[%s318 + $0x148] sm:$0xff]
        %v367 = vld [vmem:[%s318 + $0x150] sm:$0xff]
        %v368 = vld [vmem:[%s318 + $0x158] sm:$0xff]
        %v369 = vld [vmem:[%s318 + $0x160] sm:$0xff]
        %v370 = vld [vmem:[%s318 + $0x168] sm:$0xff]
        %v371 = vld [vmem:[%s318 + $0x170] sm:$0xff]
        %v372 = vld [vmem:[%s318 + $0x178] sm:$0xff]
        %v373 = vld [vmem:[%s318 + $0x180] sm:$0xff]
        %v374 = vld [vmem:[%s318 + $0x188] sm:$0xff]
        %v375 = vld [vmem:[%s318 + $0x190] sm:$0xff]
        %v376 = vld [vmem:[%s318 + $0x198] sm:$0xff]
        %v377 = vld [vmem:[%s318 + $0x1a0] sm:$0xff]
        %v378 = vld [vmem:[%s318 + $0x1a8] sm:$0xff]
        %v379 = vld [vmem:[%s318 + $0x1b0] sm:$0xff]
        %v380 = vld [vmem:[%s318 + $0x1b8] sm:$0xff]
        %v381 = vld [vmem:[%s318 + $0x1c0] sm:$0xff]
        %v382 = vld [vmem:[%s318 + $0x1c8] sm:$0xff]
        %v383 = vld [vmem:[%s318 + $0x1d0] sm:$0xff]
        %v384 = vld [vmem:[%s318 + $0x1d8] sm:$0xff]
        %v385 = vld [vmem:[%s318 + $0x1e0] sm:$0xff]
        %v386 = vld [vmem:[%s318 + $0x1e8] sm:$0xff]
        %v387 = vld [vmem:[%s318 + $0x1f0] sm:$0xff]
        %v388 = vld [vmem:[%s318 + $0x1f8] sm:$0xff]
        %v389 = vld [vmem:[%s318 + $0x200] sm:$0xff]
        %v390 = vld [vmem:[%s318 + $0x208] sm:$0xff]
        %v391 = vld [vmem:[%s318 + $0x210] sm:$0xff]
        %v392 = vld [vmem:[%s318 + $0x218] sm:$0xff]
        %v393 = vld [vmem:[%s318 + $0x220] sm:$0xff]
        %v394 = vld [vmem:[%s318 + $0x228] sm:$0xff]
        %v395 = vld [vmem:[%s318 + $0x230] sm:$0xff]
        %v396 = vld [vmem:[%s318 + $0x238] sm:$0xff]
        %v397 = vld [vmem:[%s318 + $0x240] sm:$0xff]
        %v398 = vld [vmem:[%s318 + $0x248] sm:$0xff]
        %v399 = vld [vmem:[%s318 + $0x250] sm:$0xff]
        %v400 = vld [vmem:[%s318 + $0x258] sm:$0xff]
        %v401 = vld [vmem:[%s318 + $0x260] sm:$0xff]
        %v402 = vld [vmem:[%s318 + $0x268] sm:$0xff]
        %v403 = vld [vmem:[%s318 + $0x270] sm:$0xff]
        %v404 = vld [vmem:[%s318 + $0x278] sm:$0xff]
        %v405 = vld [vmem:[%s318 + $0x280] sm:$0xff]
        %v406 = vld [vmem:[%s318 + $0x288] sm:$0xff]
        %v407 = vld [vmem:[%s318 + $0x290] sm:$0xff]
        %v408 = vld [vmem:[%s318 + $0x298] sm:$0xff]
        %v409 = vld [vmem:[%s318 + $0x2a0] sm:$0xff]
        %v410 = vld [vmem:[%s318 + $0x2a8] sm:$0xff]
        %v411 = vld [vmem:[%s318 + $0x2b0] sm:$0xff]
        %v412 = vld [vmem:[%s318 + $0x2b8] sm:$0xff]
        %v413 = vld [vmem:[%s318 + $0x2c0] sm:$0xff]
        %v414 = vld [vmem:[%s318 + $0x2c8] sm:$0xff]
        %v415 = vld [vmem:[%s318 + $0x2d0] sm:$0xff]
        %v416 = vld [vmem:[%s318 + $0x2d8] sm:$0xff]
        %v417 = vld [vmem:[%s318 + $0x2e0] sm:$0xff]
        %v418 = vld [vmem:[%s318 + $0x2e8] sm:$0xff]
        %v419 = vld [vmem:[%s318 + $0x2f0] sm:$0xff]
        %v420 = vld [vmem:[%s318 + $0x2f8] sm:$0xff]
        %v421 = vld [vmem:[%s318 + $0x300] sm:$0xff]
        %v422 = vld [vmem:[%s318 + $0x308] sm:$0xff]
        %v423 = vld [vmem:[%s318 + $0x310] sm:$0xff]
        %v424 = vld [vmem:[%s318 + $0x318] sm:$0xff]
        %v425 = vld [vmem:[%s323] sm:$0xff]
        %v426 = vld [vmem:[%s323 + $0x8] sm:$0xff]
        %v427 = vld [vmem:[%s323 + $0x10] sm:$0xff]
        %v428 = vld [vmem:[%s323 + $0x18] sm:$0xff]
        %v429 = vld [vmem:[%s323 + $0x20] sm:$0xff]
        %v430 = vld [vmem:[%s323 + $0x28] sm:$0xff]
        %v431 = vld [vmem:[%s323 + $0x30] sm:$0xff]
        %v432 = vld [vmem:[%s323 + $0x38] sm:$0xff]
        %v433 = vld [vmem:[%s323 + $0x40] sm:$0xff]
        %v434 = vld [vmem:[%s323 + $0x48] sm:$0xff]
        %v435 = vld [vmem:[%s323 + $0x50] sm:$0xff]
        %v436 = vld [vmem:[%s323 + $0x58] sm:$0xff]
        %v437 = vld [vmem:[%s323 + $0x60] sm:$0xff]
        %v438 = vld [vmem:[%s323 + $0x68] sm:$0xff]
        %v439 = vld [vmem:[%s323 + $0x70] sm:$0xff]
        %v440 = vld [vmem:[%s323 + $0x78] sm:$0xff]
        %v441 = vld [vmem:[%s323 + $0x80] sm:$0xff]
        %v442 = vld [vmem:[%s323 + $0x88] sm:$0xff]
        %v443 = vld [vmem:[%s323 + $0x90] sm:$0xff]
        %v444 = vld [vmem:[%s323 + $0x98] sm:$0xff]
        %v445 = vld [vmem:[%s323 + $0xa0] sm:$0xff]
        %v446 = vld [vmem:[%s323 + $0xa8] sm:$0xff]
        %v447 = vld [vmem:[%s323 + $0xb0] sm:$0xff]
        %v448 = vld [vmem:[%s323 + $0xb8] sm:$0xff]
        %v449 = vld [vmem:[%s323 + $0xc0] sm:$0xff]
        %v450 = vld [vmem:[%s323 + $0xc8] sm:$0xff]
        %v451 = vld [vmem:[%s323 + $0xd0] sm:$0xff]
        %v452 = vld [vmem:[%s323 + $0xd8] sm:$0xff]
        %v453 = vld [vmem:[%s323 + $0xe0] sm:$0xff]
        %v454 = vld [vmem:[%s323 + $0xe8] sm:$0xff]
        %v455 = vld [vmem:[%s323 + $0xf0] sm:$0xff]
        %v456 = vld [vmem:[%s323 + $0xf8] sm:$0xff]
        %v457 = vld [vmem:[%s323 + $0x100] sm:$0xff]
        %v458 = vld [vmem:[%s323 + $0x108] sm:$0xff]
        %v459 = vld [vmem:[%s323 + $0x110] sm:$0xff]
        %v460 = vld [vmem:[%s323 + $0x118] sm:$0xff]
        %v461 = vld [vmem:[%s323 + $0x120] sm:$0xff]
        %v462 = vld [vmem:[%s323 + $0x128] sm:$0xff]
        %v463 = vld [vmem:[%s323 + $0x130] sm:$0xff]
        %v464 = vld [vmem:[%s323 + $0x138] sm:$0xff]
        %v465 = vld [vmem:[%s323 + $0x140] sm:$0xff]
        %v466 = vld [vmem:[%s323 + $0x148] sm:$0xff]
        %v467 = vld [vmem:[%s323 + $0x150] sm:$0xff]
        %v468 = vld [vmem:[%s323 + $0x158] sm:$0xff]
        %v469 = vld [vmem:[%s323 + $0x160] sm:$0xff]
        %v470 = vld [vmem:[%s323 + $0x168] sm:$0xff]
        %v471 = vld [vmem:[%s323 + $0x170] sm:$0xff]
        %v472 = vld [vmem:[%s323 + $0x178] sm:$0xff]
        %v473 = vld [vmem:[%s323 + $0x180] sm:$0xff]
        %v474 = vld [vmem:[%s323 + $0x188] sm:$0xff]
        %v475 = vld [vmem:[%s323 + $0x190] sm:$0xff]
        %v476 = vld [vmem:[%s323 + $0x198] sm:$0xff]
        %v477 = vld [vmem:[%s323 + $0x1a0] sm:$0xff]
        %v478 = vld [vmem:[%s323 + $0x1a8] sm:$0xff]
        %v479 = vld [vmem:[%s323 + $0x1b0] sm:$0xff]
        %v480 = vld [vmem:[%s323 + $0x1b8] sm:$0xff]
        %v481 = vld [vmem:[%s323 + $0x1c0] sm:$0xff]
        %v482 = vld [vmem:[%s323 + $0x1c8] sm:$0xff]
        %v483 = vld [vmem:[%s323 + $0x1d0] sm:$0xff]
        %v484 = vld [vmem:[%s323 + $0x1d8] sm:$0xff]
        %v485 = vld [vmem:[%s323 + $0x1e0] sm:$0xff]
        %v486 = vld [vmem:[%s323 + $0x1e8] sm:$0xff]
        %v487 = vld [vmem:[%s323 + $0x1f0] sm:$0xff]
        %v488 = vld [vmem:[%s323 + $0x1f8] sm:$0xff]
        %v489 = vld [vmem:[%s323 + $0x200] sm:$0xff]
        %v490 = vld [vmem:[%s323 + $0x208] sm:$0xff]
        %v491 = vld [vmem:[%s323 + $0x210] sm:$0xff]
        %v492 = vld [vmem:[%s323 + $0x218] sm:$0xff]
        %v493 = vld [vmem:[%s323 + $0x220] sm:$0xff]
        %v494 = vld [vmem:[%s323 + $0x228] sm:$0xff]
        %v495 = vld [vmem:[%s323 + $0x230] sm:$0xff]
        %v496 = vld [vmem:[%s323 + $0x238] sm:$0xff]
        %v497 = vld [vmem:[%s323 + $0x240] sm:$0xff]
        %v498 = vld [vmem:[%s323 + $0x248] sm:$0xff]
        %v499 = vld [vmem:[%s323 + $0x250] sm:$0xff]
        %v500 = vld [vmem:[%s323 + $0x258] sm:$0xff]
        %v501 = vld [vmem:[%s323 + $0x260] sm:$0xff]
        %v502 = vld [vmem:[%s323 + $0x268] sm:$0xff]
        %v503 = vld [vmem:[%s323 + $0x270] sm:$0xff]
        %v504 = vld [vmem:[%s323 + $0x278] sm:$0xff]
        %v505 = vld [vmem:[%s323 + $0x280] sm:$0xff]
        %v506 = vld [vmem:[%s323 + $0x288] sm:$0xff]
        %v507 = vld [vmem:[%s323 + $0x290] sm:$0xff]
        %v508 = vld [vmem:[%s323 + $0x298] sm:$0xff]
        %v509 = vld [vmem:[%s323 + $0x2a0] sm:$0xff]
        %v510 = vld [vmem:[%s323 + $0x2a8] sm:$0xff]
        %v511 = vld [vmem:[%s323 + $0x2b0] sm:$0xff]
        %v512 = vld [vmem:[%s323 + $0x2b8] sm:$0xff]
        %v513 = vld [vmem:[%s323 + $0x2c0] sm:$0xff]
        %v514 = vld [vmem:[%s323 + $0x2c8] sm:$0xff]
        %v515 = vld [vmem:[%s323 + $0x2d0] sm:$0xff]
        %v516 = vld [vmem:[%s323 + $0x2d8] sm:$0xff]
        %v517 = vld [vmem:[%s323 + $0x2e0] sm:$0xff]
        %v518 = vld [vmem:[%s323 + $0x2e8] sm:$0xff]
        %v519 = vld [vmem:[%s323 + $0x2f0] sm:$0xff]
        %v520 = vld [vmem:[%s323 + $0x2f8] sm:$0xff]
        %v521 = vld [vmem:[%s323 + $0x300] sm:$0xff]
        %v522 = vld [vmem:[%s323 + $0x308] sm:$0xff]
        %v523 = vld [vmem:[%s323 + $0x310] sm:$0xff]
        %v524 = vld [vmem:[%s323 + $0x318] sm:$0xff]
        %vm525 = vcmask 39936
        %v526 = vsel %vm525, %v425, 0.0
        %527 = vadd.xlane.f32.xlu0 %v526
        %v528 = vpop.xlane.xlu0 %527
        %v529 = vsel %vm525, %v426, 0.0
        %530 = vadd.xlane.f32.xlu0 %v529
        %v531 = vpop.xlane.xlu0 %530
        %v532 = vsel %vm525, %v427, 0.0
        %533 = vadd.xlane.f32.xlu0 %v532
        %v534 = vpop.xlane.xlu0 %533
        %v535 = vsel %vm525, %v428, 0.0
        %536 = vadd.xlane.f32.xlu0 %v535
        %v537 = vpop.xlane.xlu0 %536
        %v538 = vsel %vm525, %v429, 0.0
        %539 = vadd.xlane.f32.xlu0 %v538
        %v540 = vpop.xlane.xlu0 %539
        %v541 = vsel %vm525, %v430, 0.0
        %542 = vadd.xlane.f32.xlu0 %v541
        %v543 = vpop.xlane.xlu0 %542
        %v544 = vsel %vm525, %v431, 0.0
        %545 = vadd.xlane.f32.xlu0 %v544
        %v546 = vpop.xlane.xlu0 %545
        %v547 = vsel %vm525, %v432, 0.0
        %548 = vadd.xlane.f32.xlu0 %v547
        %v549 = vpop.xlane.xlu0 %548
        %v550 = vsel %vm525, %v433, 0.0
        %551 = vadd.xlane.f32.xlu0 %v550
        %v552 = vpop.xlane.xlu0 %551
        %v553 = vsel %vm525, %v434, 0.0
        %554 = vadd.xlane.f32.xlu0 %v553
        %v555 = vpop.xlane.xlu0 %554
        %v556 = vsel %vm525, %v435, 0.0
        %557 = vadd.xlane.f32.xlu0 %v556
        %v558 = vpop.xlane.xlu0 %557
        %v559 = vsel %vm525, %v436, 0.0
        %560 = vadd.xlane.f32.xlu0 %v559
        %v561 = vpop.xlane.xlu0 %560
        %v562 = vsel %vm525, %v437, 0.0
        %563 = vadd.xlane.f32.xlu0 %v562
        %v564 = vpop.xlane.xlu0 %563
        %v565 = vsel %vm525, %v438, 0.0
        %566 = vadd.xlane.f32.xlu0 %v565
        %v567 = vpop.xlane.xlu0 %566
        %v568 = vsel %vm525, %v439, 0.0
        %569 = vadd.xlane.f32.xlu0 %v568
        %v570 = vpop.xlane.xlu0 %569
        %v571 = vsel %vm525, %v440, 0.0
        %572 = vadd.xlane.f32.xlu0 %v571
        %v573 = vpop.xlane.xlu0 %572
        %v574 = vsel %vm525, %v441, 0.0
        %575 = vadd.xlane.f32.xlu0 %v574
        %v576 = vpop.xlane.xlu0 %575
        %v577 = vsel %vm525, %v442, 0.0
        %578 = vadd.xlane.f32.xlu0 %v577
        %v579 = vpop.xlane.xlu0 %578
        %v580 = vsel %vm525, %v443, 0.0
        %581 = vadd.xlane.f32.xlu0 %v580
        %v582 = vpop.xlane.xlu0 %581
        %v583 = vsel %vm525, %v444, 0.0
        %584 = vadd.xlane.f32.xlu0 %v583
        %v585 = vpop.xlane.xlu0 %584
        %v586 = vsel %vm525, %v445, 0.0
        %587 = vadd.xlane.f32.xlu0 %v586
        %v588 = vpop.xlane.xlu0 %587
        %v589 = vsel %vm525, %v446, 0.0
        %590 = vadd.xlane.f32.xlu0 %v589
        %v591 = vpop.xlane.xlu0 %590
        %v592 = vsel %vm525, %v447, 0.0
        %593 = vadd.xlane.f32.xlu0 %v592
        %v594 = vpop.xlane.xlu0 %593
        %v595 = vsel %vm525, %v448, 0.0
        %596 = vadd.xlane.f32.xlu0 %v595
        %v597 = vpop.xlane.xlu0 %596
        %v598 = vsel %vm525, %v449, 0.0
        %599 = vadd.xlane.f32.xlu0 %v598
        %v600 = vpop.xlane.xlu0 %599
        %v601 = vsel %vm525, %v450, 0.0
        %602 = vadd.xlane.f32.xlu0 %v601
        %v603 = vpop.xlane.xlu0 %602
        %v604 = vsel %vm525, %v451, 0.0
        %605 = vadd.xlane.f32.xlu0 %v604
        %v606 = vpop.xlane.xlu0 %605
        %v607 = vsel %vm525, %v452, 0.0
        %608 = vadd.xlane.f32.xlu0 %v607
        %v609 = vpop.xlane.xlu0 %608
        %v610 = vsel %vm525, %v453, 0.0
        %611 = vadd.xlane.f32.xlu0 %v610
        %v612 = vpop.xlane.xlu0 %611
        %v613 = vsel %vm525, %v454, 0.0
        %614 = vadd.xlane.f32.xlu0 %v613
        %v615 = vpop.xlane.xlu0 %614
        %v616 = vsel %vm525, %v455, 0.0
        %617 = vadd.xlane.f32.xlu0 %v616
        %v618 = vpop.xlane.xlu0 %617
        %v619 = vsel %vm525, %v456, 0.0
        %620 = vadd.xlane.f32.xlu0 %v619
        %v621 = vpop.xlane.xlu0 %620
        %v622 = vsel %vm525, %v457, 0.0
        %623 = vadd.xlane.f32.xlu0 %v622
        %v624 = vpop.xlane.xlu0 %623
        %v625 = vsel %vm525, %v458, 0.0
        %626 = vadd.xlane.f32.xlu0 %v625
        %v627 = vpop.xlane.xlu0 %626
        %v628 = vsel %vm525, %v459, 0.0
        %629 = vadd.xlane.f32.xlu0 %v628
        %v630 = vpop.xlane.xlu0 %629
        %v631 = vsel %vm525, %v460, 0.0
        %632 = vadd.xlane.f32.xlu0 %v631
        %v633 = vpop.xlane.xlu0 %632
        %v634 = vsel %vm525, %v461, 0.0
        %635 = vadd.xlane.f32.xlu0 %v634
        %v636 = vpop.xlane.xlu0 %635
        %v637 = vsel %vm525, %v462, 0.0
        %638 = vadd.xlane.f32.xlu0 %v637
        %v639 = vpop.xlane.xlu0 %638
        %v640 = vsel %vm525, %v463, 0.0
        %641 = vadd.xlane.f32.xlu0 %v640
        %v642 = vpop.xlane.xlu0 %641
        %v643 = vsel %vm525, %v464, 0.0
        %644 = vadd.xlane.f32.xlu0 %v643
        %v645 = vpop.xlane.xlu0 %644
        %v646 = vsel %vm525, %v465, 0.0
        %647 = vadd.xlane.f32.xlu0 %v646
        %v648 = vpop.xlane.xlu0 %647
        %v649 = vsel %vm525, %v466, 0.0
        %650 = vadd.xlane.f32.xlu0 %v649
        %v651 = vpop.xlane.xlu0 %650
        %v652 = vsel %vm525, %v467, 0.0
        %653 = vadd.xlane.f32.xlu0 %v652
        %v654 = vpop.xlane.xlu0 %653
        %v655 = vsel %vm525, %v468, 0.0
        %656 = vadd.xlane.f32.xlu0 %v655
        %v657 = vpop.xlane.xlu0 %656
        %v658 = vsel %vm525, %v469, 0.0
        %659 = vadd.xlane.f32.xlu0 %v658
        %v660 = vpop.xlane.xlu0 %659
        %v661 = vsel %vm525, %v470, 0.0
        %662 = vadd.xlane.f32.xlu0 %v661
        %v663 = vpop.xlane.xlu0 %662
        %v664 = vsel %vm525, %v471, 0.0
        %665 = vadd.xlane.f32.xlu0 %v664
        %v666 = vpop.xlane.xlu0 %665
        %v667 = vsel %vm525, %v472, 0.0
        %668 = vadd.xlane.f32.xlu0 %v667
        %v669 = vpop.xlane.xlu0 %668
        %v670 = vsel %vm525, %v473, 0.0
        %671 = vadd.xlane.f32.xlu0 %v670
        %v672 = vpop.xlane.xlu0 %671
        %v673 = vsel %vm525, %v474, 0.0
        %674 = vadd.xlane.f32.xlu0 %v673
        %v675 = vpop.xlane.xlu0 %674
        %v676 = vsel %vm525, %v475, 0.0
        %677 = vadd.xlane.f32.xlu0 %v676
        %v678 = vpop.xlane.xlu0 %677
        %v679 = vsel %vm525, %v476, 0.0
        %680 = vadd.xlane.f32.xlu0 %v679
        %v681 = vpop.xlane.xlu0 %680
        %v682 = vsel %vm525, %v477, 0.0
        %683 = vadd.xlane.f32.xlu0 %v682
        %v684 = vpop.xlane.xlu0 %683
        %v685 = vsel %vm525, %v478, 0.0
        %686 = vadd.xlane.f32.xlu0 %v685
        %v687 = vpop.xlane.xlu0 %686
        %v688 = vsel %vm525, %v479, 0.0
        %689 = vadd.xlane.f32.xlu0 %v688
        %v690 = vpop.xlane.xlu0 %689
        %v691 = vsel %vm525, %v480, 0.0
        %692 = vadd.xlane.f32.xlu0 %v691
        %v693 = vpop.xlane.xlu0 %692
        %v694 = vsel %vm525, %v481, 0.0
        %695 = vadd.xlane.f32.xlu0 %v694
        %v696 = vpop.xlane.xlu0 %695
        %v697 = vsel %vm525, %v482, 0.0
        %698 = vadd.xlane.f32.xlu0 %v697
        %v699 = vpop.xlane.xlu0 %698
        %v700 = vsel %vm525, %v483, 0.0
        %701 = vadd.xlane.f32.xlu0 %v700
        %v702 = vpop.xlane.xlu0 %701
        %v703 = vsel %vm525, %v484, 0.0
        %704 = vadd.xlane.f32.xlu0 %v703
        %v705 = vpop.xlane.xlu0 %704
        %v706 = vsel %vm525, %v485, 0.0
        %707 = vadd.xlane.f32.xlu0 %v706
        %v708 = vpop.xlane.xlu0 %707
        %v709 = vsel %vm525, %v486, 0.0
        %710 = vadd.xlane.f32.xlu0 %v709
        %v711 = vpop.xlane.xlu0 %710
        %v712 = vsel %vm525, %v487, 0.0
        %713 = vadd.xlane.f32.xlu0 %v712
        %v714 = vpop.xlane.xlu0 %713
        %v715 = vsel %vm525, %v488, 0.0
        %716 = vadd.xlane.f32.xlu0 %v715
        %v717 = vpop.xlane.xlu0 %716
        %v718 = vsel %vm525, %v489, 0.0
        %719 = vadd.xlane.f32.xlu0 %v718
        %v720 = vpop.xlane.xlu0 %719
        %v721 = vsel %vm525, %v490, 0.0
        %722 = vadd.xlane.f32.xlu0 %v721
        %v723 = vpop.xlane.xlu0 %722
        %v724 = vsel %vm525, %v491, 0.0
        %725 = vadd.xlane.f32.xlu0 %v724
        %v726 = vpop.xlane.xlu0 %725
        %v727 = vsel %vm525, %v492, 0.0
        %728 = vadd.xlane.f32.xlu0 %v727
        %v729 = vpop.xlane.xlu0 %728
        %v730 = vsel %vm525, %v493, 0.0
        %731 = vadd.xlane.f32.xlu0 %v730
        %v732 = vpop.xlane.xlu0 %731
        %v733 = vsel %vm525, %v494, 0.0
        %734 = vadd.xlane.f32.xlu0 %v733
        %v735 = vpop.xlane.xlu0 %734
        %v736 = vsel %vm525, %v495, 0.0
        %737 = vadd.xlane.f32.xlu0 %v736
        %v738 = vpop.xlane.xlu0 %737
        %v739 = vsel %vm525, %v496, 0.0
        %740 = vadd.xlane.f32.xlu0 %v739
        %v741 = vpop.xlane.xlu0 %740
        %v742 = vsel %vm525, %v497, 0.0
        %743 = vadd.xlane.f32.xlu0 %v742
        %v744 = vpop.xlane.xlu0 %743
        %v745 = vsel %vm525, %v498, 0.0
        %746 = vadd.xlane.f32.xlu0 %v745
        %v747 = vpop.xlane.xlu0 %746
        %v748 = vsel %vm525, %v499, 0.0
        %749 = vadd.xlane.f32.xlu0 %v748
        %v750 = vpop.xlane.xlu0 %749
        %v751 = vsel %vm525, %v500, 0.0
        %752 = vadd.xlane.f32.xlu0 %v751
        %v753 = vpop.xlane.xlu0 %752
        %v754 = vsel %vm525, %v501, 0.0
        %755 = vadd.xlane.f32.xlu0 %v754
        %v756 = vpop.xlane.xlu0 %755
        %v757 = vsel %vm525, %v502, 0.0
        %758 = vadd.xlane.f32.xlu0 %v757
        %v759 = vpop.xlane.xlu0 %758
        %v760 = vsel %vm525, %v503, 0.0
        %761 = vadd.xlane.f32.xlu0 %v760
        %v762 = vpop.xlane.xlu0 %761
        %v763 = vsel %vm525, %v504, 0.0
        %764 = vadd.xlane.f32.xlu0 %v763
        %v765 = vpop.xlane.xlu0 %764
        %v766 = vsel %vm525, %v505, 0.0
        %767 = vadd.xlane.f32.xlu0 %v766
        %v768 = vpop.xlane.xlu0 %767
        %v769 = vsel %vm525, %v506, 0.0
        %770 = vadd.xlane.f32.xlu0 %v769
        %v771 = vpop.xlane.xlu0 %770
        %v772 = vsel %vm525, %v507, 0.0
        %773 = vadd.xlane.f32.xlu0 %v772
        %v774 = vpop.xlane.xlu0 %773
        %v775 = vsel %vm525, %v508, 0.0
        %776 = vadd.xlane.f32.xlu0 %v775
        %v777 = vpop.xlane.xlu0 %776
        %v778 = vsel %vm525, %v509, 0.0
        %779 = vadd.xlane.f32.xlu0 %v778
        %v780 = vpop.xlane.xlu0 %779
        %v781 = vsel %vm525, %v510, 0.0
        %782 = vadd.xlane.f32.xlu0 %v781
        %v783 = vpop.xlane.xlu0 %782
        %v784 = vsel %vm525, %v511, 0.0
        %785 = vadd.xlane.f32.xlu0 %v784
        %v786 = vpop.xlane.xlu0 %785
        %v787 = vsel %vm525, %v512, 0.0
        %788 = vadd.xlane.f32.xlu0 %v787
        %v789 = vpop.xlane.xlu0 %788
        %v790 = vsel %vm525, %v513, 0.0
        %791 = vadd.xlane.f32.xlu0 %v790
        %v792 = vpop.xlane.xlu0 %791
        %v793 = vsel %vm525, %v514, 0.0
        %794 = vadd.xlane.f32.xlu0 %v793
        %v795 = vpop.xlane.xlu0 %794
        %v796 = vsel %vm525, %v515, 0.0
        %797 = vadd.xlane.f32.xlu0 %v796
        %v798 = vpop.xlane.xlu0 %797
        %v799 = vsel %vm525, %v516, 0.0
        %800 = vadd.xlane.f32.xlu0 %v799
        %v801 = vpop.xlane.xlu0 %800
        %v802 = vsel %vm525, %v517, 0.0
        %803 = vadd.xlane.f32.xlu0 %v802
        %v804 = vpop.xlane.xlu0 %803
        %v805 = vsel %vm525, %v518, 0.0
        %806 = vadd.xlane.f32.xlu0 %v805
        %v807 = vpop.xlane.xlu0 %806
        %v808 = vsel %vm525, %v519, 0.0
        %809 = vadd.xlane.f32.xlu0 %v808
        %v810 = vpop.xlane.xlu0 %809
        %v811 = vsel %vm525, %v520, 0.0
        %812 = vadd.xlane.f32.xlu0 %v811
        %v813 = vpop.xlane.xlu0 %812
        %v814 = vsel %vm525, %v521, 0.0
        %815 = vadd.xlane.f32.xlu0 %v814
        %v816 = vpop.xlane.xlu0 %815
        %v817 = vsel %vm525, %v522, 0.0
        %818 = vadd.xlane.f32.xlu0 %v817
        %v819 = vpop.xlane.xlu0 %818
        %v820 = vsel %vm525, %v523, 0.0
        %821 = vadd.xlane.f32.xlu0 %v820
        %v822 = vpop.xlane.xlu0 %821
        %v823 = vsel %vm525, %v524, 0.0
        %824 = vadd.xlane.f32.xlu0 %v823
        %v825 = vpop.xlane.xlu0 %824
        %v826 = vadd.f32 %v528, %v531
        %v827 = vadd.f32 %v826, %v534
        %v828 = vadd.f32 %v827, %v537
        %v829 = vadd.f32 %v828, %v540
        %v830 = vadd.f32 %v829, %v543
        %v831 = vadd.f32 %v830, %v546
        %v832 = vadd.f32 %v831, %v549
        %v833 = vadd.f32 %v832, %v552
        %v834 = vadd.f32 %v833, %v555
        %v835 = vadd.f32 %v834, %v558
        %v836 = vadd.f32 %v835, %v561
        %v837 = vadd.f32 %v836, %v564
        %v838 = vadd.f32 %v837, %v567
        %v839 = vadd.f32 %v838, %v570
        %v840 = vadd.f32 %v839, %v573
        %v841 = vadd.f32 %v840, %v576
        %v842 = vadd.f32 %v841, %v579
        %v843 = vadd.f32 %v842, %v582
        %v844 = vadd.f32 %v843, %v585
        %v845 = vadd.f32 %v844, %v588
        %v846 = vadd.f32 %v845, %v591
        %v847 = vadd.f32 %v846, %v594
        %v848 = vadd.f32 %v847, %v597
        %v849 = vadd.f32 %v848, %v600
        %v850 = vadd.f32 %v849, %v603
        %v851 = vadd.f32 %v850, %v606
        %v852 = vadd.f32 %v851, %v609
        %v853 = vadd.f32 %v852, %v612
        %v854 = vadd.f32 %v853, %v615
        %v855 = vadd.f32 %v854, %v618
        %v856 = vadd.f32 %v855, %v621
        %v857 = vadd.f32 %v856, %v624
        %v858 = vadd.f32 %v857, %v627
        %v859 = vadd.f32 %v858, %v630
        %v860 = vadd.f32 %v859, %v633
        %v861 = vadd.f32 %v860, %v636
        %v862 = vadd.f32 %v861, %v639
        %v863 = vadd.f32 %v862, %v642
        %v864 = vadd.f32 %v863, %v645
        %v865 = vadd.f32 %v864, %v648
        %v866 = vadd.f32 %v865, %v651
        %v867 = vadd.f32 %v866, %v654
        %v868 = vadd.f32 %v867, %v657
        %v869 = vadd.f32 %v868, %v660
        %v870 = vadd.f32 %v869, %v663
        %v871 = vadd.f32 %v870, %v666
        %v872 = vadd.f32 %v871, %v669
        %v873 = vadd.f32 %v872, %v672
        %v874 = vadd.f32 %v873, %v675
        %v875 = vadd.f32 %v874, %v678
        %v876 = vadd.f32 %v875, %v681
        %v877 = vadd.f32 %v876, %v684
        %v878 = vadd.f32 %v877, %v687
        %v879 = vadd.f32 %v878, %v690
        %v880 = vadd.f32 %v879, %v693
        %v881 = vadd.f32 %v880, %v696
        %v882 = vadd.f32 %v881, %v699
        %v883 = vadd.f32 %v882, %v702
        %v884 = vadd.f32 %v883, %v705
        %v885 = vadd.f32 %v884, %v708
        %v886 = vadd.f32 %v885, %v711
        %v887 = vadd.f32 %v886, %v714
        %v888 = vadd.f32 %v887, %v717
        %v889 = vadd.f32 %v888, %v720
        %v890 = vadd.f32 %v889, %v723
        %v891 = vadd.f32 %v890, %v726
        %v892 = vadd.f32 %v891, %v729
        %v893 = vadd.f32 %v892, %v732
        %v894 = vadd.f32 %v893, %v735
        %v895 = vadd.f32 %v894, %v738
        %v896 = vadd.f32 %v895, %v741
        %v897 = vadd.f32 %v896, %v744
        %v898 = vadd.f32 %v897, %v747
        %v899 = vadd.f32 %v898, %v750
        %v900 = vadd.f32 %v899, %v753
        %v901 = vadd.f32 %v900, %v756
        %v902 = vadd.f32 %v901, %v759
        %v903 = vadd.f32 %v902, %v762
        %v904 = vadd.f32 %v903, %v765
        %v905 = vadd.f32 %v904, %v768
        %v906 = vadd.f32 %v905, %v771
        %v907 = vadd.f32 %v906, %v774
        %v908 = vadd.f32 %v907, %v777
        %v909 = vadd.f32 %v908, %v780
        %v910 = vadd.f32 %v909, %v783
        %v911 = vadd.f32 %v910, %v786
        %v912 = vadd.f32 %v911, %v789
        %v913 = vadd.f32 %v912, %v792
        %v914 = vadd.f32 %v913, %v795
        %v915 = vadd.f32 %v914, %v798
        %v916 = vadd.f32 %v915, %v801
        %v917 = vadd.f32 %v916, %v804
        %v918 = vadd.f32 %v917, %v807
        %v919 = vadd.f32 %v918, %v810
        %v920 = vadd.f32 %v919, %v813
        %v921 = vadd.f32 %v920, %v816
        %v922 = vadd.f32 %v921, %v819
        %v923 = vadd.f32 %v922, %v822
        %v924 = vadd.f32 %v923, %v825
        %v925 = vrot.slane %v924, 4
        %v926 = vadd.f32 %v924, %v925
        %v927 = vrot.slane %v926, 2
        %v928 = vadd.f32 %v926, %v927
        %v929 = vrot.slane %v928, 1
        %v930 = vadd.f32 %v928, %v929
        %v931 = vmax.f32 %v930, 1.0
        %v932 = vmul.f32 %v325, %v425
        %v933 = vmul.f32 %v326, %v426
        %v934 = vmul.f32 %v327, %v427
        %v935 = vmul.f32 %v328, %v428
        %v936 = vmul.f32 %v329, %v429
        %v937 = vmul.f32 %v330, %v430
        %v938 = vmul.f32 %v331, %v431
        %v939 = vmul.f32 %v332, %v432
        %v940 = vmul.f32 %v333, %v433
        %v941 = vmul.f32 %v334, %v434
        %v942 = vmul.f32 %v335, %v435
        %v943 = vmul.f32 %v336, %v436
        %v944 = vmul.f32 %v337, %v437
        %v945 = vmul.f32 %v338, %v438
        %v946 = vmul.f32 %v339, %v439
        %v947 = vmul.f32 %v340, %v440
        %v948 = vmul.f32 %v341, %v441
        %v949 = vmul.f32 %v342, %v442
        %v950 = vmul.f32 %v343, %v443
        %v951 = vmul.f32 %v344, %v444
        %v952 = vmul.f32 %v345, %v445
        %v953 = vmul.f32 %v346, %v446
        %v954 = vmul.f32 %v347, %v447
        %v955 = vmul.f32 %v348, %v448
        %v956 = vmul.f32 %v349, %v449
        %v957 = vmul.f32 %v350, %v450
        %v958 = vmul.f32 %v351, %v451
        %v959 = vmul.f32 %v352, %v452
        %v960 = vmul.f32 %v353, %v453
        %v961 = vmul.f32 %v354, %v454
        %v962 = vmul.f32 %v355, %v455
        %v963 = vmul.f32 %v356, %v456
        %v964 = vmul.f32 %v357, %v457
        %v965 = vmul.f32 %v358, %v458
        %v966 = vmul.f32 %v359, %v459
        %v967 = vmul.f32 %v360, %v460
        %v968 = vmul.f32 %v361, %v461
        %v969 = vmul.f32 %v362, %v462
        %v970 = vmul.f32 %v363, %v463
        %v971 = vmul.f32 %v364, %v464
        %v972 = vmul.f32 %v365, %v465
        %v973 = vmul.f32 %v366, %v466
        %v974 = vmul.f32 %v367, %v467
        %v975 = vmul.f32 %v368, %v468
        %v976 = vmul.f32 %v369, %v469
        %v977 = vmul.f32 %v370, %v470
        %v978 = vmul.f32 %v371, %v471
        %v979 = vmul.f32 %v372, %v472
        %v980 = vmul.f32 %v373, %v473
        %v981 = vmul.f32 %v374, %v474
        %v982 = vmul.f32 %v375, %v475
        %v983 = vmul.f32 %v376, %v476
        %v984 = vmul.f32 %v377, %v477
        %v985 = vmul.f32 %v378, %v478
        %v986 = vmul.f32 %v379, %v479
        %v987 = vmul.f32 %v380, %v480
        %v988 = vmul.f32 %v381, %v481
        %v989 = vmul.f32 %v382, %v482
        %v990 = vmul.f32 %v383, %v483
        %v991 = vmul.f32 %v384, %v484
        %v992 = vmul.f32 %v385, %v485
        %v993 = vmul.f32 %v386, %v486
        %v994 = vmul.f32 %v387, %v487
        %v995 = vmul.f32 %v388, %v488
        %v996 = vmul.f32 %v389, %v489
        %v997 = vmul.f32 %v390, %v490
        %v998 = vmul.f32 %v391, %v491
        %v999 = vmul.f32 %v392, %v492
        %v1000 = vmul.f32 %v393, %v493
        %v1001 = vmul.f32 %v394, %v494
        %v1002 = vmul.f32 %v395, %v495
        %v1003 = vmul.f32 %v396, %v496
        %v1004 = vmul.f32 %v397, %v497
        %v1005 = vmul.f32 %v398, %v498
        %v1006 = vmul.f32 %v399, %v499
        %v1007 = vmul.f32 %v400, %v500
        %v1008 = vmul.f32 %v401, %v501
        %v1009 = vmul.f32 %v402, %v502
        %v1010 = vmul.f32 %v403, %v503
        %v1011 = vmul.f32 %v404, %v504
        %v1012 = vmul.f32 %v405, %v505
        %v1013 = vmul.f32 %v406, %v506
        %v1014 = vmul.f32 %v407, %v507
        %v1015 = vmul.f32 %v408, %v508
        %v1016 = vmul.f32 %v409, %v509
        %v1017 = vmul.f32 %v410, %v510
        %v1018 = vmul.f32 %v411, %v511
        %v1019 = vmul.f32 %v412, %v512
        %v1020 = vmul.f32 %v413, %v513
        %v1021 = vmul.f32 %v414, %v514
        %v1022 = vmul.f32 %v415, %v515
        %v1023 = vmul.f32 %v416, %v516
        %v1024 = vmul.f32 %v417, %v517
        %v1025 = vmul.f32 %v418, %v518
        %v1026 = vmul.f32 %v419, %v519
        %v1027 = vmul.f32 %v420, %v520
        %v1028 = vmul.f32 %v421, %v521
        %v1029 = vmul.f32 %v422, %v522
        %v1030 = vmul.f32 %v423, %v523
        %v1031 = vmul.f32 %v424, %v524
        %v1032 = vsel %vm525, %v932, 0.0
        %1033 = vadd.xlane.f32.xlu0 %v1032
        %v1034 = vpop.xlane.xlu0 %1033
        %v1035 = vsel %vm525, %v933, 0.0
        %1036 = vadd.xlane.f32.xlu0 %v1035
        %v1037 = vpop.xlane.xlu0 %1036
        %v1038 = vsel %vm525, %v934, 0.0
        %1039 = vadd.xlane.f32.xlu0 %v1038
        %v1040 = vpop.xlane.xlu0 %1039
        %v1041 = vsel %vm525, %v935, 0.0
        %1042 = vadd.xlane.f32.xlu0 %v1041
        %v1043 = vpop.xlane.xlu0 %1042
        %v1044 = vsel %vm525, %v936, 0.0
        %1045 = vadd.xlane.f32.xlu0 %v1044
        %v1046 = vpop.xlane.xlu0 %1045
        %v1047 = vsel %vm525, %v937, 0.0
        %1048 = vadd.xlane.f32.xlu0 %v1047
        %v1049 = vpop.xlane.xlu0 %1048
        %v1050 = vsel %vm525, %v938, 0.0
        %1051 = vadd.xlane.f32.xlu0 %v1050
        %v1052 = vpop.xlane.xlu0 %1051
        %v1053 = vsel %vm525, %v939, 0.0
        %1054 = vadd.xlane.f32.xlu0 %v1053
        %v1055 = vpop.xlane.xlu0 %1054
        %v1056 = vsel %vm525, %v940, 0.0
        %1057 = vadd.xlane.f32.xlu0 %v1056
        %v1058 = vpop.xlane.xlu0 %1057
        %v1059 = vsel %vm525, %v941, 0.0
        %1060 = vadd.xlane.f32.xlu0 %v1059
        %v1061 = vpop.xlane.xlu0 %1060
        %v1062 = vsel %vm525, %v942, 0.0
        %1063 = vadd.xlane.f32.xlu0 %v1062
        %v1064 = vpop.xlane.xlu0 %1063
        %v1065 = vsel %vm525, %v943, 0.0
        %1066 = vadd.xlane.f32.xlu0 %v1065
        %v1067 = vpop.xlane.xlu0 %1066
        %v1068 = vsel %vm525, %v944, 0.0
        %1069 = vadd.xlane.f32.xlu0 %v1068
        %v1070 = vpop.xlane.xlu0 %1069
        %v1071 = vsel %vm525, %v945, 0.0
        %1072 = vadd.xlane.f32.xlu0 %v1071
        %v1073 = vpop.xlane.xlu0 %1072
        %v1074 = vsel %vm525, %v946, 0.0
        %1075 = vadd.xlane.f32.xlu0 %v1074
        %v1076 = vpop.xlane.xlu0 %1075
        %v1077 = vsel %vm525, %v947, 0.0
        %1078 = vadd.xlane.f32.xlu0 %v1077
        %v1079 = vpop.xlane.xlu0 %1078
        %v1080 = vsel %vm525, %v948, 0.0
        %1081 = vadd.xlane.f32.xlu0 %v1080
        %v1082 = vpop.xlane.xlu0 %1081
        %v1083 = vsel %vm525, %v949, 0.0
        %1084 = vadd.xlane.f32.xlu0 %v1083
        %v1085 = vpop.xlane.xlu0 %1084
        %v1086 = vsel %vm525, %v950, 0.0
        %1087 = vadd.xlane.f32.xlu0 %v1086
        %v1088 = vpop.xlane.xlu0 %1087
        %v1089 = vsel %vm525, %v951, 0.0
        %1090 = vadd.xlane.f32.xlu0 %v1089
        %v1091 = vpop.xlane.xlu0 %1090
        %v1092 = vsel %vm525, %v952, 0.0
        %1093 = vadd.xlane.f32.xlu0 %v1092
        %v1094 = vpop.xlane.xlu0 %1093
        %v1095 = vsel %vm525, %v953, 0.0
        %1096 = vadd.xlane.f32.xlu0 %v1095
        %v1097 = vpop.xlane.xlu0 %1096
        %v1098 = vsel %vm525, %v954, 0.0
        %1099 = vadd.xlane.f32.xlu0 %v1098
        %v1100 = vpop.xlane.xlu0 %1099
        %v1101 = vsel %vm525, %v955, 0.0
        %1102 = vadd.xlane.f32.xlu0 %v1101
        %v1103 = vpop.xlane.xlu0 %1102
        %v1104 = vsel %vm525, %v956, 0.0
        %1105 = vadd.xlane.f32.xlu0 %v1104
        %v1106 = vpop.xlane.xlu0 %1105
        %v1107 = vsel %vm525, %v957, 0.0
        %1108 = vadd.xlane.f32.xlu0 %v1107
        %v1109 = vpop.xlane.xlu0 %1108
        %v1110 = vsel %vm525, %v958, 0.0
        %1111 = vadd.xlane.f32.xlu0 %v1110
        %v1112 = vpop.xlane.xlu0 %1111
        %v1113 = vsel %vm525, %v959, 0.0
        %1114 = vadd.xlane.f32.xlu0 %v1113
        %v1115 = vpop.xlane.xlu0 %1114
        %v1116 = vsel %vm525, %v960, 0.0
        %1117 = vadd.xlane.f32.xlu0 %v1116
        %v1118 = vpop.xlane.xlu0 %1117
        %v1119 = vsel %vm525, %v961, 0.0
        %1120 = vadd.xlane.f32.xlu0 %v1119
        %v1121 = vpop.xlane.xlu0 %1120
        %v1122 = vsel %vm525, %v962, 0.0
        %1123 = vadd.xlane.f32.xlu0 %v1122
        %v1124 = vpop.xlane.xlu0 %1123
        %v1125 = vsel %vm525, %v963, 0.0
        %1126 = vadd.xlane.f32.xlu0 %v1125
        %v1127 = vpop.xlane.xlu0 %1126
        %v1128 = vsel %vm525, %v964, 0.0
        %1129 = vadd.xlane.f32.xlu0 %v1128
        %v1130 = vpop.xlane.xlu0 %1129
        %v1131 = vsel %vm525, %v965, 0.0
        %1132 = vadd.xlane.f32.xlu0 %v1131
        %v1133 = vpop.xlane.xlu0 %1132
        %v1134 = vsel %vm525, %v966, 0.0
        %1135 = vadd.xlane.f32.xlu0 %v1134
        %v1136 = vpop.xlane.xlu0 %1135
        %v1137 = vsel %vm525, %v967, 0.0
        %1138 = vadd.xlane.f32.xlu0 %v1137
        %v1139 = vpop.xlane.xlu0 %1138
        %v1140 = vsel %vm525, %v968, 0.0
        %1141 = vadd.xlane.f32.xlu0 %v1140
        %v1142 = vpop.xlane.xlu0 %1141
        %v1143 = vsel %vm525, %v969, 0.0
        %1144 = vadd.xlane.f32.xlu0 %v1143
        %v1145 = vpop.xlane.xlu0 %1144
        %v1146 = vsel %vm525, %v970, 0.0
        %1147 = vadd.xlane.f32.xlu0 %v1146
        %v1148 = vpop.xlane.xlu0 %1147
        %v1149 = vsel %vm525, %v971, 0.0
        %1150 = vadd.xlane.f32.xlu0 %v1149
        %v1151 = vpop.xlane.xlu0 %1150
        %v1152 = vsel %vm525, %v972, 0.0
        %1153 = vadd.xlane.f32.xlu0 %v1152
        %v1154 = vpop.xlane.xlu0 %1153
        %v1155 = vsel %vm525, %v973, 0.0
        %1156 = vadd.xlane.f32.xlu0 %v1155
        %v1157 = vpop.xlane.xlu0 %1156
        %v1158 = vsel %vm525, %v974, 0.0
        %1159 = vadd.xlane.f32.xlu0 %v1158
        %v1160 = vpop.xlane.xlu0 %1159
        %v1161 = vsel %vm525, %v975, 0.0
        %1162 = vadd.xlane.f32.xlu0 %v1161
        %v1163 = vpop.xlane.xlu0 %1162
        %v1164 = vsel %vm525, %v976, 0.0
        %1165 = vadd.xlane.f32.xlu0 %v1164
        %v1166 = vpop.xlane.xlu0 %1165
        %v1167 = vsel %vm525, %v977, 0.0
        %1168 = vadd.xlane.f32.xlu0 %v1167
        %v1169 = vpop.xlane.xlu0 %1168
        %v1170 = vsel %vm525, %v978, 0.0
        %1171 = vadd.xlane.f32.xlu0 %v1170
        %v1172 = vpop.xlane.xlu0 %1171
        %v1173 = vsel %vm525, %v979, 0.0
        %1174 = vadd.xlane.f32.xlu0 %v1173
        %v1175 = vpop.xlane.xlu0 %1174
        %v1176 = vsel %vm525, %v980, 0.0
        %1177 = vadd.xlane.f32.xlu0 %v1176
        %v1178 = vpop.xlane.xlu0 %1177
        %v1179 = vsel %vm525, %v981, 0.0
        %1180 = vadd.xlane.f32.xlu0 %v1179
        %v1181 = vpop.xlane.xlu0 %1180
        %v1182 = vsel %vm525, %v982, 0.0
        %1183 = vadd.xlane.f32.xlu0 %v1182
        %v1184 = vpop.xlane.xlu0 %1183
        %v1185 = vsel %vm525, %v983, 0.0
        %1186 = vadd.xlane.f32.xlu0 %v1185
        %v1187 = vpop.xlane.xlu0 %1186
        %v1188 = vsel %vm525, %v984, 0.0
        %1189 = vadd.xlane.f32.xlu0 %v1188
        %v1190 = vpop.xlane.xlu0 %1189
        %v1191 = vsel %vm525, %v985, 0.0
        %1192 = vadd.xlane.f32.xlu0 %v1191
        %v1193 = vpop.xlane.xlu0 %1192
        %v1194 = vsel %vm525, %v986, 0.0
        %1195 = vadd.xlane.f32.xlu0 %v1194
        %v1196 = vpop.xlane.xlu0 %1195
        %v1197 = vsel %vm525, %v987, 0.0
        %1198 = vadd.xlane.f32.xlu0 %v1197
        %v1199 = vpop.xlane.xlu0 %1198
        %v1200 = vsel %vm525, %v988, 0.0
        %1201 = vadd.xlane.f32.xlu0 %v1200
        %v1202 = vpop.xlane.xlu0 %1201
        %v1203 = vsel %vm525, %v989, 0.0
        %1204 = vadd.xlane.f32.xlu0 %v1203
        %v1205 = vpop.xlane.xlu0 %1204
        %v1206 = vsel %vm525, %v990, 0.0
        %1207 = vadd.xlane.f32.xlu0 %v1206
        %v1208 = vpop.xlane.xlu0 %1207
        %v1209 = vsel %vm525, %v991, 0.0
        %1210 = vadd.xlane.f32.xlu0 %v1209
        %v1211 = vpop.xlane.xlu0 %1210
        %v1212 = vsel %vm525, %v992, 0.0
        %1213 = vadd.xlane.f32.xlu0 %v1212
        %v1214 = vpop.xlane.xlu0 %1213
        %v1215 = vsel %vm525, %v993, 0.0
        %1216 = vadd.xlane.f32.xlu0 %v1215
        %v1217 = vpop.xlane.xlu0 %1216
        %v1218 = vsel %vm525, %v994, 0.0
        %1219 = vadd.xlane.f32.xlu0 %v1218
        %v1220 = vpop.xlane.xlu0 %1219
        %v1221 = vsel %vm525, %v995, 0.0
        %1222 = vadd.xlane.f32.xlu0 %v1221
        %v1223 = vpop.xlane.xlu0 %1222
        %v1224 = vsel %vm525, %v996, 0.0
        %1225 = vadd.xlane.f32.xlu0 %v1224
        %v1226 = vpop.xlane.xlu0 %1225
        %v1227 = vsel %vm525, %v997, 0.0
        %1228 = vadd.xlane.f32.xlu0 %v1227
        %v1229 = vpop.xlane.xlu0 %1228
        %v1230 = vsel %vm525, %v998, 0.0
        %1231 = vadd.xlane.f32.xlu0 %v1230
        %v1232 = vpop.xlane.xlu0 %1231
        %v1233 = vsel %vm525, %v999, 0.0
        %1234 = vadd.xlane.f32.xlu0 %v1233
        %v1235 = vpop.xlane.xlu0 %1234
        %v1236 = vsel %vm525, %v1000, 0.0
        %1237 = vadd.xlane.f32.xlu0 %v1236
        %v1238 = vpop.xlane.xlu0 %1237
        %v1239 = vsel %vm525, %v1001, 0.0
        %1240 = vadd.xlane.f32.xlu0 %v1239
        %v1241 = vpop.xlane.xlu0 %1240
        %v1242 = vsel %vm525, %v1002, 0.0
        %1243 = vadd.xlane.f32.xlu0 %v1242
        %v1244 = vpop.xlane.xlu0 %1243
        %v1245 = vsel %vm525, %v1003, 0.0
        %1246 = vadd.xlane.f32.xlu0 %v1245
        %v1247 = vpop.xlane.xlu0 %1246
        %v1248 = vsel %vm525, %v1004, 0.0
        %1249 = vadd.xlane.f32.xlu0 %v1248
        %v1250 = vpop.xlane.xlu0 %1249
        %v1251 = vsel %vm525, %v1005, 0.0
        %1252 = vadd.xlane.f32.xlu0 %v1251
        %v1253 = vpop.xlane.xlu0 %1252
        %v1254 = vsel %vm525, %v1006, 0.0
        %1255 = vadd.xlane.f32.xlu0 %v1254
        %v1256 = vpop.xlane.xlu0 %1255
        %v1257 = vsel %vm525, %v1007, 0.0
        %1258 = vadd.xlane.f32.xlu0 %v1257
        %v1259 = vpop.xlane.xlu0 %1258
        %v1260 = vsel %vm525, %v1008, 0.0
        %1261 = vadd.xlane.f32.xlu0 %v1260
        %v1262 = vpop.xlane.xlu0 %1261
        %v1263 = vsel %vm525, %v1009, 0.0
        %1264 = vadd.xlane.f32.xlu0 %v1263
        %v1265 = vpop.xlane.xlu0 %1264
        %v1266 = vsel %vm525, %v1010, 0.0
        %1267 = vadd.xlane.f32.xlu0 %v1266
        %v1268 = vpop.xlane.xlu0 %1267
        %v1269 = vsel %vm525, %v1011, 0.0
        %1270 = vadd.xlane.f32.xlu0 %v1269
        %v1271 = vpop.xlane.xlu0 %1270
        %v1272 = vsel %vm525, %v1012, 0.0
        %1273 = vadd.xlane.f32.xlu0 %v1272
        %v1274 = vpop.xlane.xlu0 %1273
        %v1275 = vsel %vm525, %v1013, 0.0
        %1276 = vadd.xlane.f32.xlu0 %v1275
        %v1277 = vpop.xlane.xlu0 %1276
        %v1278 = vsel %vm525, %v1014, 0.0
        %1279 = vadd.xlane.f32.xlu0 %v1278
        %v1280 = vpop.xlane.xlu0 %1279
        %v1281 = vsel %vm525, %v1015, 0.0
        %1282 = vadd.xlane.f32.xlu0 %v1281
        %v1283 = vpop.xlane.xlu0 %1282
        %v1284 = vsel %vm525, %v1016, 0.0
        %1285 = vadd.xlane.f32.xlu0 %v1284
        %v1286 = vpop.xlane.xlu0 %1285
        %v1287 = vsel %vm525, %v1017, 0.0
        %1288 = vadd.xlane.f32.xlu0 %v1287
        %v1289 = vpop.xlane.xlu0 %1288
        %v1290 = vsel %vm525, %v1018, 0.0
        %1291 = vadd.xlane.f32.xlu0 %v1290
        %v1292 = vpop.xlane.xlu0 %1291
        %v1293 = vsel %vm525, %v1019, 0.0
        %1294 = vadd.xlane.f32.xlu0 %v1293
        %v1295 = vpop.xlane.xlu0 %1294
        %v1296 = vsel %vm525, %v1020, 0.0
        %1297 = vadd.xlane.f32.xlu0 %v1296
        %v1298 = vpop.xlane.xlu0 %1297
        %v1299 = vsel %vm525, %v1021, 0.0
        %1300 = vadd.xlane.f32.xlu0 %v1299
        %v1301 = vpop.xlane.xlu0 %1300
        %v1302 = vsel %vm525, %v1022, 0.0
        %1303 = vadd.xlane.f32.xlu0 %v1302
        %v1304 = vpop.xlane.xlu0 %1303
        %v1305 = vsel %vm525, %v1023, 0.0
        %1306 = vadd.xlane.f32.xlu0 %v1305
        %v1307 = vpop.xlane.xlu0 %1306
        %v1308 = vsel %vm525, %v1024, 0.0
        %1309 = vadd.xlane.f32.xlu0 %v1308
        %v1310 = vpop.xlane.xlu0 %1309
        %v1311 = vsel %vm525, %v1025, 0.0
        %1312 = vadd.xlane.f32.xlu0 %v1311
        %v1313 = vpop.xlane.xlu0 %1312
        %v1314 = vsel %vm525, %v1026, 0.0
        %1315 = vadd.xlane.f32.xlu0 %v1314
        %v1316 = vpop.xlane.xlu0 %1315
        %v1317 = vsel %vm525, %v1027, 0.0
        %1318 = vadd.xlane.f32.xlu0 %v1317
        %v1319 = vpop.xlane.xlu0 %1318
        %v1320 = vsel %vm525, %v1028, 0.0
        %1321 = vadd.xlane.f32.xlu0 %v1320
        %v1322 = vpop.xlane.xlu0 %1321
        %v1323 = vsel %vm525, %v1029, 0.0
        %1324 = vadd.xlane.f32.xlu0 %v1323
        %v1325 = vpop.xlane.xlu0 %1324
        %v1326 = vsel %vm525, %v1030, 0.0
        %1327 = vadd.xlane.f32.xlu0 %v1326
        %v1328 = vpop.xlane.xlu0 %1327
        %v1329 = vsel %vm525, %v1031, 0.0
        %1330 = vadd.xlane.f32.xlu0 %v1329
        %v1331 = vpop.xlane.xlu0 %1330
        %v1332 = vadd.f32 %v1034, %v1037
        %v1333 = vadd.f32 %v1332, %v1040
        %v1334 = vadd.f32 %v1333, %v1043
        %v1335 = vadd.f32 %v1334, %v1046
        %v1336 = vadd.f32 %v1335, %v1049
        %v1337 = vadd.f32 %v1336, %v1052
        %v1338 = vadd.f32 %v1337, %v1055
        %v1339 = vadd.f32 %v1338, %v1058
        %v1340 = vadd.f32 %v1339, %v1061
        %v1341 = vadd.f32 %v1340, %v1064
        %v1342 = vadd.f32 %v1341, %v1067
        %v1343 = vadd.f32 %v1342, %v1070
        %v1344 = vadd.f32 %v1343, %v1073
        %v1345 = vadd.f32 %v1344, %v1076
        %v1346 = vadd.f32 %v1345, %v1079
        %v1347 = vadd.f32 %v1346, %v1082
        %v1348 = vadd.f32 %v1347, %v1085
        %v1349 = vadd.f32 %v1348, %v1088
        %v1350 = vadd.f32 %v1349, %v1091
        %v1351 = vadd.f32 %v1350, %v1094
        %v1352 = vadd.f32 %v1351, %v1097
        %v1353 = vadd.f32 %v1352, %v1100
        %v1354 = vadd.f32 %v1353, %v1103
        %v1355 = vadd.f32 %v1354, %v1106
        %v1356 = vadd.f32 %v1355, %v1109
        %v1357 = vadd.f32 %v1356, %v1112
        %v1358 = vadd.f32 %v1357, %v1115
        %v1359 = vadd.f32 %v1358, %v1118
        %v1360 = vadd.f32 %v1359, %v1121
        %v1361 = vadd.f32 %v1360, %v1124
        %v1362 = vadd.f32 %v1361, %v1127
        %v1363 = vadd.f32 %v1362, %v1130
        %v1364 = vadd.f32 %v1363, %v1133
        %v1365 = vadd.f32 %v1364, %v1136
        %v1366 = vadd.f32 %v1365, %v1139
        %v1367 = vadd.f32 %v1366, %v1142
        %v1368 = vadd.f32 %v1367, %v1145
        %v1369 = vadd.f32 %v1368, %v1148
        %v1370 = vadd.f32 %v1369, %v1151
        %v1371 = vadd.f32 %v1370, %v1154
        %v1372 = vadd.f32 %v1371, %v1157
        %v1373 = vadd.f32 %v1372, %v1160
        %v1374 = vadd.f32 %v1373, %v1163
        %v1375 = vadd.f32 %v1374, %v1166
        %v1376 = vadd.f32 %v1375, %v1169
        %v1377 = vadd.f32 %v1376, %v1172
        %v1378 = vadd.f32 %v1377, %v1175
        %v1379 = vadd.f32 %v1378, %v1178
        %v1380 = vadd.f32 %v1379, %v1181
        %v1381 = vadd.f32 %v1380, %v1184
        %v1382 = vadd.f32 %v1381, %v1187
        %v1383 = vadd.f32 %v1382, %v1190
        %v1384 = vadd.f32 %v1383, %v1193
        %v1385 = vadd.f32 %v1384, %v1196
        %v1386 = vadd.f32 %v1385, %v1199
        %v1387 = vadd.f32 %v1386, %v1202
        %v1388 = vadd.f32 %v1387, %v1205
        %v1389 = vadd.f32 %v1388, %v1208
        %v1390 = vadd.f32 %v1389, %v1211
        %v1391 = vadd.f32 %v1390, %v1214
        %v1392 = vadd.f32 %v1391, %v1217
        %v1393 = vadd.f32 %v1392, %v1220
        %v1394 = vadd.f32 %v1393, %v1223
        %v1395 = vadd.f32 %v1394, %v1226
        %v1396 = vadd.f32 %v1395, %v1229
        %v1397 = vadd.f32 %v1396, %v1232
        %v1398 = vadd.f32 %v1397, %v1235
        %v1399 = vadd.f32 %v1398, %v1238
        %v1400 = vadd.f32 %v1399, %v1241
        %v1401 = vadd.f32 %v1400, %v1244
        %v1402 = vadd.f32 %v1401, %v1247
        %v1403 = vadd.f32 %v1402, %v1250
        %v1404 = vadd.f32 %v1403, %v1253
        %v1405 = vadd.f32 %v1404, %v1256
        %v1406 = vadd.f32 %v1405, %v1259
        %v1407 = vadd.f32 %v1406, %v1262
        %v1408 = vadd.f32 %v1407, %v1265
        %v1409 = vadd.f32 %v1408, %v1268
        %v1410 = vadd.f32 %v1409, %v1271
        %v1411 = vadd.f32 %v1410, %v1274
        %v1412 = vadd.f32 %v1411, %v1277
        %v1413 = vadd.f32 %v1412, %v1280
        %v1414 = vadd.f32 %v1413, %v1283
        %v1415 = vadd.f32 %v1414, %v1286
        %v1416 = vadd.f32 %v1415, %v1289
        %v1417 = vadd.f32 %v1416, %v1292
        %v1418 = vadd.f32 %v1417, %v1295
        %v1419 = vadd.f32 %v1418, %v1298
        %v1420 = vadd.f32 %v1419, %v1301
        %v1421 = vadd.f32 %v1420, %v1304
        %v1422 = vadd.f32 %v1421, %v1307
        %v1423 = vadd.f32 %v1422, %v1310
        %v1424 = vadd.f32 %v1423, %v1313
        %v1425 = vadd.f32 %v1424, %v1316
        %v1426 = vadd.f32 %v1425, %v1319
        %v1427 = vadd.f32 %v1426, %v1322
        %v1428 = vadd.f32 %v1427, %v1325
        %v1429 = vadd.f32 %v1428, %v1328
        %v1430 = vadd.f32 %v1429, %v1331
        %v1431 = vrot.slane %v1430, 4
        %v1432 = vadd.f32 %v1430, %v1431
        %v1433 = vrot.slane %v1432, 2
        %v1434 = vadd.f32 %v1432, %v1433
        %v1435 = vrot.slane %v1434, 1
        %v1436 = vadd.f32 %v1434, %v1435
        %v1437 = vrcp.pop %v931
        %v1438 = vmul.f32 %v931, %v1437
        %v1439 = vsub.f32 1.0, %v1438
        %v1440 = vmul.f32 %v1437, %v1439
        %v1441 = vadd.f32 %v1437, %v1440
        %vm1442 = vweird.f32 %v931
        %vm1443 = vweird.f32 %v1437
        %vm1444 = vmor %vm1442, %vm1443
        %v1445 = vsel %vm1444, %v1437, %v1441
        %v1446 = vand.u32 2147483647, %v931
        %vm1447 = vcmp.eq.f32.partialorder %v1446, 8.507059e+37
        %v1448 = vand.u32 %v931, 2147483648
        %v1449 = vor.u32 1.1754944e-38, %v1448
        %v1450 = vsel %vm1447, %v1449, %v1445
        %v1451 = vmul.f32 %v1436, %v1450
        %v1452 = vsub.f32 %v325, %v1451
        %v1453 = vsub.f32 %v326, %v1451
        %v1454 = vsub.f32 %v327, %v1451
        %v1455 = vsub.f32 %v328, %v1451
        %v1456 = vsub.f32 %v329, %v1451
        %v1457 = vsub.f32 %v330, %v1451
        %v1458 = vsub.f32 %v331, %v1451
        %v1459 = vsub.f32 %v332, %v1451
        %v1460 = vsub.f32 %v333, %v1451
        %v1461 = vsub.f32 %v334, %v1451
        %v1462 = vsub.f32 %v335, %v1451
        %v1463 = vsub.f32 %v336, %v1451
        %v1464 = vsub.f32 %v337, %v1451
        %v1465 = vsub.f32 %v338, %v1451
        %v1466 = vsub.f32 %v339, %v1451
        %v1467 = vsub.f32 %v340, %v1451
        %v1468 = vsub.f32 %v341, %v1451
        %v1469 = vsub.f32 %v342, %v1451
        %v1470 = vsub.f32 %v343, %v1451
        %v1471 = vsub.f32 %v344, %v1451
        %v1472 = vsub.f32 %v345, %v1451
        %v1473 = vsub.f32 %v346, %v1451
        %v1474 = vsub.f32 %v347, %v1451
        %v1475 = vsub.f32 %v348, %v1451
        %v1476 = vsub.f32 %v349, %v1451
        %v1477 = vsub.f32 %v350, %v1451
        %v1478 = vsub.f32 %v351, %v1451
        %v1479 = vsub.f32 %v352, %v1451
        %v1480 = vsub.f32 %v353, %v1451
        %v1481 = vsub.f32 %v354, %v1451
        %v1482 = vsub.f32 %v355, %v1451
        %v1483 = vsub.f32 %v356, %v1451
        %v1484 = vsub.f32 %v357, %v1451
        %v1485 = vsub.f32 %v358, %v1451
        %v1486 = vsub.f32 %v359, %v1451
        %v1487 = vsub.f32 %v360, %v1451
        %v1488 = vsub.f32 %v361, %v1451
        %v1489 = vsub.f32 %v362, %v1451
        %v1490 = vsub.f32 %v363, %v1451
        %v1491 = vsub.f32 %v364, %v1451
        %v1492 = vsub.f32 %v365, %v1451
        %v1493 = vsub.f32 %v366, %v1451
        %v1494 = vsub.f32 %v367, %v1451
        %v1495 = vsub.f32 %v368, %v1451
        %v1496 = vsub.f32 %v369, %v1451
        %v1497 = vsub.f32 %v370, %v1451
        %v1498 = vsub.f32 %v371, %v1451
        %v1499 = vsub.f32 %v372, %v1451
        %v1500 = vsub.f32 %v373, %v1451
        %v1501 = vsub.f32 %v374, %v1451
        %v1502 = vsub.f32 %v375, %v1451
        %v1503 = vsub.f32 %v376, %v1451
        %v1504 = vsub.f32 %v377, %v1451
        %v1505 = vsub.f32 %v378, %v1451
        %v1506 = vsub.f32 %v379, %v1451
        %v1507 = vsub.f32 %v380, %v1451
        %v1508 = vsub.f32 %v381, %v1451
        %v1509 = vsub.f32 %v382, %v1451
        %v1510 = vsub.f32 %v383, %v1451
        %v1511 = vsub.f32 %v384, %v1451
        %v1512 = vsub.f32 %v385, %v1451
        %v1513 = vsub.f32 %v386, %v1451
        %v1514 = vsub.f32 %v387, %v1451
        %v1515 = vsub.f32 %v388, %v1451
        %v1516 = vsub.f32 %v389, %v1451
        %v1517 = vsub.f32 %v390, %v1451
        %v1518 = vsub.f32 %v391, %v1451
        %v1519 = vsub.f32 %v392, %v1451
        %v1520 = vsub.f32 %v393, %v1451
        %v1521 = vsub.f32 %v394, %v1451
        %v1522 = vsub.f32 %v395, %v1451
        %v1523 = vsub.f32 %v396, %v1451
        %v1524 = vsub.f32 %v397, %v1451
        %v1525 = vsub.f32 %v398, %v1451
        %v1526 = vsub.f32 %v399, %v1451
        %v1527 = vsub.f32 %v400, %v1451
        %v1528 = vsub.f32 %v401, %v1451
        %v1529 = vsub.f32 %v402, %v1451
        %v1530 = vsub.f32 %v403, %v1451
        %v1531 = vsub.f32 %v404, %v1451
        %v1532 = vsub.f32 %v405, %v1451
        %v1533 = vsub.f32 %v406, %v1451
        %v1534 = vsub.f32 %v407, %v1451
        %v1535 = vsub.f32 %v408, %v1451
        %v1536 = vsub.f32 %v409, %v1451
        %v1537 = vsub.f32 %v410, %v1451
        %v1538 = vsub.f32 %v411, %v1451
        %v1539 = vsub.f32 %v412, %v1451
        %v1540 = vsub.f32 %v413, %v1451
        %v1541 = vsub.f32 %v414, %v1451
        %v1542 = vsub.f32 %v415, %v1451
        %v1543 = vsub.f32 %v416, %v1451
        %v1544 = vsub.f32 %v417, %v1451
        %v1545 = vsub.f32 %v418, %v1451
        %v1546 = vsub.f32 %v419, %v1451
        %v1547 = vsub.f32 %v420, %v1451
        %v1548 = vsub.f32 %v421, %v1451
        %v1549 = vsub.f32 %v422, %v1451
        %v1550 = vsub.f32 %v423, %v1451
        %v1551 = vsub.f32 %v424, %v1451
        %v1552 = vmul.f32 %v1452, %v425
        %v1553 = vmul.f32 %v1453, %v426
        %v1554 = vmul.f32 %v1454, %v427
        %v1555 = vmul.f32 %v1455, %v428
        %v1556 = vmul.f32 %v1456, %v429
        %v1557 = vmul.f32 %v1457, %v430
        %v1558 = vmul.f32 %v1458, %v431
        %v1559 = vmul.f32 %v1459, %v432
        %v1560 = vmul.f32 %v1460, %v433
        %v1561 = vmul.f32 %v1461, %v434
        %v1562 = vmul.f32 %v1462, %v435
        %v1563 = vmul.f32 %v1463, %v436
        %v1564 = vmul.f32 %v1464, %v437
        %v1565 = vmul.f32 %v1465, %v438
        %v1566 = vmul.f32 %v1466, %v439
        %v1567 = vmul.f32 %v1467, %v440
        %v1568 = vmul.f32 %v1468, %v441
        %v1569 = vmul.f32 %v1469, %v442
        %v1570 = vmul.f32 %v1470, %v443
        %v1571 = vmul.f32 %v1471, %v444
        %v1572 = vmul.f32 %v1472, %v445
        %v1573 = vmul.f32 %v1473, %v446
        %v1574 = vmul.f32 %v1474, %v447
        %v1575 = vmul.f32 %v1475, %v448
        %v1576 = vmul.f32 %v1476, %v449
        %v1577 = vmul.f32 %v1477, %v450
        %v1578 = vmul.f32 %v1478, %v451
        %v1579 = vmul.f32 %v1479, %v452
        %v1580 = vmul.f32 %v1480, %v453
        %v1581 = vmul.f32 %v1481, %v454
        %v1582 = vmul.f32 %v1482, %v455
        %v1583 = vmul.f32 %v1483, %v456
        %v1584 = vmul.f32 %v1484, %v457
        %v1585 = vmul.f32 %v1485, %v458
        %v1586 = vmul.f32 %v1486, %v459
        %v1587 = vmul.f32 %v1487, %v460
        %v1588 = vmul.f32 %v1488, %v461
        %v1589 = vmul.f32 %v1489, %v462
        %v1590 = vmul.f32 %v1490, %v463
        %v1591 = vmul.f32 %v1491, %v464
        %v1592 = vmul.f32 %v1492, %v465
        %v1593 = vmul.f32 %v1493, %v466
        %v1594 = vmul.f32 %v1494, %v467
        %v1595 = vmul.f32 %v1495, %v468
        %v1596 = vmul.f32 %v1496, %v469
        %v1597 = vmul.f32 %v1497, %v470
        %v1598 = vmul.f32 %v1498, %v471
        %v1599 = vmul.f32 %v1499, %v472
        %v1600 = vmul.f32 %v1500, %v473
        %v1601 = vmul.f32 %v1501, %v474
        %v1602 = vmul.f32 %v1502, %v475
        %v1603 = vmul.f32 %v1503, %v476
        %v1604 = vmul.f32 %v1504, %v477
        %v1605 = vmul.f32 %v1505, %v478
        %v1606 = vmul.f32 %v1506, %v479
        %v1607 = vmul.f32 %v1507, %v480
        %v1608 = vmul.f32 %v1508, %v481
        %v1609 = vmul.f32 %v1509, %v482
        %v1610 = vmul.f32 %v1510, %v483
        %v1611 = vmul.f32 %v1511, %v484
        %v1612 = vmul.f32 %v1512, %v485
        %v1613 = vmul.f32 %v1513, %v486
        %v1614 = vmul.f32 %v1514, %v487
        %v1615 = vmul.f32 %v1515, %v488
        %v1616 = vmul.f32 %v1516, %v489
        %v1617 = vmul.f32 %v1517, %v490
        %v1618 = vmul.f32 %v1518, %v491
        %v1619 = vmul.f32 %v1519, %v492
        %v1620 = vmul.f32 %v1520, %v493
        %v1621 = vmul.f32 %v1521, %v494
        %v1622 = vmul.f32 %v1522, %v495
        %v1623 = vmul.f32 %v1523, %v496
        %v1624 = vmul.f32 %v1524, %v497
        %v1625 = vmul.f32 %v1525, %v498
        %v1626 = vmul.f32 %v1526, %v499
        %v1627 = vmul.f32 %v1527, %v500
        %v1628 = vmul.f32 %v1528, %v501
        %v1629 = vmul.f32 %v1529, %v502
        %v1630 = vmul.f32 %v1530, %v503
        %v1631 = vmul.f32 %v1531, %v504
        %v1632 = vmul.f32 %v1532, %v505
        %v1633 = vmul.f32 %v1533, %v506
        %v1634 = vmul.f32 %v1534, %v507
        %v1635 = vmul.f32 %v1535, %v508
        %v1636 = vmul.f32 %v1536, %v509
        %v1637 = vmul.f32 %v1537, %v510
        %v1638 = vmul.f32 %v1538, %v511
        %v1639 = vmul.f32 %v1539, %v512
        %v1640 = vmul.f32 %v1540, %v513
        %v1641 = vmul.f32 %v1541, %v514
        %v1642 = vmul.f32 %v1542, %v515
        %v1643 = vmul.f32 %v1543, %v516
        %v1644 = vmul.f32 %v1544, %v517
        %v1645 = vmul.f32 %v1545, %v518
        %v1646 = vmul.f32 %v1546, %v519
        %v1647 = vmul.f32 %v1547, %v520
        %v1648 = vmul.f32 %v1548, %v521
        %v1649 = vmul.f32 %v1549, %v522
        %v1650 = vmul.f32 %v1550, %v523
        %v1651 = vmul.f32 %v1551, %v524
        %v1652 = vmul.f32 %v1552, %v1552
        %v1653 = vmul.f32 %v1553, %v1553
        %v1654 = vmul.f32 %v1554, %v1554
        %v1655 = vmul.f32 %v1555, %v1555
        %v1656 = vmul.f32 %v1556, %v1556
        %v1657 = vmul.f32 %v1557, %v1557
        %v1658 = vmul.f32 %v1558, %v1558
        %v1659 = vmul.f32 %v1559, %v1559
        %v1660 = vmul.f32 %v1560, %v1560
        %v1661 = vmul.f32 %v1561, %v1561
        %v1662 = vmul.f32 %v1562, %v1562
        %v1663 = vmul.f32 %v1563, %v1563
        %v1664 = vmul.f32 %v1564, %v1564
        %v1665 = vmul.f32 %v1565, %v1565
        %v1666 = vmul.f32 %v1566, %v1566
        %v1667 = vmul.f32 %v1567, %v1567
        %v1668 = vmul.f32 %v1568, %v1568
        %v1669 = vmul.f32 %v1569, %v1569
        %v1670 = vmul.f32 %v1570, %v1570
        %v1671 = vmul.f32 %v1571, %v1571
        %v1672 = vmul.f32 %v1572, %v1572
        %v1673 = vmul.f32 %v1573, %v1573
        %v1674 = vmul.f32 %v1574, %v1574
        %v1675 = vmul.f32 %v1575, %v1575
        %v1676 = vmul.f32 %v1576, %v1576
        %v1677 = vmul.f32 %v1577, %v1577
        %v1678 = vmul.f32 %v1578, %v1578
        %v1679 = vmul.f32 %v1579, %v1579
        %v1680 = vmul.f32 %v1580, %v1580
        %v1681 = vmul.f32 %v1581, %v1581
        %v1682 = vmul.f32 %v1582, %v1582
        %v1683 = vmul.f32 %v1583, %v1583
        %v1684 = vmul.f32 %v1584, %v1584
        %v1685 = vmul.f32 %v1585, %v1585
        %v1686 = vmul.f32 %v1586, %v1586
        %v1687 = vmul.f32 %v1587, %v1587
        %v1688 = vmul.f32 %v1588, %v1588
        %v1689 = vmul.f32 %v1589, %v1589
        %v1690 = vmul.f32 %v1590, %v1590
        %v1691 = vmul.f32 %v1591, %v1591
        %v1692 = vmul.f32 %v1592, %v1592
        %v1693 = vmul.f32 %v1593, %v1593
        %v1694 = vmul.f32 %v1594, %v1594
        %v1695 = vmul.f32 %v1595, %v1595
        %v1696 = vmul.f32 %v1596, %v1596
        %v1697 = vmul.f32 %v1597, %v1597
        %v1698 = vmul.f32 %v1598, %v1598
        %v1699 = vmul.f32 %v1599, %v1599
        %v1700 = vmul.f32 %v1600, %v1600
        %v1701 = vmul.f32 %v1601, %v1601
        %v1702 = vmul.f32 %v1602, %v1602
        %v1703 = vmul.f32 %v1603, %v1603
        %v1704 = vmul.f32 %v1604, %v1604
        %v1705 = vmul.f32 %v1605, %v1605
        %v1706 = vmul.f32 %v1606, %v1606
        %v1707 = vmul.f32 %v1607, %v1607
        %v1708 = vmul.f32 %v1608, %v1608
        %v1709 = vmul.f32 %v1609, %v1609
        %v1710 = vmul.f32 %v1610, %v1610
        %v1711 = vmul.f32 %v1611, %v1611
        %v1712 = vmul.f32 %v1612, %v1612
        %v1713 = vmul.f32 %v1613, %v1613
        %v1714 = vmul.f32 %v1614, %v1614
        %v1715 = vmul.f32 %v1615, %v1615
        %v1716 = vmul.f32 %v1616, %v1616
        %v1717 = vmul.f32 %v1617, %v1617
        %v1718 = vmul.f32 %v1618, %v1618
        %v1719 = vmul.f32 %v1619, %v1619
        %v1720 = vmul.f32 %v1620, %v1620
        %v1721 = vmul.f32 %v1621, %v1621
        %v1722 = vmul.f32 %v1622, %v1622
        %v1723 = vmul.f32 %v1623, %v1623
        %v1724 = vmul.f32 %v1624, %v1624
        %v1725 = vmul.f32 %v1625, %v1625
        %v1726 = vmul.f32 %v1626, %v1626
        %v1727 = vmul.f32 %v1627, %v1627
        %v1728 = vmul.f32 %v1628, %v1628
        %v1729 = vmul.f32 %v1629, %v1629
        %v1730 = vmul.f32 %v1630, %v1630
        %v1731 = vmul.f32 %v1631, %v1631
        %v1732 = vmul.f32 %v1632, %v1632
        %v1733 = vmul.f32 %v1633, %v1633
        %v1734 = vmul.f32 %v1634, %v1634
        %v1735 = vmul.f32 %v1635, %v1635
        %v1736 = vmul.f32 %v1636, %v1636
        %v1737 = vmul.f32 %v1637, %v1637
        %v1738 = vmul.f32 %v1638, %v1638
        %v1739 = vmul.f32 %v1639, %v1639
        %v1740 = vmul.f32 %v1640, %v1640
        %v1741 = vmul.f32 %v1641, %v1641
        %v1742 = vmul.f32 %v1642, %v1642
        %v1743 = vmul.f32 %v1643, %v1643
        %v1744 = vmul.f32 %v1644, %v1644
        %v1745 = vmul.f32 %v1645, %v1645
        %v1746 = vmul.f32 %v1646, %v1646
        %v1747 = vmul.f32 %v1647, %v1647
        %v1748 = vmul.f32 %v1648, %v1648
        %v1749 = vmul.f32 %v1649, %v1649
        %v1750 = vmul.f32 %v1650, %v1650
        %v1751 = vmul.f32 %v1651, %v1651
        %v1752 = vsel %vm525, %v1652, 0.0
        %1753 = vadd.xlane.f32.xlu0 %v1752
        %v1754 = vpop.xlane.xlu0 %1753
        %v1755 = vsel %vm525, %v1653, 0.0
        %1756 = vadd.xlane.f32.xlu0 %v1755
        %v1757 = vpop.xlane.xlu0 %1756
        %v1758 = vsel %vm525, %v1654, 0.0
        %1759 = vadd.xlane.f32.xlu0 %v1758
        %v1760 = vpop.xlane.xlu0 %1759
        %v1761 = vsel %vm525, %v1655, 0.0
        %1762 = vadd.xlane.f32.xlu0 %v1761
        %v1763 = vpop.xlane.xlu0 %1762
        %v1764 = vsel %vm525, %v1656, 0.0
        %1765 = vadd.xlane.f32.xlu0 %v1764
        %v1766 = vpop.xlane.xlu0 %1765
        %v1767 = vsel %vm525, %v1657, 0.0
        %1768 = vadd.xlane.f32.xlu0 %v1767
        %v1769 = vpop.xlane.xlu0 %1768
        %v1770 = vsel %vm525, %v1658, 0.0
        %1771 = vadd.xlane.f32.xlu0 %v1770
        %v1772 = vpop.xlane.xlu0 %1771
        %v1773 = vsel %vm525, %v1659, 0.0
        %1774 = vadd.xlane.f32.xlu0 %v1773
        %v1775 = vpop.xlane.xlu0 %1774
        %v1776 = vsel %vm525, %v1660, 0.0
        %1777 = vadd.xlane.f32.xlu0 %v1776
        %v1778 = vpop.xlane.xlu0 %1777
        %v1779 = vsel %vm525, %v1661, 0.0
        %1780 = vadd.xlane.f32.xlu0 %v1779
        %v1781 = vpop.xlane.xlu0 %1780
        %v1782 = vsel %vm525, %v1662, 0.0
        %1783 = vadd.xlane.f32.xlu0 %v1782
        %v1784 = vpop.xlane.xlu0 %1783
        %v1785 = vsel %vm525, %v1663, 0.0
        %1786 = vadd.xlane.f32.xlu0 %v1785
        %v1787 = vpop.xlane.xlu0 %1786
        %v1788 = vsel %vm525, %v1664, 0.0
        %1789 = vadd.xlane.f32.xlu0 %v1788
        %v1790 = vpop.xlane.xlu0 %1789
        %v1791 = vsel %vm525, %v1665, 0.0
        %1792 = vadd.xlane.f32.xlu0 %v1791
        %v1793 = vpop.xlane.xlu0 %1792
        %v1794 = vsel %vm525, %v1666, 0.0
        %1795 = vadd.xlane.f32.xlu0 %v1794
        %v1796 = vpop.xlane.xlu0 %1795
        %v1797 = vsel %vm525, %v1667, 0.0
        %1798 = vadd.xlane.f32.xlu0 %v1797
        %v1799 = vpop.xlane.xlu0 %1798
        %v1800 = vsel %vm525, %v1668, 0.0
        %1801 = vadd.xlane.f32.xlu0 %v1800
        %v1802 = vpop.xlane.xlu0 %1801
        %v1803 = vsel %vm525, %v1669, 0.0
        %1804 = vadd.xlane.f32.xlu0 %v1803
        %v1805 = vpop.xlane.xlu0 %1804
        %v1806 = vsel %vm525, %v1670, 0.0
        %1807 = vadd.xlane.f32.xlu0 %v1806
        %v1808 = vpop.xlane.xlu0 %1807
        %v1809 = vsel %vm525, %v1671, 0.0
        %1810 = vadd.xlane.f32.xlu0 %v1809
        %v1811 = vpop.xlane.xlu0 %1810
        %v1812 = vsel %vm525, %v1672, 0.0
        %1813 = vadd.xlane.f32.xlu0 %v1812
        %v1814 = vpop.xlane.xlu0 %1813
        %v1815 = vsel %vm525, %v1673, 0.0
        %1816 = vadd.xlane.f32.xlu0 %v1815
        %v1817 = vpop.xlane.xlu0 %1816
        %v1818 = vsel %vm525, %v1674, 0.0
        %1819 = vadd.xlane.f32.xlu0 %v1818
        %v1820 = vpop.xlane.xlu0 %1819
        %v1821 = vsel %vm525, %v1675, 0.0
        %1822 = vadd.xlane.f32.xlu0 %v1821
        %v1823 = vpop.xlane.xlu0 %1822
        %v1824 = vsel %vm525, %v1676, 0.0
        %1825 = vadd.xlane.f32.xlu0 %v1824
        %v1826 = vpop.xlane.xlu0 %1825
        %v1827 = vsel %vm525, %v1677, 0.0
        %1828 = vadd.xlane.f32.xlu0 %v1827
        %v1829 = vpop.xlane.xlu0 %1828
        %v1830 = vsel %vm525, %v1678, 0.0
        %1831 = vadd.xlane.f32.xlu0 %v1830
        %v1832 = vpop.xlane.xlu0 %1831
        %v1833 = vsel %vm525, %v1679, 0.0
        %1834 = vadd.xlane.f32.xlu0 %v1833
        %v1835 = vpop.xlane.xlu0 %1834
        %v1836 = vsel %vm525, %v1680, 0.0
        %1837 = vadd.xlane.f32.xlu0 %v1836
        %v1838 = vpop.xlane.xlu0 %1837
        %v1839 = vsel %vm525, %v1681, 0.0
        %1840 = vadd.xlane.f32.xlu0 %v1839
        %v1841 = vpop.xlane.xlu0 %1840
        %v1842 = vsel %vm525, %v1682, 0.0
        %1843 = vadd.xlane.f32.xlu0 %v1842
        %v1844 = vpop.xlane.xlu0 %1843
        %v1845 = vsel %vm525, %v1683, 0.0
        %1846 = vadd.xlane.f32.xlu0 %v1845
        %v1847 = vpop.xlane.xlu0 %1846
        %v1848 = vsel %vm525, %v1684, 0.0
        %1849 = vadd.xlane.f32.xlu0 %v1848
        %v1850 = vpop.xlane.xlu0 %1849
        %v1851 = vsel %vm525, %v1685, 0.0
        %1852 = vadd.xlane.f32.xlu0 %v1851
        %v1853 = vpop.xlane.xlu0 %1852
        %v1854 = vsel %vm525, %v1686, 0.0
        %1855 = vadd.xlane.f32.xlu0 %v1854
        %v1856 = vpop.xlane.xlu0 %1855
        %v1857 = vsel %vm525, %v1687, 0.0
        %1858 = vadd.xlane.f32.xlu0 %v1857
        %v1859 = vpop.xlane.xlu0 %1858
        %v1860 = vsel %vm525, %v1688, 0.0
        %1861 = vadd.xlane.f32.xlu0 %v1860
        %v1862 = vpop.xlane.xlu0 %1861
        %v1863 = vsel %vm525, %v1689, 0.0
        %1864 = vadd.xlane.f32.xlu0 %v1863
        %v1865 = vpop.xlane.xlu0 %1864
        %v1866 = vsel %vm525, %v1690, 0.0
        %1867 = vadd.xlane.f32.xlu0 %v1866
        %v1868 = vpop.xlane.xlu0 %1867
        %v1869 = vsel %vm525, %v1691, 0.0
        %1870 = vadd.xlane.f32.xlu0 %v1869
        %v1871 = vpop.xlane.xlu0 %1870
        %v1872 = vsel %vm525, %v1692, 0.0
        %1873 = vadd.xlane.f32.xlu0 %v1872
        %v1874 = vpop.xlane.xlu0 %1873
        %v1875 = vsel %vm525, %v1693, 0.0
        %1876 = vadd.xlane.f32.xlu0 %v1875
        %v1877 = vpop.xlane.xlu0 %1876
        %v1878 = vsel %vm525, %v1694, 0.0
        %1879 = vadd.xlane.f32.xlu0 %v1878
        %v1880 = vpop.xlane.xlu0 %1879
        %v1881 = vsel %vm525, %v1695, 0.0
        %1882 = vadd.xlane.f32.xlu0 %v1881
        %v1883 = vpop.xlane.xlu0 %1882
        %v1884 = vsel %vm525, %v1696, 0.0
        %1885 = vadd.xlane.f32.xlu0 %v1884
        %v1886 = vpop.xlane.xlu0 %1885
        %v1887 = vsel %vm525, %v1697, 0.0
        %1888 = vadd.xlane.f32.xlu0 %v1887
        %v1889 = vpop.xlane.xlu0 %1888
        %v1890 = vsel %vm525, %v1698, 0.0
        %1891 = vadd.xlane.f32.xlu0 %v1890
        %v1892 = vpop.xlane.xlu0 %1891
        %v1893 = vsel %vm525, %v1699, 0.0
        %1894 = vadd.xlane.f32.xlu0 %v1893
        %v1895 = vpop.xlane.xlu0 %1894
        %v1896 = vsel %vm525, %v1700, 0.0
        %1897 = vadd.xlane.f32.xlu0 %v1896
        %v1898 = vpop.xlane.xlu0 %1897
        %v1899 = vsel %vm525, %v1701, 0.0
        %1900 = vadd.xlane.f32.xlu0 %v1899
        %v1901 = vpop.xlane.xlu0 %1900
        %v1902 = vsel %vm525, %v1702, 0.0
        %1903 = vadd.xlane.f32.xlu0 %v1902
        %v1904 = vpop.xlane.xlu0 %1903
        %v1905 = vsel %vm525, %v1703, 0.0
        %1906 = vadd.xlane.f32.xlu0 %v1905
        %v1907 = vpop.xlane.xlu0 %1906
        %v1908 = vsel %vm525, %v1704, 0.0
        %1909 = vadd.xlane.f32.xlu0 %v1908
        %v1910 = vpop.xlane.xlu0 %1909
        %v1911 = vsel %vm525, %v1705, 0.0
        %1912 = vadd.xlane.f32.xlu0 %v1911
        %v1913 = vpop.xlane.xlu0 %1912
        %v1914 = vsel %vm525, %v1706, 0.0
        %1915 = vadd.xlane.f32.xlu0 %v1914
        %v1916 = vpop.xlane.xlu0 %1915
        %v1917 = vsel %vm525, %v1707, 0.0
        %1918 = vadd.xlane.f32.xlu0 %v1917
        %v1919 = vpop.xlane.xlu0 %1918
        %v1920 = vsel %vm525, %v1708, 0.0
        %1921 = vadd.xlane.f32.xlu0 %v1920
        %v1922 = vpop.xlane.xlu0 %1921
        %v1923 = vsel %vm525, %v1709, 0.0
        %1924 = vadd.xlane.f32.xlu0 %v1923
        %v1925 = vpop.xlane.xlu0 %1924
        %v1926 = vsel %vm525, %v1710, 0.0
        %1927 = vadd.xlane.f32.xlu0 %v1926
        %v1928 = vpop.xlane.xlu0 %1927
        %v1929 = vsel %vm525, %v1711, 0.0
        %1930 = vadd.xlane.f32.xlu0 %v1929
        %v1931 = vpop.xlane.xlu0 %1930
        %v1932 = vsel %vm525, %v1712, 0.0
        %1933 = vadd.xlane.f32.xlu0 %v1932
        %v1934 = vpop.xlane.xlu0 %1933
        %v1935 = vsel %vm525, %v1713, 0.0
        %1936 = vadd.xlane.f32.xlu0 %v1935
        %v1937 = vpop.xlane.xlu0 %1936
        %v1938 = vsel %vm525, %v1714, 0.0
        %1939 = vadd.xlane.f32.xlu0 %v1938
        %v1940 = vpop.xlane.xlu0 %1939
        %v1941 = vsel %vm525, %v1715, 0.0
        %1942 = vadd.xlane.f32.xlu0 %v1941
        %v1943 = vpop.xlane.xlu0 %1942
        %v1944 = vsel %vm525, %v1716, 0.0
        %1945 = vadd.xlane.f32.xlu0 %v1944
        %v1946 = vpop.xlane.xlu0 %1945
        %v1947 = vsel %vm525, %v1717, 0.0
        %1948 = vadd.xlane.f32.xlu0 %v1947
        %v1949 = vpop.xlane.xlu0 %1948
        %v1950 = vsel %vm525, %v1718, 0.0
        %1951 = vadd.xlane.f32.xlu0 %v1950
        %v1952 = vpop.xlane.xlu0 %1951
        %v1953 = vsel %vm525, %v1719, 0.0
        %1954 = vadd.xlane.f32.xlu0 %v1953
        %v1955 = vpop.xlane.xlu0 %1954
        %v1956 = vsel %vm525, %v1720, 0.0
        %1957 = vadd.xlane.f32.xlu0 %v1956
        %v1958 = vpop.xlane.xlu0 %1957
        %v1959 = vsel %vm525, %v1721, 0.0
        %1960 = vadd.xlane.f32.xlu0 %v1959
        %v1961 = vpop.xlane.xlu0 %1960
        %v1962 = vsel %vm525, %v1722, 0.0
        %1963 = vadd.xlane.f32.xlu0 %v1962
        %v1964 = vpop.xlane.xlu0 %1963
        %v1965 = vsel %vm525, %v1723, 0.0
        %1966 = vadd.xlane.f32.xlu0 %v1965
        %v1967 = vpop.xlane.xlu0 %1966
        %v1968 = vsel %vm525, %v1724, 0.0
        %1969 = vadd.xlane.f32.xlu0 %v1968
        %v1970 = vpop.xlane.xlu0 %1969
        %v1971 = vsel %vm525, %v1725, 0.0
        %1972 = vadd.xlane.f32.xlu0 %v1971
        %v1973 = vpop.xlane.xlu0 %1972
        %v1974 = vsel %vm525, %v1726, 0.0
        %1975 = vadd.xlane.f32.xlu0 %v1974
        %v1976 = vpop.xlane.xlu0 %1975
        %v1977 = vsel %vm525, %v1727, 0.0
        %1978 = vadd.xlane.f32.xlu0 %v1977
        %v1979 = vpop.xlane.xlu0 %1978
        %v1980 = vsel %vm525, %v1728, 0.0
        %1981 = vadd.xlane.f32.xlu0 %v1980
        %v1982 = vpop.xlane.xlu0 %1981
        %v1983 = vsel %vm525, %v1729, 0.0
        %1984 = vadd.xlane.f32.xlu0 %v1983
        %v1985 = vpop.xlane.xlu0 %1984
        %v1986 = vsel %vm525, %v1730, 0.0
        %1987 = vadd.xlane.f32.xlu0 %v1986
        %v1988 = vpop.xlane.xlu0 %1987
        %v1989 = vsel %vm525, %v1731, 0.0
        %1990 = vadd.xlane.f32.xlu0 %v1989
        %v1991 = vpop.xlane.xlu0 %1990
        %v1992 = vsel %vm525, %v1732, 0.0
        %1993 = vadd.xlane.f32.xlu0 %v1992
        %v1994 = vpop.xlane.xlu0 %1993
        %v1995 = vsel %vm525, %v1733, 0.0
        %1996 = vadd.xlane.f32.xlu0 %v1995
        %v1997 = vpop.xlane.xlu0 %1996
        %v1998 = vsel %vm525, %v1734, 0.0
        %1999 = vadd.xlane.f32.xlu0 %v1998
        %v2000 = vpop.xlane.xlu0 %1999
        %v2001 = vsel %vm525, %v1735, 0.0
        %2002 = vadd.xlane.f32.xlu0 %v2001
        %v2003 = vpop.xlane.xlu0 %2002
        %v2004 = vsel %vm525, %v1736, 0.0
        %2005 = vadd.xlane.f32.xlu0 %v2004
        %v2006 = vpop.xlane.xlu0 %2005
        %v2007 = vsel %vm525, %v1737, 0.0
        %2008 = vadd.xlane.f32.xlu0 %v2007
        %v2009 = vpop.xlane.xlu0 %2008
        %v2010 = vsel %vm525, %v1738, 0.0
        %2011 = vadd.xlane.f32.xlu0 %v2010
        %v2012 = vpop.xlane.xlu0 %2011
        %v2013 = vsel %vm525, %v1739, 0.0
        %2014 = vadd.xlane.f32.xlu0 %v2013
        %v2015 = vpop.xlane.xlu0 %2014
        %v2016 = vsel %vm525, %v1740, 0.0
        %2017 = vadd.xlane.f32.xlu0 %v2016
        %v2018 = vpop.xlane.xlu0 %2017
        %v2019 = vsel %vm525, %v1741, 0.0
        %2020 = vadd.xlane.f32.xlu0 %v2019
        %v2021 = vpop.xlane.xlu0 %2020
        %v2022 = vsel %vm525, %v1742, 0.0
        %2023 = vadd.xlane.f32.xlu0 %v2022
        %v2024 = vpop.xlane.xlu0 %2023
        %v2025 = vsel %vm525, %v1743, 0.0
        %2026 = vadd.xlane.f32.xlu0 %v2025
        %v2027 = vpop.xlane.xlu0 %2026
        %v2028 = vsel %vm525, %v1744, 0.0
        %2029 = vadd.xlane.f32.xlu0 %v2028
        %v2030 = vpop.xlane.xlu0 %2029
        %v2031 = vsel %vm525, %v1745, 0.0
        %2032 = vadd.xlane.f32.xlu0 %v2031
        %v2033 = vpop.xlane.xlu0 %2032
        %v2034 = vsel %vm525, %v1746, 0.0
        %2035 = vadd.xlane.f32.xlu0 %v2034
        %v2036 = vpop.xlane.xlu0 %2035
        %v2037 = vsel %vm525, %v1747, 0.0
        %2038 = vadd.xlane.f32.xlu0 %v2037
        %v2039 = vpop.xlane.xlu0 %2038
        %v2040 = vsel %vm525, %v1748, 0.0
        %2041 = vadd.xlane.f32.xlu0 %v2040
        %v2042 = vpop.xlane.xlu0 %2041
        %v2043 = vsel %vm525, %v1749, 0.0
        %2044 = vadd.xlane.f32.xlu0 %v2043
        %v2045 = vpop.xlane.xlu0 %2044
        %v2046 = vsel %vm525, %v1750, 0.0
        %2047 = vadd.xlane.f32.xlu0 %v2046
        %v2048 = vpop.xlane.xlu0 %2047
        %v2049 = vsel %vm525, %v1751, 0.0
        %2050 = vadd.xlane.f32.xlu0 %v2049
        %v2051 = vpop.xlane.xlu0 %2050
        %v2052 = vadd.f32 %v1754, %v1757
        %v2053 = vadd.f32 %v2052, %v1760
        %v2054 = vadd.f32 %v2053, %v1763
        %v2055 = vadd.f32 %v2054, %v1766
        %v2056 = vadd.f32 %v2055, %v1769
        %v2057 = vadd.f32 %v2056, %v1772
        %v2058 = vadd.f32 %v2057, %v1775
        %v2059 = vadd.f32 %v2058, %v1778
        %v2060 = vadd.f32 %v2059, %v1781
        %v2061 = vadd.f32 %v2060, %v1784
        %v2062 = vadd.f32 %v2061, %v1787
        %v2063 = vadd.f32 %v2062, %v1790
        %v2064 = vadd.f32 %v2063, %v1793
        %v2065 = vadd.f32 %v2064, %v1796
        %v2066 = vadd.f32 %v2065, %v1799
        %v2067 = vadd.f32 %v2066, %v1802
        %v2068 = vadd.f32 %v2067, %v1805
        %v2069 = vadd.f32 %v2068, %v1808
        %v2070 = vadd.f32 %v2069, %v1811
        %v2071 = vadd.f32 %v2070, %v1814
        %v2072 = vadd.f32 %v2071, %v1817
        %v2073 = vadd.f32 %v2072, %v1820
        %v2074 = vadd.f32 %v2073, %v1823
        %v2075 = vadd.f32 %v2074, %v1826
        %v2076 = vadd.f32 %v2075, %v1829
        %v2077 = vadd.f32 %v2076, %v1832
        %v2078 = vadd.f32 %v2077, %v1835
        %v2079 = vadd.f32 %v2078, %v1838
        %v2080 = vadd.f32 %v2079, %v1841
        %v2081 = vadd.f32 %v2080, %v1844
        %v2082 = vadd.f32 %v2081, %v1847
        %v2083 = vadd.f32 %v2082, %v1850
        %v2084 = vadd.f32 %v2083, %v1853
        %v2085 = vadd.f32 %v2084, %v1856
        %v2086 = vadd.f32 %v2085, %v1859
        %v2087 = vadd.f32 %v2086, %v1862
        %v2088 = vadd.f32 %v2087, %v1865
        %v2089 = vadd.f32 %v2088, %v1868
        %v2090 = vadd.f32 %v2089, %v1871
        %v2091 = vadd.f32 %v2090, %v1874
        %v2092 = vadd.f32 %v2091, %v1877
        %v2093 = vadd.f32 %v2092, %v1880
        %v2094 = vadd.f32 %v2093, %v1883
        %v2095 = vadd.f32 %v2094, %v1886
        %v2096 = vadd.f32 %v2095, %v1889
        %v2097 = vadd.f32 %v2096, %v1892
        %v2098 = vadd.f32 %v2097, %v1895
        %v2099 = vadd.f32 %v2098, %v1898
        %v2100 = vadd.f32 %v2099, %v1901
        %v2101 = vadd.f32 %v2100, %v1904
        %v2102 = vadd.f32 %v2101, %v1907
        %v2103 = vadd.f32 %v2102, %v1910
        %v2104 = vadd.f32 %v2103, %v1913
        %v2105 = vadd.f32 %v2104, %v1916
        %v2106 = vadd.f32 %v2105, %v1919
        %v2107 = vadd.f32 %v2106, %v1922
        %v2108 = vadd.f32 %v2107, %v1925
        %v2109 = vadd.f32 %v2108, %v1928
        %v2110 = vadd.f32 %v2109, %v1931
        %v2111 = vadd.f32 %v2110, %v1934
        %v2112 = vadd.f32 %v2111, %v1937
        %v2113 = vadd.f32 %v2112, %v1940
        %v2114 = vadd.f32 %v2113, %v1943
        %v2115 = vadd.f32 %v2114, %v1946
        %v2116 = vadd.f32 %v2115, %v1949
        %v2117 = vadd.f32 %v2116, %v1952
        %v2118 = vadd.f32 %v2117, %v1955
        %v2119 = vadd.f32 %v2118, %v1958
        %v2120 = vadd.f32 %v2119, %v1961
        %v2121 = vadd.f32 %v2120, %v1964
        %v2122 = vadd.f32 %v2121, %v1967
        %v2123 = vadd.f32 %v2122, %v1970
        %v2124 = vadd.f32 %v2123, %v1973
        %v2125 = vadd.f32 %v2124, %v1976
        %v2126 = vadd.f32 %v2125, %v1979
        %v2127 = vadd.f32 %v2126, %v1982
        %v2128 = vadd.f32 %v2127, %v1985
        %v2129 = vadd.f32 %v2128, %v1988
        %v2130 = vadd.f32 %v2129, %v1991
        %v2131 = vadd.f32 %v2130, %v1994
        %v2132 = vadd.f32 %v2131, %v1997
        %v2133 = vadd.f32 %v2132, %v2000
        %v2134 = vadd.f32 %v2133, %v2003
        %v2135 = vadd.f32 %v2134, %v2006
        %v2136 = vadd.f32 %v2135, %v2009
        %v2137 = vadd.f32 %v2136, %v2012
        %v2138 = vadd.f32 %v2137, %v2015
        %v2139 = vadd.f32 %v2138, %v2018
        %v2140 = vadd.f32 %v2139, %v2021
        %v2141 = vadd.f32 %v2140, %v2024
        %v2142 = vadd.f32 %v2141, %v2027
        %v2143 = vadd.f32 %v2142, %v2030
        %v2144 = vadd.f32 %v2143, %v2033
        %v2145 = vadd.f32 %v2144, %v2036
        %v2146 = vadd.f32 %v2145, %v2039
        %v2147 = vadd.f32 %v2146, %v2042
        %v2148 = vadd.f32 %v2147, %v2045
        %v2149 = vadd.f32 %v2148, %v2048
        %v2150 = vadd.f32 %v2149, %v2051
        %v2151 = vrot.slane %v2150, 4
        %v2152 = vadd.f32 %v2150, %v2151
        %v2153 = vrot.slane %v2152, 2
        %v2154 = vadd.f32 %v2152, %v2153
        %v2155 = vrot.slane %v2154, 1
        %v2156 = vadd.f32 %v2154, %v2155
        %v2157 = vmul.f32 %v2156, %v1450
        %v2158 = vadd.f32 %v2157, 1e-07
        %v2159 = vrsqrt.pop %v2158
        %v2160 = vmul.f32 %v2159, %v2158
        %v2161 = vmul.f32 %v2160, %v2159
        %v2162 = vmul.f32 0.5, %v2161
        %v2163 = vsub.f32 1.5, %v2162
        %v2164 = vmul.f32 %v2159, %v2163
        %vm2165 = vweird.f32 %v2158
        %vm2166 = vweird.f32 %v2159
        %vm2167 = vmor %vm2165, %vm2166
        %v2168 = vsel %vm2167, %v2159, %v2164
        %v2169 = vmul.f32 %v1552, %v2168
        %v2170 = vmul.f32 %v1553, %v2168
        %v2171 = vmul.f32 %v1554, %v2168
        %v2172 = vmul.f32 %v1555, %v2168
        %v2173 = vmul.f32 %v1556, %v2168
        %v2174 = vmul.f32 %v1557, %v2168
        %v2175 = vmul.f32 %v1558, %v2168
        %v2176 = vmul.f32 %v1559, %v2168
        %v2177 = vmul.f32 %v1560, %v2168
        %v2178 = vmul.f32 %v1561, %v2168
        %v2179 = vmul.f32 %v1562, %v2168
        %v2180 = vmul.f32 %v1563, %v2168
        %v2181 = vmul.f32 %v1564, %v2168
        %v2182 = vmul.f32 %v1565, %v2168
        %v2183 = vmul.f32 %v1566, %v2168
        %v2184 = vmul.f32 %v1567, %v2168
        %v2185 = vmul.f32 %v1568, %v2168
        %v2186 = vmul.f32 %v1569, %v2168
        %v2187 = vmul.f32 %v1570, %v2168
        %v2188 = vmul.f32 %v1571, %v2168
        %v2189 = vmul.f32 %v1572, %v2168
        %v2190 = vmul.f32 %v1573, %v2168
        %v2191 = vmul.f32 %v1574, %v2168
        %v2192 = vmul.f32 %v1575, %v2168
        %v2193 = vmul.f32 %v1576, %v2168
        %v2194 = vmul.f32 %v1577, %v2168
        %v2195 = vmul.f32 %v1578, %v2168
        %v2196 = vmul.f32 %v1579, %v2168
        %v2197 = vmul.f32 %v1580, %v2168
        %v2198 = vmul.f32 %v1581, %v2168
        %v2199 = vmul.f32 %v1582, %v2168
        %v2200 = vmul.f32 %v1583, %v2168
        %v2201 = vmul.f32 %v1584, %v2168
        %v2202 = vmul.f32 %v1585, %v2168
        %v2203 = vmul.f32 %v1586, %v2168
        %v2204 = vmul.f32 %v1587, %v2168
        %v2205 = vmul.f32 %v1588, %v2168
        %v2206 = vmul.f32 %v1589, %v2168
        %v2207 = vmul.f32 %v1590, %v2168
        %v2208 = vmul.f32 %v1591, %v2168
        %v2209 = vmul.f32 %v1592, %v2168
        %v2210 = vmul.f32 %v1593, %v2168
        %v2211 = vmul.f32 %v1594, %v2168
        %v2212 = vmul.f32 %v1595, %v2168
        %v2213 = vmul.f32 %v1596, %v2168
        %v2214 = vmul.f32 %v1597, %v2168
        %v2215 = vmul.f32 %v1598, %v2168
        %v2216 = vmul.f32 %v1599, %v2168
        %v2217 = vmul.f32 %v1600, %v2168
        %v2218 = vmul.f32 %v1601, %v2168
        %v2219 = vmul.f32 %v1602, %v2168
        %v2220 = vmul.f32 %v1603, %v2168
        %v2221 = vmul.f32 %v1604, %v2168
        %v2222 = vmul.f32 %v1605, %v2168
        %v2223 = vmul.f32 %v1606, %v2168
        %v2224 = vmul.f32 %v1607, %v2168
        %v2225 = vmul.f32 %v1608, %v2168
        %v2226 = vmul.f32 %v1609, %v2168
        %v2227 = vmul.f32 %v1610, %v2168
        %v2228 = vmul.f32 %v1611, %v2168
        %v2229 = vmul.f32 %v1612, %v2168
        %v2230 = vmul.f32 %v1613, %v2168
        %v2231 = vmul.f32 %v1614, %v2168
        %v2232 = vmul.f32 %v1615, %v2168
        %v2233 = vmul.f32 %v1616, %v2168
        %v2234 = vmul.f32 %v1617, %v2168
        %v2235 = vmul.f32 %v1618, %v2168
        %v2236 = vmul.f32 %v1619, %v2168
        %v2237 = vmul.f32 %v1620, %v2168
        %v2238 = vmul.f32 %v1621, %v2168
        %v2239 = vmul.f32 %v1622, %v2168
        %v2240 = vmul.f32 %v1623, %v2168
        %v2241 = vmul.f32 %v1624, %v2168
        %v2242 = vmul.f32 %v1625, %v2168
        %v2243 = vmul.f32 %v1626, %v2168
        %v2244 = vmul.f32 %v1627, %v2168
        %v2245 = vmul.f32 %v1628, %v2168
        %v2246 = vmul.f32 %v1629, %v2168
        %v2247 = vmul.f32 %v1630, %v2168
        %v2248 = vmul.f32 %v1631, %v2168
        %v2249 = vmul.f32 %v1632, %v2168
        %v2250 = vmul.f32 %v1633, %v2168
        %v2251 = vmul.f32 %v1634, %v2168
        %v2252 = vmul.f32 %v1635, %v2168
        %v2253 = vmul.f32 %v1636, %v2168
        %v2254 = vmul.f32 %v1637, %v2168
        %v2255 = vmul.f32 %v1638, %v2168
        %v2256 = vmul.f32 %v1639, %v2168
        %v2257 = vmul.f32 %v1640, %v2168
        %v2258 = vmul.f32 %v1641, %v2168
        %v2259 = vmul.f32 %v1642, %v2168
        %v2260 = vmul.f32 %v1643, %v2168
        %v2261 = vmul.f32 %v1644, %v2168
        %v2262 = vmul.f32 %v1645, %v2168
        %v2263 = vmul.f32 %v1646, %v2168
        %v2264 = vmul.f32 %v1647, %v2168
        %v2265 = vmul.f32 %v1648, %v2168
        %v2266 = vmul.f32 %v1649, %v2168
        %v2267 = vmul.f32 %v1650, %v2168
        %v2268 = vmul.f32 %v1651, %v2168
        %vm2369 = vcmask 1046528
        %v2370 = vrot.slane %v2169, 1
        %v2371 = vrot.slane %v2170, 1
        %v2372 = vsel %vm2369, %v2370, %v2371
        %v2373 = vrot.slane %v2171, 1
        %v2374 = vsel %vm2369, %v2371, %v2373
        %v2375 = vrot.slane %v2172, 1
        %v2376 = vsel %vm2369, %v2373, %v2375
        %v2377 = vrot.slane %v2173, 1
        %v2378 = vsel %vm2369, %v2375, %v2377
        %v2379 = vrot.slane %v2174, 1
        %v2380 = vsel %vm2369, %v2377, %v2379
        %v2381 = vrot.slane %v2175, 1
        %v2382 = vsel %vm2369, %v2379, %v2381
        %v2383 = vrot.slane %v2176, 1
        %v2384 = vsel %vm2369, %v2381, %v2383
        %v2385 = vrot.slane %v2177, 1
        %v2386 = vsel %vm2369, %v2383, %v2385
        %v2387 = vrot.slane %v2178, 1
        %v2388 = vsel %vm2369, %v2385, %v2387
        %v2389 = vrot.slane %v2179, 1
        %v2390 = vsel %vm2369, %v2387, %v2389
        %v2391 = vrot.slane %v2180, 1
        %v2392 = vsel %vm2369, %v2389, %v2391
        %v2393 = vrot.slane %v2181, 1
        %v2394 = vsel %vm2369, %v2391, %v2393
        %v2395 = vrot.slane %v2182, 1
        %v2396 = vsel %vm2369, %v2393, %v2395
        %v2397 = vrot.slane %v2183, 1
        %v2398 = vsel %vm2369, %v2395, %v2397
        %v2399 = vrot.slane %v2184, 1
        %v2400 = vsel %vm2369, %v2397, %v2399
        %v2401 = vrot.slane %v2185, 1
        %v2402 = vsel %vm2369, %v2399, %v2401
        %v2403 = vrot.slane %v2186, 1
        %v2404 = vsel %vm2369, %v2401, %v2403
        %v2405 = vrot.slane %v2187, 1
        %v2406 = vsel %vm2369, %v2403, %v2405
        %v2407 = vrot.slane %v2188, 1
        %v2408 = vsel %vm2369, %v2405, %v2407
        %v2409 = vrot.slane %v2189, 1
        %v2410 = vsel %vm2369, %v2407, %v2409
        %v2411 = vrot.slane %v2190, 1
        %v2412 = vsel %vm2369, %v2409, %v2411
        %v2413 = vrot.slane %v2191, 1
        %v2414 = vsel %vm2369, %v2411, %v2413
        %v2415 = vrot.slane %v2192, 1
        %v2416 = vsel %vm2369, %v2413, %v2415
        %v2417 = vrot.slane %v2193, 1
        %v2418 = vsel %vm2369, %v2415, %v2417
        %v2419 = vrot.slane %v2194, 1
        %v2420 = vsel %vm2369, %v2417, %v2419
        %v2421 = vrot.slane %v2195, 1
        %v2422 = vsel %vm2369, %v2419, %v2421
        %v2423 = vrot.slane %v2196, 1
        %v2424 = vsel %vm2369, %v2421, %v2423
        %v2425 = vrot.slane %v2197, 1
        %v2426 = vsel %vm2369, %v2423, %v2425
        %v2427 = vrot.slane %v2198, 1
        %v2428 = vsel %vm2369, %v2425, %v2427
        %v2429 = vrot.slane %v2199, 1
        %v2430 = vsel %vm2369, %v2427, %v2429
        %v2431 = vrot.slane %v2200, 1
        %v2432 = vsel %vm2369, %v2429, %v2431
        %v2433 = vrot.slane %v2201, 1
        %v2434 = vsel %vm2369, %v2431, %v2433
        %v2435 = vrot.slane %v2202, 1
        %v2436 = vsel %vm2369, %v2433, %v2435
        %v2437 = vrot.slane %v2203, 1
        %v2438 = vsel %vm2369, %v2435, %v2437
        %v2439 = vrot.slane %v2204, 1
        %v2440 = vsel %vm2369, %v2437, %v2439
        %v2441 = vrot.slane %v2205, 1
        %v2442 = vsel %vm2369, %v2439, %v2441
        %v2443 = vrot.slane %v2206, 1
        %v2444 = vsel %vm2369, %v2441, %v2443
        %v2445 = vrot.slane %v2207, 1
        %v2446 = vsel %vm2369, %v2443, %v2445
        %v2447 = vrot.slane %v2208, 1
        %v2448 = vsel %vm2369, %v2445, %v2447
        %v2449 = vrot.slane %v2209, 1
        %v2450 = vsel %vm2369, %v2447, %v2449
        %v2451 = vrot.slane %v2210, 1
        %v2452 = vsel %vm2369, %v2449, %v2451
        %v2453 = vrot.slane %v2211, 1
        %v2454 = vsel %vm2369, %v2451, %v2453
        %v2455 = vrot.slane %v2212, 1
        %v2456 = vsel %vm2369, %v2453, %v2455
        %v2457 = vrot.slane %v2213, 1
        %v2458 = vsel %vm2369, %v2455, %v2457
        %v2459 = vrot.slane %v2214, 1
        %v2460 = vsel %vm2369, %v2457, %v2459
        %v2461 = vrot.slane %v2215, 1
        %v2462 = vsel %vm2369, %v2459, %v2461
        %v2463 = vrot.slane %v2216, 1
        %v2464 = vsel %vm2369, %v2461, %v2463
        %v2465 = vrot.slane %v2217, 1
        %v2466 = vsel %vm2369, %v2463, %v2465
        %v2467 = vrot.slane %v2218, 1
        %v2468 = vsel %vm2369, %v2465, %v2467
        %v2469 = vrot.slane %v2219, 1
        %v2470 = vsel %vm2369, %v2467, %v2469
        %v2471 = vrot.slane %v2220, 1
        %v2472 = vsel %vm2369, %v2469, %v2471
        %v2473 = vrot.slane %v2221, 1
        %v2474 = vsel %vm2369, %v2471, %v2473
        %v2475 = vrot.slane %v2222, 1
        %v2476 = vsel %vm2369, %v2473, %v2475
        %v2477 = vrot.slane %v2223, 1
        %v2478 = vsel %vm2369, %v2475, %v2477
        %v2479 = vrot.slane %v2224, 1
        %v2480 = vsel %vm2369, %v2477, %v2479
        %v2481 = vrot.slane %v2225, 1
        %v2482 = vsel %vm2369, %v2479, %v2481
        %v2483 = vrot.slane %v2226, 1
        %v2484 = vsel %vm2369, %v2481, %v2483
        %v2485 = vrot.slane %v2227, 1
        %v2486 = vsel %vm2369, %v2483, %v2485
        %v2487 = vrot.slane %v2228, 1
        %v2488 = vsel %vm2369, %v2485, %v2487
        %v2489 = vrot.slane %v2229, 1
        %v2490 = vsel %vm2369, %v2487, %v2489
        %v2491 = vrot.slane %v2230, 1
        %v2492 = vsel %vm2369, %v2489, %v2491
        %v2493 = vrot.slane %v2231, 1
        %v2494 = vsel %vm2369, %v2491, %v2493
        %v2495 = vrot.slane %v2232, 1
        %v2496 = vsel %vm2369, %v2493, %v2495
        %v2497 = vrot.slane %v2233, 1
        %v2498 = vsel %vm2369, %v2495, %v2497
        %v2499 = vrot.slane %v2234, 1
        %v2500 = vsel %vm2369, %v2497, %v2499
        %v2501 = vrot.slane %v2235, 1
        %v2502 = vsel %vm2369, %v2499, %v2501
        %v2503 = vrot.slane %v2236, 1
        %v2504 = vsel %vm2369, %v2501, %v2503
        %v2505 = vrot.slane %v2237, 1
        %v2506 = vsel %vm2369, %v2503, %v2505
        %v2507 = vrot.slane %v2238, 1
        %v2508 = vsel %vm2369, %v2505, %v2507
        %v2509 = vrot.slane %v2239, 1
        %v2510 = vsel %vm2369, %v2507, %v2509
        %v2511 = vrot.slane %v2240, 1
        %v2512 = vsel %vm2369, %v2509, %v2511
        %v2513 = vrot.slane %v2241, 1
        %v2514 = vsel %vm2369, %v2511, %v2513
        %v2515 = vrot.slane %v2242, 1
        %v2516 = vsel %vm2369, %v2513, %v2515
        %v2517 = vrot.slane %v2243, 1
        %v2518 = vsel %vm2369, %v2515, %v2517
        %v2519 = vrot.slane %v2244, 1
        %v2520 = vsel %vm2369, %v2517, %v2519
        %v2521 = vrot.slane %v2245, 1
        %v2522 = vsel %vm2369, %v2519, %v2521
        %v2523 = vrot.slane %v2246, 1
        %v2524 = vsel %vm2369, %v2521, %v2523
        %v2525 = vrot.slane %v2247, 1
        %v2526 = vsel %vm2369, %v2523, %v2525
        %v2527 = vrot.slane %v2248, 1
        %v2528 = vsel %vm2369, %v2525, %v2527
        %v2529 = vrot.slane %v2249, 1
        %v2530 = vsel %vm2369, %v2527, %v2529
        %v2531 = vrot.slane %v2250, 1
        %v2532 = vsel %vm2369, %v2529, %v2531
        %v2533 = vrot.slane %v2251, 1
        %v2534 = vsel %vm2369, %v2531, %v2533
        %v2535 = vrot.slane %v2252, 1
        %v2536 = vsel %vm2369, %v2533, %v2535
        %v2537 = vrot.slane %v2253, 1
        %v2538 = vsel %vm2369, %v2535, %v2537
        %v2539 = vrot.slane %v2254, 1
        %v2540 = vsel %vm2369, %v2537, %v2539
        %v2541 = vrot.slane %v2255, 1
        %v2542 = vsel %vm2369, %v2539, %v2541
        %v2543 = vrot.slane %v2256, 1
        %v2544 = vsel %vm2369, %v2541, %v2543
        %v2545 = vrot.slane %v2257, 1
        %v2546 = vsel %vm2369, %v2543, %v2545
        %v2547 = vrot.slane %v2258, 1
        %v2548 = vsel %vm2369, %v2545, %v2547
        %v2549 = vrot.slane %v2259, 1
        %v2550 = vsel %vm2369, %v2547, %v2549
        %v2551 = vrot.slane %v2260, 1
        %v2552 = vsel %vm2369, %v2549, %v2551
        %v2553 = vrot.slane %v2261, 1
        %v2554 = vsel %vm2369, %v2551, %v2553
        %v2555 = vrot.slane %v2262, 1
        %v2556 = vsel %vm2369, %v2553, %v2555
        %v2557 = vrot.slane %v2263, 1
        %v2558 = vsel %vm2369, %v2555, %v2557
        %v2559 = vrot.slane %v2264, 1
        %v2560 = vsel %vm2369, %v2557, %v2559
        %v2561 = vrot.slane %v2265, 1
        %v2562 = vsel %vm2369, %v2559, %v2561
        %v2563 = vrot.slane %v2266, 1
        %v2564 = vsel %vm2369, %v2561, %v2563
        %v2565 = vrot.slane %v2267, 1
        %v2566 = vsel %vm2369, %v2563, %v2565
        %v2567 = vrot.slane %v2268, 1
        %v2568 = vsel %vm2369, %v2565, %v2567
        %2569 = vrot.lane.b32.xlu0 %v2372, 5
        %v2570 = vpop.permute.xlu0 %2569
        %2571 = vrot.lane.b32.xlu0 %v2374, 5
        %v2572 = vpop.permute.xlu0 %2571
        %2573 = vrot.lane.b32.xlu0 %v2376, 5
        %v2574 = vpop.permute.xlu0 %2573
        %2575 = vrot.lane.b32.xlu0 %v2378, 5
        %v2576 = vpop.permute.xlu0 %2575
        %2577 = vrot.lane.b32.xlu0 %v2380, 5
        %v2578 = vpop.permute.xlu0 %2577
        %2579 = vrot.lane.b32.xlu0 %v2382, 5
        %v2580 = vpop.permute.xlu0 %2579
        %2581 = vrot.lane.b32.xlu0 %v2384, 5
        %v2582 = vpop.permute.xlu0 %2581
        %2583 = vrot.lane.b32.xlu0 %v2386, 5
        %v2584 = vpop.permute.xlu0 %2583
        %2585 = vrot.lane.b32.xlu0 %v2388, 5
        %v2586 = vpop.permute.xlu0 %2585
        %2587 = vrot.lane.b32.xlu0 %v2390, 5
        %v2588 = vpop.permute.xlu0 %2587
        %2589 = vrot.lane.b32.xlu0 %v2392, 5
        %v2590 = vpop.permute.xlu0 %2589
        %2591 = vrot.lane.b32.xlu0 %v2394, 5
        %v2592 = vpop.permute.xlu0 %2591
        %2593 = vrot.lane.b32.xlu0 %v2396, 5
        %v2594 = vpop.permute.xlu0 %2593
        %2595 = vrot.lane.b32.xlu0 %v2398, 5
        %v2596 = vpop.permute.xlu0 %2595
        %2597 = vrot.lane.b32.xlu0 %v2400, 5
        %v2598 = vpop.permute.xlu0 %2597
        %2599 = vrot.lane.b32.xlu0 %v2402, 5
        %v2600 = vpop.permute.xlu0 %2599
        %2601 = vrot.lane.b32.xlu0 %v2404, 5
        %v2602 = vpop.permute.xlu0 %2601
        %2603 = vrot.lane.b32.xlu0 %v2406, 5
        %v2604 = vpop.permute.xlu0 %2603
        %2605 = vrot.lane.b32.xlu0 %v2408, 5
        %v2606 = vpop.permute.xlu0 %2605
        %2607 = vrot.lane.b32.xlu0 %v2410, 5
        %v2608 = vpop.permute.xlu0 %2607
        %2609 = vrot.lane.b32.xlu0 %v2412, 5
        %v2610 = vpop.permute.xlu0 %2609
        %2611 = vrot.lane.b32.xlu0 %v2414, 5
        %v2612 = vpop.permute.xlu0 %2611
        %2613 = vrot.lane.b32.xlu0 %v2416, 5
        %v2614 = vpop.permute.xlu0 %2613
        %2615 = vrot.lane.b32.xlu0 %v2418, 5
        %v2616 = vpop.permute.xlu0 %2615
        %2617 = vrot.lane.b32.xlu0 %v2420, 5
        %v2618 = vpop.permute.xlu0 %2617
        %2619 = vrot.lane.b32.xlu0 %v2422, 5
        %v2620 = vpop.permute.xlu0 %2619
        %2621 = vrot.lane.b32.xlu0 %v2424, 5
        %v2622 = vpop.permute.xlu0 %2621
        %2623 = vrot.lane.b32.xlu0 %v2426, 5
        %v2624 = vpop.permute.xlu0 %2623
        %2625 = vrot.lane.b32.xlu0 %v2428, 5
        %v2626 = vpop.permute.xlu0 %2625
        %2627 = vrot.lane.b32.xlu0 %v2430, 5
        %v2628 = vpop.permute.xlu0 %2627
        %2629 = vrot.lane.b32.xlu0 %v2432, 5
        %v2630 = vpop.permute.xlu0 %2629
        %2631 = vrot.lane.b32.xlu0 %v2434, 5
        %v2632 = vpop.permute.xlu0 %2631
        %2633 = vrot.lane.b32.xlu0 %v2436, 5
        %v2634 = vpop.permute.xlu0 %2633
        %2635 = vrot.lane.b32.xlu0 %v2438, 5
        %v2636 = vpop.permute.xlu0 %2635
        %2637 = vrot.lane.b32.xlu0 %v2440, 5
        %v2638 = vpop.permute.xlu0 %2637
        %2639 = vrot.lane.b32.xlu0 %v2442, 5
        %v2640 = vpop.permute.xlu0 %2639
        %2641 = vrot.lane.b32.xlu0 %v2444, 5
        %v2642 = vpop.permute.xlu0 %2641
        %2643 = vrot.lane.b32.xlu0 %v2446, 5
        %v2644 = vpop.permute.xlu0 %2643
        %2645 = vrot.lane.b32.xlu0 %v2448, 5
        %v2646 = vpop.permute.xlu0 %2645
        %2647 = vrot.lane.b32.xlu0 %v2450, 5
        %v2648 = vpop.permute.xlu0 %2647
        %2649 = vrot.lane.b32.xlu0 %v2452, 5
        %v2650 = vpop.permute.xlu0 %2649
        %2651 = vrot.lane.b32.xlu0 %v2454, 5
        %v2652 = vpop.permute.xlu0 %2651
        %2653 = vrot.lane.b32.xlu0 %v2456, 5
        %v2654 = vpop.permute.xlu0 %2653
        %2655 = vrot.lane.b32.xlu0 %v2458, 5
        %v2656 = vpop.permute.xlu0 %2655
        %2657 = vrot.lane.b32.xlu0 %v2460, 5
        %v2658 = vpop.permute.xlu0 %2657
        %2659 = vrot.lane.b32.xlu0 %v2462, 5
        %v2660 = vpop.permute.xlu0 %2659
        %2661 = vrot.lane.b32.xlu0 %v2464, 5
        %v2662 = vpop.permute.xlu0 %2661
        %2663 = vrot.lane.b32.xlu0 %v2466, 5
        %v2664 = vpop.permute.xlu0 %2663
        %2665 = vrot.lane.b32.xlu0 %v2468, 5
        %v2666 = vpop.permute.xlu0 %2665
        %2667 = vrot.lane.b32.xlu0 %v2470, 5
        %v2668 = vpop.permute.xlu0 %2667
        %2669 = vrot.lane.b32.xlu0 %v2472, 5
        %v2670 = vpop.permute.xlu0 %2669
        %2671 = vrot.lane.b32.xlu0 %v2474, 5
        %v2672 = vpop.permute.xlu0 %2671
        %2673 = vrot.lane.b32.xlu0 %v2476, 5
        %v2674 = vpop.permute.xlu0 %2673
        %2675 = vrot.lane.b32.xlu0 %v2478, 5
        %v2676 = vpop.permute.xlu0 %2675
        %2677 = vrot.lane.b32.xlu0 %v2480, 5
        %v2678 = vpop.permute.xlu0 %2677
        %2679 = vrot.lane.b32.xlu0 %v2482, 5
        %v2680 = vpop.permute.xlu0 %2679
        %2681 = vrot.lane.b32.xlu0 %v2484, 5
        %v2682 = vpop.permute.xlu0 %2681
        %2683 = vrot.lane.b32.xlu0 %v2486, 5
        %v2684 = vpop.permute.xlu0 %2683
        %2685 = vrot.lane.b32.xlu0 %v2488, 5
        %v2686 = vpop.permute.xlu0 %2685
        %2687 = vrot.lane.b32.xlu0 %v2490, 5
        %v2688 = vpop.permute.xlu0 %2687
        %2689 = vrot.lane.b32.xlu0 %v2492, 5
        %v2690 = vpop.permute.xlu0 %2689
        %2691 = vrot.lane.b32.xlu0 %v2494, 5
        %v2692 = vpop.permute.xlu0 %2691
        %2693 = vrot.lane.b32.xlu0 %v2496, 5
        %v2694 = vpop.permute.xlu0 %2693
        %2695 = vrot.lane.b32.xlu0 %v2498, 5
        %v2696 = vpop.permute.xlu0 %2695
        %2697 = vrot.lane.b32.xlu0 %v2500, 5
        %v2698 = vpop.permute.xlu0 %2697
        %2699 = vrot.lane.b32.xlu0 %v2502, 5
        %v2700 = vpop.permute.xlu0 %2699
        %2701 = vrot.lane.b32.xlu0 %v2504, 5
        %v2702 = vpop.permute.xlu0 %2701
        %2703 = vrot.lane.b32.xlu0 %v2506, 5
        %v2704 = vpop.permute.xlu0 %2703
        %2705 = vrot.lane.b32.xlu0 %v2508, 5
        %v2706 = vpop.permute.xlu0 %2705
        %2707 = vrot.lane.b32.xlu0 %v2510, 5
        %v2708 = vpop.permute.xlu0 %2707
        %2709 = vrot.lane.b32.xlu0 %v2512, 5
        %v2710 = vpop.permute.xlu0 %2709
        %2711 = vrot.lane.b32.xlu0 %v2514, 5
        %v2712 = vpop.permute.xlu0 %2711
        %2713 = vrot.lane.b32.xlu0 %v2516, 5
        %v2714 = vpop.permute.xlu0 %2713
        %2715 = vrot.lane.b32.xlu0 %v2518, 5
        %v2716 = vpop.permute.xlu0 %2715
        %2717 = vrot.lane.b32.xlu0 %v2520, 5
        %v2718 = vpop.permute.xlu0 %2717
        %2719 = vrot.lane.b32.xlu0 %v2522, 5
        %v2720 = vpop.permute.xlu0 %2719
        %2721 = vrot.lane.b32.xlu0 %v2524, 5
        %v2722 = vpop.permute.xlu0 %2721
        %2723 = vrot.lane.b32.xlu0 %v2526, 5
        %v2724 = vpop.permute.xlu0 %2723
        %2725 = vrot.lane.b32.xlu0 %v2528, 5
        %v2726 = vpop.permute.xlu0 %2725
        %2727 = vrot.lane.b32.xlu0 %v2530, 5
        %v2728 = vpop.permute.xlu0 %2727
        %2729 = vrot.lane.b32.xlu0 %v2532, 5
        %v2730 = vpop.permute.xlu0 %2729
        %2731 = vrot.lane.b32.xlu0 %v2534, 5
        %v2732 = vpop.permute.xlu0 %2731
        %2733 = vrot.lane.b32.xlu0 %v2536, 5
        %v2734 = vpop.permute.xlu0 %2733
        %2735 = vrot.lane.b32.xlu0 %v2538, 5
        %v2736 = vpop.permute.xlu0 %2735
        %2737 = vrot.lane.b32.xlu0 %v2540, 5
        %v2738 = vpop.permute.xlu0 %2737
        %2739 = vrot.lane.b32.xlu0 %v2542, 5
        %v2740 = vpop.permute.xlu0 %2739
        %2741 = vrot.lane.b32.xlu0 %v2544, 5
        %v2742 = vpop.permute.xlu0 %2741
        %2743 = vrot.lane.b32.xlu0 %v2546, 5
        %v2744 = vpop.permute.xlu0 %2743
        %2745 = vrot.lane.b32.xlu0 %v2548, 5
        %v2746 = vpop.permute.xlu0 %2745
        %2747 = vrot.lane.b32.xlu0 %v2550, 5
        %v2748 = vpop.permute.xlu0 %2747
        %2749 = vrot.lane.b32.xlu0 %v2552, 5
        %v2750 = vpop.permute.xlu0 %2749
        %2751 = vrot.lane.b32.xlu0 %v2554, 5
        %v2752 = vpop.permute.xlu0 %2751
        %2753 = vrot.lane.b32.xlu0 %v2556, 5
        %v2754 = vpop.permute.xlu0 %2753
        %2755 = vrot.lane.b32.xlu0 %v2558, 5
        %v2756 = vpop.permute.xlu0 %2755
        %2757 = vrot.lane.b32.xlu0 %v2560, 5
        %v2758 = vpop.permute.xlu0 %2757
        %2759 = vrot.lane.b32.xlu0 %v2562, 5
        %v2760 = vpop.permute.xlu0 %2759
        %2761 = vrot.lane.b32.xlu0 %v2564, 5
        %v2762 = vpop.permute.xlu0 %2761
        %2763 = vrot.lane.b32.xlu0 %v2566, 5
        %v2764 = vpop.permute.xlu0 %2763
        %2765 = vrot.lane.b32.xlu0 %v2568, 5
        %v2766 = vpop.permute.xlu0 %2765
        %2767 = vrot.lane.b32.xlu0 %v2567, 5
        %v2768 = vpop.permute.xlu0 %2767
        %v2869 = vsel %vm525, %v2169, %v2570
        %v2870 = vsel %vm525, %v2170, %v2572
        %v2871 = vsel %vm525, %v2171, %v2574
        %v2872 = vsel %vm525, %v2172, %v2576
        %v2873 = vsel %vm525, %v2173, %v2578
        %v2874 = vsel %vm525, %v2174, %v2580
        %v2875 = vsel %vm525, %v2175, %v2582
        %v2876 = vsel %vm525, %v2176, %v2584
        %v2877 = vsel %vm525, %v2177, %v2586
        %v2878 = vsel %vm525, %v2178, %v2588
        %v2879 = vsel %vm525, %v2179, %v2590
        %v2880 = vsel %vm525, %v2180, %v2592
        %v2881 = vsel %vm525, %v2181, %v2594
        %v2882 = vsel %vm525, %v2182, %v2596
        %v2883 = vsel %vm525, %v2183, %v2598
        %v2884 = vsel %vm525, %v2184, %v2600
        %v2885 = vsel %vm525, %v2185, %v2602
        %v2886 = vsel %vm525, %v2186, %v2604
        %v2887 = vsel %vm525, %v2187, %v2606
        %v2888 = vsel %vm525, %v2188, %v2608
        %v2889 = vsel %vm525, %v2189, %v2610
        %v2890 = vsel %vm525, %v2190, %v2612
        %v2891 = vsel %vm525, %v2191, %v2614
        %v2892 = vsel %vm525, %v2192, %v2616
        %v2893 = vsel %vm525, %v2193, %v2618
        %v2894 = vsel %vm525, %v2194, %v2620
        %v2895 = vsel %vm525, %v2195, %v2622
        %v2896 = vsel %vm525, %v2196, %v2624
        %v2897 = vsel %vm525, %v2197, %v2626
        %v2898 = vsel %vm525, %v2198, %v2628
        %v2899 = vsel %vm525, %v2199, %v2630
        %v2900 = vsel %vm525, %v2200, %v2632
        %v2901 = vsel %vm525, %v2201, %v2634
        %v2902 = vsel %vm525, %v2202, %v2636
        %v2903 = vsel %vm525, %v2203, %v2638
        %v2904 = vsel %vm525, %v2204, %v2640
        %v2905 = vsel %vm525, %v2205, %v2642
        %v2906 = vsel %vm525, %v2206, %v2644
        %v2907 = vsel %vm525, %v2207, %v2646
        %v2908 = vsel %vm525, %v2208, %v2648
        %v2909 = vsel %vm525, %v2209, %v2650
        %v2910 = vsel %vm525, %v2210, %v2652
        %v2911 = vsel %vm525, %v2211, %v2654
        %v2912 = vsel %vm525, %v2212, %v2656
        %v2913 = vsel %vm525, %v2213, %v2658
        %v2914 = vsel %vm525, %v2214, %v2660
        %v2915 = vsel %vm525, %v2215, %v2662
        %v2916 = vsel %vm525, %v2216, %v2664
        %v2917 = vsel %vm525, %v2217, %v2666
        %v2918 = vsel %vm525, %v2218, %v2668
        %v2919 = vsel %vm525, %v2219, %v2670
        %v2920 = vsel %vm525, %v2220, %v2672
        %v2921 = vsel %vm525, %v2221, %v2674
        %v2922 = vsel %vm525, %v2222, %v2676
        %v2923 = vsel %vm525, %v2223, %v2678
        %v2924 = vsel %vm525, %v2224, %v2680
        %v2925 = vsel %vm525, %v2225, %v2682
        %v2926 = vsel %vm525, %v2226, %v2684
        %v2927 = vsel %vm525, %v2227, %v2686
        %v2928 = vsel %vm525, %v2228, %v2688
        %v2929 = vsel %vm525, %v2229, %v2690
        %v2930 = vsel %vm525, %v2230, %v2692
        %v2931 = vsel %vm525, %v2231, %v2694
        %v2932 = vsel %vm525, %v2232, %v2696
        %v2933 = vsel %vm525, %v2233, %v2698
        %v2934 = vsel %vm525, %v2234, %v2700
        %v2935 = vsel %vm525, %v2235, %v2702
        %v2936 = vsel %vm525, %v2236, %v2704
        %v2937 = vsel %vm525, %v2237, %v2706
        %v2938 = vsel %vm525, %v2238, %v2708
        %v2939 = vsel %vm525, %v2239, %v2710
        %v2940 = vsel %vm525, %v2240, %v2712
        %v2941 = vsel %vm525, %v2241, %v2714
        %v2942 = vsel %vm525, %v2242, %v2716
        %v2943 = vsel %vm525, %v2243, %v2718
        %v2944 = vsel %vm525, %v2244, %v2720
        %v2945 = vsel %vm525, %v2245, %v2722
        %v2946 = vsel %vm525, %v2246, %v2724
        %v2947 = vsel %vm525, %v2247, %v2726
        %v2948 = vsel %vm525, %v2248, %v2728
        %v2949 = vsel %vm525, %v2249, %v2730
        %v2950 = vsel %vm525, %v2250, %v2732
        %v2951 = vsel %vm525, %v2251, %v2734
        %v2952 = vsel %vm525, %v2252, %v2736
        %v2953 = vsel %vm525, %v2253, %v2738
        %v2954 = vsel %vm525, %v2254, %v2740
        %v2955 = vsel %vm525, %v2255, %v2742
        %v2956 = vsel %vm525, %v2256, %v2744
        %v2957 = vsel %vm525, %v2257, %v2746
        %v2958 = vsel %vm525, %v2258, %v2748
        %v2959 = vsel %vm525, %v2259, %v2750
        %v2960 = vsel %vm525, %v2260, %v2752
        %v2961 = vsel %vm525, %v2261, %v2754
        %v2962 = vsel %vm525, %v2262, %v2756
        %v2963 = vsel %vm525, %v2263, %v2758
        %v2964 = vsel %vm525, %v2264, %v2760
        %v2965 = vsel %vm525, %v2265, %v2762
        %v2966 = vsel %vm525, %v2266, %v2764
        %v2967 = vsel %vm525, %v2267, %v2766
        %v2968 = vsel %vm525, %v2268, %v2768
        %v2969 = vpack.c.bf16 %v2870, %v2869
        %v2970 = vpack.c.bf16 %v2872, %v2871
        %v2971 = vpack.c.bf16 %v2874, %v2873
        %v2972 = vpack.c.bf16 %v2876, %v2875
        %v2973 = vpack.c.bf16 %v2878, %v2877
        %v2974 = vpack.c.bf16 %v2880, %v2879
        %v2975 = vpack.c.bf16 %v2882, %v2881
        %v2976 = vpack.c.bf16 %v2884, %v2883
        %v2977 = vpack.c.bf16 %v2886, %v2885
        %v2978 = vpack.c.bf16 %v2888, %v2887
        %v2979 = vpack.c.bf16 %v2890, %v2889
        %v2980 = vpack.c.bf16 %v2892, %v2891
        %v2981 = vpack.c.bf16 %v2894, %v2893
        %v2982 = vpack.c.bf16 %v2896, %v2895
        %v2983 = vpack.c.bf16 %v2898, %v2897
        %v2984 = vpack.c.bf16 %v2900, %v2899
        %v2985 = vpack.c.bf16 %v2902, %v2901
        %v2986 = vpack.c.bf16 %v2904, %v2903
        %v2987 = vpack.c.bf16 %v2906, %v2905
        %v2988 = vpack.c.bf16 %v2908, %v2907
        %v2989 = vpack.c.bf16 %v2910, %v2909
        %v2990 = vpack.c.bf16 %v2912, %v2911
        %v2991 = vpack.c.bf16 %v2914, %v2913
        %v2992 = vpack.c.bf16 %v2916, %v2915
        %v2993 = vpack.c.bf16 %v2918, %v2917
        %v2994 = vpack.c.bf16 %v2920, %v2919
        %v2995 = vpack.c.bf16 %v2922, %v2921
        %v2996 = vpack.c.bf16 %v2924, %v2923
        %v2997 = vpack.c.bf16 %v2926, %v2925
        %v2998 = vpack.c.bf16 %v2928, %v2927
        %v2999 = vpack.c.bf16 %v2930, %v2929
        %v3000 = vpack.c.bf16 %v2932, %v2931
        %v3001 = vpack.c.bf16 %v2934, %v2933
        %v3002 = vpack.c.bf16 %v2936, %v2935
        %v3003 = vpack.c.bf16 %v2938, %v2937
        %v3004 = vpack.c.bf16 %v2940, %v2939
        %v3005 = vpack.c.bf16 %v2942, %v2941
        %v3006 = vpack.c.bf16 %v2944, %v2943
        %v3007 = vpack.c.bf16 %v2946, %v2945
        %v3008 = vpack.c.bf16 %v2948, %v2947
        %v3009 = vpack.c.bf16 %v2950, %v2949
        %v3010 = vpack.c.bf16 %v2952, %v2951
        %v3011 = vpack.c.bf16 %v2954, %v2953
        %v3012 = vpack.c.bf16 %v2956, %v2955
        %v3013 = vpack.c.bf16 %v2958, %v2957
        %v3014 = vpack.c.bf16 %v2960, %v2959
        %v3015 = vpack.c.bf16 %v2962, %v2961
        %v3016 = vpack.c.bf16 %v2964, %v2963
        %v3017 = vpack.c.bf16 %v2966, %v2965
        %v3018 = vpack.c.bf16 %v2968, %v2967
        %v3019 = vld [vmem:[%s2] sm:$0xf]
        %v3020 = vld [vmem:[%s2 + $0x4] sm:$0x1]
        %v3023 = vunpack.c.l.b16 %v3019
        %v3024 = vunpack.c.l.b16 %v3020
        %v3025 = vpack.c.b16 %v3024, %v3023
        %vm3026 = vcmask 80896
        %v3028 = vsel %vm3026, %v2969, 0
        %v3031 = vsel %vm3026, %v2970, 0
        %v3034 = vsel %vm3026, %v2971, 0
        %v3037 = vsel %vm3026, %v2972, 0
        %v3040 = vsel %vm3026, %v2973, 0
        %v3043 = vsel %vm3026, %v2974, 0
        %v3046 = vsel %vm3026, %v2975, 0
        %v3049 = vsel %vm3026, %v2976, 0
        %v3052 = vsel %vm3026, %v2977, 0
        %v3055 = vsel %vm3026, %v2978, 0
        %v3058 = vsel %vm3026, %v2979, 0
        %v3061 = vsel %vm3026, %v2980, 0
        %v3064 = vsel %vm3026, %v2981, 0
        %v3067 = vsel %vm3026, %v2982, 0
        %v3070 = vsel %vm3026, %v2983, 0
        %v3073 = vsel %vm3026, %v2984, 0
        %v3076 = vsel %vm3026, %v2985, 0
        %v3079 = vsel %vm3026, %v2986, 0
        %v3082 = vsel %vm3026, %v2987, 0
        %v3085 = vsel %vm3026, %v2988, 0
        %v3088 = vsel %vm3026, %v2989, 0
        %v3091 = vsel %vm3026, %v2990, 0
        %v3094 = vsel %vm3026, %v2991, 0
        %v3097 = vsel %vm3026, %v2992, 0
        %v3100 = vsel %vm3026, %v2993, 0
        %v3103 = vsel %vm3026, %v2994, 0
        %v3106 = vsel %vm3026, %v2995, 0
        %v3109 = vsel %vm3026, %v2996, 0
        %v3112 = vsel %vm3026, %v2997, 0
        %v3115 = vsel %vm3026, %v2998, 0
        %v3118 = vsel %vm3026, %v2999, 0
        %v3121 = vsel %vm3026, %v3000, 0
        %v3124 = vsel %vm3026, %v3001, 0
        %v3127 = vsel %vm3026, %v3002, 0
        %v3130 = vsel %vm3026, %v3003, 0
        %v3133 = vsel %vm3026, %v3004, 0
        %v3136 = vsel %vm3026, %v3005, 0
        %v3139 = vsel %vm3026, %v3006, 0
        %v3142 = vsel %vm3026, %v3007, 0
        %v3145 = vsel %vm3026, %v3008, 0
        %v3148 = vsel %vm3026, %v3009, 0
        %v3151 = vsel %vm3026, %v3010, 0
        %v3154 = vsel %vm3026, %v3011, 0
        %v3157 = vsel %vm3026, %v3012, 0
        %v3160 = vsel %vm3026, %v3013, 0
        %v3163 = vsel %vm3026, %v3014, 0
        %v3166 = vsel %vm3026, %v3015, 0
        %v3169 = vsel %vm3026, %v3016, 0
        %v3172 = vsel %vm3026, %v3017, 0
        %v3175 = vsel %vm3026, %v3018, 0
        %vm3177 = vcmask 1044480
        %v3179 = vsel %vm3177, %v3025, 0
        %3181 = vmatpush.bf16.msra.mxu0 0
        %3182 = vmatpush.bf16.msra.mxu0 0
        %3183 = vmatpush.bf16.msra.mxu0 0
        %3184 = vmatpush.bf16.msra.mxu0 0
        %3185 = vmatpush.bf16.msra.mxu0 0
        %3186 = vmatpush.bf16.msra.mxu0 0
        %3187 = vmatpush.bf16.msra.mxu0 0
        %3188 = vmatpush.bf16.msra.mxu0 %v3179
        %3189 = vmatmul.bf16.gmra.mxu0 %v3028
        %v3190 = vpop.f32.mrf.mxu0
        %v3191 = vadd.f32 0.0, %v3190
        %v3192 = vpop.f32.mrf.mxu0
        %v3193 = vadd.f32 0.0, %v3192
        %3194 = vmatmul.bf16.gmra.mxu0 %v3031
        %v3195 = vpop.f32.mrf.mxu0
        %v3196 = vadd.f32 0.0, %v3195
        %v3197 = vpop.f32.mrf.mxu0
        %v3198 = vadd.f32 0.0, %v3197
        %3199 = vmatmul.bf16.gmra.mxu0 %v3034
        %v3200 = vpop.f32.mrf.mxu0
        %v3201 = vadd.f32 0.0, %v3200
        %v3202 = vpop.f32.mrf.mxu0
        %v3203 = vadd.f32 0.0, %v3202
        %3204 = vmatmul.bf16.gmra.mxu0 %v3037
        %v3205 = vpop.f32.mrf.mxu0
        %v3206 = vadd.f32 0.0, %v3205
        %v3207 = vpop.f32.mrf.mxu0
        %v3208 = vadd.f32 0.0, %v3207
        %3209 = vmatmul.bf16.gmra.mxu0 %v3040
        %v3210 = vpop.f32.mrf.mxu0
        %v3211 = vadd.f32 0.0, %v3210
        %v3212 = vpop.f32.mrf.mxu0
        %v3213 = vadd.f32 0.0, %v3212
        %3214 = vmatmul.bf16.gmra.mxu0 %v3043
        %v3215 = vpop.f32.mrf.mxu0
        %v3216 = vadd.f32 0.0, %v3215
        %v3217 = vpop.f32.mrf.mxu0
        %v3218 = vadd.f32 0.0, %v3217
        %3219 = vmatmul.bf16.gmra.mxu0 %v3046
        %v3220 = vpop.f32.mrf.mxu0
        %v3221 = vadd.f32 0.0, %v3220
        %v3222 = vpop.f32.mrf.mxu0
        %v3223 = vadd.f32 0.0, %v3222
        %3224 = vmatmul.bf16.gmra.mxu0 %v3049
        %v3225 = vpop.f32.mrf.mxu0
        %v3226 = vadd.f32 0.0, %v3225
        %v3227 = vpop.f32.mrf.mxu0
        %v3228 = vadd.f32 0.0, %v3227
        %3229 = vmatmul.bf16.gmra.mxu0 %v3052
        %v3230 = vpop.f32.mrf.mxu0
        %v3231 = vadd.f32 0.0, %v3230
        %v3232 = vpop.f32.mrf.mxu0
        %v3233 = vadd.f32 0.0, %v3232
        %3234 = vmatmul.bf16.gmra.mxu0 %v3055
        %v3235 = vpop.f32.mrf.mxu0
        %v3236 = vadd.f32 0.0, %v3235
        %v3237 = vpop.f32.mrf.mxu0
        %v3238 = vadd.f32 0.0, %v3237
        %3239 = vmatmul.bf16.gmra.mxu0 %v3058
        %v3240 = vpop.f32.mrf.mxu0
        %v3241 = vadd.f32 0.0, %v3240
        %v3242 = vpop.f32.mrf.mxu0
        %v3243 = vadd.f32 0.0, %v3242
        %3244 = vmatmul.bf16.gmra.mxu0 %v3061
        %v3245 = vpop.f32.mrf.mxu0
        %v3246 = vadd.f32 0.0, %v3245
        %v3247 = vpop.f32.mrf.mxu0
        %v3248 = vadd.f32 0.0, %v3247
        %3249 = vmatmul.bf16.gmra.mxu0 %v3064
        %v3250 = vpop.f32.mrf.mxu0
        %v3251 = vadd.f32 0.0, %v3250
        %v3252 = vpop.f32.mrf.mxu0
        %v3253 = vadd.f32 0.0, %v3252
        %3254 = vmatmul.bf16.gmra.mxu0 %v3067
        %v3255 = vpop.f32.mrf.mxu0
        %v3256 = vadd.f32 0.0, %v3255
        %v3257 = vpop.f32.mrf.mxu0
        %v3258 = vadd.f32 0.0, %v3257
        %3259 = vmatmul.bf16.gmra.mxu0 %v3070
        %v3260 = vpop.f32.mrf.mxu0
        %v3261 = vadd.f32 0.0, %v3260
        %v3262 = vpop.f32.mrf.mxu0
        %v3263 = vadd.f32 0.0, %v3262
        %3264 = vmatmul.bf16.gmra.mxu0 %v3073
        %v3265 = vpop.f32.mrf.mxu0
        %v3266 = vadd.f32 0.0, %v3265
        %v3267 = vpop.f32.mrf.mxu0
        %v3268 = vadd.f32 0.0, %v3267
        %3269 = vmatmul.bf16.gmra.mxu0 %v3076
        %v3270 = vpop.f32.mrf.mxu0
        %v3271 = vadd.f32 0.0, %v3270
        %v3272 = vpop.f32.mrf.mxu0
        %v3273 = vadd.f32 0.0, %v3272
        %3274 = vmatmul.bf16.gmra.mxu0 %v3079
        %v3275 = vpop.f32.mrf.mxu0
        %v3276 = vadd.f32 0.0, %v3275
        %v3277 = vpop.f32.mrf.mxu0
        %v3278 = vadd.f32 0.0, %v3277
        %3279 = vmatmul.bf16.gmra.mxu0 %v3082
        %v3280 = vpop.f32.mrf.mxu0
        %v3281 = vadd.f32 0.0, %v3280
        %v3282 = vpop.f32.mrf.mxu0
        %v3283 = vadd.f32 0.0, %v3282
        %3284 = vmatmul.bf16.gmra.mxu0 %v3085
        %v3285 = vpop.f32.mrf.mxu0
        %v3286 = vadd.f32 0.0, %v3285
        %v3287 = vpop.f32.mrf.mxu0
        %v3288 = vadd.f32 0.0, %v3287
        %3289 = vmatmul.bf16.gmra.mxu0 %v3088
        %v3290 = vpop.f32.mrf.mxu0
        %v3291 = vadd.f32 0.0, %v3290
        %v3292 = vpop.f32.mrf.mxu0
        %v3293 = vadd.f32 0.0, %v3292
        %3294 = vmatmul.bf16.gmra.mxu0 %v3091
        %v3295 = vpop.f32.mrf.mxu0
        %v3296 = vadd.f32 0.0, %v3295
        %v3297 = vpop.f32.mrf.mxu0
        %v3298 = vadd.f32 0.0, %v3297
        %3299 = vmatmul.bf16.gmra.mxu0 %v3094
        %v3300 = vpop.f32.mrf.mxu0
        %v3301 = vadd.f32 0.0, %v3300
        %v3302 = vpop.f32.mrf.mxu0
        %v3303 = vadd.f32 0.0, %v3302
        %3304 = vmatmul.bf16.gmra.mxu0 %v3097
        %v3305 = vpop.f32.mrf.mxu0
        %v3306 = vadd.f32 0.0, %v3305
        %v3307 = vpop.f32.mrf.mxu0
        %v3308 = vadd.f32 0.0, %v3307
        %3309 = vmatmul.bf16.gmra.mxu0 %v3100
        %v3310 = vpop.f32.mrf.mxu0
        %v3311 = vadd.f32 0.0, %v3310
        %v3312 = vpop.f32.mrf.mxu0
        %v3313 = vadd.f32 0.0, %v3312
        %3314 = vmatmul.bf16.gmra.mxu0 %v3103
        %v3315 = vpop.f32.mrf.mxu0
        %v3316 = vadd.f32 0.0, %v3315
        %v3317 = vpop.f32.mrf.mxu0
        %v3318 = vadd.f32 0.0, %v3317
        %3319 = vmatmul.bf16.gmra.mxu0 %v3106
        %v3320 = vpop.f32.mrf.mxu0
        %v3321 = vadd.f32 0.0, %v3320
        %v3322 = vpop.f32.mrf.mxu0
        %v3323 = vadd.f32 0.0, %v3322
        %3324 = vmatmul.bf16.gmra.mxu0 %v3109
        %v3325 = vpop.f32.mrf.mxu0
        %v3326 = vadd.f32 0.0, %v3325
        %v3327 = vpop.f32.mrf.mxu0
        %v3328 = vadd.f32 0.0, %v3327
        %3329 = vmatmul.bf16.gmra.mxu0 %v3112
        %v3330 = vpop.f32.mrf.mxu0
        %v3331 = vadd.f32 0.0, %v3330
        %v3332 = vpop.f32.mrf.mxu0
        %v3333 = vadd.f32 0.0, %v3332
        %3334 = vmatmul.bf16.gmra.mxu0 %v3115
        %v3335 = vpop.f32.mrf.mxu0
        %v3336 = vadd.f32 0.0, %v3335
        %v3337 = vpop.f32.mrf.mxu0
        %v3338 = vadd.f32 0.0, %v3337
        %3339 = vmatmul.bf16.gmra.mxu0 %v3118
        %v3340 = vpop.f32.mrf.mxu0
        %v3341 = vadd.f32 0.0, %v3340
        %v3342 = vpop.f32.mrf.mxu0
        %v3343 = vadd.f32 0.0, %v3342
        %3344 = vmatmul.bf16.gmra.mxu0 %v3121
        %v3345 = vpop.f32.mrf.mxu0
        %v3346 = vadd.f32 0.0, %v3345
        %v3347 = vpop.f32.mrf.mxu0
        %v3348 = vadd.f32 0.0, %v3347
        %3349 = vmatmul.bf16.gmra.mxu0 %v3124
        %v3350 = vpop.f32.mrf.mxu0
        %v3351 = vadd.f32 0.0, %v3350
        %v3352 = vpop.f32.mrf.mxu0
        %v3353 = vadd.f32 0.0, %v3352
        %3354 = vmatmul.bf16.gmra.mxu0 %v3127
        %v3355 = vpop.f32.mrf.mxu0
        %v3356 = vadd.f32 0.0, %v3355
        %v3357 = vpop.f32.mrf.mxu0
        %v3358 = vadd.f32 0.0, %v3357
        %3359 = vmatmul.bf16.gmra.mxu0 %v3130
        %v3360 = vpop.f32.mrf.mxu0
        %v3361 = vadd.f32 0.0, %v3360
        %v3362 = vpop.f32.mrf.mxu0
        %v3363 = vadd.f32 0.0, %v3362
        %3364 = vmatmul.bf16.gmra.mxu0 %v3133
        %v3365 = vpop.f32.mrf.mxu0
        %v3366 = vadd.f32 0.0, %v3365
        %v3367 = vpop.f32.mrf.mxu0
        %v3368 = vadd.f32 0.0, %v3367
        %3369 = vmatmul.bf16.gmra.mxu0 %v3136
        %v3370 = vpop.f32.mrf.mxu0
        %v3371 = vadd.f32 0.0, %v3370
        %v3372 = vpop.f32.mrf.mxu0
        %v3373 = vadd.f32 0.0, %v3372
        %3374 = vmatmul.bf16.gmra.mxu0 %v3139
        %v3375 = vpop.f32.mrf.mxu0
        %v3376 = vadd.f32 0.0, %v3375
        %v3377 = vpop.f32.mrf.mxu0
        %v3378 = vadd.f32 0.0, %v3377
        %3379 = vmatmul.bf16.gmra.mxu0 %v3142
        %v3380 = vpop.f32.mrf.mxu0
        %v3381 = vadd.f32 0.0, %v3380
        %v3382 = vpop.f32.mrf.mxu0
        %v3383 = vadd.f32 0.0, %v3382
        %3384 = vmatmul.bf16.gmra.mxu0 %v3145
        %v3385 = vpop.f32.mrf.mxu0
        %v3386 = vadd.f32 0.0, %v3385
        %v3387 = vpop.f32.mrf.mxu0
        %v3388 = vadd.f32 0.0, %v3387
        %3389 = vmatmul.bf16.gmra.mxu0 %v3148
        %v3390 = vpop.f32.mrf.mxu0
        %v3391 = vadd.f32 0.0, %v3390
        %v3392 = vpop.f32.mrf.mxu0
        %v3393 = vadd.f32 0.0, %v3392
        %3394 = vmatmul.bf16.gmra.mxu0 %v3151
        %v3395 = vpop.f32.mrf.mxu0
        %v3396 = vadd.f32 0.0, %v3395
        %v3397 = vpop.f32.mrf.mxu0
        %v3398 = vadd.f32 0.0, %v3397
        %3399 = vmatmul.bf16.gmra.mxu0 %v3154
        %v3400 = vpop.f32.mrf.mxu0
        %v3401 = vadd.f32 0.0, %v3400
        %v3402 = vpop.f32.mrf.mxu0
        %v3403 = vadd.f32 0.0, %v3402
        %3404 = vmatmul.bf16.gmra.mxu0 %v3157
        %v3405 = vpop.f32.mrf.mxu0
        %v3406 = vadd.f32 0.0, %v3405
        %v3407 = vpop.f32.mrf.mxu0
        %v3408 = vadd.f32 0.0, %v3407
        %3409 = vmatmul.bf16.gmra.mxu0 %v3160
        %v3410 = vpop.f32.mrf.mxu0
        %v3411 = vadd.f32 0.0, %v3410
        %v3412 = vpop.f32.mrf.mxu0
        %v3413 = vadd.f32 0.0, %v3412
        %3414 = vmatmul.bf16.gmra.mxu0 %v3163
        %v3415 = vpop.f32.mrf.mxu0
        %v3416 = vadd.f32 0.0, %v3415
        %v3417 = vpop.f32.mrf.mxu0
        %v3418 = vadd.f32 0.0, %v3417
        %3419 = vmatmul.bf16.gmra.mxu0 %v3166
        %v3420 = vpop.f32.mrf.mxu0
        %v3421 = vadd.f32 0.0, %v3420
        %v3422 = vpop.f32.mrf.mxu0
        %v3423 = vadd.f32 0.0, %v3422
        %3424 = vmatmul.bf16.gmra.mxu0 %v3169
        %v3425 = vpop.f32.mrf.mxu0
        %v3426 = vadd.f32 0.0, %v3425
        %v3427 = vpop.f32.mrf.mxu0
        %v3428 = vadd.f32 0.0, %v3427
        %3429 = vmatmul.bf16.gmra.mxu0 %v3172
        %v3430 = vpop.f32.mrf.mxu0
        %v3431 = vadd.f32 0.0, %v3430
        %v3432 = vpop.f32.mrf.mxu0
        %v3433 = vadd.f32 0.0, %v3432
        %3434 = vmatmul.bf16.gmra.mxu0 %v3175
        %v3435 = vpop.f32.mrf.mxu0
        %v3436 = vadd.f32 0.0, %v3435
        %v3437 = vpop.f32.mrf.mxu0
        %v3438 = vadd.f32 0.0, %v3437
        %3439 = vdwg.mxu0
        %vm3440 = vcmask 261120
        %v3441 = vsel %vm3440, %v3191, 0.0
        %v3442 = vsel %vm3440, %v3193, 0.0
        %v3443 = vadd.f32 %v3441, %v3442
        %v3444 = vsel %vm3440, %v3196, 0.0
        %v3445 = vadd.f32 %v3443, %v3444
        %v3446 = vsel %vm3440, %v3198, 0.0
        %v3447 = vadd.f32 %v3445, %v3446
        %v3448 = vsel %vm3440, %v3201, 0.0
        %v3449 = vadd.f32 %v3447, %v3448
        %v3450 = vsel %vm3440, %v3203, 0.0
        %v3451 = vadd.f32 %v3449, %v3450
        %v3452 = vsel %vm3440, %v3206, 0.0
        %v3453 = vadd.f32 %v3451, %v3452
        %v3454 = vsel %vm3440, %v3208, 0.0
        %v3455 = vadd.f32 %v3453, %v3454
        %v3456 = vsel %vm3440, %v3211, 0.0
        %v3457 = vadd.f32 %v3455, %v3456
        %v3458 = vsel %vm3440, %v3213, 0.0
        %v3459 = vadd.f32 %v3457, %v3458
        %v3460 = vsel %vm3440, %v3216, 0.0
        %v3461 = vadd.f32 %v3459, %v3460
        %v3462 = vsel %vm3440, %v3218, 0.0
        %v3463 = vadd.f32 %v3461, %v3462
        %v3464 = vsel %vm3440, %v3221, 0.0
        %v3465 = vadd.f32 %v3463, %v3464
        %v3466 = vsel %vm3440, %v3223, 0.0
        %v3467 = vadd.f32 %v3465, %v3466
        %v3468 = vsel %vm3440, %v3226, 0.0
        %v3469 = vadd.f32 %v3467, %v3468
        %v3470 = vsel %vm3440, %v3228, 0.0
        %v3471 = vadd.f32 %v3469, %v3470
        %v3472 = vsel %vm3440, %v3231, 0.0
        %v3473 = vadd.f32 %v3471, %v3472
        %v3474 = vsel %vm3440, %v3233, 0.0
        %v3475 = vadd.f32 %v3473, %v3474
        %v3476 = vsel %vm3440, %v3236, 0.0
        %v3477 = vadd.f32 %v3475, %v3476
        %v3478 = vsel %vm3440, %v3238, 0.0
        %v3479 = vadd.f32 %v3477, %v3478
        %v3480 = vsel %vm3440, %v3241, 0.0
        %v3481 = vadd.f32 %v3479, %v3480
        %v3482 = vsel %vm3440, %v3243, 0.0
        %v3483 = vadd.f32 %v3481, %v3482
        %v3484 = vsel %vm3440, %v3246, 0.0
        %v3485 = vadd.f32 %v3483, %v3484
        %v3486 = vsel %vm3440, %v3248, 0.0
        %v3487 = vadd.f32 %v3485, %v3486
        %v3488 = vsel %vm3440, %v3251, 0.0
        %v3489 = vadd.f32 %v3487, %v3488
        %v3490 = vsel %vm3440, %v3253, 0.0
        %v3491 = vadd.f32 %v3489, %v3490
        %v3492 = vsel %vm3440, %v3256, 0.0
        %v3493 = vadd.f32 %v3491, %v3492
        %v3494 = vsel %vm3440, %v3258, 0.0
        %v3495 = vadd.f32 %v3493, %v3494
        %v3496 = vsel %vm3440, %v3261, 0.0
        %v3497 = vadd.f32 %v3495, %v3496
        %v3498 = vsel %vm3440, %v3263, 0.0
        %v3499 = vadd.f32 %v3497, %v3498
        %v3500 = vsel %vm3440, %v3266, 0.0
        %v3501 = vadd.f32 %v3499, %v3500
        %v3502 = vsel %vm3440, %v3268, 0.0
        %v3503 = vadd.f32 %v3501, %v3502
        %v3504 = vsel %vm3440, %v3271, 0.0
        %v3505 = vadd.f32 %v3503, %v3504
        %v3506 = vsel %vm3440, %v3273, 0.0
        %v3507 = vadd.f32 %v3505, %v3506
        %v3508 = vsel %vm3440, %v3276, 0.0
        %v3509 = vadd.f32 %v3507, %v3508
        %v3510 = vsel %vm3440, %v3278, 0.0
        %v3511 = vadd.f32 %v3509, %v3510
        %v3512 = vsel %vm3440, %v3281, 0.0
        %v3513 = vadd.f32 %v3511, %v3512
        %v3514 = vsel %vm3440, %v3283, 0.0
        %v3515 = vadd.f32 %v3513, %v3514
        %v3516 = vsel %vm3440, %v3286, 0.0
        %v3517 = vadd.f32 %v3515, %v3516
        %v3518 = vsel %vm3440, %v3288, 0.0
        %v3519 = vadd.f32 %v3517, %v3518
        %v3520 = vsel %vm3440, %v3291, 0.0
        %v3521 = vadd.f32 %v3519, %v3520
        %v3522 = vsel %vm3440, %v3293, 0.0
        %v3523 = vadd.f32 %v3521, %v3522
        %v3524 = vsel %vm3440, %v3296, 0.0
        %v3525 = vadd.f32 %v3523, %v3524
        %v3526 = vsel %vm3440, %v3298, 0.0
        %v3527 = vadd.f32 %v3525, %v3526
        %v3528 = vsel %vm3440, %v3301, 0.0
        %v3529 = vadd.f32 %v3527, %v3528
        %v3530 = vsel %vm3440, %v3303, 0.0
        %v3531 = vadd.f32 %v3529, %v3530
        %v3532 = vsel %vm3440, %v3306, 0.0
        %v3533 = vadd.f32 %v3531, %v3532
        %v3534 = vsel %vm3440, %v3308, 0.0
        %v3535 = vadd.f32 %v3533, %v3534
        %v3536 = vsel %vm3440, %v3311, 0.0
        %v3537 = vadd.f32 %v3535, %v3536
        %v3538 = vsel %vm3440, %v3313, 0.0
        %v3539 = vadd.f32 %v3537, %v3538
        %v3540 = vsel %vm3440, %v3316, 0.0
        %v3541 = vadd.f32 %v3539, %v3540
        %v3542 = vsel %vm3440, %v3318, 0.0
        %v3543 = vadd.f32 %v3541, %v3542
        %v3544 = vsel %vm3440, %v3321, 0.0
        %v3545 = vadd.f32 %v3543, %v3544
        %v3546 = vsel %vm3440, %v3323, 0.0
        %v3547 = vadd.f32 %v3545, %v3546
        %v3548 = vsel %vm3440, %v3326, 0.0
        %v3549 = vadd.f32 %v3547, %v3548
        %v3550 = vsel %vm3440, %v3328, 0.0
        %v3551 = vadd.f32 %v3549, %v3550
        %v3552 = vsel %vm3440, %v3331, 0.0
        %v3553 = vadd.f32 %v3551, %v3552
        %v3554 = vsel %vm3440, %v3333, 0.0
        %v3555 = vadd.f32 %v3553, %v3554
        %v3556 = vsel %vm3440, %v3336, 0.0
        %v3557 = vadd.f32 %v3555, %v3556
        %v3558 = vsel %vm3440, %v3338, 0.0
        %v3559 = vadd.f32 %v3557, %v3558
        %v3560 = vsel %vm3440, %v3341, 0.0
        %v3561 = vadd.f32 %v3559, %v3560
        %v3562 = vsel %vm3440, %v3343, 0.0
        %v3563 = vadd.f32 %v3561, %v3562
        %v3564 = vsel %vm3440, %v3346, 0.0
        %v3565 = vadd.f32 %v3563, %v3564
        %v3566 = vsel %vm3440, %v3348, 0.0
        %v3567 = vadd.f32 %v3565, %v3566
        %v3568 = vsel %vm3440, %v3351, 0.0
        %v3569 = vadd.f32 %v3567, %v3568
        %v3570 = vsel %vm3440, %v3353, 0.0
        %v3571 = vadd.f32 %v3569, %v3570
        %v3572 = vsel %vm3440, %v3356, 0.0
        %v3573 = vadd.f32 %v3571, %v3572
        %v3574 = vsel %vm3440, %v3358, 0.0
        %v3575 = vadd.f32 %v3573, %v3574
        %v3576 = vsel %vm3440, %v3361, 0.0
        %v3577 = vadd.f32 %v3575, %v3576
        %v3578 = vsel %vm3440, %v3363, 0.0
        %v3579 = vadd.f32 %v3577, %v3578
        %v3580 = vsel %vm3440, %v3366, 0.0
        %v3581 = vadd.f32 %v3579, %v3580
        %v3582 = vsel %vm3440, %v3368, 0.0
        %v3583 = vadd.f32 %v3581, %v3582
        %v3584 = vsel %vm3440, %v3371, 0.0
        %v3585 = vadd.f32 %v3583, %v3584
        %v3586 = vsel %vm3440, %v3373, 0.0
        %v3587 = vadd.f32 %v3585, %v3586
        %v3588 = vsel %vm3440, %v3376, 0.0
        %v3589 = vadd.f32 %v3587, %v3588
        %v3590 = vsel %vm3440, %v3378, 0.0
        %v3591 = vadd.f32 %v3589, %v3590
        %v3592 = vsel %vm3440, %v3381, 0.0
        %v3593 = vadd.f32 %v3591, %v3592
        %v3594 = vsel %vm3440, %v3383, 0.0
        %v3595 = vadd.f32 %v3593, %v3594
        %v3596 = vsel %vm3440, %v3386, 0.0
        %v3597 = vadd.f32 %v3595, %v3596
        %v3598 = vsel %vm3440, %v3388, 0.0
        %v3599 = vadd.f32 %v3597, %v3598
        %v3600 = vsel %vm3440, %v3391, 0.0
        %v3601 = vadd.f32 %v3599, %v3600
        %v3602 = vsel %vm3440, %v3393, 0.0
        %v3603 = vadd.f32 %v3601, %v3602
        %v3604 = vsel %vm3440, %v3396, 0.0
        %v3605 = vadd.f32 %v3603, %v3604
        %v3606 = vsel %vm3440, %v3398, 0.0
        %v3607 = vadd.f32 %v3605, %v3606
        %v3608 = vsel %vm3440, %v3401, 0.0
        %v3609 = vadd.f32 %v3607, %v3608
        %v3610 = vsel %vm3440, %v3403, 0.0
        %v3611 = vadd.f32 %v3609, %v3610
        %v3612 = vsel %vm3440, %v3406, 0.0
        %v3613 = vadd.f32 %v3611, %v3612
        %v3614 = vsel %vm3440, %v3408, 0.0
        %v3615 = vadd.f32 %v3613, %v3614
        %v3616 = vsel %vm3440, %v3411, 0.0
        %v3617 = vadd.f32 %v3615, %v3616
        %v3618 = vsel %vm3440, %v3413, 0.0
        %v3619 = vadd.f32 %v3617, %v3618
        %v3620 = vsel %vm3440, %v3416, 0.0
        %v3621 = vadd.f32 %v3619, %v3620
        %v3622 = vsel %vm3440, %v3418, 0.0
        %v3623 = vadd.f32 %v3621, %v3622
        %v3624 = vsel %vm3440, %v3421, 0.0
        %v3625 = vadd.f32 %v3623, %v3624
        %v3626 = vsel %vm3440, %v3423, 0.0
        %v3627 = vadd.f32 %v3625, %v3626
        %v3628 = vsel %vm3440, %v3426, 0.0
        %v3629 = vadd.f32 %v3627, %v3628
        %v3630 = vsel %vm3440, %v3428, 0.0
        %v3631 = vadd.f32 %v3629, %v3630
        %v3632 = vsel %vm3440, %v3431, 0.0
        %v3633 = vadd.f32 %v3631, %v3632
        %v3634 = vsel %vm3440, %v3433, 0.0
        %v3635 = vadd.f32 %v3633, %v3634
        %v3636 = vsel %vm3440, %v3436, 0.0
        %v3637 = vadd.f32 %v3635, %v3636
        %vm3638 = vcmask 260096
        %v3639 = vsel %vm3638, %v3438, 0.0
        %v3640 = vadd.f32 %v3637, %v3639
        %v3641 = vrot.slane %v3640, 4
        %v3642 = vadd.f32 %v3640, %v3641
        %v3643 = vrot.slane %v3642, 2
        %v3644 = vadd.f32 %v3642, %v3643
        %v3645 = vrot.slane %v3644, 1
        %v3646 = vadd.f32 %v3644, %v3645
        %v3647 = vrcp.pop 799.0
        %v3648 = vmul.f32 799.0, %v3647
        %v3649 = vsub.f32 1.0, %v3648
        %v3650 = vmul.f32 %v3647, %v3649
        %v3651 = vadd.f32 %v3647, %v3650
        %vm3652 = vweird.f32 %v3647
        %v3653 = vsel %vm3652, %v3647, %v3651
        %v3654 = vmul.f32 %v3646, %v3653
        %v3655 = vsub.f32 %v3191, %v3654
        %v3656 = vsub.f32 %v3193, %v3654
        %v3657 = vsub.f32 %v3196, %v3654
        %v3658 = vsub.f32 %v3198, %v3654
        %v3659 = vsub.f32 %v3201, %v3654
        %v3660 = vsub.f32 %v3203, %v3654
        %v3661 = vsub.f32 %v3206, %v3654
        %v3662 = vsub.f32 %v3208, %v3654
        %v3663 = vsub.f32 %v3211, %v3654
        %v3664 = vsub.f32 %v3213, %v3654
        %v3665 = vsub.f32 %v3216, %v3654
        %v3666 = vsub.f32 %v3218, %v3654
        %v3667 = vsub.f32 %v3221, %v3654
        %v3668 = vsub.f32 %v3223, %v3654
        %v3669 = vsub.f32 %v3226, %v3654
        %v3670 = vsub.f32 %v3228, %v3654
        %v3671 = vsub.f32 %v3231, %v3654
        %v3672 = vsub.f32 %v3233, %v3654
        %v3673 = vsub.f32 %v3236, %v3654
        %v3674 = vsub.f32 %v3238, %v3654
        %v3675 = vsub.f32 %v3241, %v3654
        %v3676 = vsub.f32 %v3243, %v3654
        %v3677 = vsub.f32 %v3246, %v3654
        %v3678 = vsub.f32 %v3248, %v3654
        %v3679 = vsub.f32 %v3251, %v3654
        %v3680 = vsub.f32 %v3253, %v3654
        %v3681 = vsub.f32 %v3256, %v3654
        %v3682 = vsub.f32 %v3258, %v3654
        %v3683 = vsub.f32 %v3261, %v3654
        %v3684 = vsub.f32 %v3263, %v3654
        %v3685 = vsub.f32 %v3266, %v3654
        %v3686 = vsub.f32 %v3268, %v3654
        %v3687 = vsub.f32 %v3271, %v3654
        %v3688 = vsub.f32 %v3273, %v3654
        %v3689 = vsub.f32 %v3276, %v3654
        %v3690 = vsub.f32 %v3278, %v3654
        %v3691 = vsub.f32 %v3281, %v3654
        %v3692 = vsub.f32 %v3283, %v3654
        %v3693 = vsub.f32 %v3286, %v3654
        %v3694 = vsub.f32 %v3288, %v3654
        %v3695 = vsub.f32 %v3291, %v3654
        %v3696 = vsub.f32 %v3293, %v3654
        %v3697 = vsub.f32 %v3296, %v3654
        %v3698 = vsub.f32 %v3298, %v3654
        %v3699 = vsub.f32 %v3301, %v3654
        %v3700 = vsub.f32 %v3303, %v3654
        %v3701 = vsub.f32 %v3306, %v3654
        %v3702 = vsub.f32 %v3308, %v3654
        %v3703 = vsub.f32 %v3311, %v3654
        %v3704 = vsub.f32 %v3313, %v3654
        %v3705 = vsub.f32 %v3316, %v3654
        %v3706 = vsub.f32 %v3318, %v3654
        %v3707 = vsub.f32 %v3321, %v3654
        %v3708 = vsub.f32 %v3323, %v3654
        %v3709 = vsub.f32 %v3326, %v3654
        %v3710 = vsub.f32 %v3328, %v3654
        %v3711 = vsub.f32 %v3331, %v3654
        %v3712 = vsub.f32 %v3333, %v3654
        %v3713 = vsub.f32 %v3336, %v3654
        %v3714 = vsub.f32 %v3338, %v3654
        %v3715 = vsub.f32 %v3341, %v3654
        %v3716 = vsub.f32 %v3343, %v3654
        %v3717 = vsub.f32 %v3346, %v3654
        %v3718 = vsub.f32 %v3348, %v3654
        %v3719 = vsub.f32 %v3351, %v3654
        %v3720 = vsub.f32 %v3353, %v3654
        %v3721 = vsub.f32 %v3356, %v3654
        %v3722 = vsub.f32 %v3358, %v3654
        %v3723 = vsub.f32 %v3361, %v3654
        %v3724 = vsub.f32 %v3363, %v3654
        %v3725 = vsub.f32 %v3366, %v3654
        %v3726 = vsub.f32 %v3368, %v3654
        %v3727 = vsub.f32 %v3371, %v3654
        %v3728 = vsub.f32 %v3373, %v3654
        %v3729 = vsub.f32 %v3376, %v3654
        %v3730 = vsub.f32 %v3378, %v3654
        %v3731 = vsub.f32 %v3381, %v3654
        %v3732 = vsub.f32 %v3383, %v3654
        %v3733 = vsub.f32 %v3386, %v3654
        %v3734 = vsub.f32 %v3388, %v3654
        %v3735 = vsub.f32 %v3391, %v3654
        %v3736 = vsub.f32 %v3393, %v3654
        %v3737 = vsub.f32 %v3396, %v3654
        %v3738 = vsub.f32 %v3398, %v3654
        %v3739 = vsub.f32 %v3401, %v3654
        %v3740 = vsub.f32 %v3403, %v3654
        %v3741 = vsub.f32 %v3406, %v3654
        %v3742 = vsub.f32 %v3408, %v3654
        %v3743 = vsub.f32 %v3411, %v3654
        %v3744 = vsub.f32 %v3413, %v3654
        %v3745 = vsub.f32 %v3416, %v3654
        %v3746 = vsub.f32 %v3418, %v3654
        %v3747 = vsub.f32 %v3421, %v3654
        %v3748 = vsub.f32 %v3423, %v3654
        %v3749 = vsub.f32 %v3426, %v3654
        %v3750 = vsub.f32 %v3428, %v3654
        %v3751 = vsub.f32 %v3431, %v3654
        %v3752 = vsub.f32 %v3433, %v3654
        %v3753 = vsub.f32 %v3436, %v3654
        %v3754 = vsub.f32 %v3438, %v3654
        %v3755 = vmul.f32 %v3655, %v3655
        %v3756 = vmul.f32 %v3656, %v3656
        %v3757 = vmul.f32 %v3657, %v3657
        %v3758 = vmul.f32 %v3658, %v3658
        %v3759 = vmul.f32 %v3659, %v3659
        %v3760 = vmul.f32 %v3660, %v3660
        %v3761 = vmul.f32 %v3661, %v3661
        %v3762 = vmul.f32 %v3662, %v3662
        %v3763 = vmul.f32 %v3663, %v3663
        %v3764 = vmul.f32 %v3664, %v3664
        %v3765 = vmul.f32 %v3665, %v3665
        %v3766 = vmul.f32 %v3666, %v3666
        %v3767 = vmul.f32 %v3667, %v3667
        %v3768 = vmul.f32 %v3668, %v3668
        %v3769 = vmul.f32 %v3669, %v3669
        %v3770 = vmul.f32 %v3670, %v3670
        %v3771 = vmul.f32 %v3671, %v3671
        %v3772 = vmul.f32 %v3672, %v3672
        %v3773 = vmul.f32 %v3673, %v3673
        %v3774 = vmul.f32 %v3674, %v3674
        %v3775 = vmul.f32 %v3675, %v3675
        %v3776 = vmul.f32 %v3676, %v3676
        %v3777 = vmul.f32 %v3677, %v3677
        %v3778 = vmul.f32 %v3678, %v3678
        %v3779 = vmul.f32 %v3679, %v3679
        %v3780 = vmul.f32 %v3680, %v3680
        %v3781 = vmul.f32 %v3681, %v3681
        %v3782 = vmul.f32 %v3682, %v3682
        %v3783 = vmul.f32 %v3683, %v3683
        %v3784 = vmul.f32 %v3684, %v3684
        %v3785 = vmul.f32 %v3685, %v3685
        %v3786 = vmul.f32 %v3686, %v3686
        %v3787 = vmul.f32 %v3687, %v3687
        %v3788 = vmul.f32 %v3688, %v3688
        %v3789 = vmul.f32 %v3689, %v3689
        %v3790 = vmul.f32 %v3690, %v3690
        %v3791 = vmul.f32 %v3691, %v3691
        %v3792 = vmul.f32 %v3692, %v3692
        %v3793 = vmul.f32 %v3693, %v3693
        %v3794 = vmul.f32 %v3694, %v3694
        %v3795 = vmul.f32 %v3695, %v3695
        %v3796 = vmul.f32 %v3696, %v3696
        %v3797 = vmul.f32 %v3697, %v3697
        %v3798 = vmul.f32 %v3698, %v3698
        %v3799 = vmul.f32 %v3699, %v3699
        %v3800 = vmul.f32 %v3700, %v3700
        %v3801 = vmul.f32 %v3701, %v3701
        %v3802 = vmul.f32 %v3702, %v3702
        %v3803 = vmul.f32 %v3703, %v3703
        %v3804 = vmul.f32 %v3704, %v3704
        %v3805 = vmul.f32 %v3705, %v3705
        %v3806 = vmul.f32 %v3706, %v3706
        %v3807 = vmul.f32 %v3707, %v3707
        %v3808 = vmul.f32 %v3708, %v3708
        %v3809 = vmul.f32 %v3709, %v3709
        %v3810 = vmul.f32 %v3710, %v3710
        %v3811 = vmul.f32 %v3711, %v3711
        %v3812 = vmul.f32 %v3712, %v3712
        %v3813 = vmul.f32 %v3713, %v3713
        %v3814 = vmul.f32 %v3714, %v3714
        %v3815 = vmul.f32 %v3715, %v3715
        %v3816 = vmul.f32 %v3716, %v3716
        %v3817 = vmul.f32 %v3717, %v3717
        %v3818 = vmul.f32 %v3718, %v3718
        %v3819 = vmul.f32 %v3719, %v3719
        %v3820 = vmul.f32 %v3720, %v3720
        %v3821 = vmul.f32 %v3721, %v3721
        %v3822 = vmul.f32 %v3722, %v3722
        %v3823 = vmul.f32 %v3723, %v3723
        %v3824 = vmul.f32 %v3724, %v3724
        %v3825 = vmul.f32 %v3725, %v3725
        %v3826 = vmul.f32 %v3726, %v3726
        %v3827 = vmul.f32 %v3727, %v3727
        %v3828 = vmul.f32 %v3728, %v3728
        %v3829 = vmul.f32 %v3729, %v3729
        %v3830 = vmul.f32 %v3730, %v3730
        %v3831 = vmul.f32 %v3731, %v3731
        %v3832 = vmul.f32 %v3732, %v3732
        %v3833 = vmul.f32 %v3733, %v3733
        %v3834 = vmul.f32 %v3734, %v3734
        %v3835 = vmul.f32 %v3735, %v3735
        %v3836 = vmul.f32 %v3736, %v3736
        %v3837 = vmul.f32 %v3737, %v3737
        %v3838 = vmul.f32 %v3738, %v3738
        %v3839 = vmul.f32 %v3739, %v3739
        %v3840 = vmul.f32 %v3740, %v3740
        %v3841 = vmul.f32 %v3741, %v3741
        %v3842 = vmul.f32 %v3742, %v3742
        %v3843 = vmul.f32 %v3743, %v3743
        %v3844 = vmul.f32 %v3744, %v3744
        %v3845 = vmul.f32 %v3745, %v3745
        %v3846 = vmul.f32 %v3746, %v3746
        %v3847 = vmul.f32 %v3747, %v3747
        %v3848 = vmul.f32 %v3748, %v3748
        %v3849 = vmul.f32 %v3749, %v3749
        %v3850 = vmul.f32 %v3750, %v3750
        %v3851 = vmul.f32 %v3751, %v3751
        %v3852 = vmul.f32 %v3752, %v3752
        %v3853 = vmul.f32 %v3753, %v3753
        %v3854 = vmul.f32 %v3754, %v3754
        %v3855 = vsel %vm3440, %v3755, 0.0
        %v3856 = vsel %vm3440, %v3756, 0.0
        %v3857 = vadd.f32 %v3855, %v3856
        %v3858 = vsel %vm3440, %v3757, 0.0
        %v3859 = vadd.f32 %v3857, %v3858
        %v3860 = vsel %vm3440, %v3758, 0.0
        %v3861 = vadd.f32 %v3859, %v3860
        %v3862 = vsel %vm3440, %v3759, 0.0
        %v3863 = vadd.f32 %v3861, %v3862
        %v3864 = vsel %vm3440, %v3760, 0.0
        %v3865 = vadd.f32 %v3863, %v3864
        %v3866 = vsel %vm3440, %v3761, 0.0
        %v3867 = vadd.f32 %v3865, %v3866
        %v3868 = vsel %vm3440, %v3762, 0.0
        %v3869 = vadd.f32 %v3867, %v3868
        %v3870 = vsel %vm3440, %v3763, 0.0
        %v3871 = vadd.f32 %v3869, %v3870
        %v3872 = vsel %vm3440, %v3764, 0.0
        %v3873 = vadd.f32 %v3871, %v3872
        %v3874 = vsel %vm3440, %v3765, 0.0
        %v3875 = vadd.f32 %v3873, %v3874
        %v3876 = vsel %vm3440, %v3766, 0.0
        %v3877 = vadd.f32 %v3875, %v3876
        %v3878 = vsel %vm3440, %v3767, 0.0
        %v3879 = vadd.f32 %v3877, %v3878
        %v3880 = vsel %vm3440, %v3768, 0.0
        %v3881 = vadd.f32 %v3879, %v3880
        %v3882 = vsel %vm3440, %v3769, 0.0
        %v3883 = vadd.f32 %v3881, %v3882
        %v3884 = vsel %vm3440, %v3770, 0.0
        %v3885 = vadd.f32 %v3883, %v3884
        %v3886 = vsel %vm3440, %v3771, 0.0
        %v3887 = vadd.f32 %v3885, %v3886
        %v3888 = vsel %vm3440, %v3772, 0.0
        %v3889 = vadd.f32 %v3887, %v3888
        %v3890 = vsel %vm3440, %v3773, 0.0
        %v3891 = vadd.f32 %v3889, %v3890
        %v3892 = vsel %vm3440, %v3774, 0.0
        %v3893 = vadd.f32 %v3891, %v3892
        %v3894 = vsel %vm3440, %v3775, 0.0
        %v3895 = vadd.f32 %v3893, %v3894
        %v3896 = vsel %vm3440, %v3776, 0.0
        %v3897 = vadd.f32 %v3895, %v3896
        %v3898 = vsel %vm3440, %v3777, 0.0
        %v3899 = vadd.f32 %v3897, %v3898
        %v3900 = vsel %vm3440, %v3778, 0.0
        %v3901 = vadd.f32 %v3899, %v3900
        %v3902 = vsel %vm3440, %v3779, 0.0
        %v3903 = vadd.f32 %v3901, %v3902
        %v3904 = vsel %vm3440, %v3780, 0.0
        %v3905 = vadd.f32 %v3903, %v3904
        %v3906 = vsel %vm3440, %v3781, 0.0
        %v3907 = vadd.f32 %v3905, %v3906
        %v3908 = vsel %vm3440, %v3782, 0.0
        %v3909 = vadd.f32 %v3907, %v3908
        %v3910 = vsel %vm3440, %v3783, 0.0
        %v3911 = vadd.f32 %v3909, %v3910
        %v3912 = vsel %vm3440, %v3784, 0.0
        %v3913 = vadd.f32 %v3911, %v3912
        %v3914 = vsel %vm3440, %v3785, 0.0
        %v3915 = vadd.f32 %v3913, %v3914
        %v3916 = vsel %vm3440, %v3786, 0.0
        %v3917 = vadd.f32 %v3915, %v3916
        %v3918 = vsel %vm3440, %v3787, 0.0
        %v3919 = vadd.f32 %v3917, %v3918
        %v3920 = vsel %vm3440, %v3788, 0.0
        %v3921 = vadd.f32 %v3919, %v3920
        %v3922 = vsel %vm3440, %v3789, 0.0
        %v3923 = vadd.f32 %v3921, %v3922
        %v3924 = vsel %vm3440, %v3790, 0.0
        %v3925 = vadd.f32 %v3923, %v3924
        %v3926 = vsel %vm3440, %v3791, 0.0
        %v3927 = vadd.f32 %v3925, %v3926
        %v3928 = vsel %vm3440, %v3792, 0.0
        %v3929 = vadd.f32 %v3927, %v3928
        %v3930 = vsel %vm3440, %v3793, 0.0
        %v3931 = vadd.f32 %v3929, %v3930
        %v3932 = vsel %vm3440, %v3794, 0.0
        %v3933 = vadd.f32 %v3931, %v3932
        %v3934 = vsel %vm3440, %v3795, 0.0
        %v3935 = vadd.f32 %v3933, %v3934
        %v3936 = vsel %vm3440, %v3796, 0.0
        %v3937 = vadd.f32 %v3935, %v3936
        %v3938 = vsel %vm3440, %v3797, 0.0
        %v3939 = vadd.f32 %v3937, %v3938
        %v3940 = vsel %vm3440, %v3798, 0.0
        %v3941 = vadd.f32 %v3939, %v3940
        %v3942 = vsel %vm3440, %v3799, 0.0
        %v3943 = vadd.f32 %v3941, %v3942
        %v3944 = vsel %vm3440, %v3800, 0.0
        %v3945 = vadd.f32 %v3943, %v3944
        %v3946 = vsel %vm3440, %v3801, 0.0
        %v3947 = vadd.f32 %v3945, %v3946
        %v3948 = vsel %vm3440, %v3802, 0.0
        %v3949 = vadd.f32 %v3947, %v3948
        %v3950 = vsel %vm3440, %v3803, 0.0
        %v3951 = vadd.f32 %v3949, %v3950
        %v3952 = vsel %vm3440, %v3804, 0.0
        %v3953 = vadd.f32 %v3951, %v3952
        %v3954 = vsel %vm3440, %v3805, 0.0
        %v3955 = vadd.f32 %v3953, %v3954
        %v3956 = vsel %vm3440, %v3806, 0.0
        %v3957 = vadd.f32 %v3955, %v3956
        %v3958 = vsel %vm3440, %v3807, 0.0
        %v3959 = vadd.f32 %v3957, %v3958
        %v3960 = vsel %vm3440, %v3808, 0.0
        %v3961 = vadd.f32 %v3959, %v3960
        %v3962 = vsel %vm3440, %v3809, 0.0
        %v3963 = vadd.f32 %v3961, %v3962
        %v3964 = vsel %vm3440, %v3810, 0.0
        %v3965 = vadd.f32 %v3963, %v3964
        %v3966 = vsel %vm3440, %v3811, 0.0
        %v3967 = vadd.f32 %v3965, %v3966
        %v3968 = vsel %vm3440, %v3812, 0.0
        %v3969 = vadd.f32 %v3967, %v3968
        %v3970 = vsel %vm3440, %v3813, 0.0
        %v3971 = vadd.f32 %v3969, %v3970
        %v3972 = vsel %vm3440, %v3814, 0.0
        %v3973 = vadd.f32 %v3971, %v3972
        %v3974 = vsel %vm3440, %v3815, 0.0
        %v3975 = vadd.f32 %v3973, %v3974
        %v3976 = vsel %vm3440, %v3816, 0.0
        %v3977 = vadd.f32 %v3975, %v3976
        %v3978 = vsel %vm3440, %v3817, 0.0
        %v3979 = vadd.f32 %v3977, %v3978
        %v3980 = vsel %vm3440, %v3818, 0.0
        %v3981 = vadd.f32 %v3979, %v3980
        %v3982 = vsel %vm3440, %v3819, 0.0
        %v3983 = vadd.f32 %v3981, %v3982
        %v3984 = vsel %vm3440, %v3820, 0.0
        %v3985 = vadd.f32 %v3983, %v3984
        %v3986 = vsel %vm3440, %v3821, 0.0
        %v3987 = vadd.f32 %v3985, %v3986
        %v3988 = vsel %vm3440, %v3822, 0.0
        %v3989 = vadd.f32 %v3987, %v3988
        %v3990 = vsel %vm3440, %v3823, 0.0
        %v3991 = vadd.f32 %v3989, %v3990
        %v3992 = vsel %vm3440, %v3824, 0.0
        %v3993 = vadd.f32 %v3991, %v3992
        %v3994 = vsel %vm3440, %v3825, 0.0
        %v3995 = vadd.f32 %v3993, %v3994
        %v3996 = vsel %vm3440, %v3826, 0.0
        %v3997 = vadd.f32 %v3995, %v3996
        %v3998 = vsel %vm3440, %v3827, 0.0
        %v3999 = vadd.f32 %v3997, %v3998
        %v4000 = vsel %vm3440, %v3828, 0.0
        %v4001 = vadd.f32 %v3999, %v4000
        %v4002 = vsel %vm3440, %v3829, 0.0
        %v4003 = vadd.f32 %v4001, %v4002
        %v4004 = vsel %vm3440, %v3830, 0.0
        %v4005 = vadd.f32 %v4003, %v4004
        %v4006 = vsel %vm3440, %v3831, 0.0
        %v4007 = vadd.f32 %v4005, %v4006
        %v4008 = vsel %vm3440, %v3832, 0.0
        %v4009 = vadd.f32 %v4007, %v4008
        %v4010 = vsel %vm3440, %v3833, 0.0
        %v4011 = vadd.f32 %v4009, %v4010
        %v4012 = vsel %vm3440, %v3834, 0.0
        %v4013 = vadd.f32 %v4011, %v4012
        %v4014 = vsel %vm3440, %v3835, 0.0
        %v4015 = vadd.f32 %v4013, %v4014
        %v4016 = vsel %vm3440, %v3836, 0.0
        %v4017 = vadd.f32 %v4015, %v4016
        %v4018 = vsel %vm3440, %v3837, 0.0
        %v4019 = vadd.f32 %v4017, %v4018
        %v4020 = vsel %vm3440, %v3838, 0.0
        %v4021 = vadd.f32 %v4019, %v4020
        %v4022 = vsel %vm3440, %v3839, 0.0
        %v4023 = vadd.f32 %v4021, %v4022
        %v4024 = vsel %vm3440, %v3840, 0.0
        %v4025 = vadd.f32 %v4023, %v4024
        %v4026 = vsel %vm3440, %v3841, 0.0
        %v4027 = vadd.f32 %v4025, %v4026
        %v4028 = vsel %vm3440, %v3842, 0.0
        %v4029 = vadd.f32 %v4027, %v4028
        %v4030 = vsel %vm3440, %v3843, 0.0
        %v4031 = vadd.f32 %v4029, %v4030
        %v4032 = vsel %vm3440, %v3844, 0.0
        %v4033 = vadd.f32 %v4031, %v4032
        %v4034 = vsel %vm3440, %v3845, 0.0
        %v4035 = vadd.f32 %v4033, %v4034
        %v4036 = vsel %vm3440, %v3846, 0.0
        %v4037 = vadd.f32 %v4035, %v4036
        %v4038 = vsel %vm3440, %v3847, 0.0
        %v4039 = vadd.f32 %v4037, %v4038
        %v4040 = vsel %vm3440, %v3848, 0.0
        %v4041 = vadd.f32 %v4039, %v4040
        %v4042 = vsel %vm3440, %v3849, 0.0
        %v4043 = vadd.f32 %v4041, %v4042
        %v4044 = vsel %vm3440, %v3850, 0.0
        %v4045 = vadd.f32 %v4043, %v4044
        %v4046 = vsel %vm3440, %v3851, 0.0
        %v4047 = vadd.f32 %v4045, %v4046
        %v4048 = vsel %vm3440, %v3852, 0.0
        %v4049 = vadd.f32 %v4047, %v4048
        %v4050 = vsel %vm3440, %v3853, 0.0
        %v4051 = vadd.f32 %v4049, %v4050
        %v4052 = vsel %vm3638, %v3854, 0.0
        %v4053 = vadd.f32 %v4051, %v4052
        %v4054 = vrot.slane %v4053, 4
        %v4055 = vadd.f32 %v4053, %v4054
        %v4056 = vrot.slane %v4055, 2
        %v4057 = vadd.f32 %v4055, %v4056
        %v4058 = vrot.slane %v4057, 1
        %v4059 = vadd.f32 %v4057, %v4058
        %v4060 = vmul.f32 %v4059, %v3653
        %v4061 = vadd.f32 %v4060, 1e-05
        %v4062 = vrsqrt.pop %v4061
        %v4063 = vmul.f32 %v4062, %v4061
        %v4064 = vmul.f32 %v4063, %v4062
        %v4065 = vmul.f32 0.5, %v4064
        %v4066 = vsub.f32 1.5, %v4065
        %v4067 = vmul.f32 %v4062, %v4066
        %vm4068 = vweird.f32 %v4061
        %vm4069 = vweird.f32 %v4062
        %vm4070 = vmor %vm4068, %vm4069
        %v4071 = vsel %vm4070, %v4062, %v4067
        %v4072 = vmul.f32 %v3655, %v4071
        %v4073 = vmul.f32 %v3656, %v4071
        %v4074 = vmul.f32 %v3657, %v4071
        %v4075 = vmul.f32 %v3658, %v4071
        %v4076 = vmul.f32 %v3659, %v4071
        %v4077 = vmul.f32 %v3660, %v4071
        %v4078 = vmul.f32 %v3661, %v4071
        %v4079 = vmul.f32 %v3662, %v4071
        %v4080 = vmul.f32 %v3663, %v4071
        %v4081 = vmul.f32 %v3664, %v4071
        %v4082 = vmul.f32 %v3665, %v4071
        %v4083 = vmul.f32 %v3666, %v4071
        %v4084 = vmul.f32 %v3667, %v4071
        %v4085 = vmul.f32 %v3668, %v4071
        %v4086 = vmul.f32 %v3669, %v4071
        %v4087 = vmul.f32 %v3670, %v4071
        %v4088 = vmul.f32 %v3671, %v4071
        %v4089 = vmul.f32 %v3672, %v4071
        %v4090 = vmul.f32 %v3673, %v4071
        %v4091 = vmul.f32 %v3674, %v4071
        %v4092 = vmul.f32 %v3675, %v4071
        %v4093 = vmul.f32 %v3676, %v4071
        %v4094 = vmul.f32 %v3677, %v4071
        %v4095 = vmul.f32 %v3678, %v4071
        %v4096 = vmul.f32 %v3679, %v4071
        %v4097 = vmul.f32 %v3680, %v4071
        %v4098 = vmul.f32 %v3681, %v4071
        %v4099 = vmul.f32 %v3682, %v4071
        %v4100 = vmul.f32 %v3683, %v4071
        %v4101 = vmul.f32 %v3684, %v4071
        %v4102 = vmul.f32 %v3685, %v4071
        %v4103 = vmul.f32 %v3686, %v4071
        %v4104 = vmul.f32 %v3687, %v4071
        %v4105 = vmul.f32 %v3688, %v4071
        %v4106 = vmul.f32 %v3689, %v4071
        %v4107 = vmul.f32 %v3690, %v4071
        %v4108 = vmul.f32 %v3691, %v4071
        %v4109 = vmul.f32 %v3692, %v4071
        %v4110 = vmul.f32 %v3693, %v4071
        %v4111 = vmul.f32 %v3694, %v4071
        %v4112 = vmul.f32 %v3695, %v4071
        %v4113 = vmul.f32 %v3696, %v4071
        %v4114 = vmul.f32 %v3697, %v4071
        %v4115 = vmul.f32 %v3698, %v4071
        %v4116 = vmul.f32 %v3699, %v4071
        %v4117 = vmul.f32 %v3700, %v4071
        %v4118 = vmul.f32 %v3701, %v4071
        %v4119 = vmul.f32 %v3702, %v4071
        %v4120 = vmul.f32 %v3703, %v4071
        %v4121 = vmul.f32 %v3704, %v4071
        %v4122 = vmul.f32 %v3705, %v4071
        %v4123 = vmul.f32 %v3706, %v4071
        %v4124 = vmul.f32 %v3707, %v4071
        %v4125 = vmul.f32 %v3708, %v4071
        %v4126 = vmul.f32 %v3709, %v4071
        %v4127 = vmul.f32 %v3710, %v4071
        %v4128 = vmul.f32 %v3711, %v4071
        %v4129 = vmul.f32 %v3712, %v4071
        %v4130 = vmul.f32 %v3713, %v4071
        %v4131 = vmul.f32 %v3714, %v4071
        %v4132 = vmul.f32 %v3715, %v4071
        %v4133 = vmul.f32 %v3716, %v4071
        %v4134 = vmul.f32 %v3717, %v4071
        %v4135 = vmul.f32 %v3718, %v4071
        %v4136 = vmul.f32 %v3719, %v4071
        %v4137 = vmul.f32 %v3720, %v4071
        %v4138 = vmul.f32 %v3721, %v4071
        %v4139 = vmul.f32 %v3722, %v4071
        %v4140 = vmul.f32 %v3723, %v4071
        %v4141 = vmul.f32 %v3724, %v4071
        %v4142 = vmul.f32 %v3725, %v4071
        %v4143 = vmul.f32 %v3726, %v4071
        %v4144 = vmul.f32 %v3727, %v4071
        %v4145 = vmul.f32 %v3728, %v4071
        %v4146 = vmul.f32 %v3729, %v4071
        %v4147 = vmul.f32 %v3730, %v4071
        %v4148 = vmul.f32 %v3731, %v4071
        %v4149 = vmul.f32 %v3732, %v4071
        %v4150 = vmul.f32 %v3733, %v4071
        %v4151 = vmul.f32 %v3734, %v4071
        %v4152 = vmul.f32 %v3735, %v4071
        %v4153 = vmul.f32 %v3736, %v4071
        %v4154 = vmul.f32 %v3737, %v4071
        %v4155 = vmul.f32 %v3738, %v4071
        %v4156 = vmul.f32 %v3739, %v4071
        %v4157 = vmul.f32 %v3740, %v4071
        %v4158 = vmul.f32 %v3741, %v4071
        %v4159 = vmul.f32 %v3742, %v4071
        %v4160 = vmul.f32 %v3743, %v4071
        %v4161 = vmul.f32 %v3744, %v4071
        %v4162 = vmul.f32 %v3745, %v4071
        %v4163 = vmul.f32 %v3746, %v4071
        %v4164 = vmul.f32 %v3747, %v4071
        %v4165 = vmul.f32 %v3748, %v4071
        %v4166 = vmul.f32 %v3749, %v4071
        %v4167 = vmul.f32 %v3750, %v4071
        %v4168 = vmul.f32 %v3751, %v4071
        %v4169 = vmul.f32 %v3752, %v4071
        %v4170 = vmul.f32 %v3753, %v4071
        %v4171 = vmul.f32 %v3754, %v4071
        %v4172 = vld [vmem:[%s3] sm:$0x1]
        %v4174 = vperm.slane %v4172, 0
        %v4176 = vmul.f32 %v4072, %v4174
        %v4177 = vmul.f32 %v4073, %v4174
        %v4178 = vmul.f32 %v4074, %v4174
        %v4179 = vmul.f32 %v4075, %v4174
        %v4180 = vmul.f32 %v4076, %v4174
        %v4181 = vmul.f32 %v4077, %v4174
        %v4182 = vmul.f32 %v4078, %v4174
        %v4183 = vmul.f32 %v4079, %v4174
        %v4184 = vmul.f32 %v4080, %v4174
        %v4185 = vmul.f32 %v4081, %v4174
        %v4186 = vmul.f32 %v4082, %v4174
        %v4187 = vmul.f32 %v4083, %v4174
        %v4188 = vmul.f32 %v4084, %v4174
        %v4189 = vmul.f32 %v4085, %v4174
        %v4190 = vmul.f32 %v4086, %v4174
        %v4191 = vmul.f32 %v4087, %v4174
        %v4192 = vmul.f32 %v4088, %v4174
        %v4193 = vmul.f32 %v4089, %v4174
        %v4194 = vmul.f32 %v4090, %v4174
        %v4195 = vmul.f32 %v4091, %v4174
        %v4196 = vmul.f32 %v4092, %v4174
        %v4197 = vmul.f32 %v4093, %v4174
        %v4198 = vmul.f32 %v4094, %v4174
        %v4199 = vmul.f32 %v4095, %v4174
        %v4200 = vmul.f32 %v4096, %v4174
        %v4201 = vmul.f32 %v4097, %v4174
        %v4202 = vmul.f32 %v4098, %v4174
        %v4203 = vmul.f32 %v4099, %v4174
        %v4204 = vmul.f32 %v4100, %v4174
        %v4205 = vmul.f32 %v4101, %v4174
        %v4206 = vmul.f32 %v4102, %v4174
        %v4207 = vmul.f32 %v4103, %v4174
        %v4208 = vmul.f32 %v4104, %v4174
        %v4209 = vmul.f32 %v4105, %v4174
        %v4210 = vmul.f32 %v4106, %v4174
        %v4211 = vmul.f32 %v4107, %v4174
        %v4212 = vmul.f32 %v4108, %v4174
        %v4213 = vmul.f32 %v4109, %v4174
        %v4214 = vmul.f32 %v4110, %v4174
        %v4215 = vmul.f32 %v4111, %v4174
        %v4216 = vmul.f32 %v4112, %v4174
        %v4217 = vmul.f32 %v4113, %v4174
        %v4218 = vmul.f32 %v4114, %v4174
        %v4219 = vmul.f32 %v4115, %v4174
        %v4220 = vmul.f32 %v4116, %v4174
        %v4221 = vmul.f32 %v4117, %v4174
        %v4222 = vmul.f32 %v4118, %v4174
        %v4223 = vmul.f32 %v4119, %v4174
        %v4224 = vmul.f32 %v4120, %v4174
        %v4225 = vmul.f32 %v4121, %v4174
        %v4226 = vmul.f32 %v4122, %v4174
        %v4227 = vmul.f32 %v4123, %v4174
        %v4228 = vmul.f32 %v4124, %v4174
        %v4229 = vmul.f32 %v4125, %v4174
        %v4230 = vmul.f32 %v4126, %v4174
        %v4231 = vmul.f32 %v4127, %v4174
        %v4232 = vmul.f32 %v4128, %v4174
        %v4233 = vmul.f32 %v4129, %v4174
        %v4234 = vmul.f32 %v4130, %v4174
        %v4235 = vmul.f32 %v4131, %v4174
        %v4236 = vmul.f32 %v4132, %v4174
        %v4237 = vmul.f32 %v4133, %v4174
        %v4238 = vmul.f32 %v4134, %v4174
        %v4239 = vmul.f32 %v4135, %v4174
        %v4240 = vmul.f32 %v4136, %v4174
        %v4241 = vmul.f32 %v4137, %v4174
        %v4242 = vmul.f32 %v4138, %v4174
        %v4243 = vmul.f32 %v4139, %v4174
        %v4244 = vmul.f32 %v4140, %v4174
        %v4245 = vmul.f32 %v4141, %v4174
        %v4246 = vmul.f32 %v4142, %v4174
        %v4247 = vmul.f32 %v4143, %v4174
        %v4248 = vmul.f32 %v4144, %v4174
        %v4249 = vmul.f32 %v4145, %v4174
        %v4250 = vmul.f32 %v4146, %v4174
        %v4251 = vmul.f32 %v4147, %v4174
        %v4252 = vmul.f32 %v4148, %v4174
        %v4253 = vmul.f32 %v4149, %v4174
        %v4254 = vmul.f32 %v4150, %v4174
        %v4255 = vmul.f32 %v4151, %v4174
        %v4256 = vmul.f32 %v4152, %v4174
        %v4257 = vmul.f32 %v4153, %v4174
        %v4258 = vmul.f32 %v4154, %v4174
        %v4259 = vmul.f32 %v4155, %v4174
        %v4260 = vmul.f32 %v4156, %v4174
        %v4261 = vmul.f32 %v4157, %v4174
        %v4262 = vmul.f32 %v4158, %v4174
        %v4263 = vmul.f32 %v4159, %v4174
        %v4264 = vmul.f32 %v4160, %v4174
        %v4265 = vmul.f32 %v4161, %v4174
        %v4266 = vmul.f32 %v4162, %v4174
        %v4267 = vmul.f32 %v4163, %v4174
        %v4268 = vmul.f32 %v4164, %v4174
        %v4269 = vmul.f32 %v4165, %v4174
        %v4270 = vmul.f32 %v4166, %v4174
        %v4271 = vmul.f32 %v4167, %v4174
        %v4272 = vmul.f32 %v4168, %v4174
        %v4273 = vmul.f32 %v4169, %v4174
        %v4274 = vmul.f32 %v4170, %v4174
        %v4275 = vmul.f32 %v4171, %v4174
        %v4276 = vld [vmem:[%s4] sm:$0x1]
        %v4278 = vperm.slane %v4276, 0
        %v4280 = vadd.f32 %v4176, %v4278
        %v4281 = vadd.f32 %v4177, %v4278
        %v4282 = vadd.f32 %v4178, %v4278
        %v4283 = vadd.f32 %v4179, %v4278
        %v4284 = vadd.f32 %v4180, %v4278
        %v4285 = vadd.f32 %v4181, %v4278
        %v4286 = vadd.f32 %v4182, %v4278
        %v4287 = vadd.f32 %v4183, %v4278
        %v4288 = vadd.f32 %v4184, %v4278
        %v4289 = vadd.f32 %v4185, %v4278
        %v4290 = vadd.f32 %v4186, %v4278
        %v4291 = vadd.f32 %v4187, %v4278
        %v4292 = vadd.f32 %v4188, %v4278
        %v4293 = vadd.f32 %v4189, %v4278
        %v4294 = vadd.f32 %v4190, %v4278
        %v4295 = vadd.f32 %v4191, %v4278
        %v4296 = vadd.f32 %v4192, %v4278
        %v4297 = vadd.f32 %v4193, %v4278
        %v4298 = vadd.f32 %v4194, %v4278
        %v4299 = vadd.f32 %v4195, %v4278
        %v4300 = vadd.f32 %v4196, %v4278
        %v4301 = vadd.f32 %v4197, %v4278
        %v4302 = vadd.f32 %v4198, %v4278
        %v4303 = vadd.f32 %v4199, %v4278
        %v4304 = vadd.f32 %v4200, %v4278
        %v4305 = vadd.f32 %v4201, %v4278
        %v4306 = vadd.f32 %v4202, %v4278
        %v4307 = vadd.f32 %v4203, %v4278
        %v4308 = vadd.f32 %v4204, %v4278
        %v4309 = vadd.f32 %v4205, %v4278
        %v4310 = vadd.f32 %v4206, %v4278
        %v4311 = vadd.f32 %v4207, %v4278
        %v4312 = vadd.f32 %v4208, %v4278
        %v4313 = vadd.f32 %v4209, %v4278
        %v4314 = vadd.f32 %v4210, %v4278
        %v4315 = vadd.f32 %v4211, %v4278
        %v4316 = vadd.f32 %v4212, %v4278
        %v4317 = vadd.f32 %v4213, %v4278
        %v4318 = vadd.f32 %v4214, %v4278
        %v4319 = vadd.f32 %v4215, %v4278
        %v4320 = vadd.f32 %v4216, %v4278
        %v4321 = vadd.f32 %v4217, %v4278
        %v4322 = vadd.f32 %v4218, %v4278
        %v4323 = vadd.f32 %v4219, %v4278
        %v4324 = vadd.f32 %v4220, %v4278
        %v4325 = vadd.f32 %v4221, %v4278
        %v4326 = vadd.f32 %v4222, %v4278
        %v4327 = vadd.f32 %v4223, %v4278
        %v4328 = vadd.f32 %v4224, %v4278
        %v4329 = vadd.f32 %v4225, %v4278
        %v4330 = vadd.f32 %v4226, %v4278
        %v4331 = vadd.f32 %v4227, %v4278
        %v4332 = vadd.f32 %v4228, %v4278
        %v4333 = vadd.f32 %v4229, %v4278
        %v4334 = vadd.f32 %v4230, %v4278
        %v4335 = vadd.f32 %v4231, %v4278
        %v4336 = vadd.f32 %v4232, %v4278
        %v4337 = vadd.f32 %v4233, %v4278
        %v4338 = vadd.f32 %v4234, %v4278
        %v4339 = vadd.f32 %v4235, %v4278
        %v4340 = vadd.f32 %v4236, %v4278
        %v4341 = vadd.f32 %v4237, %v4278
        %v4342 = vadd.f32 %v4238, %v4278
        %v4343 = vadd.f32 %v4239, %v4278
        %v4344 = vadd.f32 %v4240, %v4278
        %v4345 = vadd.f32 %v4241, %v4278
        %v4346 = vadd.f32 %v4242, %v4278
        %v4347 = vadd.f32 %v4243, %v4278
        %v4348 = vadd.f32 %v4244, %v4278
        %v4349 = vadd.f32 %v4245, %v4278
        %v4350 = vadd.f32 %v4246, %v4278
        %v4351 = vadd.f32 %v4247, %v4278
        %v4352 = vadd.f32 %v4248, %v4278
        %v4353 = vadd.f32 %v4249, %v4278
        %v4354 = vadd.f32 %v4250, %v4278
        %v4355 = vadd.f32 %v4251, %v4278
        %v4356 = vadd.f32 %v4252, %v4278
        %v4357 = vadd.f32 %v4253, %v4278
        %v4358 = vadd.f32 %v4254, %v4278
        %v4359 = vadd.f32 %v4255, %v4278
        %v4360 = vadd.f32 %v4256, %v4278
        %v4361 = vadd.f32 %v4257, %v4278
        %v4362 = vadd.f32 %v4258, %v4278
        %v4363 = vadd.f32 %v4259, %v4278
        %v4364 = vadd.f32 %v4260, %v4278
        %v4365 = vadd.f32 %v4261, %v4278
        %v4366 = vadd.f32 %v4262, %v4278
        %v4367 = vadd.f32 %v4263, %v4278
        %v4368 = vadd.f32 %v4264, %v4278
        %v4369 = vadd.f32 %v4265, %v4278
        %v4370 = vadd.f32 %v4266, %v4278
        %v4371 = vadd.f32 %v4267, %v4278
        %v4372 = vadd.f32 %v4268, %v4278
        %v4373 = vadd.f32 %v4269, %v4278
        %v4374 = vadd.f32 %v4270, %v4278
        %v4375 = vadd.f32 %v4271, %v4278
        %v4376 = vadd.f32 %v4272, %v4278
        %v4377 = vadd.f32 %v4273, %v4278
        %v4378 = vadd.f32 %v4274, %v4278
        %v4379 = vadd.f32 %v4275, %v4278
        %v4380 = vmul.f32 %v4280, %v4280
        %v4381 = vmul.f32 %v4281, %v4281
        %v4382 = vmul.f32 %v4282, %v4282
        %v4383 = vmul.f32 %v4283, %v4283
        %v4384 = vmul.f32 %v4284, %v4284
        %v4385 = vmul.f32 %v4285, %v4285
        %v4386 = vmul.f32 %v4286, %v4286
        %v4387 = vmul.f32 %v4287, %v4287
        %v4388 = vmul.f32 %v4288, %v4288
        %v4389 = vmul.f32 %v4289, %v4289
        %v4390 = vmul.f32 %v4290, %v4290
        %v4391 = vmul.f32 %v4291, %v4291
        %v4392 = vmul.f32 %v4292, %v4292
        %v4393 = vmul.f32 %v4293, %v4293
        %v4394 = vmul.f32 %v4294, %v4294
        %v4395 = vmul.f32 %v4295, %v4295
        %v4396 = vmul.f32 %v4296, %v4296
        %v4397 = vmul.f32 %v4297, %v4297
        %v4398 = vmul.f32 %v4298, %v4298
        %v4399 = vmul.f32 %v4299, %v4299
        %v4400 = vmul.f32 %v4300, %v4300
        %v4401 = vmul.f32 %v4301, %v4301
        %v4402 = vmul.f32 %v4302, %v4302
        %v4403 = vmul.f32 %v4303, %v4303
        %v4404 = vmul.f32 %v4304, %v4304
        %v4405 = vmul.f32 %v4305, %v4305
        %v4406 = vmul.f32 %v4306, %v4306
        %v4407 = vmul.f32 %v4307, %v4307
        %v4408 = vmul.f32 %v4308, %v4308
        %v4409 = vmul.f32 %v4309, %v4309
        %v4410 = vmul.f32 %v4310, %v4310
        %v4411 = vmul.f32 %v4311, %v4311
        %v4412 = vmul.f32 %v4312, %v4312
        %v4413 = vmul.f32 %v4313, %v4313
        %v4414 = vmul.f32 %v4314, %v4314
        %v4415 = vmul.f32 %v4315, %v4315
        %v4416 = vmul.f32 %v4316, %v4316
        %v4417 = vmul.f32 %v4317, %v4317
        %v4418 = vmul.f32 %v4318, %v4318
        %v4419 = vmul.f32 %v4319, %v4319
        %v4420 = vmul.f32 %v4320, %v4320
        %v4421 = vmul.f32 %v4321, %v4321
        %v4422 = vmul.f32 %v4322, %v4322
        %v4423 = vmul.f32 %v4323, %v4323
        %v4424 = vmul.f32 %v4324, %v4324
        %v4425 = vmul.f32 %v4325, %v4325
        %v4426 = vmul.f32 %v4326, %v4326
        %v4427 = vmul.f32 %v4327, %v4327
        %v4428 = vmul.f32 %v4328, %v4328
        %v4429 = vmul.f32 %v4329, %v4329
        %v4430 = vmul.f32 %v4330, %v4330
        %v4431 = vmul.f32 %v4331, %v4331
        %v4432 = vmul.f32 %v4332, %v4332
        %v4433 = vmul.f32 %v4333, %v4333
        %v4434 = vmul.f32 %v4334, %v4334
        %v4435 = vmul.f32 %v4335, %v4335
        %v4436 = vmul.f32 %v4336, %v4336
        %v4437 = vmul.f32 %v4337, %v4337
        %v4438 = vmul.f32 %v4338, %v4338
        %v4439 = vmul.f32 %v4339, %v4339
        %v4440 = vmul.f32 %v4340, %v4340
        %v4441 = vmul.f32 %v4341, %v4341
        %v4442 = vmul.f32 %v4342, %v4342
        %v4443 = vmul.f32 %v4343, %v4343
        %v4444 = vmul.f32 %v4344, %v4344
        %v4445 = vmul.f32 %v4345, %v4345
        %v4446 = vmul.f32 %v4346, %v4346
        %v4447 = vmul.f32 %v4347, %v4347
        %v4448 = vmul.f32 %v4348, %v4348
        %v4449 = vmul.f32 %v4349, %v4349
        %v4450 = vmul.f32 %v4350, %v4350
        %v4451 = vmul.f32 %v4351, %v4351
        %v4452 = vmul.f32 %v4352, %v4352
        %v4453 = vmul.f32 %v4353, %v4353
        %v4454 = vmul.f32 %v4354, %v4354
        %v4455 = vmul.f32 %v4355, %v4355
        %v4456 = vmul.f32 %v4356, %v4356
        %v4457 = vmul.f32 %v4357, %v4357
        %v4458 = vmul.f32 %v4358, %v4358
        %v4459 = vmul.f32 %v4359, %v4359
        %v4460 = vmul.f32 %v4360, %v4360
        %v4461 = vmul.f32 %v4361, %v4361
        %v4462 = vmul.f32 %v4362, %v4362
        %v4463 = vmul.f32 %v4363, %v4363
        %v4464 = vmul.f32 %v4364, %v4364
        %v4465 = vmul.f32 %v4365, %v4365
        %v4466 = vmul.f32 %v4366, %v4366
        %v4467 = vmul.f32 %v4367, %v4367
        %v4468 = vmul.f32 %v4368, %v4368
        %v4469 = vmul.f32 %v4369, %v4369
        %v4470 = vmul.f32 %v4370, %v4370
        %v4471 = vmul.f32 %v4371, %v4371
        %v4472 = vmul.f32 %v4372, %v4372
        %v4473 = vmul.f32 %v4373, %v4373
        %v4474 = vmul.f32 %v4374, %v4374
        %v4475 = vmul.f32 %v4375, %v4375
        %v4476 = vmul.f32 %v4376, %v4376
        %v4477 = vmul.f32 %v4377, %v4377
        %v4478 = vmul.f32 %v4378, %v4378
        %v4479 = vmul.f32 %v4379, %v4379
        %v4480 = vmul.f32 %v4280, %v4380
        %v4481 = vmul.f32 %v4281, %v4381
        %v4482 = vmul.f32 %v4282, %v4382
        %v4483 = vmul.f32 %v4283, %v4383
        %v4484 = vmul.f32 %v4284, %v4384
        %v4485 = vmul.f32 %v4285, %v4385
        %v4486 = vmul.f32 %v4286, %v4386
        %v4487 = vmul.f32 %v4287, %v4387
        %v4488 = vmul.f32 %v4288, %v4388
        %v4489 = vmul.f32 %v4289, %v4389
        %v4490 = vmul.f32 %v4290, %v4390
        %v4491 = vmul.f32 %v4291, %v4391
        %v4492 = vmul.f32 %v4292, %v4392
        %v4493 = vmul.f32 %v4293, %v4393
        %v4494 = vmul.f32 %v4294, %v4394
        %v4495 = vmul.f32 %v4295, %v4395
        %v4496 = vmul.f32 %v4296, %v4396
        %v4497 = vmul.f32 %v4297, %v4397
        %v4498 = vmul.f32 %v4298, %v4398
        %v4499 = vmul.f32 %v4299, %v4399
        %v4500 = vmul.f32 %v4300, %v4400
        %v4501 = vmul.f32 %v4301, %v4401
        %v4502 = vmul.f32 %v4302, %v4402
        %v4503 = vmul.f32 %v4303, %v4403
        %v4504 = vmul.f32 %v4304, %v4404
        %v4505 = vmul.f32 %v4305, %v4405
        %v4506 = vmul.f32 %v4306, %v4406
        %v4507 = vmul.f32 %v4307, %v4407
        %v4508 = vmul.f32 %v4308, %v4408
        %v4509 = vmul.f32 %v4309, %v4409
        %v4510 = vmul.f32 %v4310, %v4410
        %v4511 = vmul.f32 %v4311, %v4411
        %v4512 = vmul.f32 %v4312, %v4412
        %v4513 = vmul.f32 %v4313, %v4413
        %v4514 = vmul.f32 %v4314, %v4414
        %v4515 = vmul.f32 %v4315, %v4415
        %v4516 = vmul.f32 %v4316, %v4416
        %v4517 = vmul.f32 %v4317, %v4417
        %v4518 = vmul.f32 %v4318, %v4418
        %v4519 = vmul.f32 %v4319, %v4419
        %v4520 = vmul.f32 %v4320, %v4420
        %v4521 = vmul.f32 %v4321, %v4421
        %v4522 = vmul.f32 %v4322, %v4422
        %v4523 = vmul.f32 %v4323, %v4423
        %v4524 = vmul.f32 %v4324, %v4424
        %v4525 = vmul.f32 %v4325, %v4425
        %v4526 = vmul.f32 %v4326, %v4426
        %v4527 = vmul.f32 %v4327, %v4427
        %v4528 = vmul.f32 %v4328, %v4428
        %v4529 = vmul.f32 %v4329, %v4429
        %v4530 = vmul.f32 %v4330, %v4430
        %v4531 = vmul.f32 %v4331, %v4431
        %v4532 = vmul.f32 %v4332, %v4432
        %v4533 = vmul.f32 %v4333, %v4433
        %v4534 = vmul.f32 %v4334, %v4434
        %v4535 = vmul.f32 %v4335, %v4435
        %v4536 = vmul.f32 %v4336, %v4436
        %v4537 = vmul.f32 %v4337, %v4437
        %v4538 = vmul.f32 %v4338, %v4438
        %v4539 = vmul.f32 %v4339, %v4439
        %v4540 = vmul.f32 %v4340, %v4440
        %v4541 = vmul.f32 %v4341, %v4441
        %v4542 = vmul.f32 %v4342, %v4442
        %v4543 = vmul.f32 %v4343, %v4443
        %v4544 = vmul.f32 %v4344, %v4444
        %v4545 = vmul.f32 %v4345, %v4445
        %v4546 = vmul.f32 %v4346, %v4446
        %v4547 = vmul.f32 %v4347, %v4447
        %v4548 = vmul.f32 %v4348, %v4448
        %v4549 = vmul.f32 %v4349, %v4449
        %v4550 = vmul.f32 %v4350, %v4450
        %v4551 = vmul.f32 %v4351, %v4451
        %v4552 = vmul.f32 %v4352, %v4452
        %v4553 = vmul.f32 %v4353, %v4453
        %v4554 = vmul.f32 %v4354, %v4454
        %v4555 = vmul.f32 %v4355, %v4455
        %v4556 = vmul.f32 %v4356, %v4456
        %v4557 = vmul.f32 %v4357, %v4457
        %v4558 = vmul.f32 %v4358, %v4458
        %v4559 = vmul.f32 %v4359, %v4459
        %v4560 = vmul.f32 %v4360, %v4460
        %v4561 = vmul.f32 %v4361, %v4461
        %v4562 = vmul.f32 %v4362, %v4462
        %v4563 = vmul.f32 %v4363, %v4463
        %v4564 = vmul.f32 %v4364, %v4464
        %v4565 = vmul.f32 %v4365, %v4465
        %v4566 = vmul.f32 %v4366, %v4466
        %v4567 = vmul.f32 %v4367, %v4467
        %v4568 = vmul.f32 %v4368, %v4468
        %v4569 = vmul.f32 %v4369, %v4469
        %v4570 = vmul.f32 %v4370, %v4470
        %v4571 = vmul.f32 %v4371, %v4471
        %v4572 = vmul.f32 %v4372, %v4472
        %v4573 = vmul.f32 %v4373, %v4473
        %v4574 = vmul.f32 %v4374, %v4474
        %v4575 = vmul.f32 %v4375, %v4475
        %v4576 = vmul.f32 %v4376, %v4476
        %v4577 = vmul.f32 %v4377, %v4477
        %v4578 = vmul.f32 %v4378, %v4478
        %v4579 = vmul.f32 %v4379, %v4479
        %v4580 = vmul.f32 %v4480, 0.044715
        %v4581 = vmul.f32 %v4481, 0.044715
        %v4582 = vmul.f32 %v4482, 0.044715
        %v4583 = vmul.f32 %v4483, 0.044715
        %v4584 = vmul.f32 %v4484, 0.044715
        %v4585 = vmul.f32 %v4485, 0.044715
        %v4586 = vmul.f32 %v4486, 0.044715
        %v4587 = vmul.f32 %v4487, 0.044715
        %v4588 = vmul.f32 %v4488, 0.044715
        %v4589 = vmul.f32 %v4489, 0.044715
        %v4590 = vmul.f32 %v4490, 0.044715
        %v4591 = vmul.f32 %v4491, 0.044715
        %v4592 = vmul.f32 %v4492, 0.044715
        %v4593 = vmul.f32 %v4493, 0.044715
        %v4594 = vmul.f32 %v4494, 0.044715
        %v4595 = vmul.f32 %v4495, 0.044715
        %v4596 = vmul.f32 %v4496, 0.044715
        %v4597 = vmul.f32 %v4497, 0.044715
        %v4598 = vmul.f32 %v4498, 0.044715
        %v4599 = vmul.f32 %v4499, 0.044715
        %v4600 = vmul.f32 %v4500, 0.044715
        %v4601 = vmul.f32 %v4501, 0.044715
        %v4602 = vmul.f32 %v4502, 0.044715
        %v4603 = vmul.f32 %v4503, 0.044715
        %v4604 = vmul.f32 %v4504, 0.044715
        %v4605 = vmul.f32 %v4505, 0.044715
        %v4606 = vmul.f32 %v4506, 0.044715
        %v4607 = vmul.f32 %v4507, 0.044715
        %v4608 = vmul.f32 %v4508, 0.044715
        %v4609 = vmul.f32 %v4509, 0.044715
        %v4610 = vmul.f32 %v4510, 0.044715
        %v4611 = vmul.f32 %v4511, 0.044715
        %v4612 = vmul.f32 %v4512, 0.044715
        %v4613 = vmul.f32 %v4513, 0.044715
        %v4614 = vmul.f32 %v4514, 0.044715
        %v4615 = vmul.f32 %v4515, 0.044715
        %v4616 = vmul.f32 %v4516, 0.044715
        %v4617 = vmul.f32 %v4517, 0.044715
        %v4618 = vmul.f32 %v4518, 0.044715
        %v4619 = vmul.f32 %v4519, 0.044715
        %v4620 = vmul.f32 %v4520, 0.044715
        %v4621 = vmul.f32 %v4521, 0.044715
        %v4622 = vmul.f32 %v4522, 0.044715
        %v4623 = vmul.f32 %v4523, 0.044715
        %v4624 = vmul.f32 %v4524, 0.044715
        %v4625 = vmul.f32 %v4525, 0.044715
        %v4626 = vmul.f32 %v4526, 0.044715
        %v4627 = vmul.f32 %v4527, 0.044715
        %v4628 = vmul.f32 %v4528, 0.044715
        %v4629 = vmul.f32 %v4529, 0.044715
        %v4630 = vmul.f32 %v4530, 0.044715
        %v4631 = vmul.f32 %v4531, 0.044715
        %v4632 = vmul.f32 %v4532, 0.044715
        %v4633 = vmul.f32 %v4533, 0.044715
        %v4634 = vmul.f32 %v4534, 0.044715
        %v4635 = vmul.f32 %v4535, 0.044715
        %v4636 = vmul.f32 %v4536, 0.044715
        %v4637 = vmul.f32 %v4537, 0.044715
        %v4638 = vmul.f32 %v4538, 0.044715
        %v4639 = vmul.f32 %v4539, 0.044715
        %v4640 = vmul.f32 %v4540, 0.044715
        %v4641 = vmul.f32 %v4541, 0.044715
        %v4642 = vmul.f32 %v4542, 0.044715
        %v4643 = vmul.f32 %v4543, 0.044715
        %v4644 = vmul.f32 %v4544, 0.044715
        %v4645 = vmul.f32 %v4545, 0.044715
        %v4646 = vmul.f32 %v4546, 0.044715
        %v4647 = vmul.f32 %v4547, 0.044715
        %v4648 = vmul.f32 %v4548, 0.044715
        %v4649 = vmul.f32 %v4549, 0.044715
        %v4650 = vmul.f32 %v4550, 0.044715
        %v4651 = vmul.f32 %v4551, 0.044715
        %v4652 = vmul.f32 %v4552, 0.044715
        %v4653 = vmul.f32 %v4553, 0.044715
        %v4654 = vmul.f32 %v4554, 0.044715
        %v4655 = vmul.f32 %v4555, 0.044715
        %v4656 = vmul.f32 %v4556, 0.044715
        %v4657 = vmul.f32 %v4557, 0.044715
        %v4658 = vmul.f32 %v4558, 0.044715
        %v4659 = vmul.f32 %v4559, 0.044715
        %v4660 = vmul.f32 %v4560, 0.044715
        %v4661 = vmul.f32 %v4561, 0.044715
        %v4662 = vmul.f32 %v4562, 0.044715
        %v4663 = vmul.f32 %v4563, 0.044715
        %v4664 = vmul.f32 %v4564, 0.044715
        %v4665 = vmul.f32 %v4565, 0.044715
        %v4666 = vmul.f32 %v4566, 0.044715
        %v4667 = vmul.f32 %v4567, 0.044715
        %v4668 = vmul.f32 %v4568, 0.044715
        %v4669 = vmul.f32 %v4569, 0.044715
        %v4670 = vmul.f32 %v4570, 0.044715
        %v4671 = vmul.f32 %v4571, 0.044715
        %v4672 = vmul.f32 %v4572, 0.044715
        %v4673 = vmul.f32 %v4573, 0.044715
        %v4674 = vmul.f32 %v4574, 0.044715
        %v4675 = vmul.f32 %v4575, 0.044715
        %v4676 = vmul.f32 %v4576, 0.044715
        %v4677 = vmul.f32 %v4577, 0.044715
        %v4678 = vmul.f32 %v4578, 0.044715
        %v4679 = vmul.f32 %v4579, 0.044715
        %v4680 = vadd.f32 %v4280, %v4580
        %v4681 = vadd.f32 %v4281, %v4581
        %v4682 = vadd.f32 %v4282, %v4582
        %v4683 = vadd.f32 %v4283, %v4583
        %v4684 = vadd.f32 %v4284, %v4584
        %v4685 = vadd.f32 %v4285, %v4585
        %v4686 = vadd.f32 %v4286, %v4586
        %v4687 = vadd.f32 %v4287, %v4587
        %v4688 = vadd.f32 %v4288, %v4588
        %v4689 = vadd.f32 %v4289, %v4589
        %v4690 = vadd.f32 %v4290, %v4590
        %v4691 = vadd.f32 %v4291, %v4591
        %v4692 = vadd.f32 %v4292, %v4592
        %v4693 = vadd.f32 %v4293, %v4593
        %v4694 = vadd.f32 %v4294, %v4594
        %v4695 = vadd.f32 %v4295, %v4595
        %v4696 = vadd.f32 %v4296, %v4596
        %v4697 = vadd.f32 %v4297, %v4597
        %v4698 = vadd.f32 %v4298, %v4598
        %v4699 = vadd.f32 %v4299, %v4599
        %v4700 = vadd.f32 %v4300, %v4600
        %v4701 = vadd.f32 %v4301, %v4601
        %v4702 = vadd.f32 %v4302, %v4602
        %v4703 = vadd.f32 %v4303, %v4603
        %v4704 = vadd.f32 %v4304, %v4604
        %v4705 = vadd.f32 %v4305, %v4605
        %v4706 = vadd.f32 %v4306, %v4606
        %v4707 = vadd.f32 %v4307, %v4607
        %v4708 = vadd.f32 %v4308, %v4608
        %v4709 = vadd.f32 %v4309, %v4609
        %v4710 = vadd.f32 %v4310, %v4610
        %v4711 = vadd.f32 %v4311, %v4611
        %v4712 = vadd.f32 %v4312, %v4612
        %v4713 = vadd.f32 %v4313, %v4613
        %v4714 = vadd.f32 %v4314, %v4614
        %v4715 = vadd.f32 %v4315, %v4615
        %v4716 = vadd.f32 %v4316, %v4616
        %v4717 = vadd.f32 %v4317, %v4617
        %v4718 = vadd.f32 %v4318, %v4618
        %v4719 = vadd.f32 %v4319, %v4619
        %v4720 = vadd.f32 %v4320, %v4620
        %v4721 = vadd.f32 %v4321, %v4621
        %v4722 = vadd.f32 %v4322, %v4622
        %v4723 = vadd.f32 %v4323, %v4623
        %v4724 = vadd.f32 %v4324, %v4624
        %v4725 = vadd.f32 %v4325, %v4625
        %v4726 = vadd.f32 %v4326, %v4626
        %v4727 = vadd.f32 %v4327, %v4627
        %v4728 = vadd.f32 %v4328, %v4628
        %v4729 = vadd.f32 %v4329, %v4629
        %v4730 = vadd.f32 %v4330, %v4630
        %v4731 = vadd.f32 %v4331, %v4631
        %v4732 = vadd.f32 %v4332, %v4632
        %v4733 = vadd.f32 %v4333, %v4633
        %v4734 = vadd.f32 %v4334, %v4634
        %v4735 = vadd.f32 %v4335, %v4635
        %v4736 = vadd.f32 %v4336, %v4636
        %v4737 = vadd.f32 %v4337, %v4637
        %v4738 = vadd.f32 %v4338, %v4638
        %v4739 = vadd.f32 %v4339, %v4639
        %v4740 = vadd.f32 %v4340, %v4640
        %v4741 = vadd.f32 %v4341, %v4641
        %v4742 = vadd.f32 %v4342, %v4642
        %v4743 = vadd.f32 %v4343, %v4643
        %v4744 = vadd.f32 %v4344, %v4644
        %v4745 = vadd.f32 %v4345, %v4645
        %v4746 = vadd.f32 %v4346, %v4646
        %v4747 = vadd.f32 %v4347, %v4647
        %v4748 = vadd.f32 %v4348, %v4648
        %v4749 = vadd.f32 %v4349, %v4649
        %v4750 = vadd.f32 %v4350, %v4650
        %v4751 = vadd.f32 %v4351, %v4651
        %v4752 = vadd.f32 %v4352, %v4652
        %v4753 = vadd.f32 %v4353, %v4653
        %v4754 = vadd.f32 %v4354, %v4654
        %v4755 = vadd.f32 %v4355, %v4655
        %v4756 = vadd.f32 %v4356, %v4656
        %v4757 = vadd.f32 %v4357, %v4657
        %v4758 = vadd.f32 %v4358, %v4658
        %v4759 = vadd.f32 %v4359, %v4659
        %v4760 = vadd.f32 %v4360, %v4660
        %v4761 = vadd.f32 %v4361, %v4661
        %v4762 = vadd.f32 %v4362, %v4662
        %v4763 = vadd.f32 %v4363, %v4663
        %v4764 = vadd.f32 %v4364, %v4664
        %v4765 = vadd.f32 %v4365, %v4665
        %v4766 = vadd.f32 %v4366, %v4666
        %v4767 = vadd.f32 %v4367, %v4667
        %v4768 = vadd.f32 %v4368, %v4668
        %v4769 = vadd.f32 %v4369, %v4669
        %v4770 = vadd.f32 %v4370, %v4670
        %v4771 = vadd.f32 %v4371, %v4671
        %v4772 = vadd.f32 %v4372, %v4672
        %v4773 = vadd.f32 %v4373, %v4673
        %v4774 = vadd.f32 %v4374, %v4674
        %v4775 = vadd.f32 %v4375, %v4675
        %v4776 = vadd.f32 %v4376, %v4676
        %v4777 = vadd.f32 %v4377, %v4677
        %v4778 = vadd.f32 %v4378, %v4678
        %v4779 = vadd.f32 %v4379, %v4679
        %v4780 = vmul.f32 %v4680, 0.7978846
        %v4781 = vmul.f32 %v4681, 0.7978846
        %v4782 = vmul.f32 %v4682, 0.7978846
        %v4783 = vmul.f32 %v4683, 0.7978846
        %v4784 = vmul.f32 %v4684, 0.7978846
        %v4785 = vmul.f32 %v4685, 0.7978846
        %v4786 = vmul.f32 %v4686, 0.7978846
        %v4787 = vmul.f32 %v4687, 0.7978846
        %v4788 = vmul.f32 %v4688, 0.7978846
        %v4789 = vmul.f32 %v4689, 0.7978846
        %v4790 = vmul.f32 %v4690, 0.7978846
        %v4791 = vmul.f32 %v4691, 0.7978846
        %v4792 = vmul.f32 %v4692, 0.7978846
        %v4793 = vmul.f32 %v4693, 0.7978846
        %v4794 = vmul.f32 %v4694, 0.7978846
        %v4795 = vmul.f32 %v4695, 0.7978846
        %v4796 = vmul.f32 %v4696, 0.7978846
        %v4797 = vmul.f32 %v4697, 0.7978846
        %v4798 = vmul.f32 %v4698, 0.7978846
        %v4799 = vmul.f32 %v4699, 0.7978846
        %v4800 = vmul.f32 %v4700, 0.7978846
        %v4801 = vmul.f32 %v4701, 0.7978846
        %v4802 = vmul.f32 %v4702, 0.7978846
        %v4803 = vmul.f32 %v4703, 0.7978846
        %v4804 = vmul.f32 %v4704, 0.7978846
        %v4805 = vmul.f32 %v4705, 0.7978846
        %v4806 = vmul.f32 %v4706, 0.7978846
        %v4807 = vmul.f32 %v4707, 0.7978846
        %v4808 = vmul.f32 %v4708, 0.7978846
        %v4809 = vmul.f32 %v4709, 0.7978846
        %v4810 = vmul.f32 %v4710, 0.7978846
        %v4811 = vmul.f32 %v4711, 0.7978846
        %v4812 = vmul.f32 %v4712, 0.7978846
        %v4813 = vmul.f32 %v4713, 0.7978846
        %v4814 = vmul.f32 %v4714, 0.7978846
        %v4815 = vmul.f32 %v4715, 0.7978846
        %v4816 = vmul.f32 %v4716, 0.7978846
        %v4817 = vmul.f32 %v4717, 0.7978846
        %v4818 = vmul.f32 %v4718, 0.7978846
        %v4819 = vmul.f32 %v4719, 0.7978846
        %v4820 = vmul.f32 %v4720, 0.7978846
        %v4821 = vmul.f32 %v4721, 0.7978846
        %v4822 = vmul.f32 %v4722, 0.7978846
        %v4823 = vmul.f32 %v4723, 0.7978846
        %v4824 = vmul.f32 %v4724, 0.7978846
        %v4825 = vmul.f32 %v4725, 0.7978846
        %v4826 = vmul.f32 %v4726, 0.7978846
        %v4827 = vmul.f32 %v4727, 0.7978846
        %v4828 = vmul.f32 %v4728, 0.7978846
        %v4829 = vmul.f32 %v4729, 0.7978846
        %v4830 = vmul.f32 %v4730, 0.7978846
        %v4831 = vmul.f32 %v4731, 0.7978846
        %v4832 = vmul.f32 %v4732, 0.7978846
        %v4833 = vmul.f32 %v4733, 0.7978846
        %v4834 = vmul.f32 %v4734, 0.7978846
        %v4835 = vmul.f32 %v4735, 0.7978846
        %v4836 = vmul.f32 %v4736, 0.7978846
        %v4837 = vmul.f32 %v4737, 0.7978846
        %v4838 = vmul.f32 %v4738, 0.7978846
        %v4839 = vmul.f32 %v4739, 0.7978846
        %v4840 = vmul.f32 %v4740, 0.7978846
        %v4841 = vmul.f32 %v4741, 0.7978846
        %v4842 = vmul.f32 %v4742, 0.7978846
        %v4843 = vmul.f32 %v4743, 0.7978846
        %v4844 = vmul.f32 %v4744, 0.7978846
        %v4845 = vmul.f32 %v4745, 0.7978846
        %v4846 = vmul.f32 %v4746, 0.7978846
        %v4847 = vmul.f32 %v4747, 0.7978846
        %v4848 = vmul.f32 %v4748, 0.7978846
        %v4849 = vmul.f32 %v4749, 0.7978846
        %v4850 = vmul.f32 %v4750, 0.7978846
        %v4851 = vmul.f32 %v4751, 0.7978846
        %v4852 = vmul.f32 %v4752, 0.7978846
        %v4853 = vmul.f32 %v4753, 0.7978846
        %v4854 = vmul.f32 %v4754, 0.7978846
        %v4855 = vmul.f32 %v4755, 0.7978846
        %v4856 = vmul.f32 %v4756, 0.7978846
        %v4857 = vmul.f32 %v4757, 0.7978846
        %v4858 = vmul.f32 %v4758, 0.7978846
        %v4859 = vmul.f32 %v4759, 0.7978846
        %v4860 = vmul.f32 %v4760, 0.7978846
        %v4861 = vmul.f32 %v4761, 0.7978846
        %v4862 = vmul.f32 %v4762, 0.7978846
        %v4863 = vmul.f32 %v4763, 0.7978846
        %v4864 = vmul.f32 %v4764, 0.7978846
        %v4865 = vmul.f32 %v4765, 0.7978846
        %v4866 = vmul.f32 %v4766, 0.7978846
        %v4867 = vmul.f32 %v4767, 0.7978846
        %v4868 = vmul.f32 %v4768, 0.7978846
        %v4869 = vmul.f32 %v4769, 0.7978846
        %v4870 = vmul.f32 %v4770, 0.7978846
        %v4871 = vmul.f32 %v4771, 0.7978846
        %v4872 = vmul.f32 %v4772, 0.7978846
        %v4873 = vmul.f32 %v4773, 0.7978846
        %v4874 = vmul.f32 %v4774, 0.7978846
        %v4875 = vmul.f32 %v4775, 0.7978846
        %v4876 = vmul.f32 %v4776, 0.7978846
        %v4877 = vmul.f32 %v4777, 0.7978846
        %v4878 = vmul.f32 %v4778, 0.7978846
        %v4879 = vmul.f32 %v4779, 0.7978846
        %v4880 = vtanh.pop %v4780
        %v4881 = vtanh.pop %v4781
        %v4882 = vtanh.pop %v4782
        %v4883 = vtanh.pop %v4783
        %v4884 = vtanh.pop %v4784
        %v4885 = vtanh.pop %v4785
        %v4886 = vtanh.pop %v4786
        %v4887 = vtanh.pop %v4787
        %v4888 = vtanh.pop %v4788
        %v4889 = vtanh.pop %v4789
        %v4890 = vtanh.pop %v4790
        %v4891 = vtanh.pop %v4791
        %v4892 = vtanh.pop %v4792
        %v4893 = vtanh.pop %v4793
        %v4894 = vtanh.pop %v4794
        %v4895 = vtanh.pop %v4795
        %v4896 = vtanh.pop %v4796
        %v4897 = vtanh.pop %v4797
        %v4898 = vtanh.pop %v4798
        %v4899 = vtanh.pop %v4799
        %v4900 = vtanh.pop %v4800
        %v4901 = vtanh.pop %v4801
        %v4902 = vtanh.pop %v4802
        %v4903 = vtanh.pop %v4803
        %v4904 = vtanh.pop %v4804
        %v4905 = vtanh.pop %v4805
        %v4906 = vtanh.pop %v4806
        %v4907 = vtanh.pop %v4807
        %v4908 = vtanh.pop %v4808
        %v4909 = vtanh.pop %v4809
        %v4910 = vtanh.pop %v4810
        %v4911 = vtanh.pop %v4811
        %v4912 = vtanh.pop %v4812
        %v4913 = vtanh.pop %v4813
        %v4914 = vtanh.pop %v4814
        %v4915 = vtanh.pop %v4815
        %v4916 = vtanh.pop %v4816
        %v4917 = vtanh.pop %v4817
        %v4918 = vtanh.pop %v4818
        %v4919 = vtanh.pop %v4819
        %v4920 = vtanh.pop %v4820
        %v4921 = vtanh.pop %v4821
        %v4922 = vtanh.pop %v4822
        %v4923 = vtanh.pop %v4823
        %v4924 = vtanh.pop %v4824
        %v4925 = vtanh.pop %v4825
        %v4926 = vtanh.pop %v4826
        %v4927 = vtanh.pop %v4827
        %v4928 = vtanh.pop %v4828
        %v4929 = vtanh.pop %v4829
        %v4930 = vtanh.pop %v4830
        %v4931 = vtanh.pop %v4831
        %v4932 = vtanh.pop %v4832
        %v4933 = vtanh.pop %v4833
        %v4934 = vtanh.pop %v4834
        %v4935 = vtanh.pop %v4835
        %v4936 = vtanh.pop %v4836
        %v4937 = vtanh.pop %v4837
        %v4938 = vtanh.pop %v4838
        %v4939 = vtanh.pop %v4839
        %v4940 = vtanh.pop %v4840
        %v4941 = vtanh.pop %v4841
        %v4942 = vtanh.pop %v4842
        %v4943 = vtanh.pop %v4843
        %v4944 = vtanh.pop %v4844
        %v4945 = vtanh.pop %v4845
        %v4946 = vtanh.pop %v4846
        %v4947 = vtanh.pop %v4847
        %v4948 = vtanh.pop %v4848
        %v4949 = vtanh.pop %v4849
        %v4950 = vtanh.pop %v4850
        %v4951 = vtanh.pop %v4851
        %v4952 = vtanh.pop %v4852
        %v4953 = vtanh.pop %v4853
        %v4954 = vtanh.pop %v4854
        %v4955 = vtanh.pop %v4855
        %v4956 = vtanh.pop %v4856
        %v4957 = vtanh.pop %v4857
        %v4958 = vtanh.pop %v4858
        %v4959 = vtanh.pop %v4859
        %v4960 = vtanh.pop %v4860
        %v4961 = vtanh.pop %v4861
        %v4962 = vtanh.pop %v4862
        %v4963 = vtanh.pop %v4863
        %v4964 = vtanh.pop %v4864
        %v4965 = vtanh.pop %v4865
        %v4966 = vtanh.pop %v4866
        %v4967 = vtanh.pop %v4867
        %v4968 = vtanh.pop %v4868
        %v4969 = vtanh.pop %v4869
        %v4970 = vtanh.pop %v4870
        %v4971 = vtanh.pop %v4871
        %v4972 = vtanh.pop %v4872
        %v4973 = vtanh.pop %v4873
        %v4974 = vtanh.pop %v4874
        %v4975 = vtanh.pop %v4875
        %v4976 = vtanh.pop %v4876
        %v4977 = vtanh.pop %v4877
        %v4978 = vtanh.pop %v4878
        %v4979 = vtanh.pop %v4879
        %v4980 = vadd.f32 %v4880, 1.0
        %v4981 = vadd.f32 %v4881, 1.0
        %v4982 = vadd.f32 %v4882, 1.0
        %v4983 = vadd.f32 %v4883, 1.0
        %v4984 = vadd.f32 %v4884, 1.0
        %v4985 = vadd.f32 %v4885, 1.0
        %v4986 = vadd.f32 %v4886, 1.0
        %v4987 = vadd.f32 %v4887, 1.0
        %v4988 = vadd.f32 %v4888, 1.0
        %v4989 = vadd.f32 %v4889, 1.0
        %v4990 = vadd.f32 %v4890, 1.0
        %v4991 = vadd.f32 %v4891, 1.0
        %v4992 = vadd.f32 %v4892, 1.0
        %v4993 = vadd.f32 %v4893, 1.0
        %v4994 = vadd.f32 %v4894, 1.0
        %v4995 = vadd.f32 %v4895, 1.0
        %v4996 = vadd.f32 %v4896, 1.0
        %v4997 = vadd.f32 %v4897, 1.0
        %v4998 = vadd.f32 %v4898, 1.0
        %v4999 = vadd.f32 %v4899, 1.0
        %v5000 = vadd.f32 %v4900, 1.0
        %v5001 = vadd.f32 %v4901, 1.0
        %v5002 = vadd.f32 %v4902, 1.0
        %v5003 = vadd.f32 %v4903, 1.0
        %v5004 = vadd.f32 %v4904, 1.0
        %v5005 = vadd.f32 %v4905, 1.0
        %v5006 = vadd.f32 %v4906, 1.0
        %v5007 = vadd.f32 %v4907, 1.0
        %v5008 = vadd.f32 %v4908, 1.0
        %v5009 = vadd.f32 %v4909, 1.0
        %v5010 = vadd.f32 %v4910, 1.0
        %v5011 = vadd.f32 %v4911, 1.0
        %v5012 = vadd.f32 %v4912, 1.0
        %v5013 = vadd.f32 %v4913, 1.0
        %v5014 = vadd.f32 %v4914, 1.0
        %v5015 = vadd.f32 %v4915, 1.0
        %v5016 = vadd.f32 %v4916, 1.0
        %v5017 = vadd.f32 %v4917, 1.0
        %v5018 = vadd.f32 %v4918, 1.0
        %v5019 = vadd.f32 %v4919, 1.0
        %v5020 = vadd.f32 %v4920, 1.0
        %v5021 = vadd.f32 %v4921, 1.0
        %v5022 = vadd.f32 %v4922, 1.0
        %v5023 = vadd.f32 %v4923, 1.0
        %v5024 = vadd.f32 %v4924, 1.0
        %v5025 = vadd.f32 %v4925, 1.0
        %v5026 = vadd.f32 %v4926, 1.0
        %v5027 = vadd.f32 %v4927, 1.0
        %v5028 = vadd.f32 %v4928, 1.0
        %v5029 = vadd.f32 %v4929, 1.0
        %v5030 = vadd.f32 %v4930, 1.0
        %v5031 = vadd.f32 %v4931, 1.0
        %v5032 = vadd.f32 %v4932, 1.0
        %v5033 = vadd.f32 %v4933, 1.0
        %v5034 = vadd.f32 %v4934, 1.0
        %v5035 = vadd.f32 %v4935, 1.0
        %v5036 = vadd.f32 %v4936, 1.0
        %v5037 = vadd.f32 %v4937, 1.0
        %v5038 = vadd.f32 %v4938, 1.0
        %v5039 = vadd.f32 %v4939, 1.0
        %v5040 = vadd.f32 %v4940, 1.0
        %v5041 = vadd.f32 %v4941, 1.0
        %v5042 = vadd.f32 %v4942, 1.0
        %v5043 = vadd.f32 %v4943, 1.0
        %v5044 = vadd.f32 %v4944, 1.0
        %v5045 = vadd.f32 %v4945, 1.0
        %v5046 = vadd.f32 %v4946, 1.0
        %v5047 = vadd.f32 %v4947, 1.0
        %v5048 = vadd.f32 %v4948, 1.0
        %v5049 = vadd.f32 %v4949, 1.0
        %v5050 = vadd.f32 %v4950, 1.0
        %v5051 = vadd.f32 %v4951, 1.0
        %v5052 = vadd.f32 %v4952, 1.0
        %v5053 = vadd.f32 %v4953, 1.0
        %v5054 = vadd.f32 %v4954, 1.0
        %v5055 = vadd.f32 %v4955, 1.0
        %v5056 = vadd.f32 %v4956, 1.0
        %v5057 = vadd.f32 %v4957, 1.0
        %v5058 = vadd.f32 %v4958, 1.0
        %v5059 = vadd.f32 %v4959, 1.0
        %v5060 = vadd.f32 %v4960, 1.0
        %v5061 = vadd.f32 %v4961, 1.0
        %v5062 = vadd.f32 %v4962, 1.0
        %v5063 = vadd.f32 %v4963, 1.0
        %v5064 = vadd.f32 %v4964, 1.0
        %v5065 = vadd.f32 %v4965, 1.0
        %v5066 = vadd.f32 %v4966, 1.0
        %v5067 = vadd.f32 %v4967, 1.0
        %v5068 = vadd.f32 %v4968, 1.0
        %v5069 = vadd.f32 %v4969, 1.0
        %v5070 = vadd.f32 %v4970, 1.0
        %v5071 = vadd.f32 %v4971, 1.0
        %v5072 = vadd.f32 %v4972, 1.0
        %v5073 = vadd.f32 %v4973, 1.0
        %v5074 = vadd.f32 %v4974, 1.0
        %v5075 = vadd.f32 %v4975, 1.0
        %v5076 = vadd.f32 %v4976, 1.0
        %v5077 = vadd.f32 %v4977, 1.0
        %v5078 = vadd.f32 %v4978, 1.0
        %v5079 = vadd.f32 %v4979, 1.0
        %v5080 = vmul.f32 %v4980, 0.5
        %v5081 = vmul.f32 %v4981, 0.5
        %v5082 = vmul.f32 %v4982, 0.5
        %v5083 = vmul.f32 %v4983, 0.5
        %v5084 = vmul.f32 %v4984, 0.5
        %v5085 = vmul.f32 %v4985, 0.5
        %v5086 = vmul.f32 %v4986, 0.5
        %v5087 = vmul.f32 %v4987, 0.5
        %v5088 = vmul.f32 %v4988, 0.5
        %v5089 = vmul.f32 %v4989, 0.5
        %v5090 = vmul.f32 %v4990, 0.5
        %v5091 = vmul.f32 %v4991, 0.5
        %v5092 = vmul.f32 %v4992, 0.5
        %v5093 = vmul.f32 %v4993, 0.5
        %v5094 = vmul.f32 %v4994, 0.5
        %v5095 = vmul.f32 %v4995, 0.5
        %v5096 = vmul.f32 %v4996, 0.5
        %v5097 = vmul.f32 %v4997, 0.5
        %v5098 = vmul.f32 %v4998, 0.5
        %v5099 = vmul.f32 %v4999, 0.5
        %v5100 = vmul.f32 %v5000, 0.5
        %v5101 = vmul.f32 %v5001, 0.5
        %v5102 = vmul.f32 %v5002, 0.5
        %v5103 = vmul.f32 %v5003, 0.5
        %v5104 = vmul.f32 %v5004, 0.5
        %v5105 = vmul.f32 %v5005, 0.5
        %v5106 = vmul.f32 %v5006, 0.5
        %v5107 = vmul.f32 %v5007, 0.5
        %v5108 = vmul.f32 %v5008, 0.5
        %v5109 = vmul.f32 %v5009, 0.5
        %v5110 = vmul.f32 %v5010, 0.5
        %v5111 = vmul.f32 %v5011, 0.5
        %v5112 = vmul.f32 %v5012, 0.5
        %v5113 = vmul.f32 %v5013, 0.5
        %v5114 = vmul.f32 %v5014, 0.5
        %v5115 = vmul.f32 %v5015, 0.5
        %v5116 = vmul.f32 %v5016, 0.5
        %v5117 = vmul.f32 %v5017, 0.5
        %v5118 = vmul.f32 %v5018, 0.5
        %v5119 = vmul.f32 %v5019, 0.5
        %v5120 = vmul.f32 %v5020, 0.5
        %v5121 = vmul.f32 %v5021, 0.5
        %v5122 = vmul.f32 %v5022, 0.5
        %v5123 = vmul.f32 %v5023, 0.5
        %v5124 = vmul.f32 %v5024, 0.5
        %v5125 = vmul.f32 %v5025, 0.5
        %v5126 = vmul.f32 %v5026, 0.5
        %v5127 = vmul.f32 %v5027, 0.5
        %v5128 = vmul.f32 %v5028, 0.5
        %v5129 = vmul.f32 %v5029, 0.5
        %v5130 = vmul.f32 %v5030, 0.5
        %v5131 = vmul.f32 %v5031, 0.5
        %v5132 = vmul.f32 %v5032, 0.5
        %v5133 = vmul.f32 %v5033, 0.5
        %v5134 = vmul.f32 %v5034, 0.5
        %v5135 = vmul.f32 %v5035, 0.5
        %v5136 = vmul.f32 %v5036, 0.5
        %v5137 = vmul.f32 %v5037, 0.5
        %v5138 = vmul.f32 %v5038, 0.5
        %v5139 = vmul.f32 %v5039, 0.5
        %v5140 = vmul.f32 %v5040, 0.5
        %v5141 = vmul.f32 %v5041, 0.5
        %v5142 = vmul.f32 %v5042, 0.5
        %v5143 = vmul.f32 %v5043, 0.5
        %v5144 = vmul.f32 %v5044, 0.5
        %v5145 = vmul.f32 %v5045, 0.5
        %v5146 = vmul.f32 %v5046, 0.5
        %v5147 = vmul.f32 %v5047, 0.5
        %v5148 = vmul.f32 %v5048, 0.5
        %v5149 = vmul.f32 %v5049, 0.5
        %v5150 = vmul.f32 %v5050, 0.5
        %v5151 = vmul.f32 %v5051, 0.5
        %v5152 = vmul.f32 %v5052, 0.5
        %v5153 = vmul.f32 %v5053, 0.5
        %v5154 = vmul.f32 %v5054, 0.5
        %v5155 = vmul.f32 %v5055, 0.5
        %v5156 = vmul.f32 %v5056, 0.5
        %v5157 = vmul.f32 %v5057, 0.5
        %v5158 = vmul.f32 %v5058, 0.5
        %v5159 = vmul.f32 %v5059, 0.5
        %v5160 = vmul.f32 %v5060, 0.5
        %v5161 = vmul.f32 %v5061, 0.5
        %v5162 = vmul.f32 %v5062, 0.5
        %v5163 = vmul.f32 %v5063, 0.5
        %v5164 = vmul.f32 %v5064, 0.5
        %v5165 = vmul.f32 %v5065, 0.5
        %v5166 = vmul.f32 %v5066, 0.5
        %v5167 = vmul.f32 %v5067, 0.5
        %v5168 = vmul.f32 %v5068, 0.5
        %v5169 = vmul.f32 %v5069, 0.5
        %v5170 = vmul.f32 %v5070, 0.5
        %v5171 = vmul.f32 %v5071, 0.5
        %v5172 = vmul.f32 %v5072, 0.5
        %v5173 = vmul.f32 %v5073, 0.5
        %v5174 = vmul.f32 %v5074, 0.5
        %v5175 = vmul.f32 %v5075, 0.5
        %v5176 = vmul.f32 %v5076, 0.5
        %v5177 = vmul.f32 %v5077, 0.5
        %v5178 = vmul.f32 %v5078, 0.5
        %v5179 = vmul.f32 %v5079, 0.5
        %v5180 = vmul.f32 %v4280, %v5080
        %v5181 = vmul.f32 %v4281, %v5081
        %v5182 = vmul.f32 %v4282, %v5082
        %v5183 = vmul.f32 %v4283, %v5083
        %v5184 = vmul.f32 %v4284, %v5084
        %v5185 = vmul.f32 %v4285, %v5085
        %v5186 = vmul.f32 %v4286, %v5086
        %v5187 = vmul.f32 %v4287, %v5087
        %v5188 = vmul.f32 %v4288, %v5088
        %v5189 = vmul.f32 %v4289, %v5089
        %v5190 = vmul.f32 %v4290, %v5090
        %v5191 = vmul.f32 %v4291, %v5091
        %v5192 = vmul.f32 %v4292, %v5092
        %v5193 = vmul.f32 %v4293, %v5093
        %v5194 = vmul.f32 %v4294, %v5094
        %v5195 = vmul.f32 %v4295, %v5095
        %v5196 = vmul.f32 %v4296, %v5096
        %v5197 = vmul.f32 %v4297, %v5097
        %v5198 = vmul.f32 %v4298, %v5098
        %v5199 = vmul.f32 %v4299, %v5099
        %v5200 = vmul.f32 %v4300, %v5100
        %v5201 = vmul.f32 %v4301, %v5101
        %v5202 = vmul.f32 %v4302, %v5102
        %v5203 = vmul.f32 %v4303, %v5103
        %v5204 = vmul.f32 %v4304, %v5104
        %v5205 = vmul.f32 %v4305, %v5105
        %v5206 = vmul.f32 %v4306, %v5106
        %v5207 = vmul.f32 %v4307, %v5107
        %v5208 = vmul.f32 %v4308, %v5108
        %v5209 = vmul.f32 %v4309, %v5109
        %v5210 = vmul.f32 %v4310, %v5110
        %v5211 = vmul.f32 %v4311, %v5111
        %v5212 = vmul.f32 %v4312, %v5112
        %v5213 = vmul.f32 %v4313, %v5113
        %v5214 = vmul.f32 %v4314, %v5114
        %v5215 = vmul.f32 %v4315, %v5115
        %v5216 = vmul.f32 %v4316, %v5116
        %v5217 = vmul.f32 %v4317, %v5117
        %v5218 = vmul.f32 %v4318, %v5118
        %v5219 = vmul.f32 %v4319, %v5119
        %v5220 = vmul.f32 %v4320, %v5120
        %v5221 = vmul.f32 %v4321, %v5121
        %v5222 = vmul.f32 %v4322, %v5122
        %v5223 = vmul.f32 %v4323, %v5123
        %v5224 = vmul.f32 %v4324, %v5124
        %v5225 = vmul.f32 %v4325, %v5125
        %v5226 = vmul.f32 %v4326, %v5126
        %v5227 = vmul.f32 %v4327, %v5127
        %v5228 = vmul.f32 %v4328, %v5128
        %v5229 = vmul.f32 %v4329, %v5129
        %v5230 = vmul.f32 %v4330, %v5130
        %v5231 = vmul.f32 %v4331, %v5131
        %v5232 = vmul.f32 %v4332, %v5132
        %v5233 = vmul.f32 %v4333, %v5133
        %v5234 = vmul.f32 %v4334, %v5134
        %v5235 = vmul.f32 %v4335, %v5135
        %v5236 = vmul.f32 %v4336, %v5136
        %v5237 = vmul.f32 %v4337, %v5137
        %v5238 = vmul.f32 %v4338, %v5138
        %v5239 = vmul.f32 %v4339, %v5139
        %v5240 = vmul.f32 %v4340, %v5140
        %v5241 = vmul.f32 %v4341, %v5141
        %v5242 = vmul.f32 %v4342, %v5142
        %v5243 = vmul.f32 %v4343, %v5143
        %v5244 = vmul.f32 %v4344, %v5144
        %v5245 = vmul.f32 %v4345, %v5145
        %v5246 = vmul.f32 %v4346, %v5146
        %v5247 = vmul.f32 %v4347, %v5147
        %v5248 = vmul.f32 %v4348, %v5148
        %v5249 = vmul.f32 %v4349, %v5149
        %v5250 = vmul.f32 %v4350, %v5150
        %v5251 = vmul.f32 %v4351, %v5151
        %v5252 = vmul.f32 %v4352, %v5152
        %v5253 = vmul.f32 %v4353, %v5153
        %v5254 = vmul.f32 %v4354, %v5154
        %v5255 = vmul.f32 %v4355, %v5155
        %v5256 = vmul.f32 %v4356, %v5156
        %v5257 = vmul.f32 %v4357, %v5157
        %v5258 = vmul.f32 %v4358, %v5158
        %v5259 = vmul.f32 %v4359, %v5159
        %v5260 = vmul.f32 %v4360, %v5160
        %v5261 = vmul.f32 %v4361, %v5161
        %v5262 = vmul.f32 %v4362, %v5162
        %v5263 = vmul.f32 %v4363, %v5163
        %v5264 = vmul.f32 %v4364, %v5164
        %v5265 = vmul.f32 %v4365, %v5165
        %v5266 = vmul.f32 %v4366, %v5166
        %v5267 = vmul.f32 %v4367, %v5167
        %v5268 = vmul.f32 %v4368, %v5168
        %v5269 = vmul.f32 %v4369, %v5169
        %v5270 = vmul.f32 %v4370, %v5170
        %v5271 = vmul.f32 %v4371, %v5171
        %v5272 = vmul.f32 %v4372, %v5172
        %v5273 = vmul.f32 %v4373, %v5173
        %v5274 = vmul.f32 %v4374, %v5174
        %v5275 = vmul.f32 %v4375, %v5175
        %v5276 = vmul.f32 %v4376, %v5176
        %v5277 = vmul.f32 %v4377, %v5177
        %v5278 = vmul.f32 %v4378, %v5178
        %v5279 = vmul.f32 %v4379, %v5179
        %5280 = vst.msk [vmem:[#allocation2] sm:$0xff] %vm3440, %v5180
        %5281 = vst.msk [vmem:[#allocation2 + $0x8] sm:$0xff] %vm3440, %v5181
        %5282 = vst.msk [vmem:[#allocation2 + $0x10] sm:$0xff] %vm3440, %v5182
        %5283 = vst.msk [vmem:[#allocation2 + $0x18] sm:$0xff] %vm3440, %v5183
        %5284 = vst.msk [vmem:[#allocation2 + $0x20] sm:$0xff] %vm3440, %v5184
        %5285 = vst.msk [vmem:[#allocation2 + $0x28] sm:$0xff] %vm3440, %v5185
        %5286 = vst.msk [vmem:[#allocation2 + $0x30] sm:$0xff] %vm3440, %v5186
        %5287 = vst.msk [vmem:[#allocation2 + $0x38] sm:$0xff] %vm3440, %v5187
        %5288 = vst.msk [vmem:[#allocation2 + $0x40] sm:$0xff] %vm3440, %v5188
        %5289 = vst.msk [vmem:[#allocation2 + $0x48] sm:$0xff] %vm3440, %v5189
        %5290 = vst.msk [vmem:[#allocation2 + $0x50] sm:$0xff] %vm3440, %v5190
        %5291 = vst.msk [vmem:[#allocation2 + $0x58] sm:$0xff] %vm3440, %v5191
        %5292 = vst.msk [vmem:[#allocation2 + $0x60] sm:$0xff] %vm3440, %v5192
        %5293 = vst.msk [vmem:[#allocation2 + $0x68] sm:$0xff] %vm3440, %v5193
        %5294 = vst.msk [vmem:[#allocation2 + $0x70] sm:$0xff] %vm3440, %v5194
        %5295 = vst.msk [vmem:[#allocation2 + $0x78] sm:$0xff] %vm3440, %v5195
        %5296 = vst.msk [vmem:[#allocation2 + $0x80] sm:$0xff] %vm3440, %v5196
        %5297 = vst.msk [vmem:[#allocation2 + $0x88] sm:$0xff] %vm3440, %v5197
        %5298 = vst.msk [vmem:[#allocation2 + $0x90] sm:$0xff] %vm3440, %v5198
        %5299 = vst.msk [vmem:[#allocation2 + $0x98] sm:$0xff] %vm3440, %v5199
        %5300 = vst.msk [vmem:[#allocation2 + $0xa0] sm:$0xff] %vm3440, %v5200
        %5301 = vst.msk [vmem:[#allocation2 + $0xa8] sm:$0xff] %vm3440, %v5201
        %5302 = vst.msk [vmem:[#allocation2 + $0xb0] sm:$0xff] %vm3440, %v5202
        %5303 = vst.msk [vmem:[#allocation2 + $0xb8] sm:$0xff] %vm3440, %v5203
        %5304 = vst.msk [vmem:[#allocation2 + $0xc0] sm:$0xff] %vm3440, %v5204
        %5305 = vst.msk [vmem:[#allocation2 + $0xc8] sm:$0xff] %vm3440, %v5205
        %5306 = vst.msk [vmem:[#allocation2 + $0xd0] sm:$0xff] %vm3440, %v5206
        %5307 = vst.msk [vmem:[#allocation2 + $0xd8] sm:$0xff] %vm3440, %v5207
        %5308 = vst.msk [vmem:[#allocation2 + $0xe0] sm:$0xff] %vm3440, %v5208
        %5309 = vst.msk [vmem:[#allocation2 + $0xe8] sm:$0xff] %vm3440, %v5209
        %5310 = vst.msk [vmem:[#allocation2 + $0xf0] sm:$0xff] %vm3440, %v5210
        %5311 = vst.msk [vmem:[#allocation2 + $0xf8] sm:$0xff] %vm3440, %v5211
        %5312 = vst.msk [vmem:[#allocation2 + $0x100] sm:$0xff] %vm3440, %v5212
        %5313 = vst.msk [vmem:[#allocation2 + $0x108] sm:$0xff] %vm3440, %v5213
        %5314 = vst.msk [vmem:[#allocation2 + $0x110] sm:$0xff] %vm3440, %v5214
        %5315 = vst.msk [vmem:[#allocation2 + $0x118] sm:$0xff] %vm3440, %v5215
        %5316 = vst.msk [vmem:[#allocation2 + $0x120] sm:$0xff] %vm3440, %v5216
        %5317 = vst.msk [vmem:[#allocation2 + $0x128] sm:$0xff] %vm3440, %v5217
        %5318 = vst.msk [vmem:[#allocation2 + $0x130] sm:$0xff] %vm3440, %v5218
        %5319 = vst.msk [vmem:[#allocation2 + $0x138] sm:$0xff] %vm3440, %v5219
        %5320 = vst.msk [vmem:[#allocation2 + $0x140] sm:$0xff] %vm3440, %v5220
        %5321 = vst.msk [vmem:[#allocation2 + $0x148] sm:$0xff] %vm3440, %v5221
        %5322 = vst.msk [vmem:[#allocation2 + $0x150] sm:$0xff] %vm3440, %v5222
        %5323 = vst.msk [vmem:[#allocation2 + $0x158] sm:$0xff] %vm3440, %v5223
        %5324 = vst.msk [vmem:[#allocation2 + $0x160] sm:$0xff] %vm3440, %v5224
        %5325 = vst.msk [vmem:[#allocation2 + $0x168] sm:$0xff] %vm3440, %v5225
        %5326 = vst.msk [vmem:[#allocation2 + $0x170] sm:$0xff] %vm3440, %v5226
        %5327 = vst.msk [vmem:[#allocation2 + $0x178] sm:$0xff] %vm3440, %v5227
        %5328 = vst.msk [vmem:[#allocation2 + $0x180] sm:$0xff] %vm3440, %v5228
        %5329 = vst.msk [vmem:[#allocation2 + $0x188] sm:$0xff] %vm3440, %v5229
        %5330 = vst.msk [vmem:[#allocation2 + $0x190] sm:$0xff] %vm3440, %v5230
        %5331 = vst.msk [vmem:[#allocation2 + $0x198] sm:$0xff] %vm3440, %v5231
        %5332 = vst.msk [vmem:[#allocation2 + $0x1a0] sm:$0xff] %vm3440, %v5232
        %5333 = vst.msk [vmem:[#allocation2 + $0x1a8] sm:$0xff] %vm3440, %v5233
        %5334 = vst.msk [vmem:[#allocation2 + $0x1b0] sm:$0xff] %vm3440, %v5234
        %5335 = vst.msk [vmem:[#allocation2 + $0x1b8] sm:$0xff] %vm3440, %v5235
        %5336 = vst.msk [vmem:[#allocation2 + $0x1c0] sm:$0xff] %vm3440, %v5236
        %5337 = vst.msk [vmem:[#allocation2 + $0x1c8] sm:$0xff] %vm3440, %v5237
        %5338 = vst.msk [vmem:[#allocation2 + $0x1d0] sm:$0xff] %vm3440, %v5238
        %5339 = vst.msk [vmem:[#allocation2 + $0x1d8] sm:$0xff] %vm3440, %v5239
        %5340 = vst.msk [vmem:[#allocation2 + $0x1e0] sm:$0xff] %vm3440, %v5240
        %5341 = vst.msk [vmem:[#allocation2 + $0x1e8] sm:$0xff] %vm3440, %v5241
        %5342 = vst.msk [vmem:[#allocation2 + $0x1f0] sm:$0xff] %vm3440, %v5242
        %5343 = vst.msk [vmem:[#allocation2 + $0x1f8] sm:$0xff] %vm3440, %v5243
        %5344 = vst.msk [vmem:[#allocation2 + $0x200] sm:$0xff] %vm3440, %v5244
        %5345 = vst.msk [vmem:[#allocation2 + $0x208] sm:$0xff] %vm3440, %v5245
        %5346 = vst.msk [vmem:[#allocation2 + $0x210] sm:$0xff] %vm3440, %v5246
        %5347 = vst.msk [vmem:[#allocation2 + $0x218] sm:$0xff] %vm3440, %v5247
        %5348 = vst.msk [vmem:[#allocation2 + $0x220] sm:$0xff] %vm3440, %v5248
        %5349 = vst.msk [vmem:[#allocation2 + $0x228] sm:$0xff] %vm3440, %v5249
        %5350 = vst.msk [vmem:[#allocation2 + $0x230] sm:$0xff] %vm3440, %v5250
        %5351 = vst.msk [vmem:[#allocation2 + $0x238] sm:$0xff] %vm3440, %v5251
        %5352 = vst.msk [vmem:[#allocation2 + $0x240] sm:$0xff] %vm3440, %v5252
        %5353 = vst.msk [vmem:[#allocation2 + $0x248] sm:$0xff] %vm3440, %v5253
        %5354 = vst.msk [vmem:[#allocation2 + $0x250] sm:$0xff] %vm3440, %v5254
        %5355 = vst.msk [vmem:[#allocation2 + $0x258] sm:$0xff] %vm3440, %v5255
        %5356 = vst.msk [vmem:[#allocation2 + $0x260] sm:$0xff] %vm3440, %v5256
        %5357 = vst.msk [vmem:[#allocation2 + $0x268] sm:$0xff] %vm3440, %v5257
        %5358 = vst.msk [vmem:[#allocation2 + $0x270] sm:$0xff] %vm3440, %v5258
        %5359 = vst.msk [vmem:[#allocation2 + $0x278] sm:$0xff] %vm3440, %v5259
        %5360 = vst.msk [vmem:[#allocation2 + $0x280] sm:$0xff] %vm3440, %v5260
        %5361 = vst.msk [vmem:[#allocation2 + $0x288] sm:$0xff] %vm3440, %v5261
        %5362 = vst.msk [vmem:[#allocation2 + $0x290] sm:$0xff] %vm3440, %v5262
        %5363 = vst.msk [vmem:[#allocation2 + $0x298] sm:$0xff] %vm3440, %v5263
        %5364 = vst.msk [vmem:[#allocation2 + $0x2a0] sm:$0xff] %vm3440, %v5264
        %5365 = vst.msk [vmem:[#allocation2 + $0x2a8] sm:$0xff] %vm3440, %v5265
        %5366 = vst.msk [vmem:[#allocation2 + $0x2b0] sm:$0xff] %vm3440, %v5266
        %5367 = vst.msk [vmem:[#allocation2 + $0x2b8] sm:$0xff] %vm3440, %v5267
        %5368 = vst.msk [vmem:[#allocation2 + $0x2c0] sm:$0xff] %vm3440, %v5268
        %5369 = vst.msk [vmem:[#allocation2 + $0x2c8] sm:$0xff] %vm3440, %v5269
        %5370 = vst.msk [vmem:[#allocation2 + $0x2d0] sm:$0xff] %vm3440, %v5270
        %5371 = vst.msk [vmem:[#allocation2 + $0x2d8] sm:$0xff] %vm3440, %v5271
        %5372 = vst.msk [vmem:[#allocation2 + $0x2e0] sm:$0xff] %vm3440, %v5272
        %5373 = vst.msk [vmem:[#allocation2 + $0x2e8] sm:$0xff] %vm3440, %v5273
        %5374 = vst.msk [vmem:[#allocation2 + $0x2f0] sm:$0xff] %vm3440, %v5274
        %5375 = vst.msk [vmem:[#allocation2 + $0x2f8] sm:$0xff] %vm3440, %v5275
        %5376 = vst.msk [vmem:[#allocation2 + $0x300] sm:$0xff] %vm3440, %v5276
        %5377 = vst.msk [vmem:[#allocation2 + $0x308] sm:$0xff] %vm3440, %v5277
        %5378 = vst.msk [vmem:[#allocation2 + $0x310] sm:$0xff] %vm3440, %v5278
        %5379 = vst.msk [vmem:[#allocation2 + $0x318] sm:$0x7f] %vm3638, %v5279
        %v5380 = vld [vmem:[#allocation2] ss:$2 sm:$0xff]
        %s5381 = scalar_lea.vmem [#allocation2], 16
        %v5382 = vld [vmem:[%s5381] ss:$2 sm:$0xff]
        %s5383 = scalar_lea.vmem [#allocation2], 32
        %v5384 = vld [vmem:[%s5383] ss:$2 sm:$0xff]
        %s5385 = scalar_lea.vmem [#allocation2], 48
        %v5386 = vld [vmem:[%s5385] ss:$2 sm:$0xff]
        %s5387 = scalar_lea.vmem [#allocation2], 64
        %v5388 = vld [vmem:[%s5387] ss:$2 sm:$0xff]
        %s5389 = scalar_lea.vmem [#allocation2], 80
        %v5390 = vld [vmem:[%s5389] ss:$2 sm:$0xff]
        %s5391 = scalar_lea.vmem [#allocation2], 96
        %v5392 = vld [vmem:[%s5391] ss:$2 sm:$0xff]
        %s5393 = scalar_lea.vmem [#allocation2], 112
        %v5394 = vld [vmem:[%s5393] ss:$2 sm:$0xff]
        %s5395 = scalar_lea.vmem [#allocation2], 128
        %v5396 = vld [vmem:[%s5395] ss:$2 sm:$0xff]
        %s5397 = scalar_lea.vmem [#allocation2], 144
        %v5398 = vld [vmem:[%s5397] ss:$2 sm:$0xff]
        %s5399 = scalar_lea.vmem [#allocation2], 160
        %v5400 = vld [vmem:[%s5399] ss:$2 sm:$0xff]
        %s5401 = scalar_lea.vmem [#allocation2], 176
        %v5402 = vld [vmem:[%s5401] ss:$2 sm:$0xff]
        %s5403 = scalar_lea.vmem [#allocation2], 192
        %v5404 = vld [vmem:[%s5403] ss:$2 sm:$0xff]
        %s5405 = scalar_lea.vmem [#allocation2], 208
        %v5406 = vld [vmem:[%s5405] ss:$2 sm:$0xff]
        %s5407 = scalar_lea.vmem [#allocation2], 224
        %v5408 = vld [vmem:[%s5407] ss:$2 sm:$0xff]
        %s5409 = scalar_lea.vmem [#allocation2], 240
        %v5410 = vld [vmem:[%s5409] ss:$2 sm:$0xff]
        %s5411 = scalar_lea.vmem [#allocation2], 256
        %v5412 = vld [vmem:[%s5411] ss:$2 sm:$0xff]
        %s5413 = scalar_lea.vmem [#allocation2], 272
        %v5414 = vld [vmem:[%s5413] ss:$2 sm:$0xff]
        %s5415 = scalar_lea.vmem [#allocation2], 288
        %v5416 = vld [vmem:[%s5415] ss:$2 sm:$0xff]
        %s5417 = scalar_lea.vmem [#allocation2], 304
        %v5418 = vld [vmem:[%s5417] ss:$2 sm:$0xff]
        %s5419 = scalar_lea.vmem [#allocation2], 320
        %v5420 = vld [vmem:[%s5419] ss:$2 sm:$0xff]
        %s5421 = scalar_lea.vmem [#allocation2], 336
        %v5422 = vld [vmem:[%s5421] ss:$2 sm:$0xff]
        %s5423 = scalar_lea.vmem [#allocation2], 352
        %v5424 = vld [vmem:[%s5423] ss:$2 sm:$0xff]
        %s5425 = scalar_lea.vmem [#allocation2], 368
        %v5426 = vld [vmem:[%s5425] ss:$2 sm:$0xff]
        %s5427 = scalar_lea.vmem [#allocation2], 384
        %v5428 = vld [vmem:[%s5427] ss:$2 sm:$0xff]
        %s5429 = scalar_lea.vmem [#allocation2], 400
        %v5430 = vld [vmem:[%s5429] ss:$2 sm:$0xff]
        %s5431 = scalar_lea.vmem [#allocation2], 416
        %v5432 = vld [vmem:[%s5431] ss:$2 sm:$0xff]
        %s5433 = scalar_lea.vmem [#allocation2], 432
        %v5434 = vld [vmem:[%s5433] ss:$2 sm:$0xff]
        %s5435 = scalar_lea.vmem [#allocation2], 448
        %v5436 = vld [vmem:[%s5435] ss:$2 sm:$0xff]
        %s5437 = scalar_lea.vmem [#allocation2], 464
        %v5438 = vld [vmem:[%s5437] ss:$2 sm:$0xff]
        %s5439 = scalar_lea.vmem [#allocation2], 480
        %v5440 = vld [vmem:[%s5439] ss:$2 sm:$0xff]
        %s5441 = scalar_lea.vmem [#allocation2], 496
        %v5442 = vld [vmem:[%s5441] ss:$2 sm:$0xff]
        %s5443 = scalar_lea.vmem [#allocation2], 512
        %v5444 = vld [vmem:[%s5443] ss:$2 sm:$0xff]
        %s5445 = scalar_lea.vmem [#allocation2], 528
        %v5446 = vld [vmem:[%s5445] ss:$2 sm:$0xff]
        %s5447 = scalar_lea.vmem [#allocation2], 544
        %v5448 = vld [vmem:[%s5447] ss:$2 sm:$0xff]
        %s5449 = scalar_lea.vmem [#allocation2], 560
        %v5450 = vld [vmem:[%s5449] ss:$2 sm:$0xff]
        %s5451 = scalar_lea.vmem [#allocation2], 576
        %v5452 = vld [vmem:[%s5451] ss:$2 sm:$0xff]
        %s5453 = scalar_lea.vmem [#allocation2], 592
        %v5454 = vld [vmem:[%s5453] ss:$2 sm:$0xff]
        %s5455 = scalar_lea.vmem [#allocation2], 608
        %v5456 = vld [vmem:[%s5455] ss:$2 sm:$0xff]
        %s5457 = scalar_lea.vmem [#allocation2], 624
        %v5458 = vld [vmem:[%s5457] ss:$2 sm:$0xff]
        %s5459 = scalar_lea.vmem [#allocation2], 640
        %v5460 = vld [vmem:[%s5459] ss:$2 sm:$0xff]
        %s5461 = scalar_lea.vmem [#allocation2], 656
        %v5462 = vld [vmem:[%s5461] ss:$2 sm:$0xff]
        %s5463 = scalar_lea.vmem [#allocation2], 672
        %v5464 = vld [vmem:[%s5463] ss:$2 sm:$0xff]
        %s5465 = scalar_lea.vmem [#allocation2], 688
        %v5466 = vld [vmem:[%s5465] ss:$2 sm:$0xff]
        %s5467 = scalar_lea.vmem [#allocation2], 704
        %v5468 = vld [vmem:[%s5467] ss:$2 sm:$0xff]
        %s5469 = scalar_lea.vmem [#allocation2], 720
        %v5470 = vld [vmem:[%s5469] ss:$2 sm:$0xff]
        %s5471 = scalar_lea.vmem [#allocation2], 736
        %v5472 = vld [vmem:[%s5471] ss:$2 sm:$0xff]
        %s5473 = scalar_lea.vmem [#allocation2], 752
        %v5474 = vld [vmem:[%s5473] ss:$2 sm:$0xff]
        %s5475 = scalar_lea.vmem [#allocation2], 768
        %v5476 = vld [vmem:[%s5475] ss:$2 sm:$0xff]
        %s5477 = scalar_lea.vmem [#allocation2], 784
        %v5478 = vld [vmem:[%s5477] ss:$2 sm:$0x7f]
        %s5479 = scalar_lea.vmem [#allocation2], 1
        %v5480 = vld [vmem:[%s5479] ss:$2 sm:$0xff]
        %s5481 = scalar_lea.vmem [#allocation2], 17
        %v5482 = vld [vmem:[%s5481] ss:$2 sm:$0xff]
        %s5483 = scalar_lea.vmem [#allocation2], 33
        %v5484 = vld [vmem:[%s5483] ss:$2 sm:$0xff]
        %s5485 = scalar_lea.vmem [#allocation2], 49
        %v5486 = vld [vmem:[%s5485] ss:$2 sm:$0xff]
        %s5487 = scalar_lea.vmem [#allocation2], 65
        %v5488 = vld [vmem:[%s5487] ss:$2 sm:$0xff]
        %s5489 = scalar_lea.vmem [#allocation2], 81
        %v5490 = vld [vmem:[%s5489] ss:$2 sm:$0xff]
        %s5491 = scalar_lea.vmem [#allocation2], 97
        %v5492 = vld [vmem:[%s5491] ss:$2 sm:$0xff]
        %s5493 = scalar_lea.vmem [#allocation2], 113
        %v5494 = vld [vmem:[%s5493] ss:$2 sm:$0xff]
        %s5495 = scalar_lea.vmem [#allocation2], 129
        %v5496 = vld [vmem:[%s5495] ss:$2 sm:$0xff]
        %s5497 = scalar_lea.vmem [#allocation2], 145
        %v5498 = vld [vmem:[%s5497] ss:$2 sm:$0xff]
        %s5499 = scalar_lea.vmem [#allocation2], 161
        %v5500 = vld [vmem:[%s5499] ss:$2 sm:$0xff]
        %s5501 = scalar_lea.vmem [#allocation2], 177
        %v5502 = vld [vmem:[%s5501] ss:$2 sm:$0xff]
        %s5503 = scalar_lea.vmem [#allocation2], 193
        %v5504 = vld [vmem:[%s5503] ss:$2 sm:$0xff]
        %s5505 = scalar_lea.vmem [#allocation2], 209
        %v5506 = vld [vmem:[%s5505] ss:$2 sm:$0xff]
        %s5507 = scalar_lea.vmem [#allocation2], 225
        %v5508 = vld [vmem:[%s5507] ss:$2 sm:$0xff]
        %s5509 = scalar_lea.vmem [#allocation2], 241
        %v5510 = vld [vmem:[%s5509] ss:$2 sm:$0xff]
        %s5511 = scalar_lea.vmem [#allocation2], 257
        %v5512 = vld [vmem:[%s5511] ss:$2 sm:$0xff]
        %s5513 = scalar_lea.vmem [#allocation2], 273
        %v5514 = vld [vmem:[%s5513] ss:$2 sm:$0xff]
        %s5515 = scalar_lea.vmem [#allocation2], 289
        %v5516 = vld [vmem:[%s5515] ss:$2 sm:$0xff]
        %s5517 = scalar_lea.vmem [#allocation2], 305
        %v5518 = vld [vmem:[%s5517] ss:$2 sm:$0xff]
        %s5519 = scalar_lea.vmem [#allocation2], 321
        %v5520 = vld [vmem:[%s5519] ss:$2 sm:$0xff]
        %s5521 = scalar_lea.vmem [#allocation2], 337
        %v5522 = vld [vmem:[%s5521] ss:$2 sm:$0xff]
        %s5523 = scalar_lea.vmem [#allocation2], 353
        %v5524 = vld [vmem:[%s5523] ss:$2 sm:$0xff]
        %s5525 = scalar_lea.vmem [#allocation2], 369
        %v5526 = vld [vmem:[%s5525] ss:$2 sm:$0xff]
        %s5527 = scalar_lea.vmem [#allocation2], 385
        %v5528 = vld [vmem:[%s5527] ss:$2 sm:$0xff]
        %s5529 = scalar_lea.vmem [#allocation2], 401
        %v5530 = vld [vmem:[%s5529] ss:$2 sm:$0xff]
        %s5531 = scalar_lea.vmem [#allocation2], 417
        %v5532 = vld [vmem:[%s5531] ss:$2 sm:$0xff]
        %s5533 = scalar_lea.vmem [#allocation2], 433
        %v5534 = vld [vmem:[%s5533] ss:$2 sm:$0xff]
        %s5535 = scalar_lea.vmem [#allocation2], 449
        %v5536 = vld [vmem:[%s5535] ss:$2 sm:$0xff]
        %s5537 = scalar_lea.vmem [#allocation2], 465
        %v5538 = vld [vmem:[%s5537] ss:$2 sm:$0xff]
        %s5539 = scalar_lea.vmem [#allocation2], 481
        %v5540 = vld [vmem:[%s5539] ss:$2 sm:$0xff]
        %s5541 = scalar_lea.vmem [#allocation2], 497
        %v5542 = vld [vmem:[%s5541] ss:$2 sm:$0xff]
        %s5543 = scalar_lea.vmem [#allocation2], 513
        %v5544 = vld [vmem:[%s5543] ss:$2 sm:$0xff]
        %s5545 = scalar_lea.vmem [#allocation2], 529
        %v5546 = vld [vmem:[%s5545] ss:$2 sm:$0xff]
        %s5547 = scalar_lea.vmem [#allocation2], 545
        %v5548 = vld [vmem:[%s5547] ss:$2 sm:$0xff]
        %s5549 = scalar_lea.vmem [#allocation2], 561
        %v5550 = vld [vmem:[%s5549] ss:$2 sm:$0xff]
        %s5551 = scalar_lea.vmem [#allocation2], 577
        %v5552 = vld [vmem:[%s5551] ss:$2 sm:$0xff]
        %s5553 = scalar_lea.vmem [#allocation2], 593
        %v5554 = vld [vmem:[%s5553] ss:$2 sm:$0xff]
        %s5555 = scalar_lea.vmem [#allocation2], 609
        %v5556 = vld [vmem:[%s5555] ss:$2 sm:$0xff]
        %s5557 = scalar_lea.vmem [#allocation2], 625
        %v5558 = vld [vmem:[%s5557] ss:$2 sm:$0xff]
        %s5559 = scalar_lea.vmem [#allocation2], 641
        %v5560 = vld [vmem:[%s5559] ss:$2 sm:$0xff]
        %s5561 = scalar_lea.vmem [#allocation2], 657
        %v5562 = vld [vmem:[%s5561] ss:$2 sm:$0xff]
        %s5563 = scalar_lea.vmem [#allocation2], 673
        %v5564 = vld [vmem:[%s5563] ss:$2 sm:$0xff]
        %s5565 = scalar_lea.vmem [#allocation2], 689
        %v5566 = vld [vmem:[%s5565] ss:$2 sm:$0xff]
        %s5567 = scalar_lea.vmem [#allocation2], 705
        %v5568 = vld [vmem:[%s5567] ss:$2 sm:$0xff]
        %s5569 = scalar_lea.vmem [#allocation2], 721
        %v5570 = vld [vmem:[%s5569] ss:$2 sm:$0xff]
        %s5571 = scalar_lea.vmem [#allocation2], 737
        %v5572 = vld [vmem:[%s5571] ss:$2 sm:$0xff]
        %s5573 = scalar_lea.vmem [#allocation2], 753
        %v5574 = vld [vmem:[%s5573] ss:$2 sm:$0xff]
        %s5575 = scalar_lea.vmem [#allocation2], 769
        %v5576 = vld [vmem:[%s5575] ss:$2 sm:$0xff]
        %s5577 = scalar_lea.vmem [#allocation2], 785
        %v5578 = vld [vmem:[%s5577] ss:$2 sm:$0x7f]
        %5629 = vrot.lane.b32.xlu0 %v5480, 32
        %v5630 = vpop.permute.xlu0 %5629
        %5631 = vrot.lane.b32.xlu0 %v5482, 32
        %v5632 = vpop.permute.xlu0 %5631
        %5633 = vrot.lane.b32.xlu0 %v5484, 32
        %v5634 = vpop.permute.xlu0 %5633
        %5635 = vrot.lane.b32.xlu0 %v5486, 32
        %v5636 = vpop.permute.xlu0 %5635
        %5637 = vrot.lane.b32.xlu0 %v5488, 32
        %v5638 = vpop.permute.xlu0 %5637
        %5639 = vrot.lane.b32.xlu0 %v5490, 32
        %v5640 = vpop.permute.xlu0 %5639
        %5641 = vrot.lane.b32.xlu0 %v5492, 32
        %v5642 = vpop.permute.xlu0 %5641
        %5643 = vrot.lane.b32.xlu0 %v5494, 32
        %v5644 = vpop.permute.xlu0 %5643
        %5645 = vrot.lane.b32.xlu0 %v5496, 32
        %v5646 = vpop.permute.xlu0 %5645
        %5647 = vrot.lane.b32.xlu0 %v5498, 32
        %v5648 = vpop.permute.xlu0 %5647
        %5649 = vrot.lane.b32.xlu0 %v5500, 32
        %v5650 = vpop.permute.xlu0 %5649
        %5651 = vrot.lane.b32.xlu0 %v5502, 32
        %v5652 = vpop.permute.xlu0 %5651
        %5653 = vrot.lane.b32.xlu0 %v5504, 32
        %v5654 = vpop.permute.xlu0 %5653
        %5655 = vrot.lane.b32.xlu0 %v5506, 32
        %v5656 = vpop.permute.xlu0 %5655
        %5657 = vrot.lane.b32.xlu0 %v5508, 32
        %v5658 = vpop.permute.xlu0 %5657
        %5659 = vrot.lane.b32.xlu0 %v5510, 32
        %v5660 = vpop.permute.xlu0 %5659
        %5661 = vrot.lane.b32.xlu0 %v5512, 32
        %v5662 = vpop.permute.xlu0 %5661
        %5663 = vrot.lane.b32.xlu0 %v5514, 32
        %v5664 = vpop.permute.xlu0 %5663
        %5665 = vrot.lane.b32.xlu0 %v5516, 32
        %v5666 = vpop.permute.xlu0 %5665
        %5667 = vrot.lane.b32.xlu0 %v5518, 32
        %v5668 = vpop.permute.xlu0 %5667
        %5669 = vrot.lane.b32.xlu0 %v5520, 32
        %v5670 = vpop.permute.xlu0 %5669
        %5671 = vrot.lane.b32.xlu0 %v5522, 32
        %v5672 = vpop.permute.xlu0 %5671
        %5673 = vrot.lane.b32.xlu0 %v5524, 32
        %v5674 = vpop.permute.xlu0 %5673
        %5675 = vrot.lane.b32.xlu0 %v5526, 32
        %v5676 = vpop.permute.xlu0 %5675
        %5677 = vrot.lane.b32.xlu0 %v5528, 32
        %v5678 = vpop.permute.xlu0 %5677
        %5679 = vrot.lane.b32.xlu0 %v5530, 32
        %v5680 = vpop.permute.xlu0 %5679
        %5681 = vrot.lane.b32.xlu0 %v5532, 32
        %v5682 = vpop.permute.xlu0 %5681
        %5683 = vrot.lane.b32.xlu0 %v5534, 32
        %v5684 = vpop.permute.xlu0 %5683
        %5685 = vrot.lane.b32.xlu0 %v5536, 32
        %v5686 = vpop.permute.xlu0 %5685
        %5687 = vrot.lane.b32.xlu0 %v5538, 32
        %v5688 = vpop.permute.xlu0 %5687
        %5689 = vrot.lane.b32.xlu0 %v5540, 32
        %v5690 = vpop.permute.xlu0 %5689
        %5691 = vrot.lane.b32.xlu0 %v5542, 32
        %v5692 = vpop.permute.xlu0 %5691
        %5693 = vrot.lane.b32.xlu0 %v5544, 32
        %v5694 = vpop.permute.xlu0 %5693
        %5695 = vrot.lane.b32.xlu0 %v5546, 32
        %v5696 = vpop.permute.xlu0 %5695
        %5697 = vrot.lane.b32.xlu0 %v5548, 32
        %v5698 = vpop.permute.xlu0 %5697
        %5699 = vrot.lane.b32.xlu0 %v5550, 32
        %v5700 = vpop.permute.xlu0 %5699
        %5701 = vrot.lane.b32.xlu0 %v5552, 32
        %v5702 = vpop.permute.xlu0 %5701
        %5703 = vrot.lane.b32.xlu0 %v5554, 32
        %v5704 = vpop.permute.xlu0 %5703
        %5705 = vrot.lane.b32.xlu0 %v5556, 32
        %v5706 = vpop.permute.xlu0 %5705
        %5707 = vrot.lane.b32.xlu0 %v5558, 32
        %v5708 = vpop.permute.xlu0 %5707
        %5709 = vrot.lane.b32.xlu0 %v5560, 32
        %v5710 = vpop.permute.xlu0 %5709
        %5711 = vrot.lane.b32.xlu0 %v5562, 32
        %v5712 = vpop.permute.xlu0 %5711
        %5713 = vrot.lane.b32.xlu0 %v5564, 32
        %v5714 = vpop.permute.xlu0 %5713
        %5715 = vrot.lane.b32.xlu0 %v5566, 32
        %v5716 = vpop.permute.xlu0 %5715
        %5717 = vrot.lane.b32.xlu0 %v5568, 32
        %v5718 = vpop.permute.xlu0 %5717
        %5719 = vrot.lane.b32.xlu0 %v5570, 32
        %v5720 = vpop.permute.xlu0 %5719
        %5721 = vrot.lane.b32.xlu0 %v5572, 32
        %v5722 = vpop.permute.xlu0 %5721
        %5723 = vrot.lane.b32.xlu0 %v5574, 32
        %v5724 = vpop.permute.xlu0 %5723
        %5725 = vrot.lane.b32.xlu0 %v5576, 32
        %v5726 = vpop.permute.xlu0 %5725
        %5727 = vrot.lane.b32.xlu0 %v5578, 32
        %v5728 = vpop.permute.xlu0 %5727
        %v5779 = vsel %vm3440, %v5380, %v5630
        %v5780 = vsel %vm3440, %v5382, %v5632
        %v5781 = vsel %vm3440, %v5384, %v5634
        %v5782 = vsel %vm3440, %v5386, %v5636
        %v5783 = vsel %vm3440, %v5388, %v5638
        %v5784 = vsel %vm3440, %v5390, %v5640
        %v5785 = vsel %vm3440, %v5392, %v5642
        %v5786 = vsel %vm3440, %v5394, %v5644
        %v5787 = vsel %vm3440, %v5396, %v5646
        %v5788 = vsel %vm3440, %v5398, %v5648
        %v5789 = vsel %vm3440, %v5400, %v5650
        %v5790 = vsel %vm3440, %v5402, %v5652
        %v5791 = vsel %vm3440, %v5404, %v5654
        %v5792 = vsel %vm3440, %v5406, %v5656
        %v5793 = vsel %vm3440, %v5408, %v5658
        %v5794 = vsel %vm3440, %v5410, %v5660
        %v5795 = vsel %vm3440, %v5412, %v5662
        %v5796 = vsel %vm3440, %v5414, %v5664
        %v5797 = vsel %vm3440, %v5416, %v5666
        %v5798 = vsel %vm3440, %v5418, %v5668
        %v5799 = vsel %vm3440, %v5420, %v5670
        %v5800 = vsel %vm3440, %v5422, %v5672
        %v5801 = vsel %vm3440, %v5424, %v5674
        %v5802 = vsel %vm3440, %v5426, %v5676
        %v5803 = vsel %vm3440, %v5428, %v5678
        %v5804 = vsel %vm3440, %v5430, %v5680
        %v5805 = vsel %vm3440, %v5432, %v5682
        %v5806 = vsel %vm3440, %v5434, %v5684
        %v5807 = vsel %vm3440, %v5436, %v5686
        %v5808 = vsel %vm3440, %v5438, %v5688
        %v5809 = vsel %vm3440, %v5440, %v5690
        %v5810 = vsel %vm3440, %v5442, %v5692
        %v5811 = vsel %vm3440, %v5444, %v5694
        %v5812 = vsel %vm3440, %v5446, %v5696
        %v5813 = vsel %vm3440, %v5448, %v5698
        %v5814 = vsel %vm3440, %v5450, %v5700
        %v5815 = vsel %vm3440, %v5452, %v5702
        %v5816 = vsel %vm3440, %v5454, %v5704
        %v5817 = vsel %vm3440, %v5456, %v5706
        %v5818 = vsel %vm3440, %v5458, %v5708
        %v5819 = vsel %vm3440, %v5460, %v5710
        %v5820 = vsel %vm3440, %v5462, %v5712
        %v5821 = vsel %vm3440, %v5464, %v5714
        %v5822 = vsel %vm3440, %v5466, %v5716
        %v5823 = vsel %vm3440, %v5468, %v5718
        %v5824 = vsel %vm3440, %v5470, %v5720
        %v5825 = vsel %vm3440, %v5472, %v5722
        %v5826 = vsel %vm3440, %v5474, %v5724
        %v5827 = vsel %vm3440, %v5476, %v5726
        %v5828 = vsel %vm3440, %v5478, %v5728
        %v5829 = vpack.c.bf16 %v5780, %v5779
        %v5830 = vpack.c.bf16 %v5782, %v5781
        %v5831 = vpack.c.bf16 %v5784, %v5783
        %v5832 = vpack.c.bf16 %v5786, %v5785
        %v5833 = vpack.c.bf16 %v5788, %v5787
        %v5834 = vpack.c.bf16 %v5790, %v5789
        %v5835 = vpack.c.bf16 %v5792, %v5791
        %v5836 = vpack.c.bf16 %v5794, %v5793
        %v5837 = vpack.c.bf16 %v5796, %v5795
        %v5838 = vpack.c.bf16 %v5798, %v5797
        %v5839 = vpack.c.bf16 %v5800, %v5799
        %v5840 = vpack.c.bf16 %v5802, %v5801
        %v5841 = vpack.c.bf16 %v5804, %v5803
        %v5842 = vpack.c.bf16 %v5806, %v5805
        %v5843 = vpack.c.bf16 %v5808, %v5807
        %v5844 = vpack.c.bf16 %v5810, %v5809
        %v5845 = vpack.c.bf16 %v5812, %v5811
        %v5846 = vpack.c.bf16 %v5814, %v5813
        %v5847 = vpack.c.bf16 %v5816, %v5815
        %v5848 = vpack.c.bf16 %v5818, %v5817
        %v5849 = vpack.c.bf16 %v5820, %v5819
        %v5850 = vpack.c.bf16 %v5822, %v5821
        %v5851 = vpack.c.bf16 %v5824, %v5823
        %v5852 = vpack.c.bf16 %v5826, %v5825
        %v5853 = vpack.c.bf16 %v5828, %v5827
        %v5854 = vld [vmem:[%s5] sm:$0xf]
        %v5855 = vld [vmem:[%s5 + $0x4] sm:$0xf]
        %v5856 = vld [vmem:[%s5 + $0x8] sm:$0xf]
        %v5857 = vld [vmem:[%s5 + $0xc] sm:$0xf]
        %v5858 = vld [vmem:[%s5 + $0x10] sm:$0xf]
        %v5859 = vld [vmem:[%s5 + $0x14] sm:$0xf]
        %v5860 = vld [vmem:[%s5 + $0x18] sm:$0xf]
        %v5861 = vld [vmem:[%s5 + $0x1c] sm:$0xf]
        %s5862 = scalar_lea.vmem [#allocation2], 2
        %v5863 = vld [vmem:[%s5862] ss:$2 sm:$0xff]
        %s5864 = scalar_lea.vmem [#allocation2], 18
        %v5865 = vld [vmem:[%s5864] ss:$2 sm:$0xff]
        %s5866 = scalar_lea.vmem [#allocation2], 34
        %v5867 = vld [vmem:[%s5866] ss:$2 sm:$0xff]
        %s5868 = scalar_lea.vmem [#allocation2], 50
        %v5869 = vld [vmem:[%s5868] ss:$2 sm:$0xff]
        %s5870 = scalar_lea.vmem [#allocation2], 66
        %v5871 = vld [vmem:[%s5870] ss:$2 sm:$0xff]
        %s5872 = scalar_lea.vmem [#allocation2], 82
        %v5873 = vld [vmem:[%s5872] ss:$2 sm:$0xff]
        %s5874 = scalar_lea.vmem [#allocation2], 98
        %v5875 = vld [vmem:[%s5874] ss:$2 sm:$0xff]
        %s5876 = scalar_lea.vmem [#allocation2], 114
        %v5877 = vld [vmem:[%s5876] ss:$2 sm:$0xff]
        %s5878 = scalar_lea.vmem [#allocation2], 130
        %v5879 = vld [vmem:[%s5878] ss:$2 sm:$0xff]
        %s5880 = scalar_lea.vmem [#allocation2], 146
        %v5881 = vld [vmem:[%s5880] ss:$2 sm:$0xff]
        %s5882 = scalar_lea.vmem [#allocation2], 162
        %v5883 = vld [vmem:[%s5882] ss:$2 sm:$0xff]
        %s5884 = scalar_lea.vmem [#allocation2], 178
        %v5885 = vld [vmem:[%s5884] ss:$2 sm:$0xff]
        %s5886 = scalar_lea.vmem [#allocation2], 194
        %v5887 = vld [vmem:[%s5886] ss:$2 sm:$0xff]
        %s5888 = scalar_lea.vmem [#allocation2], 210
        %v5889 = vld [vmem:[%s5888] ss:$2 sm:$0xff]
        %s5890 = scalar_lea.vmem [#allocation2], 226
        %v5891 = vld [vmem:[%s5890] ss:$2 sm:$0xff]
        %s5892 = scalar_lea.vmem [#allocation2], 242
        %v5893 = vld [vmem:[%s5892] ss:$2 sm:$0xff]
        %s5894 = scalar_lea.vmem [#allocation2], 258
        %v5895 = vld [vmem:[%s5894] ss:$2 sm:$0xff]
        %s5896 = scalar_lea.vmem [#allocation2], 274
        %v5897 = vld [vmem:[%s5896] ss:$2 sm:$0xff]
        %s5898 = scalar_lea.vmem [#allocation2], 290
        %v5899 = vld [vmem:[%s5898] ss:$2 sm:$0xff]
        %s5900 = scalar_lea.vmem [#allocation2], 306
        %v5901 = vld [vmem:[%s5900] ss:$2 sm:$0xff]
        %s5902 = scalar_lea.vmem [#allocation2], 322
        %v5903 = vld [vmem:[%s5902] ss:$2 sm:$0xff]
        %s5904 = scalar_lea.vmem [#allocation2], 338
        %v5905 = vld [vmem:[%s5904] ss:$2 sm:$0xff]
        %s5906 = scalar_lea.vmem [#allocation2], 354
        %v5907 = vld [vmem:[%s5906] ss:$2 sm:$0xff]
        %s5908 = scalar_lea.vmem [#allocation2], 370
        %v5909 = vld [vmem:[%s5908] ss:$2 sm:$0xff]
        %s5910 = scalar_lea.vmem [#allocation2], 386
        %v5911 = vld [vmem:[%s5910] ss:$2 sm:$0xff]
        %s5912 = scalar_lea.vmem [#allocation2], 402
        %v5913 = vld [vmem:[%s5912] ss:$2 sm:$0xff]
        %s5914 = scalar_lea.vmem [#allocation2], 418
        %v5915 = vld [vmem:[%s5914] ss:$2 sm:$0xff]
        %s5916 = scalar_lea.vmem [#allocation2], 434
        %v5917 = vld [vmem:[%s5916] ss:$2 sm:$0xff]
        %s5918 = scalar_lea.vmem [#allocation2], 450
        %v5919 = vld [vmem:[%s5918] ss:$2 sm:$0xff]
        %s5920 = scalar_lea.vmem [#allocation2], 466
        %v5921 = vld [vmem:[%s5920] ss:$2 sm:$0xff]
        %s5922 = scalar_lea.vmem [#allocation2], 482
        %v5923 = vld [vmem:[%s5922] ss:$2 sm:$0xff]
        %s5924 = scalar_lea.vmem [#allocation2], 498
        %v5925 = vld [vmem:[%s5924] ss:$2 sm:$0xff]
        %s5926 = scalar_lea.vmem [#allocation2], 514
        %v5927 = vld [vmem:[%s5926] ss:$2 sm:$0xff]
        %s5928 = scalar_lea.vmem [#allocation2], 530
        %v5929 = vld [vmem:[%s5928] ss:$2 sm:$0xff]
        %s5930 = scalar_lea.vmem [#allocation2], 546
        %v5931 = vld [vmem:[%s5930] ss:$2 sm:$0xff]
        %s5932 = scalar_lea.vmem [#allocation2], 562
        %v5933 = vld [vmem:[%s5932] ss:$2 sm:$0xff]
        %s5934 = scalar_lea.vmem [#allocation2], 578
        %v5935 = vld [vmem:[%s5934] ss:$2 sm:$0xff]
        %s5936 = scalar_lea.vmem [#allocation2], 594
        %v5937 = vld [vmem:[%s5936] ss:$2 sm:$0xff]
        %s5938 = scalar_lea.vmem [#allocation2], 610
        %v5939 = vld [vmem:[%s5938] ss:$2 sm:$0xff]
        %s5940 = scalar_lea.vmem [#allocation2], 626
        %v5941 = vld [vmem:[%s5940] ss:$2 sm:$0xff]
        %s5942 = scalar_lea.vmem [#allocation2], 642
        %v5943 = vld [vmem:[%s5942] ss:$2 sm:$0xff]
        %s5944 = scalar_lea.vmem [#allocation2], 658
        %v5945 = vld [vmem:[%s5944] ss:$2 sm:$0xff]
        %s5946 = scalar_lea.vmem [#allocation2], 674
        %v5947 = vld [vmem:[%s5946] ss:$2 sm:$0xff]
        %s5948 = scalar_lea.vmem [#allocation2], 690
        %v5949 = vld [vmem:[%s5948] ss:$2 sm:$0xff]
        %s5950 = scalar_lea.vmem [#allocation2], 706
        %v5951 = vld [vmem:[%s5950] ss:$2 sm:$0xff]
        %s5952 = scalar_lea.vmem [#allocation2], 722
        %v5953 = vld [vmem:[%s5952] ss:$2 sm:$0xff]
        %s5954 = scalar_lea.vmem [#allocation2], 738
        %v5955 = vld [vmem:[%s5954] ss:$2 sm:$0xff]
        %s5956 = scalar_lea.vmem [#allocation2], 754
        %v5957 = vld [vmem:[%s5956] ss:$2 sm:$0xff]
        %s5958 = scalar_lea.vmem [#allocation2], 770
        %v5959 = vld [vmem:[%s5958] ss:$2 sm:$0xff]
        %s5960 = scalar_lea.vmem [#allocation2], 786
        %v5961 = vld [vmem:[%s5960] ss:$2 sm:$0x7f]
        %v5962 = vpack.c.bf16 %v5865, %v5863
        %v5963 = vpack.c.bf16 %v5869, %v5867
        %v5964 = vpack.c.bf16 %v5873, %v5871
        %v5965 = vpack.c.bf16 %v5877, %v5875
        %v5966 = vpack.c.bf16 %v5881, %v5879
        %v5967 = vpack.c.bf16 %v5885, %v5883
        %v5968 = vpack.c.bf16 %v5889, %v5887
        %v5969 = vpack.c.bf16 %v5893, %v5891
        %v5970 = vpack.c.bf16 %v5897, %v5895
        %v5971 = vpack.c.bf16 %v5901, %v5899
        %v5972 = vpack.c.bf16 %v5905, %v5903
        %v5973 = vpack.c.bf16 %v5909, %v5907
        %v5974 = vpack.c.bf16 %v5913, %v5911
        %v5975 = vpack.c.bf16 %v5917, %v5915
        %v5976 = vpack.c.bf16 %v5921, %v5919
        %v5977 = vpack.c.bf16 %v5925, %v5923
        %v5978 = vpack.c.bf16 %v5929, %v5927
        %v5979 = vpack.c.bf16 %v5933, %v5931
        %v5980 = vpack.c.bf16 %v5937, %v5935
        %v5981 = vpack.c.bf16 %v5941, %v5939
        %v5982 = vpack.c.bf16 %v5945, %v5943
        %v5983 = vpack.c.bf16 %v5949, %v5947
        %v5984 = vpack.c.bf16 %v5953, %v5951
        %v5985 = vpack.c.bf16 %v5957, %v5955
        %v5986 = vpack.c.bf16 %v5961, %v5959
        %v5987 = vld [vmem:[%s6] sm:$0xf]
        %v5988 = vld [vmem:[%s6 + $0x4] sm:$0xf]
        %v5989 = vld [vmem:[%s6 + $0x8] sm:$0xf]
        %v5990 = vld [vmem:[%s6 + $0xc] sm:$0xf]
        %v5995 = vunpack.c.l.b16 %v5987
        %v5996 = vunpack.c.l.b16 %v5988
        %v5997 = vunpack.c.l.b16 %v5989
        %v5998 = vunpack.c.l.b16 %v5990
        %v5999 = vpack.c.b16 %v5996, %v5995
        %v6000 = vpack.c.b16 %v5998, %v5997
        %v6004 = vsel %vm3440, %v5962, 0
        %v6007 = vsel %vm3440, %v5963, 0
        %v6010 = vsel %vm3440, %v5964, 0
        %v6013 = vsel %vm3440, %v5965, 0
        %v6016 = vsel %vm3440, %v5966, 0
        %v6019 = vsel %vm3440, %v5967, 0
        %v6022 = vsel %vm3440, %v5968, 0
        %v6025 = vsel %vm3440, %v5969, 0
        %v6028 = vsel %vm3440, %v5970, 0
        %v6031 = vsel %vm3440, %v5971, 0
        %v6034 = vsel %vm3440, %v5972, 0
        %v6037 = vsel %vm3440, %v5973, 0
        %v6040 = vsel %vm3440, %v5974, 0
        %v6043 = vsel %vm3440, %v5975, 0
        %v6046 = vsel %vm3440, %v5976, 0
        %v6049 = vsel %vm3440, %v5977, 0
        %v6052 = vsel %vm3440, %v5978, 0
        %v6055 = vsel %vm3440, %v5979, 0
        %v6058 = vsel %vm3440, %v5980, 0
        %v6061 = vsel %vm3440, %v5981, 0
        %v6064 = vsel %vm3440, %v5982, 0
        %v6067 = vsel %vm3440, %v5983, 0
        %v6070 = vsel %vm3440, %v5984, 0
        %v6073 = vsel %vm3440, %v5985, 0
        %v6076 = vsel %vm3440, %v5986, 0
        %6078 = vmatpush.bf16.msra.mxu0 0
        %6079 = vmatpush.bf16.msra.mxu0 0
        %6080 = vmatpush.bf16.msra.mxu0 0
        %6081 = vmatpush.bf16.msra.mxu0 0
        %6082 = vmatpush.bf16.msra.mxu0 0
        %6083 = vmatpush.bf16.msra.mxu0 0
        %6084 = vmatpush.bf16.msra.mxu0 %v6000
        %6085 = vmatpush.bf16.msra.mxu0 %v5999
        %6086 = vmatmul.bf16.gmra.mxu0 %v6004
        %v6087 = vpop.f32.mrf.mxu0
        %v6088 = vadd.f32 0.0, %v6087
        %v6089 = vpop.f32.mrf.mxu0
        %v6090 = vadd.f32 0.0, %v6089
        %6091 = vmatmul.bf16.gmra.mxu0 %v6007
        %v6092 = vpop.f32.mrf.mxu0
        %v6093 = vadd.f32 0.0, %v6092
        %v6094 = vpop.f32.mrf.mxu0
        %v6095 = vadd.f32 0.0, %v6094
        %6096 = vmatmul.bf16.gmra.mxu0 %v6010
        %v6097 = vpop.f32.mrf.mxu0
        %v6098 = vadd.f32 0.0, %v6097
        %v6099 = vpop.f32.mrf.mxu0
        %v6100 = vadd.f32 0.0, %v6099
        %6101 = vmatmul.bf16.gmra.mxu0 %v6013
        %v6102 = vpop.f32.mrf.mxu0
        %v6103 = vadd.f32 0.0, %v6102
        %v6104 = vpop.f32.mrf.mxu0
        %v6105 = vadd.f32 0.0, %v6104
        %6106 = vmatmul.bf16.gmra.mxu0 %v6016
        %v6107 = vpop.f32.mrf.mxu0
        %v6108 = vadd.f32 0.0, %v6107
        %v6109 = vpop.f32.mrf.mxu0
        %v6110 = vadd.f32 0.0, %v6109
        %6111 = vmatmul.bf16.gmra.mxu0 %v6019
        %v6112 = vpop.f32.mrf.mxu0
        %v6113 = vadd.f32 0.0, %v6112
        %v6114 = vpop.f32.mrf.mxu0
        %v6115 = vadd.f32 0.0, %v6114
        %6116 = vmatmul.bf16.gmra.mxu0 %v6022
        %v6117 = vpop.f32.mrf.mxu0
        %v6118 = vadd.f32 0.0, %v6117
        %v6119 = vpop.f32.mrf.mxu0
        %v6120 = vadd.f32 0.0, %v6119
        %6121 = vmatmul.bf16.gmra.mxu0 %v6025
        %v6122 = vpop.f32.mrf.mxu0
        %v6123 = vadd.f32 0.0, %v6122
        %v6124 = vpop.f32.mrf.mxu0
        %v6125 = vadd.f32 0.0, %v6124
        %6126 = vmatmul.bf16.gmra.mxu0 %v6028
        %v6127 = vpop.f32.mrf.mxu0
        %v6128 = vadd.f32 0.0, %v6127
        %v6129 = vpop.f32.mrf.mxu0
        %v6130 = vadd.f32 0.0, %v6129
        %6131 = vmatmul.bf16.gmra.mxu0 %v6031
        %v6132 = vpop.f32.mrf.mxu0
        %v6133 = vadd.f32 0.0, %v6132
        %v6134 = vpop.f32.mrf.mxu0
        %v6135 = vadd.f32 0.0, %v6134
        %6136 = vmatmul.bf16.gmra.mxu0 %v6034
        %v6137 = vpop.f32.mrf.mxu0
        %v6138 = vadd.f32 0.0, %v6137
        %v6139 = vpop.f32.mrf.mxu0
        %v6140 = vadd.f32 0.0, %v6139
        %6141 = vmatmul.bf16.gmra.mxu0 %v6037
        %v6142 = vpop.f32.mrf.mxu0
        %v6143 = vadd.f32 0.0, %v6142
        %v6144 = vpop.f32.mrf.mxu0
        %v6145 = vadd.f32 0.0, %v6144
        %6146 = vmatmul.bf16.gmra.mxu0 %v6040
        %v6147 = vpop.f32.mrf.mxu0
        %v6148 = vadd.f32 0.0, %v6147
        %v6149 = vpop.f32.mrf.mxu0
        %v6150 = vadd.f32 0.0, %v6149
        %6151 = vmatmul.bf16.gmra.mxu0 %v6043
        %v6152 = vpop.f32.mrf.mxu0
        %v6153 = vadd.f32 0.0, %v6152
        %v6154 = vpop.f32.mrf.mxu0
        %v6155 = vadd.f32 0.0, %v6154
        %6156 = vmatmul.bf16.gmra.mxu0 %v6046
        %v6157 = vpop.f32.mrf.mxu0
        %v6158 = vadd.f32 0.0, %v6157
        %v6159 = vpop.f32.mrf.mxu0
        %v6160 = vadd.f32 0.0, %v6159
        %6161 = vmatmul.bf16.gmra.mxu0 %v6049
        %v6162 = vpop.f32.mrf.mxu0
        %v6163 = vadd.f32 0.0, %v6162
        %v6164 = vpop.f32.mrf.mxu0
        %v6165 = vadd.f32 0.0, %v6164
        %6166 = vmatmul.bf16.gmra.mxu0 %v6052
        %v6167 = vpop.f32.mrf.mxu0
        %v6168 = vadd.f32 0.0, %v6167
        %v6169 = vpop.f32.mrf.mxu0
        %v6170 = vadd.f32 0.0, %v6169
        %6171 = vmatmul.bf16.gmra.mxu0 %v6055
        %v6172 = vpop.f32.mrf.mxu0
        %v6173 = vadd.f32 0.0, %v6172
        %v6174 = vpop.f32.mrf.mxu0
        %v6175 = vadd.f32 0.0, %v6174
        %6176 = vmatmul.bf16.gmra.mxu0 %v6058
        %v6177 = vpop.f32.mrf.mxu0
        %v6178 = vadd.f32 0.0, %v6177
        %v6179 = vpop.f32.mrf.mxu0
        %v6180 = vadd.f32 0.0, %v6179
        %6181 = vmatmul.bf16.gmra.mxu0 %v6061
        %v6182 = vpop.f32.mrf.mxu0
        %v6183 = vadd.f32 0.0, %v6182
        %v6184 = vpop.f32.mrf.mxu0
        %v6185 = vadd.f32 0.0, %v6184
        %6186 = vmatmul.bf16.gmra.mxu0 %v6064
        %v6187 = vpop.f32.mrf.mxu0
        %v6188 = vadd.f32 0.0, %v6187
        %v6189 = vpop.f32.mrf.mxu0
        %v6190 = vadd.f32 0.0, %v6189
        %6191 = vmatmul.bf16.gmra.mxu0 %v6067
        %v6192 = vpop.f32.mrf.mxu0
        %v6193 = vadd.f32 0.0, %v6192
        %v6194 = vpop.f32.mrf.mxu0
        %v6195 = vadd.f32 0.0, %v6194
        %6196 = vmatmul.bf16.gmra.mxu0 %v6070
        %v6197 = vpop.f32.mrf.mxu0
        %v6198 = vadd.f32 0.0, %v6197
        %v6199 = vpop.f32.mrf.mxu0
        %v6200 = vadd.f32 0.0, %v6199
        %6201 = vmatmul.bf16.gmra.mxu0 %v6073
        %v6202 = vpop.f32.mrf.mxu0
        %v6203 = vadd.f32 0.0, %v6202
        %v6204 = vpop.f32.mrf.mxu0
        %v6205 = vadd.f32 0.0, %v6204
        %6206 = vmatmul.bf16.gmra.mxu0 %v6076
        %v6207 = vpop.f32.mrf.mxu0
        %v6208 = vadd.f32 0.0, %v6207
        %v6209 = vpop.f32.mrf.mxu0
        %v6210 = vadd.f32 0.0, %v6209
        %6211 = vdwg.mxu0
        %v6220 = vunpack.c.l.b16 %v5854
        %v6221 = vunpack.c.l.b16 %v5855
        %v6222 = vunpack.c.l.b16 %v5856
        %v6223 = vunpack.c.l.b16 %v5857
        %v6224 = vunpack.c.l.b16 %v5858
        %v6225 = vunpack.c.l.b16 %v5859
        %v6226 = vunpack.c.l.b16 %v5860
        %v6227 = vunpack.c.l.b16 %v5861
        %v6228 = vpack.c.b16 %v6221, %v6220
        %v6229 = vpack.c.b16 %v6223, %v6222
        %v6230 = vpack.c.b16 %v6225, %v6224
        %v6231 = vpack.c.b16 %v6227, %v6226
        %vm6236 = vcmask 523264
        %v6238 = vsel %vm6236, %v5829, 0
        %v6241 = vsel %vm6236, %v5830, 0
        %v6244 = vsel %vm6236, %v5831, 0
        %v6247 = vsel %vm6236, %v5832, 0
        %v6250 = vsel %vm6236, %v5833, 0
        %v6253 = vsel %vm6236, %v5834, 0
        %v6256 = vsel %vm6236, %v5835, 0
        %v6259 = vsel %vm6236, %v5836, 0
        %v6262 = vsel %vm6236, %v5837, 0
        %v6265 = vsel %vm6236, %v5838, 0
        %v6268 = vsel %vm6236, %v5839, 0
        %v6271 = vsel %vm6236, %v5840, 0
        %v6274 = vsel %vm6236, %v5841, 0
        %v6277 = vsel %vm6236, %v5842, 0
        %v6280 = vsel %vm6236, %v5843, 0
        %v6283 = vsel %vm6236, %v5844, 0
        %v6286 = vsel %vm6236, %v5845, 0
        %v6289 = vsel %vm6236, %v5846, 0
        %v6292 = vsel %vm6236, %v5847, 0
        %v6295 = vsel %vm6236, %v5848, 0
        %v6298 = vsel %vm6236, %v5849, 0
        %v6301 = vsel %vm6236, %v5850, 0
        %v6304 = vsel %vm6236, %v5851, 0
        %v6307 = vsel %vm6236, %v5852, 0
        %v6310 = vsel %vm6236, %v5853, 0
        %6312 = vmatpush.bf16.msra.mxu0 0
        %6313 = vmatpush.bf16.msra.mxu0 0
        %6314 = vmatpush.bf16.msra.mxu0 0
        %6315 = vmatpush.bf16.msra.mxu0 0
        %6316 = vmatpush.bf16.msra.mxu0 %v6231
        %6317 = vmatpush.bf16.msra.mxu0 %v6230
        %6318 = vmatpush.bf16.msra.mxu0 %v6229
        %6319 = vmatpush.bf16.msra.mxu0 %v6228
        %6320 = vmatmul.bf16.gmra.mxu0 %v6238
        %v6321 = vpop.f32.mrf.mxu0
        %v6322 = vadd.f32 %v6088, %v6321
        %v6323 = vpop.f32.mrf.mxu0
        %v6324 = vadd.f32 %v6090, %v6323
        %6325 = vmatmul.bf16.gmra.mxu0 %v6241
        %v6326 = vpop.f32.mrf.mxu0
        %v6327 = vadd.f32 %v6093, %v6326
        %v6328 = vpop.f32.mrf.mxu0
        %v6329 = vadd.f32 %v6095, %v6328
        %6330 = vmatmul.bf16.gmra.mxu0 %v6244
        %v6331 = vpop.f32.mrf.mxu0
        %v6332 = vadd.f32 %v6098, %v6331
        %v6333 = vpop.f32.mrf.mxu0
        %v6334 = vadd.f32 %v6100, %v6333
        %6335 = vmatmul.bf16.gmra.mxu0 %v6247
        %v6336 = vpop.f32.mrf.mxu0
        %v6337 = vadd.f32 %v6103, %v6336
        %v6338 = vpop.f32.mrf.mxu0
        %v6339 = vadd.f32 %v6105, %v6338
        %6340 = vmatmul.bf16.gmra.mxu0 %v6250
        %v6341 = vpop.f32.mrf.mxu0
        %v6342 = vadd.f32 %v6108, %v6341
        %v6343 = vpop.f32.mrf.mxu0
        %v6344 = vadd.f32 %v6110, %v6343
        %6345 = vmatmul.bf16.gmra.mxu0 %v6253
        %v6346 = vpop.f32.mrf.mxu0
        %v6347 = vadd.f32 %v6113, %v6346
        %v6348 = vpop.f32.mrf.mxu0
        %v6349 = vadd.f32 %v6115, %v6348
        %6350 = vmatmul.bf16.gmra.mxu0 %v6256
        %v6351 = vpop.f32.mrf.mxu0
        %v6352 = vadd.f32 %v6118, %v6351
        %v6353 = vpop.f32.mrf.mxu0
        %v6354 = vadd.f32 %v6120, %v6353
        %6355 = vmatmul.bf16.gmra.mxu0 %v6259
        %v6356 = vpop.f32.mrf.mxu0
        %v6357 = vadd.f32 %v6123, %v6356
        %v6358 = vpop.f32.mrf.mxu0
        %v6359 = vadd.f32 %v6125, %v6358
        %6360 = vmatmul.bf16.gmra.mxu0 %v6262
        %v6361 = vpop.f32.mrf.mxu0
        %v6362 = vadd.f32 %v6128, %v6361
        %v6363 = vpop.f32.mrf.mxu0
        %v6364 = vadd.f32 %v6130, %v6363
        %6365 = vmatmul.bf16.gmra.mxu0 %v6265
        %v6366 = vpop.f32.mrf.mxu0
        %v6367 = vadd.f32 %v6133, %v6366
        %v6368 = vpop.f32.mrf.mxu0
        %v6369 = vadd.f32 %v6135, %v6368
        %6370 = vmatmul.bf16.gmra.mxu0 %v6268
        %v6371 = vpop.f32.mrf.mxu0
        %v6372 = vadd.f32 %v6138, %v6371
        %v6373 = vpop.f32.mrf.mxu0
        %v6374 = vadd.f32 %v6140, %v6373
        %6375 = vmatmul.bf16.gmra.mxu0 %v6271
        %v6376 = vpop.f32.mrf.mxu0
        %v6377 = vadd.f32 %v6143, %v6376
        %v6378 = vpop.f32.mrf.mxu0
        %v6379 = vadd.f32 %v6145, %v6378
        %6380 = vmatmul.bf16.gmra.mxu0 %v6274
        %v6381 = vpop.f32.mrf.mxu0
        %v6382 = vadd.f32 %v6148, %v6381
        %v6383 = vpop.f32.mrf.mxu0
        %v6384 = vadd.f32 %v6150, %v6383
        %6385 = vmatmul.bf16.gmra.mxu0 %v6277
        %v6386 = vpop.f32.mrf.mxu0
        %v6387 = vadd.f32 %v6153, %v6386
        %v6388 = vpop.f32.mrf.mxu0
        %v6389 = vadd.f32 %v6155, %v6388
        %6390 = vmatmul.bf16.gmra.mxu0 %v6280
        %v6391 = vpop.f32.mrf.mxu0
        %v6392 = vadd.f32 %v6158, %v6391
        %v6393 = vpop.f32.mrf.mxu0
        %v6394 = vadd.f32 %v6160, %v6393
        %6395 = vmatmul.bf16.gmra.mxu0 %v6283
        %v6396 = vpop.f32.mrf.mxu0
        %v6397 = vadd.f32 %v6163, %v6396
        %v6398 = vpop.f32.mrf.mxu0
        %v6399 = vadd.f32 %v6165, %v6398
        %6400 = vmatmul.bf16.gmra.mxu0 %v6286
        %v6401 = vpop.f32.mrf.mxu0
        %v6402 = vadd.f32 %v6168, %v6401
        %v6403 = vpop.f32.mrf.mxu0
        %v6404 = vadd.f32 %v6170, %v6403
        %6405 = vmatmul.bf16.gmra.mxu0 %v6289
        %v6406 = vpop.f32.mrf.mxu0
        %v6407 = vadd.f32 %v6173, %v6406
        %v6408 = vpop.f32.mrf.mxu0
        %v6409 = vadd.f32 %v6175, %v6408
        %6410 = vmatmul.bf16.gmra.mxu0 %v6292
        %v6411 = vpop.f32.mrf.mxu0
        %v6412 = vadd.f32 %v6178, %v6411
        %v6413 = vpop.f32.mrf.mxu0
        %v6414 = vadd.f32 %v6180, %v6413
        %6415 = vmatmul.bf16.gmra.mxu0 %v6295
        %v6416 = vpop.f32.mrf.mxu0
        %v6417 = vadd.f32 %v6183, %v6416
        %v6418 = vpop.f32.mrf.mxu0
        %v6419 = vadd.f32 %v6185, %v6418
        %6420 = vmatmul.bf16.gmra.mxu0 %v6298
        %v6421 = vpop.f32.mrf.mxu0
        %v6422 = vadd.f32 %v6188, %v6421
        %v6423 = vpop.f32.mrf.mxu0
        %v6424 = vadd.f32 %v6190, %v6423
        %6425 = vmatmul.bf16.gmra.mxu0 %v6301
        %v6426 = vpop.f32.mrf.mxu0
        %v6427 = vadd.f32 %v6193, %v6426
        %v6428 = vpop.f32.mrf.mxu0
        %v6429 = vadd.f32 %v6195, %v6428
        %6430 = vmatmul.bf16.gmra.mxu0 %v6304
        %v6431 = vpop.f32.mrf.mxu0
        %v6432 = vadd.f32 %v6198, %v6431
        %v6433 = vpop.f32.mrf.mxu0
        %v6434 = vadd.f32 %v6200, %v6433
        %6435 = vmatmul.bf16.gmra.mxu0 %v6307
        %v6436 = vpop.f32.mrf.mxu0
        %v6437 = vadd.f32 %v6203, %v6436
        %v6438 = vpop.f32.mrf.mxu0
        %v6439 = vadd.f32 %v6205, %v6438
        %6440 = vmatmul.bf16.gmra.mxu0 %v6310
        %v6441 = vpop.f32.mrf.mxu0
        %v6442 = vadd.f32 %v6208, %v6441
        %v6443 = vpop.f32.mrf.mxu0
        %v6444 = vadd.f32 %v6210, %v6443
        %6445 = vdwg.mxu0
        %v6446 = vmul.f32 %v6322, %v6322
        %v6447 = vmul.f32 %v6324, %v6324
        %v6448 = vmul.f32 %v6327, %v6327
        %v6449 = vmul.f32 %v6329, %v6329
        %v6450 = vmul.f32 %v6332, %v6332
        %v6451 = vmul.f32 %v6334, %v6334
        %v6452 = vmul.f32 %v6337, %v6337
        %v6453 = vmul.f32 %v6339, %v6339
        %v6454 = vmul.f32 %v6342, %v6342
        %v6455 = vmul.f32 %v6344, %v6344
        %v6456 = vmul.f32 %v6347, %v6347
        %v6457 = vmul.f32 %v6349, %v6349
        %v6458 = vmul.f32 %v6352, %v6352
        %v6459 = vmul.f32 %v6354, %v6354
        %v6460 = vmul.f32 %v6357, %v6357
        %v6461 = vmul.f32 %v6359, %v6359
        %v6462 = vmul.f32 %v6362, %v6362
        %v6463 = vmul.f32 %v6364, %v6364
        %v6464 = vmul.f32 %v6367, %v6367
        %v6465 = vmul.f32 %v6369, %v6369
        %v6466 = vmul.f32 %v6372, %v6372
        %v6467 = vmul.f32 %v6374, %v6374
        %v6468 = vmul.f32 %v6377, %v6377
        %v6469 = vmul.f32 %v6379, %v6379
        %v6470 = vmul.f32 %v6382, %v6382
        %v6471 = vmul.f32 %v6384, %v6384
        %v6472 = vmul.f32 %v6387, %v6387
        %v6473 = vmul.f32 %v6389, %v6389
        %v6474 = vmul.f32 %v6392, %v6392
        %v6475 = vmul.f32 %v6394, %v6394
        %v6476 = vmul.f32 %v6397, %v6397
        %v6477 = vmul.f32 %v6399, %v6399
        %v6478 = vmul.f32 %v6402, %v6402
        %v6479 = vmul.f32 %v6404, %v6404
        %v6480 = vmul.f32 %v6407, %v6407
        %v6481 = vmul.f32 %v6409, %v6409
        %v6482 = vmul.f32 %v6412, %v6412
        %v6483 = vmul.f32 %v6414, %v6414
        %v6484 = vmul.f32 %v6417, %v6417
        %v6485 = vmul.f32 %v6419, %v6419
        %v6486 = vmul.f32 %v6422, %v6422
        %v6487 = vmul.f32 %v6424, %v6424
        %v6488 = vmul.f32 %v6427, %v6427
        %v6489 = vmul.f32 %v6429, %v6429
        %v6490 = vmul.f32 %v6432, %v6432
        %v6491 = vmul.f32 %v6434, %v6434
        %v6492 = vmul.f32 %v6437, %v6437
        %v6493 = vmul.f32 %v6439, %v6439
        %v6494 = vmul.f32 %v6442, %v6442
        %v6495 = vmul.f32 %v6444, %v6444
        %v6496 = vmul.f32 %v6322, %v6446
        %v6497 = vmul.f32 %v6324, %v6447
        %v6498 = vmul.f32 %v6327, %v6448
        %v6499 = vmul.f32 %v6329, %v6449
        %v6500 = vmul.f32 %v6332, %v6450
        %v6501 = vmul.f32 %v6334, %v6451
        %v6502 = vmul.f32 %v6337, %v6452
        %v6503 = vmul.f32 %v6339, %v6453
        %v6504 = vmul.f32 %v6342, %v6454
        %v6505 = vmul.f32 %v6344, %v6455
        %v6506 = vmul.f32 %v6347, %v6456
        %v6507 = vmul.f32 %v6349, %v6457
        %v6508 = vmul.f32 %v6352, %v6458
        %v6509 = vmul.f32 %v6354, %v6459
        %v6510 = vmul.f32 %v6357, %v6460
        %v6511 = vmul.f32 %v6359, %v6461
        %v6512 = vmul.f32 %v6362, %v6462
        %v6513 = vmul.f32 %v6364, %v6463
        %v6514 = vmul.f32 %v6367, %v6464
        %v6515 = vmul.f32 %v6369, %v6465
        %v6516 = vmul.f32 %v6372, %v6466
        %v6517 = vmul.f32 %v6374, %v6467
        %v6518 = vmul.f32 %v6377, %v6468
        %v6519 = vmul.f32 %v6379, %v6469
        %v6520 = vmul.f32 %v6382, %v6470
        %v6521 = vmul.f32 %v6384, %v6471
        %v6522 = vmul.f32 %v6387, %v6472
        %v6523 = vmul.f32 %v6389, %v6473
        %v6524 = vmul.f32 %v6392, %v6474
        %v6525 = vmul.f32 %v6394, %v6475
        %v6526 = vmul.f32 %v6397, %v6476
        %v6527 = vmul.f32 %v6399, %v6477
        %v6528 = vmul.f32 %v6402, %v6478
        %v6529 = vmul.f32 %v6404, %v6479
        %v6530 = vmul.f32 %v6407, %v6480
        %v6531 = vmul.f32 %v6409, %v6481
        %v6532 = vmul.f32 %v6412, %v6482
        %v6533 = vmul.f32 %v6414, %v6483
        %v6534 = vmul.f32 %v6417, %v6484
        %v6535 = vmul.f32 %v6419, %v6485
        %v6536 = vmul.f32 %v6422, %v6486
        %v6537 = vmul.f32 %v6424, %v6487
        %v6538 = vmul.f32 %v6427, %v6488
        %v6539 = vmul.f32 %v6429, %v6489
        %v6540 = vmul.f32 %v6432, %v6490
        %v6541 = vmul.f32 %v6434, %v6491
        %v6542 = vmul.f32 %v6437, %v6492
        %v6543 = vmul.f32 %v6439, %v6493
        %v6544 = vmul.f32 %v6442, %v6494
        %v6545 = vmul.f32 %v6444, %v6495
        %v6546 = vmul.f32 %v6496, 0.044715
        %v6547 = vmul.f32 %v6497, 0.044715
        %v6548 = vmul.f32 %v6498, 0.044715
        %v6549 = vmul.f32 %v6499, 0.044715
        %v6550 = vmul.f32 %v6500, 0.044715
        %v6551 = vmul.f32 %v6501, 0.044715
        %v6552 = vmul.f32 %v6502, 0.044715
        %v6553 = vmul.f32 %v6503, 0.044715
        %v6554 = vmul.f32 %v6504, 0.044715
        %v6555 = vmul.f32 %v6505, 0.044715
        %v6556 = vmul.f32 %v6506, 0.044715
        %v6557 = vmul.f32 %v6507, 0.044715
        %v6558 = vmul.f32 %v6508, 0.044715
        %v6559 = vmul.f32 %v6509, 0.044715
        %v6560 = vmul.f32 %v6510, 0.044715
        %v6561 = vmul.f32 %v6511, 0.044715
        %v6562 = vmul.f32 %v6512, 0.044715
        %v6563 = vmul.f32 %v6513, 0.044715
        %v6564 = vmul.f32 %v6514, 0.044715
        %v6565 = vmul.f32 %v6515, 0.044715
        %v6566 = vmul.f32 %v6516, 0.044715
        %v6567 = vmul.f32 %v6517, 0.044715
        %v6568 = vmul.f32 %v6518, 0.044715
        %v6569 = vmul.f32 %v6519, 0.044715
        %v6570 = vmul.f32 %v6520, 0.044715
        %v6571 = vmul.f32 %v6521, 0.044715
        %v6572 = vmul.f32 %v6522, 0.044715
        %v6573 = vmul.f32 %v6523, 0.044715
        %v6574 = vmul.f32 %v6524, 0.044715
        %v6575 = vmul.f32 %v6525, 0.044715
        %v6576 = vmul.f32 %v6526, 0.044715
        %v6577 = vmul.f32 %v6527, 0.044715
        %v6578 = vmul.f32 %v6528, 0.044715
        %v6579 = vmul.f32 %v6529, 0.044715
        %v6580 = vmul.f32 %v6530, 0.044715
        %v6581 = vmul.f32 %v6531, 0.044715
        %v6582 = vmul.f32 %v6532, 0.044715
        %v6583 = vmul.f32 %v6533, 0.044715
        %v6584 = vmul.f32 %v6534, 0.044715
        %v6585 = vmul.f32 %v6535, 0.044715
        %v6586 = vmul.f32 %v6536, 0.044715
        %v6587 = vmul.f32 %v6537, 0.044715
        %v6588 = vmul.f32 %v6538, 0.044715
        %v6589 = vmul.f32 %v6539, 0.044715
        %v6590 = vmul.f32 %v6540, 0.044715
        %v6591 = vmul.f32 %v6541, 0.044715
        %v6592 = vmul.f32 %v6542, 0.044715
        %v6593 = vmul.f32 %v6543, 0.044715
        %v6594 = vmul.f32 %v6544, 0.044715
        %v6595 = vmul.f32 %v6545, 0.044715
        %v6596 = vadd.f32 %v6322, %v6546
        %v6597 = vadd.f32 %v6324, %v6547
        %v6598 = vadd.f32 %v6327, %v6548
        %v6599 = vadd.f32 %v6329, %v6549
        %v6600 = vadd.f32 %v6332, %v6550
        %v6601 = vadd.f32 %v6334, %v6551
        %v6602 = vadd.f32 %v6337, %v6552
        %v6603 = vadd.f32 %v6339, %v6553
        %v6604 = vadd.f32 %v6342, %v6554
        %v6605 = vadd.f32 %v6344, %v6555
        %v6606 = vadd.f32 %v6347, %v6556
        %v6607 = vadd.f32 %v6349, %v6557
        %v6608 = vadd.f32 %v6352, %v6558
        %v6609 = vadd.f32 %v6354, %v6559
        %v6610 = vadd.f32 %v6357, %v6560
        %v6611 = vadd.f32 %v6359, %v6561
        %v6612 = vadd.f32 %v6362, %v6562
        %v6613 = vadd.f32 %v6364, %v6563
        %v6614 = vadd.f32 %v6367, %v6564
        %v6615 = vadd.f32 %v6369, %v6565
        %v6616 = vadd.f32 %v6372, %v6566
        %v6617 = vadd.f32 %v6374, %v6567
        %v6618 = vadd.f32 %v6377, %v6568
        %v6619 = vadd.f32 %v6379, %v6569
        %v6620 = vadd.f32 %v6382, %v6570
        %v6621 = vadd.f32 %v6384, %v6571
        %v6622 = vadd.f32 %v6387, %v6572
        %v6623 = vadd.f32 %v6389, %v6573
        %v6624 = vadd.f32 %v6392, %v6574
        %v6625 = vadd.f32 %v6394, %v6575
        %v6626 = vadd.f32 %v6397, %v6576
        %v6627 = vadd.f32 %v6399, %v6577
        %v6628 = vadd.f32 %v6402, %v6578
        %v6629 = vadd.f32 %v6404, %v6579
        %v6630 = vadd.f32 %v6407, %v6580
        %v6631 = vadd.f32 %v6409, %v6581
        %v6632 = vadd.f32 %v6412, %v6582
        %v6633 = vadd.f32 %v6414, %v6583
        %v6634 = vadd.f32 %v6417, %v6584
        %v6635 = vadd.f32 %v6419, %v6585
        %v6636 = vadd.f32 %v6422, %v6586
        %v6637 = vadd.f32 %v6424, %v6587
        %v6638 = vadd.f32 %v6427, %v6588
        %v6639 = vadd.f32 %v6429, %v6589
        %v6640 = vadd.f32 %v6432, %v6590
        %v6641 = vadd.f32 %v6434, %v6591
        %v6642 = vadd.f32 %v6437, %v6592
        %v6643 = vadd.f32 %v6439, %v6593
        %v6644 = vadd.f32 %v6442, %v6594
        %v6645 = vadd.f32 %v6444, %v6595
        %v6646 = vmul.f32 %v6596, 0.7978846
        %v6647 = vmul.f32 %v6597, 0.7978846
        %v6648 = vmul.f32 %v6598, 0.7978846
        %v6649 = vmul.f32 %v6599, 0.7978846
        %v6650 = vmul.f32 %v6600, 0.7978846
        %v6651 = vmul.f32 %v6601, 0.7978846
        %v6652 = vmul.f32 %v6602, 0.7978846
        %v6653 = vmul.f32 %v6603, 0.7978846
        %v6654 = vmul.f32 %v6604, 0.7978846
        %v6655 = vmul.f32 %v6605, 0.7978846
        %v6656 = vmul.f32 %v6606, 0.7978846
        %v6657 = vmul.f32 %v6607, 0.7978846
        %v6658 = vmul.f32 %v6608, 0.7978846
        %v6659 = vmul.f32 %v6609, 0.7978846
        %v6660 = vmul.f32 %v6610, 0.7978846
        %v6661 = vmul.f32 %v6611, 0.7978846
        %v6662 = vmul.f32 %v6612, 0.7978846
        %v6663 = vmul.f32 %v6613, 0.7978846
        %v6664 = vmul.f32 %v6614, 0.7978846
        %v6665 = vmul.f32 %v6615, 0.7978846
        %v6666 = vmul.f32 %v6616, 0.7978846
        %v6667 = vmul.f32 %v6617, 0.7978846
        %v6668 = vmul.f32 %v6618, 0.7978846
        %v6669 = vmul.f32 %v6619, 0.7978846
        %v6670 = vmul.f32 %v6620, 0.7978846
        %v6671 = vmul.f32 %v6621, 0.7978846
        %v6672 = vmul.f32 %v6622, 0.7978846
        %v6673 = vmul.f32 %v6623, 0.7978846
        %v6674 = vmul.f32 %v6624, 0.7978846
        %v6675 = vmul.f32 %v6625, 0.7978846
        %v6676 = vmul.f32 %v6626, 0.7978846
        %v6677 = vmul.f32 %v6627, 0.7978846
        %v6678 = vmul.f32 %v6628, 0.7978846
        %v6679 = vmul.f32 %v6629, 0.7978846
        %v6680 = vmul.f32 %v6630, 0.7978846
        %v6681 = vmul.f32 %v6631, 0.7978846
        %v6682 = vmul.f32 %v6632, 0.7978846
        %v6683 = vmul.f32 %v6633, 0.7978846
        %v6684 = vmul.f32 %v6634, 0.7978846
        %v6685 = vmul.f32 %v6635, 0.7978846
        %v6686 = vmul.f32 %v6636, 0.7978846
        %v6687 = vmul.f32 %v6637, 0.7978846
        %v6688 = vmul.f32 %v6638, 0.7978846
        %v6689 = vmul.f32 %v6639, 0.7978846
        %v6690 = vmul.f32 %v6640, 0.7978846
        %v6691 = vmul.f32 %v6641, 0.7978846
        %v6692 = vmul.f32 %v6642, 0.7978846
        %v6693 = vmul.f32 %v6643, 0.7978846
        %v6694 = vmul.f32 %v6644, 0.7978846
        %v6695 = vmul.f32 %v6645, 0.7978846
        %v6696 = vtanh.pop %v6646
        %v6697 = vtanh.pop %v6647
        %v6698 = vtanh.pop %v6648
        %v6699 = vtanh.pop %v6649
        %v6700 = vtanh.pop %v6650
        %v6701 = vtanh.pop %v6651
        %v6702 = vtanh.pop %v6652
        %v6703 = vtanh.pop %v6653
        %v6704 = vtanh.pop %v6654
        %v6705 = vtanh.pop %v6655
        %v6706 = vtanh.pop %v6656
        %v6707 = vtanh.pop %v6657
        %v6708 = vtanh.pop %v6658
        %v6709 = vtanh.pop %v6659
        %v6710 = vtanh.pop %v6660
        %v6711 = vtanh.pop %v6661
        %v6712 = vtanh.pop %v6662
        %v6713 = vtanh.pop %v6663
        %v6714 = vtanh.pop %v6664
        %v6715 = vtanh.pop %v6665
        %v6716 = vtanh.pop %v6666
        %v6717 = vtanh.pop %v6667
        %v6718 = vtanh.pop %v6668
        %v6719 = vtanh.pop %v6669
        %v6720 = vtanh.pop %v6670
        %v6721 = vtanh.pop %v6671
        %v6722 = vtanh.pop %v6672
        %v6723 = vtanh.pop %v6673
        %v6724 = vtanh.pop %v6674
        %v6725 = vtanh.pop %v6675
        %v6726 = vtanh.pop %v6676
        %v6727 = vtanh.pop %v6677
        %v6728 = vtanh.pop %v6678
        %v6729 = vtanh.pop %v6679
        %v6730 = vtanh.pop %v6680
        %v6731 = vtanh.pop %v6681
        %v6732 = vtanh.pop %v6682
        %v6733 = vtanh.pop %v6683
        %v6734 = vtanh.pop %v6684
        %v6735 = vtanh.pop %v6685
        %v6736 = vtanh.pop %v6686
        %v6737 = vtanh.pop %v6687
        %v6738 = vtanh.pop %v6688
        %v6739 = vtanh.pop %v6689
        %v6740 = vtanh.pop %v6690
        %v6741 = vtanh.pop %v6691
        %v6742 = vtanh.pop %v6692
        %v6743 = vtanh.pop %v6693
        %v6744 = vtanh.pop %v6694
        %v6745 = vtanh.pop %v6695
        %v6746 = vadd.f32 %v6696, 1.0
        %v6747 = vadd.f32 %v6697, 1.0
        %v6748 = vadd.f32 %v6698, 1.0
        %v6749 = vadd.f32 %v6699, 1.0
        %v6750 = vadd.f32 %v6700, 1.0
        %v6751 = vadd.f32 %v6701, 1.0
        %v6752 = vadd.f32 %v6702, 1.0
        %v6753 = vadd.f32 %v6703, 1.0
        %v6754 = vadd.f32 %v6704, 1.0
        %v6755 = vadd.f32 %v6705, 1.0
        %v6756 = vadd.f32 %v6706, 1.0
        %v6757 = vadd.f32 %v6707, 1.0
        %v6758 = vadd.f32 %v6708, 1.0
        %v6759 = vadd.f32 %v6709, 1.0
        %v6760 = vadd.f32 %v6710, 1.0
        %v6761 = vadd.f32 %v6711, 1.0
        %v6762 = vadd.f32 %v6712, 1.0
        %v6763 = vadd.f32 %v6713, 1.0
        %v6764 = vadd.f32 %v6714, 1.0
        %v6765 = vadd.f32 %v6715, 1.0
        %v6766 = vadd.f32 %v6716, 1.0
        %v6767 = vadd.f32 %v6717, 1.0
        %v6768 = vadd.f32 %v6718, 1.0
        %v6769 = vadd.f32 %v6719, 1.0
        %v6770 = vadd.f32 %v6720, 1.0
        %v6771 = vadd.f32 %v6721, 1.0
        %v6772 = vadd.f32 %v6722, 1.0
        %v6773 = vadd.f32 %v6723, 1.0
        %v6774 = vadd.f32 %v6724, 1.0
        %v6775 = vadd.f32 %v6725, 1.0
        %v6776 = vadd.f32 %v6726, 1.0
        %v6777 = vadd.f32 %v6727, 1.0
        %v6778 = vadd.f32 %v6728, 1.0
        %v6779 = vadd.f32 %v6729, 1.0
        %v6780 = vadd.f32 %v6730, 1.0
        %v6781 = vadd.f32 %v6731, 1.0
        %v6782 = vadd.f32 %v6732, 1.0
        %v6783 = vadd.f32 %v6733, 1.0
        %v6784 = vadd.f32 %v6734, 1.0
        %v6785 = vadd.f32 %v6735, 1.0
        %v6786 = vadd.f32 %v6736, 1.0
        %v6787 = vadd.f32 %v6737, 1.0
        %v6788 = vadd.f32 %v6738, 1.0
        %v6789 = vadd.f32 %v6739, 1.0
        %v6790 = vadd.f32 %v6740, 1.0
        %v6791 = vadd.f32 %v6741, 1.0
        %v6792 = vadd.f32 %v6742, 1.0
        %v6793 = vadd.f32 %v6743, 1.0
        %v6794 = vadd.f32 %v6744, 1.0
        %v6795 = vadd.f32 %v6745, 1.0
        %v6796 = vmul.f32 %v6746, 0.5
        %v6797 = vmul.f32 %v6747, 0.5
        %v6798 = vmul.f32 %v6748, 0.5
        %v6799 = vmul.f32 %v6749, 0.5
        %v6800 = vmul.f32 %v6750, 0.5
        %v6801 = vmul.f32 %v6751, 0.5
        %v6802 = vmul.f32 %v6752, 0.5
        %v6803 = vmul.f32 %v6753, 0.5
        %v6804 = vmul.f32 %v6754, 0.5
        %v6805 = vmul.f32 %v6755, 0.5
        %v6806 = vmul.f32 %v6756, 0.5
        %v6807 = vmul.f32 %v6757, 0.5
        %v6808 = vmul.f32 %v6758, 0.5
        %v6809 = vmul.f32 %v6759, 0.5
        %v6810 = vmul.f32 %v6760, 0.5
        %v6811 = vmul.f32 %v6761, 0.5
        %v6812 = vmul.f32 %v6762, 0.5
        %v6813 = vmul.f32 %v6763, 0.5
        %v6814 = vmul.f32 %v6764, 0.5
        %v6815 = vmul.f32 %v6765, 0.5
        %v6816 = vmul.f32 %v6766, 0.5
        %v6817 = vmul.f32 %v6767, 0.5
        %v6818 = vmul.f32 %v6768, 0.5
        %v6819 = vmul.f32 %v6769, 0.5
        %v6820 = vmul.f32 %v6770, 0.5
        %v6821 = vmul.f32 %v6771, 0.5
        %v6822 = vmul.f32 %v6772, 0.5
        %v6823 = vmul.f32 %v6773, 0.5
        %v6824 = vmul.f32 %v6774, 0.5
        %v6825 = vmul.f32 %v6775, 0.5
        %v6826 = vmul.f32 %v6776, 0.5
        %v6827 = vmul.f32 %v6777, 0.5
        %v6828 = vmul.f32 %v6778, 0.5
        %v6829 = vmul.f32 %v6779, 0.5
        %v6830 = vmul.f32 %v6780, 0.5
        %v6831 = vmul.f32 %v6781, 0.5
        %v6832 = vmul.f32 %v6782, 0.5
        %v6833 = vmul.f32 %v6783, 0.5
        %v6834 = vmul.f32 %v6784, 0.5
        %v6835 = vmul.f32 %v6785, 0.5
        %v6836 = vmul.f32 %v6786, 0.5
        %v6837 = vmul.f32 %v6787, 0.5
        %v6838 = vmul.f32 %v6788, 0.5
        %v6839 = vmul.f32 %v6789, 0.5
        %v6840 = vmul.f32 %v6790, 0.5
        %v6841 = vmul.f32 %v6791, 0.5
        %v6842 = vmul.f32 %v6792, 0.5
        %v6843 = vmul.f32 %v6793, 0.5
        %v6844 = vmul.f32 %v6794, 0.5
        %v6845 = vmul.f32 %v6795, 0.5
        %v6846 = vmul.f32 %v6322, %v6796
        %v6847 = vmul.f32 %v6324, %v6797
        %v6848 = vmul.f32 %v6327, %v6798
        %v6849 = vmul.f32 %v6329, %v6799
        %v6850 = vmul.f32 %v6332, %v6800
        %v6851 = vmul.f32 %v6334, %v6801
        %v6852 = vmul.f32 %v6337, %v6802
        %v6853 = vmul.f32 %v6339, %v6803
        %v6854 = vmul.f32 %v6342, %v6804
        %v6855 = vmul.f32 %v6344, %v6805
        %v6856 = vmul.f32 %v6347, %v6806
        %v6857 = vmul.f32 %v6349, %v6807
        %v6858 = vmul.f32 %v6352, %v6808
        %v6859 = vmul.f32 %v6354, %v6809
        %v6860 = vmul.f32 %v6357, %v6810
        %v6861 = vmul.f32 %v6359, %v6811
        %v6862 = vmul.f32 %v6362, %v6812
        %v6863 = vmul.f32 %v6364, %v6813
        %v6864 = vmul.f32 %v6367, %v6814
        %v6865 = vmul.f32 %v6369, %v6815
        %v6866 = vmul.f32 %v6372, %v6816
        %v6867 = vmul.f32 %v6374, %v6817
        %v6868 = vmul.f32 %v6377, %v6818
        %v6869 = vmul.f32 %v6379, %v6819
        %v6870 = vmul.f32 %v6382, %v6820
        %v6871 = vmul.f32 %v6384, %v6821
        %v6872 = vmul.f32 %v6387, %v6822
        %v6873 = vmul.f32 %v6389, %v6823
        %v6874 = vmul.f32 %v6392, %v6824
        %v6875 = vmul.f32 %v6394, %v6825
        %v6876 = vmul.f32 %v6397, %v6826
        %v6877 = vmul.f32 %v6399, %v6827
        %v6878 = vmul.f32 %v6402, %v6828
        %v6879 = vmul.f32 %v6404, %v6829
        %v6880 = vmul.f32 %v6407, %v6830
        %v6881 = vmul.f32 %v6409, %v6831
        %v6882 = vmul.f32 %v6412, %v6832
        %v6883 = vmul.f32 %v6414, %v6833
        %v6884 = vmul.f32 %v6417, %v6834
        %v6885 = vmul.f32 %v6419, %v6835
        %v6886 = vmul.f32 %v6422, %v6836
        %v6887 = vmul.f32 %v6424, %v6837
        %v6888 = vmul.f32 %v6427, %v6838
        %v6889 = vmul.f32 %v6429, %v6839
        %v6890 = vmul.f32 %v6432, %v6840
        %v6891 = vmul.f32 %v6434, %v6841
        %v6892 = vmul.f32 %v6437, %v6842
        %v6893 = vmul.f32 %v6439, %v6843
        %v6894 = vmul.f32 %v6442, %v6844
        %v6895 = vmul.f32 %v6444, %v6845
        %6896 = vst.msk [vmem:[#allocation2] sm:$0xff] %vm3440, %v6846
        %6897 = vst.msk [vmem:[#allocation2 + $0x8] sm:$0xff] %vm3440, %v6847
        %6898 = vst.msk [vmem:[#allocation2 + $0x10] sm:$0xff] %vm3440, %v6848
        %6899 = vst.msk [vmem:[#allocation2 + $0x18] sm:$0xff] %vm3440, %v6849
        %6900 = vst.msk [vmem:[#allocation2 + $0x20] sm:$0xff] %vm3440, %v6850
        %6901 = vst.msk [vmem:[#allocation2 + $0x28] sm:$0xff] %vm3440, %v6851
        %6902 = vst.msk [vmem:[#allocation2 + $0x30] sm:$0xff] %vm3440, %v6852
        %6903 = vst.msk [vmem:[#allocation2 + $0x38] sm:$0xff] %vm3440, %v6853
        %6904 = vst.msk [vmem:[#allocation2 + $0x40] sm:$0xff] %vm3440, %v6854
        %6905 = vst.msk [vmem:[#allocation2 + $0x48] sm:$0xff] %vm3440, %v6855
        %6906 = vst.msk [vmem:[#allocation2 + $0x50] sm:$0xff] %vm3440, %v6856
        %6907 = vst.msk [vmem:[#allocation2 + $0x58] sm:$0xff] %vm3440, %v6857
        %6908 = vst.msk [vmem:[#allocation2 + $0x60] sm:$0xff] %vm3440, %v6858
        %6909 = vst.msk [vmem:[#allocation2 + $0x68] sm:$0xff] %vm3440, %v6859
        %6910 = vst.msk [vmem:[#allocation2 + $0x70] sm:$0xff] %vm3440, %v6860
        %6911 = vst.msk [vmem:[#allocation2 + $0x78] sm:$0xff] %vm3440, %v6861
        %6912 = vst.msk [vmem:[#allocation2 + $0x80] sm:$0xff] %vm3440, %v6862
        %6913 = vst.msk [vmem:[#allocation2 + $0x88] sm:$0xff] %vm3440, %v6863
        %6914 = vst.msk [vmem:[#allocation2 + $0x90] sm:$0xff] %vm3440, %v6864
        %6915 = vst.msk [vmem:[#allocation2 + $0x98] sm:$0xff] %vm3440, %v6865
        %6916 = vst.msk [vmem:[#allocation2 + $0xa0] sm:$0xff] %vm3440, %v6866
        %6917 = vst.msk [vmem:[#allocation2 + $0xa8] sm:$0xff] %vm3440, %v6867
        %6918 = vst.msk [vmem:[#allocation2 + $0xb0] sm:$0xff] %vm3440, %v6868
        %6919 = vst.msk [vmem:[#allocation2 + $0xb8] sm:$0xff] %vm3440, %v6869
        %6920 = vst.msk [vmem:[#allocation2 + $0xc0] sm:$0xff] %vm3440, %v6870
        %6921 = vst.msk [vmem:[#allocation2 + $0xc8] sm:$0xff] %vm3440, %v6871
        %6922 = vst.msk [vmem:[#allocation2 + $0xd0] sm:$0xff] %vm3440, %v6872
        %6923 = vst.msk [vmem:[#allocation2 + $0xd8] sm:$0xff] %vm3440, %v6873
        %6924 = vst.msk [vmem:[#allocation2 + $0xe0] sm:$0xff] %vm3440, %v6874
        %6925 = vst.msk [vmem:[#allocation2 + $0xe8] sm:$0xff] %vm3440, %v6875
        %6926 = vst.msk [vmem:[#allocation2 + $0xf0] sm:$0xff] %vm3440, %v6876
        %6927 = vst.msk [vmem:[#allocation2 + $0xf8] sm:$0xff] %vm3440, %v6877
        %6928 = vst.msk [vmem:[#allocation2 + $0x100] sm:$0xff] %vm3440, %v6878
        %6929 = vst.msk [vmem:[#allocation2 + $0x108] sm:$0xff] %vm3440, %v6879
        %6930 = vst.msk [vmem:[#allocation2 + $0x110] sm:$0xff] %vm3440, %v6880
        %6931 = vst.msk [vmem:[#allocation2 + $0x118] sm:$0xff] %vm3440, %v6881
        %6932 = vst.msk [vmem:[#allocation2 + $0x120] sm:$0xff] %vm3440, %v6882
        %6933 = vst.msk [vmem:[#allocation2 + $0x128] sm:$0xff] %vm3440, %v6883
        %6934 = vst.msk [vmem:[#allocation2 + $0x130] sm:$0xff] %vm3440, %v6884
        %6935 = vst.msk [vmem:[#allocation2 + $0x138] sm:$0xff] %vm3440, %v6885
        %6936 = vst.msk [vmem:[#allocation2 + $0x140] sm:$0xff] %vm3440, %v6886
        %6937 = vst.msk [vmem:[#allocation2 + $0x148] sm:$0xff] %vm3440, %v6887
        %6938 = vst.msk [vmem:[#allocation2 + $0x150] sm:$0xff] %vm3440, %v6888
        %6939 = vst.msk [vmem:[#allocation2 + $0x158] sm:$0xff] %vm3440, %v6889
        %6940 = vst.msk [vmem:[#allocation2 + $0x160] sm:$0xff] %vm3440, %v6890
        %6941 = vst.msk [vmem:[#allocation2 + $0x168] sm:$0xff] %vm3440, %v6891
        %6942 = vst.msk [vmem:[#allocation2 + $0x170] sm:$0xff] %vm3440, %v6892
        %6943 = vst.msk [vmem:[#allocation2 + $0x178] sm:$0xff] %vm3440, %v6893
        %6944 = vst.msk [vmem:[#allocation2 + $0x180] sm:$0xff] %vm3440, %v6894
        %6945 = vst.msk [vmem:[#allocation2 + $0x188] sm:$0x7f] %vm3638, %v6895
        %v6946 = vld [vmem:[#allocation2] ss:$2 sm:$0xff]
        %v6947 = vld [vmem:[%s5381] ss:$2 sm:$0xff]
        %v6948 = vld [vmem:[%s5383] ss:$2 sm:$0xff]
        %v6949 = vld [vmem:[%s5385] ss:$2 sm:$0xff]
        %v6950 = vld [vmem:[%s5387] ss:$2 sm:$0xff]
        %v6951 = vld [vmem:[%s5389] ss:$2 sm:$0xff]
        %v6952 = vld [vmem:[%s5391] ss:$2 sm:$0xff]
        %v6953 = vld [vmem:[%s5393] ss:$2 sm:$0xff]
        %v6954 = vld [vmem:[%s5395] ss:$2 sm:$0xff]
        %v6955 = vld [vmem:[%s5397] ss:$2 sm:$0xff]
        %v6956 = vld [vmem:[%s5399] ss:$2 sm:$0xff]
        %v6957 = vld [vmem:[%s5401] ss:$2 sm:$0xff]
        %v6958 = vld [vmem:[%s5403] ss:$2 sm:$0xff]
        %v6959 = vld [vmem:[%s5405] ss:$2 sm:$0xff]
        %v6960 = vld [vmem:[%s5407] ss:$2 sm:$0xff]
        %v6961 = vld [vmem:[%s5409] ss:$2 sm:$0xff]
        %v6962 = vld [vmem:[%s5411] ss:$2 sm:$0xff]
        %v6963 = vld [vmem:[%s5413] ss:$2 sm:$0xff]
        %v6964 = vld [vmem:[%s5415] ss:$2 sm:$0xff]
        %v6965 = vld [vmem:[%s5417] ss:$2 sm:$0xff]
        %v6966 = vld [vmem:[%s5419] ss:$2 sm:$0xff]
        %v6967 = vld [vmem:[%s5421] ss:$2 sm:$0xff]
        %v6968 = vld [vmem:[%s5423] ss:$2 sm:$0xff]
        %v6969 = vld [vmem:[%s5425] ss:$2 sm:$0xff]
        %v6970 = vld [vmem:[%s5427] ss:$2 sm:$0x7f]
        %v6971 = vld [vmem:[%s5479] ss:$2 sm:$0xff]
        %v6972 = vld [vmem:[%s5481] ss:$2 sm:$0xff]
        %v6973 = vld [vmem:[%s5483] ss:$2 sm:$0xff]
        %v6974 = vld [vmem:[%s5485] ss:$2 sm:$0xff]
        %v6975 = vld [vmem:[%s5487] ss:$2 sm:$0xff]
        %v6976 = vld [vmem:[%s5489] ss:$2 sm:$0xff]
        %v6977 = vld [vmem:[%s5491] ss:$2 sm:$0xff]
        %v6978 = vld [vmem:[%s5493] ss:$2 sm:$0xff]
        %v6979 = vld [vmem:[%s5495] ss:$2 sm:$0xff]
        %v6980 = vld [vmem:[%s5497] ss:$2 sm:$0xff]
        %v6981 = vld [vmem:[%s5499] ss:$2 sm:$0xff]
        %v6982 = vld [vmem:[%s5501] ss:$2 sm:$0xff]
        %v6983 = vld [vmem:[%s5503] ss:$2 sm:$0xff]
        %v6984 = vld [vmem:[%s5505] ss:$2 sm:$0xff]
        %v6985 = vld [vmem:[%s5507] ss:$2 sm:$0xff]
        %v6986 = vld [vmem:[%s5509] ss:$2 sm:$0xff]
        %v6987 = vld [vmem:[%s5511] ss:$2 sm:$0xff]
        %v6988 = vld [vmem:[%s5513] ss:$2 sm:$0xff]
        %v6989 = vld [vmem:[%s5515] ss:$2 sm:$0xff]
        %v6990 = vld [vmem:[%s5517] ss:$2 sm:$0xff]
        %v6991 = vld [vmem:[%s5519] ss:$2 sm:$0xff]
        %v6992 = vld [vmem:[%s5521] ss:$2 sm:$0xff]
        %v6993 = vld [vmem:[%s5523] ss:$2 sm:$0xff]
        %v6994 = vld [vmem:[%s5525] ss:$2 sm:$0xff]
        %v6995 = vld [vmem:[%s5527] ss:$2 sm:$0x7f]
        %7021 = vrot.lane.b32.xlu0 %v6971, 32
        %v7022 = vpop.permute.xlu0 %7021
        %7023 = vrot.lane.b32.xlu0 %v6972, 32
        %v7024 = vpop.permute.xlu0 %7023
        %7025 = vrot.lane.b32.xlu0 %v6973, 32
        %v7026 = vpop.permute.xlu0 %7025
        %7027 = vrot.lane.b32.xlu0 %v6974, 32
        %v7028 = vpop.permute.xlu0 %7027
        %7029 = vrot.lane.b32.xlu0 %v6975, 32
        %v7030 = vpop.permute.xlu0 %7029
        %7031 = vrot.lane.b32.xlu0 %v6976, 32
        %v7032 = vpop.permute.xlu0 %7031
        %7033 = vrot.lane.b32.xlu0 %v6977, 32
        %v7034 = vpop.permute.xlu0 %7033
        %7035 = vrot.lane.b32.xlu0 %v6978, 32
        %v7036 = vpop.permute.xlu0 %7035
        %7037 = vrot.lane.b32.xlu0 %v6979, 32
        %v7038 = vpop.permute.xlu0 %7037
        %7039 = vrot.lane.b32.xlu0 %v6980, 32
        %v7040 = vpop.permute.xlu0 %7039
        %7041 = vrot.lane.b32.xlu0 %v6981, 32
        %v7042 = vpop.permute.xlu0 %7041
        %7043 = vrot.lane.b32.xlu0 %v6982, 32
        %v7044 = vpop.permute.xlu0 %7043
        %7045 = vrot.lane.b32.xlu0 %v6983, 32
        %v7046 = vpop.permute.xlu0 %7045
        %7047 = vrot.lane.b32.xlu0 %v6984, 32
        %v7048 = vpop.permute.xlu0 %7047
        %7049 = vrot.lane.b32.xlu0 %v6985, 32
        %v7050 = vpop.permute.xlu0 %7049
        %7051 = vrot.lane.b32.xlu0 %v6986, 32
        %v7052 = vpop.permute.xlu0 %7051
        %7053 = vrot.lane.b32.xlu0 %v6987, 32
        %v7054 = vpop.permute.xlu0 %7053
        %7055 = vrot.lane.b32.xlu0 %v6988, 32
        %v7056 = vpop.permute.xlu0 %7055
        %7057 = vrot.lane.b32.xlu0 %v6989, 32
        %v7058 = vpop.permute.xlu0 %7057
        %7059 = vrot.lane.b32.xlu0 %v6990, 32
        %v7060 = vpop.permute.xlu0 %7059
        %7061 = vrot.lane.b32.xlu0 %v6991, 32
        %v7062 = vpop.permute.xlu0 %7061
        %7063 = vrot.lane.b32.xlu0 %v6992, 32
        %v7064 = vpop.permute.xlu0 %7063
        %7065 = vrot.lane.b32.xlu0 %v6993, 32
        %v7066 = vpop.permute.xlu0 %7065
        %7067 = vrot.lane.b32.xlu0 %v6994, 32
        %v7068 = vpop.permute.xlu0 %7067
        %7069 = vrot.lane.b32.xlu0 %v6995, 32
        %v7070 = vpop.permute.xlu0 %7069
        %v7096 = vsel %vm3440, %v6946, %v7022
        %v7097 = vsel %vm3440, %v6947, %v7024
        %v7098 = vsel %vm3440, %v6948, %v7026
        %v7099 = vsel %vm3440, %v6949, %v7028
        %v7100 = vsel %vm3440, %v6950, %v7030
        %v7101 = vsel %vm3440, %v6951, %v7032
        %v7102 = vsel %vm3440, %v6952, %v7034
        %v7103 = vsel %vm3440, %v6953, %v7036
        %v7104 = vsel %vm3440, %v6954, %v7038
        %v7105 = vsel %vm3440, %v6955, %v7040
        %v7106 = vsel %vm3440, %v6956, %v7042
        %v7107 = vsel %vm3440, %v6957, %v7044
        %v7108 = vsel %vm3440, %v6958, %v7046
        %v7109 = vsel %vm3440, %v6959, %v7048
        %v7110 = vsel %vm3440, %v6960, %v7050
        %v7111 = vsel %vm3440, %v6961, %v7052
        %v7112 = vsel %vm3440, %v6962, %v7054
        %v7113 = vsel %vm3440, %v6963, %v7056
        %v7114 = vsel %vm3440, %v6964, %v7058
        %v7115 = vsel %vm3440, %v6965, %v7060
        %v7116 = vsel %vm3440, %v6966, %v7062
        %v7117 = vsel %vm3440, %v6967, %v7064
        %v7118 = vsel %vm3440, %v6968, %v7066
        %v7119 = vsel %vm3440, %v6969, %v7068
        %v7120 = vsel %vm3440, %v6970, %v7070
        %v7121 = vpack.c.bf16 %v7097, %v7096
        %v7122 = vpack.c.bf16 %v7099, %v7098
        %v7123 = vpack.c.bf16 %v7101, %v7100
        %v7124 = vpack.c.bf16 %v7103, %v7102
        %v7125 = vpack.c.bf16 %v7105, %v7104
        %v7126 = vpack.c.bf16 %v7107, %v7106
        %v7127 = vpack.c.bf16 %v7109, %v7108
        %v7128 = vpack.c.bf16 %v7111, %v7110
        %v7129 = vpack.c.bf16 %v7113, %v7112
        %v7130 = vpack.c.bf16 %v7115, %v7114
        %v7131 = vpack.c.bf16 %v7117, %v7116
        %v7132 = vpack.c.bf16 %v7119, %v7118
        %v7133 = vpack.c.bf16 %v7120, %v7120
        %s7134 = scalar_lea.vmem %s5, 32
        %v7135 = vld [vmem:[%s7134] sm:$0xf]
        %v7136 = vld [vmem:[%s7134 + $0x4] sm:$0xf]
        %v7137 = vld [vmem:[%s7134 + $0x8] sm:$0xf]
        %v7138 = vld [vmem:[%s7134 + $0xc] sm:$0xf]
        %v7139 = vld [vmem:[%s7134 + $0x10] sm:$0xf]
        %v7140 = vld [vmem:[%s7134 + $0x14] sm:$0xf]
        %v7141 = vld [vmem:[%s7134 + $0x18] sm:$0xf]
        %v7142 = vld [vmem:[%s7134 + $0x1c] sm:$0xf]
        %v7143 = vld [vmem:[%s5862] ss:$2 sm:$0xff]
        %v7144 = vld [vmem:[%s5864] ss:$2 sm:$0xff]
        %v7145 = vld [vmem:[%s5866] ss:$2 sm:$0xff]
        %v7146 = vld [vmem:[%s5868] ss:$2 sm:$0xff]
        %v7147 = vld [vmem:[%s5870] ss:$2 sm:$0xff]
        %v7148 = vld [vmem:[%s5872] ss:$2 sm:$0xff]
        %v7149 = vld [vmem:[%s5874] ss:$2 sm:$0xff]
        %v7150 = vld [vmem:[%s5876] ss:$2 sm:$0xff]
        %v7151 = vld [vmem:[%s5878] ss:$2 sm:$0xff]
        %v7152 = vld [vmem:[%s5880] ss:$2 sm:$0xff]
        %v7153 = vld [vmem:[%s5882] ss:$2 sm:$0xff]
        %v7154 = vld [vmem:[%s5884] ss:$2 sm:$0xff]
        %v7155 = vld [vmem:[%s5886] ss:$2 sm:$0xff]
        %v7156 = vld [vmem:[%s5888] ss:$2 sm:$0xff]
        %v7157 = vld [vmem:[%s5890] ss:$2 sm:$0xff]
        %v7158 = vld [vmem:[%s5892] ss:$2 sm:$0xff]
        %v7159 = vld [vmem:[%s5894] ss:$2 sm:$0xff]
        %v7160 = vld [vmem:[%s5896] ss:$2 sm:$0xff]
        %v7161 = vld [vmem:[%s5898] ss:$2 sm:$0xff]
        %v7162 = vld [vmem:[%s5900] ss:$2 sm:$0xff]
        %v7163 = vld [vmem:[%s5902] ss:$2 sm:$0xff]
        %v7164 = vld [vmem:[%s5904] ss:$2 sm:$0xff]
        %v7165 = vld [vmem:[%s5906] ss:$2 sm:$0xff]
        %v7166 = vld [vmem:[%s5908] ss:$2 sm:$0xff]
        %v7167 = vld [vmem:[%s5910] ss:$2 sm:$0x7f]
        %v7168 = vpack.c.bf16 %v7144, %v7143
        %v7169 = vpack.c.bf16 %v7146, %v7145
        %v7170 = vpack.c.bf16 %v7148, %v7147
        %v7171 = vpack.c.bf16 %v7150, %v7149
        %v7172 = vpack.c.bf16 %v7152, %v7151
        %v7173 = vpack.c.bf16 %v7154, %v7153
        %v7174 = vpack.c.bf16 %v7156, %v7155
        %v7175 = vpack.c.bf16 %v7158, %v7157
        %v7176 = vpack.c.bf16 %v7160, %v7159
        %v7177 = vpack.c.bf16 %v7162, %v7161
        %v7178 = vpack.c.bf16 %v7164, %v7163
        %v7179 = vpack.c.bf16 %v7166, %v7165
        %v7180 = vpack.c.bf16 %v7167, %v7167
        %s7181 = scalar_lea.vmem %s6, 16
        %v7182 = vld [vmem:[%s7181] sm:$0xf]
        %v7183 = vld [vmem:[%s7181 + $0x4] sm:$0xf]
        %v7184 = vld [vmem:[%s7181 + $0x8] sm:$0xf]
        %v7185 = vld [vmem:[%s7181 + $0xc] sm:$0xf]
        %v7190 = vunpack.c.l.b16 %v7182
        %v7191 = vunpack.c.l.b16 %v7183
        %v7192 = vunpack.c.l.b16 %v7184
        %v7193 = vunpack.c.l.b16 %v7185
        %v7194 = vpack.c.b16 %v7191, %v7190
        %v7195 = vpack.c.b16 %v7193, %v7192
        %v7199 = vsel %vm3440, %v7168, 0
        %v7202 = vsel %vm3440, %v7169, 0
        %v7205 = vsel %vm3440, %v7170, 0
        %v7208 = vsel %vm3440, %v7171, 0
        %v7211 = vsel %vm3440, %v7172, 0
        %v7214 = vsel %vm3440, %v7173, 0
        %v7217 = vsel %vm3440, %v7174, 0
        %v7220 = vsel %vm3440, %v7175, 0
        %v7223 = vsel %vm3440, %v7176, 0
        %v7226 = vsel %vm3440, %v7177, 0
        %v7229 = vsel %vm3440, %v7178, 0
        %v7232 = vsel %vm3440, %v7179, 0
        %v7235 = vsel %vm3440, %v7180, 0
        %7237 = vmatpush.bf16.msra.mxu0 0
        %7238 = vmatpush.bf16.msra.mxu0 0
        %7239 = vmatpush.bf16.msra.mxu0 0
        %7240 = vmatpush.bf16.msra.mxu0 0
        %7241 = vmatpush.bf16.msra.mxu0 0
        %7242 = vmatpush.bf16.msra.mxu0 0
        %7243 = vmatpush.bf16.msra.mxu0 %v7195
        %7244 = vmatpush.bf16.msra.mxu0 %v7194
        %7245 = vmatmul.bf16.gmra.mxu0 %v7199
        %v7246 = vpop.f32.mrf.mxu0
        %v7247 = vadd.f32 0.0, %v7246
        %v7248 = vpop.f32.mrf.mxu0
        %v7249 = vadd.f32 0.0, %v7248
        %7250 = vmatmul.bf16.gmra.mxu0 %v7202
        %v7251 = vpop.f32.mrf.mxu0
        %v7252 = vadd.f32 0.0, %v7251
        %v7253 = vpop.f32.mrf.mxu0
        %v7254 = vadd.f32 0.0, %v7253
        %7255 = vmatmul.bf16.gmra.mxu0 %v7205
        %v7256 = vpop.f32.mrf.mxu0
        %v7257 = vadd.f32 0.0, %v7256
        %v7258 = vpop.f32.mrf.mxu0
        %v7259 = vadd.f32 0.0, %v7258
        %7260 = vmatmul.bf16.gmra.mxu0 %v7208
        %v7261 = vpop.f32.mrf.mxu0
        %v7262 = vadd.f32 0.0, %v7261
        %v7263 = vpop.f32.mrf.mxu0
        %v7264 = vadd.f32 0.0, %v7263
        %7265 = vmatmul.bf16.gmra.mxu0 %v7211
        %v7266 = vpop.f32.mrf.mxu0
        %v7267 = vadd.f32 0.0, %v7266
        %v7268 = vpop.f32.mrf.mxu0
        %v7269 = vadd.f32 0.0, %v7268
        %7270 = vmatmul.bf16.gmra.mxu0 %v7214
        %v7271 = vpop.f32.mrf.mxu0
        %v7272 = vadd.f32 0.0, %v7271
        %v7273 = vpop.f32.mrf.mxu0
        %v7274 = vadd.f32 0.0, %v7273
        %7275 = vmatmul.bf16.gmra.mxu0 %v7217
        %v7276 = vpop.f32.mrf.mxu0
        %v7277 = vadd.f32 0.0, %v7276
        %v7278 = vpop.f32.mrf.mxu0
        %v7279 = vadd.f32 0.0, %v7278
        %7280 = vmatmul.bf16.gmra.mxu0 %v7220
        %v7281 = vpop.f32.mrf.mxu0
        %v7282 = vadd.f32 0.0, %v7281
        %v7283 = vpop.f32.mrf.mxu0
        %v7284 = vadd.f32 0.0, %v7283
        %7285 = vmatmul.bf16.gmra.mxu0 %v7223
        %v7286 = vpop.f32.mrf.mxu0
        %v7287 = vadd.f32 0.0, %v7286
        %v7288 = vpop.f32.mrf.mxu0
        %v7289 = vadd.f32 0.0, %v7288
        %7290 = vmatmul.bf16.gmra.mxu0 %v7226
        %v7291 = vpop.f32.mrf.mxu0
        %v7292 = vadd.f32 0.0, %v7291
        %v7293 = vpop.f32.mrf.mxu0
        %v7294 = vadd.f32 0.0, %v7293
        %7295 = vmatmul.bf16.gmra.mxu0 %v7229
        %v7296 = vpop.f32.mrf.mxu0
        %v7297 = vadd.f32 0.0, %v7296
        %v7298 = vpop.f32.mrf.mxu0
        %v7299 = vadd.f32 0.0, %v7298
        %7300 = vmatmul.bf16.gmra.mxu0 %v7232
        %v7301 = vpop.f32.mrf.mxu0
        %v7302 = vadd.f32 0.0, %v7301
        %v7303 = vpop.f32.mrf.mxu0
        %v7304 = vadd.f32 0.0, %v7303
        %7305 = vmatmul.bf16.gmra.mxu0 %v7235
        %v7306 = vpop.f32.mrf.mxu0
        %v7307 = vadd.f32 0.0, %v7306
        %v7308 = vpop.f32.mrf.mxu0
        %7309 = vdwg.mxu0
        %v7318 = vunpack.c.l.b16 %v7135
        %v7319 = vunpack.c.l.b16 %v7136
        %v7320 = vunpack.c.l.b16 %v7137
        %v7321 = vunpack.c.l.b16 %v7138
        %v7322 = vunpack.c.l.b16 %v7139
        %v7323 = vunpack.c.l.b16 %v7140
        %v7324 = vunpack.c.l.b16 %v7141
        %v7325 = vunpack.c.l.b16 %v7142
        %v7326 = vpack.c.b16 %v7319, %v7318
        %v7327 = vpack.c.b16 %v7321, %v7320
        %v7328 = vpack.c.b16 %v7323, %v7322
        %v7329 = vpack.c.b16 %v7325, %v7324
        %v7335 = vsel %vm6236, %v7121, 0
        %v7338 = vsel %vm6236, %v7122, 0
        %v7341 = vsel %vm6236, %v7123, 0
        %v7344 = vsel %vm6236, %v7124, 0
        %v7347 = vsel %vm6236, %v7125, 0
        %v7350 = vsel %vm6236, %v7126, 0
        %v7353 = vsel %vm6236, %v7127, 0
        %v7356 = vsel %vm6236, %v7128, 0
        %v7359 = vsel %vm6236, %v7129, 0
        %v7362 = vsel %vm6236, %v7130, 0
        %v7365 = vsel %vm6236, %v7131, 0
        %v7368 = vsel %vm6236, %v7132, 0
        %v7371 = vsel %vm6236, %v7133, 0
        %7373 = vmatpush.bf16.msra.mxu0 0
        %7374 = vmatpush.bf16.msra.mxu0 0
        %7375 = vmatpush.bf16.msra.mxu0 0
        %7376 = vmatpush.bf16.msra.mxu0 0
        %7377 = vmatpush.bf16.msra.mxu0 %v7329
        %7378 = vmatpush.bf16.msra.mxu0 %v7328
        %7379 = vmatpush.bf16.msra.mxu0 %v7327
        %7380 = vmatpush.bf16.msra.mxu0 %v7326
        %7381 = vmatmul.bf16.gmra.mxu0 %v7335
        %v7382 = vpop.f32.mrf.mxu0
        %v7383 = vadd.f32 %v7247, %v7382
        %v7384 = vpop.f32.mrf.mxu0
        %v7385 = vadd.f32 %v7249, %v7384
        %7386 = vmatmul.bf16.gmra.mxu0 %v7338
        %v7387 = vpop.f32.mrf.mxu0
        %v7388 = vadd.f32 %v7252, %v7387
        %v7389 = vpop.f32.mrf.mxu0
        %v7390 = vadd.f32 %v7254, %v7389
        %7391 = vmatmul.bf16.gmra.mxu0 %v7341
        %v7392 = vpop.f32.mrf.mxu0
        %v7393 = vadd.f32 %v7257, %v7392
        %v7394 = vpop.f32.mrf.mxu0
        %v7395 = vadd.f32 %v7259, %v7394
        %7396 = vmatmul.bf16.gmra.mxu0 %v7344
        %v7397 = vpop.f32.mrf.mxu0
        %v7398 = vadd.f32 %v7262, %v7397
        %v7399 = vpop.f32.mrf.mxu0
        %v7400 = vadd.f32 %v7264, %v7399
        %7401 = vmatmul.bf16.gmra.mxu0 %v7347
        %v7402 = vpop.f32.mrf.mxu0
        %v7403 = vadd.f32 %v7267, %v7402
        %v7404 = vpop.f32.mrf.mxu0
        %v7405 = vadd.f32 %v7269, %v7404
        %7406 = vmatmul.bf16.gmra.mxu0 %v7350
        %v7407 = vpop.f32.mrf.mxu0
        %v7408 = vadd.f32 %v7272, %v7407
        %v7409 = vpop.f32.mrf.mxu0
        %v7410 = vadd.f32 %v7274, %v7409
        %7411 = vmatmul.bf16.gmra.mxu0 %v7353
        %v7412 = vpop.f32.mrf.mxu0
        %v7413 = vadd.f32 %v7277, %v7412
        %v7414 = vpop.f32.mrf.mxu0
        %v7415 = vadd.f32 %v7279, %v7414
        %7416 = vmatmul.bf16.gmra.mxu0 %v7356
        %v7417 = vpop.f32.mrf.mxu0
        %v7418 = vadd.f32 %v7282, %v7417
        %v7419 = vpop.f32.mrf.mxu0
        %v7420 = vadd.f32 %v7284, %v7419
        %7421 = vmatmul.bf16.gmra.mxu0 %v7359
        %v7422 = vpop.f32.mrf.mxu0
        %v7423 = vadd.f32 %v7287, %v7422
        %v7424 = vpop.f32.mrf.mxu0
        %v7425 = vadd.f32 %v7289, %v7424
        %7426 = vmatmul.bf16.gmra.mxu0 %v7362
        %v7427 = vpop.f32.mrf.mxu0
        %v7428 = vadd.f32 %v7292, %v7427
        %v7429 = vpop.f32.mrf.mxu0
        %v7430 = vadd.f32 %v7294, %v7429
        %7431 = vmatmul.bf16.gmra.mxu0 %v7365
        %v7432 = vpop.f32.mrf.mxu0
        %v7433 = vadd.f32 %v7297, %v7432
        %v7434 = vpop.f32.mrf.mxu0
        %v7435 = vadd.f32 %v7299, %v7434
        %7436 = vmatmul.bf16.gmra.mxu0 %v7368
        %v7437 = vpop.f32.mrf.mxu0
        %v7438 = vadd.f32 %v7302, %v7437
        %v7439 = vpop.f32.mrf.mxu0
        %v7440 = vadd.f32 %v7304, %v7439
        %7441 = vmatmul.bf16.gmra.mxu0 %v7371
        %v7442 = vpop.f32.mrf.mxu0
        %v7443 = vadd.f32 %v7307, %v7442
        %v7444 = vpop.f32.mrf.mxu0
        %7445 = vdwg.mxu0
        %v7446 = vmul.f32 %v7383, %v7383
        %v7447 = vmul.f32 %v7385, %v7385
        %v7448 = vmul.f32 %v7388, %v7388
        %v7449 = vmul.f32 %v7390, %v7390
        %v7450 = vmul.f32 %v7393, %v7393
        %v7451 = vmul.f32 %v7395, %v7395
        %v7452 = vmul.f32 %v7398, %v7398
        %v7453 = vmul.f32 %v7400, %v7400
        %v7454 = vmul.f32 %v7403, %v7403
        %v7455 = vmul.f32 %v7405, %v7405
        %v7456 = vmul.f32 %v7408, %v7408
        %v7457 = vmul.f32 %v7410, %v7410
        %v7458 = vmul.f32 %v7413, %v7413
        %v7459 = vmul.f32 %v7415, %v7415
        %v7460 = vmul.f32 %v7418, %v7418
        %v7461 = vmul.f32 %v7420, %v7420
        %v7462 = vmul.f32 %v7423, %v7423
        %v7463 = vmul.f32 %v7425, %v7425
        %v7464 = vmul.f32 %v7428, %v7428
        %v7465 = vmul.f32 %v7430, %v7430
        %v7466 = vmul.f32 %v7433, %v7433
        %v7467 = vmul.f32 %v7435, %v7435
        %v7468 = vmul.f32 %v7438, %v7438
        %v7469 = vmul.f32 %v7440, %v7440
        %v7470 = vmul.f32 %v7443, %v7443
        %v7471 = vmul.f32 %v7383, %v7446
        %v7472 = vmul.f32 %v7385, %v7447
        %v7473 = vmul.f32 %v7388, %v7448
        %v7474 = vmul.f32 %v7390, %v7449
        %v7475 = vmul.f32 %v7393, %v7450
        %v7476 = vmul.f32 %v7395, %v7451
        %v7477 = vmul.f32 %v7398, %v7452
        %v7478 = vmul.f32 %v7400, %v7453
        %v7479 = vmul.f32 %v7403, %v7454
        %v7480 = vmul.f32 %v7405, %v7455
        %v7481 = vmul.f32 %v7408, %v7456
        %v7482 = vmul.f32 %v7410, %v7457
        %v7483 = vmul.f32 %v7413, %v7458
        %v7484 = vmul.f32 %v7415, %v7459
        %v7485 = vmul.f32 %v7418, %v7460
        %v7486 = vmul.f32 %v7420, %v7461
        %v7487 = vmul.f32 %v7423, %v7462
        %v7488 = vmul.f32 %v7425, %v7463
        %v7489 = vmul.f32 %v7428, %v7464
        %v7490 = vmul.f32 %v7430, %v7465
        %v7491 = vmul.f32 %v7433, %v7466
        %v7492 = vmul.f32 %v7435, %v7467
        %v7493 = vmul.f32 %v7438, %v7468
        %v7494 = vmul.f32 %v7440, %v7469
        %v7495 = vmul.f32 %v7443, %v7470
        %v7496 = vmul.f32 %v7471, 0.044715
        %v7497 = vmul.f32 %v7472, 0.044715
        %v7498 = vmul.f32 %v7473, 0.044715
        %v7499 = vmul.f32 %v7474, 0.044715
        %v7500 = vmul.f32 %v7475, 0.044715
        %v7501 = vmul.f32 %v7476, 0.044715
        %v7502 = vmul.f32 %v7477, 0.044715
        %v7503 = vmul.f32 %v7478, 0.044715
        %v7504 = vmul.f32 %v7479, 0.044715
        %v7505 = vmul.f32 %v7480, 0.044715
        %v7506 = vmul.f32 %v7481, 0.044715
        %v7507 = vmul.f32 %v7482, 0.044715
        %v7508 = vmul.f32 %v7483, 0.044715
        %v7509 = vmul.f32 %v7484, 0.044715
        %v7510 = vmul.f32 %v7485, 0.044715
        %v7511 = vmul.f32 %v7486, 0.044715
        %v7512 = vmul.f32 %v7487, 0.044715
        %v7513 = vmul.f32 %v7488, 0.044715
        %v7514 = vmul.f32 %v7489, 0.044715
        %v7515 = vmul.f32 %v7490, 0.044715
        %v7516 = vmul.f32 %v7491, 0.044715
        %v7517 = vmul.f32 %v7492, 0.044715
        %v7518 = vmul.f32 %v7493, 0.044715
        %v7519 = vmul.f32 %v7494, 0.044715
        %v7520 = vmul.f32 %v7495, 0.044715
        %v7521 = vadd.f32 %v7383, %v7496
        %v7522 = vadd.f32 %v7385, %v7497
        %v7523 = vadd.f32 %v7388, %v7498
        %v7524 = vadd.f32 %v7390, %v7499
        %v7525 = vadd.f32 %v7393, %v7500
        %v7526 = vadd.f32 %v7395, %v7501
        %v7527 = vadd.f32 %v7398, %v7502
        %v7528 = vadd.f32 %v7400, %v7503
        %v7529 = vadd.f32 %v7403, %v7504
        %v7530 = vadd.f32 %v7405, %v7505
        %v7531 = vadd.f32 %v7408, %v7506
        %v7532 = vadd.f32 %v7410, %v7507
        %v7533 = vadd.f32 %v7413, %v7508
        %v7534 = vadd.f32 %v7415, %v7509
        %v7535 = vadd.f32 %v7418, %v7510
        %v7536 = vadd.f32 %v7420, %v7511
        %v7537 = vadd.f32 %v7423, %v7512
        %v7538 = vadd.f32 %v7425, %v7513
        %v7539 = vadd.f32 %v7428, %v7514
        %v7540 = vadd.f32 %v7430, %v7515
        %v7541 = vadd.f32 %v7433, %v7516
        %v7542 = vadd.f32 %v7435, %v7517
        %v7543 = vadd.f32 %v7438, %v7518
        %v7544 = vadd.f32 %v7440, %v7519
        %v7545 = vadd.f32 %v7443, %v7520
        %v7546 = vmul.f32 %v7521, 0.7978846
        %v7547 = vmul.f32 %v7522, 0.7978846
        %v7548 = vmul.f32 %v7523, 0.7978846
        %v7549 = vmul.f32 %v7524, 0.7978846
        %v7550 = vmul.f32 %v7525, 0.7978846
        %v7551 = vmul.f32 %v7526, 0.7978846
        %v7552 = vmul.f32 %v7527, 0.7978846
        %v7553 = vmul.f32 %v7528, 0.7978846
        %v7554 = vmul.f32 %v7529, 0.7978846
        %v7555 = vmul.f32 %v7530, 0.7978846
        %v7556 = vmul.f32 %v7531, 0.7978846
        %v7557 = vmul.f32 %v7532, 0.7978846
        %v7558 = vmul.f32 %v7533, 0.7978846
        %v7559 = vmul.f32 %v7534, 0.7978846
        %v7560 = vmul.f32 %v7535, 0.7978846
        %v7561 = vmul.f32 %v7536, 0.7978846
        %v7562 = vmul.f32 %v7537, 0.7978846
        %v7563 = vmul.f32 %v7538, 0.7978846
        %v7564 = vmul.f32 %v7539, 0.7978846
        %v7565 = vmul.f32 %v7540, 0.7978846
        %v7566 = vmul.f32 %v7541, 0.7978846
        %v7567 = vmul.f32 %v7542, 0.7978846
        %v7568 = vmul.f32 %v7543, 0.7978846
        %v7569 = vmul.f32 %v7544, 0.7978846
        %v7570 = vmul.f32 %v7545, 0.7978846
        %v7571 = vtanh.pop %v7546
        %v7572 = vtanh.pop %v7547
        %v7573 = vtanh.pop %v7548
        %v7574 = vtanh.pop %v7549
        %v7575 = vtanh.pop %v7550
        %v7576 = vtanh.pop %v7551
        %v7577 = vtanh.pop %v7552
        %v7578 = vtanh.pop %v7553
        %v7579 = vtanh.pop %v7554
        %v7580 = vtanh.pop %v7555
        %v7581 = vtanh.pop %v7556
        %v7582 = vtanh.pop %v7557
        %v7583 = vtanh.pop %v7558
        %v7584 = vtanh.pop %v7559
        %v7585 = vtanh.pop %v7560
        %v7586 = vtanh.pop %v7561
        %v7587 = vtanh.pop %v7562
        %v7588 = vtanh.pop %v7563
        %v7589 = vtanh.pop %v7564
        %v7590 = vtanh.pop %v7565
        %v7591 = vtanh.pop %v7566
        %v7592 = vtanh.pop %v7567
        %v7593 = vtanh.pop %v7568
        %v7594 = vtanh.pop %v7569
        %v7595 = vtanh.pop %v7570
        %v7596 = vadd.f32 %v7571, 1.0
        %v7597 = vadd.f32 %v7572, 1.0
        %v7598 = vadd.f32 %v7573, 1.0
        %v7599 = vadd.f32 %v7574, 1.0
        %v7600 = vadd.f32 %v7575, 1.0
        %v7601 = vadd.f32 %v7576, 1.0
        %v7602 = vadd.f32 %v7577, 1.0
        %v7603 = vadd.f32 %v7578, 1.0
        %v7604 = vadd.f32 %v7579, 1.0
        %v7605 = vadd.f32 %v7580, 1.0
        %v7606 = vadd.f32 %v7581, 1.0
        %v7607 = vadd.f32 %v7582, 1.0
        %v7608 = vadd.f32 %v7583, 1.0
        %v7609 = vadd.f32 %v7584, 1.0
        %v7610 = vadd.f32 %v7585, 1.0
        %v7611 = vadd.f32 %v7586, 1.0
        %v7612 = vadd.f32 %v7587, 1.0
        %v7613 = vadd.f32 %v7588, 1.0
        %v7614 = vadd.f32 %v7589, 1.0
        %v7615 = vadd.f32 %v7590, 1.0
        %v7616 = vadd.f32 %v7591, 1.0
        %v7617 = vadd.f32 %v7592, 1.0
        %v7618 = vadd.f32 %v7593, 1.0
        %v7619 = vadd.f32 %v7594, 1.0
        %v7620 = vadd.f32 %v7595, 1.0
        %v7621 = vmul.f32 %v7596, 0.5
        %v7622 = vmul.f32 %v7597, 0.5
        %v7623 = vmul.f32 %v7598, 0.5
        %v7624 = vmul.f32 %v7599, 0.5
        %v7625 = vmul.f32 %v7600, 0.5
        %v7626 = vmul.f32 %v7601, 0.5
        %v7627 = vmul.f32 %v7602, 0.5
        %v7628 = vmul.f32 %v7603, 0.5
        %v7629 = vmul.f32 %v7604, 0.5
        %v7630 = vmul.f32 %v7605, 0.5
        %v7631 = vmul.f32 %v7606, 0.5
        %v7632 = vmul.f32 %v7607, 0.5
        %v7633 = vmul.f32 %v7608, 0.5
        %v7634 = vmul.f32 %v7609, 0.5
        %v7635 = vmul.f32 %v7610, 0.5
        %v7636 = vmul.f32 %v7611, 0.5
        %v7637 = vmul.f32 %v7612, 0.5
        %v7638 = vmul.f32 %v7613, 0.5
        %v7639 = vmul.f32 %v7614, 0.5
        %v7640 = vmul.f32 %v7615, 0.5
        %v7641 = vmul.f32 %v7616, 0.5
        %v7642 = vmul.f32 %v7617, 0.5
        %v7643 = vmul.f32 %v7618, 0.5
        %v7644 = vmul.f32 %v7619, 0.5
        %v7645 = vmul.f32 %v7620, 0.5
        %v7646 = vmul.f32 %v7383, %v7621
        %v7647 = vmul.f32 %v7385, %v7622
        %v7648 = vmul.f32 %v7388, %v7623
        %v7649 = vmul.f32 %v7390, %v7624
        %v7650 = vmul.f32 %v7393, %v7625
        %v7651 = vmul.f32 %v7395, %v7626
        %v7652 = vmul.f32 %v7398, %v7627
        %v7653 = vmul.f32 %v7400, %v7628
        %v7654 = vmul.f32 %v7403, %v7629
        %v7655 = vmul.f32 %v7405, %v7630
        %v7656 = vmul.f32 %v7408, %v7631
        %v7657 = vmul.f32 %v7410, %v7632
        %v7658 = vmul.f32 %v7413, %v7633
        %v7659 = vmul.f32 %v7415, %v7634
        %v7660 = vmul.f32 %v7418, %v7635
        %v7661 = vmul.f32 %v7420, %v7636
        %v7662 = vmul.f32 %v7423, %v7637
        %v7663 = vmul.f32 %v7425, %v7638
        %v7664 = vmul.f32 %v7428, %v7639
        %v7665 = vmul.f32 %v7430, %v7640
        %v7666 = vmul.f32 %v7433, %v7641
        %v7667 = vmul.f32 %v7435, %v7642
        %v7668 = vmul.f32 %v7438, %v7643
        %v7669 = vmul.f32 %v7440, %v7644
        %v7670 = vmul.f32 %v7443, %v7645
        %7671 = vst.msk [vmem:[#allocation2] sm:$0xff] %vm3440, %v7646
        %7672 = vst.msk [vmem:[#allocation2 + $0x8] sm:$0xff] %vm3440, %v7647
        %7673 = vst.msk [vmem:[#allocation2 + $0x10] sm:$0xff] %vm3440, %v7648
        %7674 = vst.msk [vmem:[#allocation2 + $0x18] sm:$0xff] %vm3440, %v7649
        %7675 = vst.msk [vmem:[#allocation2 + $0x20] sm:$0xff] %vm3440, %v7650
        %7676 = vst.msk [vmem:[#allocation2 + $0x28] sm:$0xff] %vm3440, %v7651
        %7677 = vst.msk [vmem:[#allocation2 + $0x30] sm:$0xff] %vm3440, %v7652
        %7678 = vst.msk [vmem:[#allocation2 + $0x38] sm:$0xff] %vm3440, %v7653
        %7679 = vst.msk [vmem:[#allocation2 + $0x40] sm:$0xff] %vm3440, %v7654
        %7680 = vst.msk [vmem:[#allocation2 + $0x48] sm:$0xff] %vm3440, %v7655
        %7681 = vst.msk [vmem:[#allocation2 + $0x50] sm:$0xff] %vm3440, %v7656
        %7682 = vst.msk [vmem:[#allocation2 + $0x58] sm:$0xff] %vm3440, %v7657
        %7683 = vst.msk [vmem:[#allocation2 + $0x60] sm:$0xff] %vm3440, %v7658
        %7684 = vst.msk [vmem:[#allocation2 + $0x68] sm:$0xff] %vm3440, %v7659
        %7685 = vst.msk [vmem:[#allocation2 + $0x70] sm:$0xff] %vm3440, %v7660
        %7686 = vst.msk [vmem:[#allocation2 + $0x78] sm:$0xff] %vm3440, %v7661
        %7687 = vst.msk [vmem:[#allocation2 + $0x80] sm:$0xff] %vm3440, %v7662
        %7688 = vst.msk [vmem:[#allocation2 + $0x88] sm:$0xff] %vm3440, %v7663
        %7689 = vst.msk [vmem:[#allocation2 + $0x90] sm:$0xff] %vm3440, %v7664
        %7690 = vst.msk [vmem:[#allocation2 + $0x98] sm:$0xff] %vm3440, %v7665
        %7691 = vst.msk [vmem:[#allocation2 + $0xa0] sm:$0xff] %vm3440, %v7666
        %7692 = vst.msk [vmem:[#allocation2 + $0xa8] sm:$0xff] %vm3440, %v7667
        %7693 = vst.msk [vmem:[#allocation2 + $0xb0] sm:$0xff] %vm3440, %v7668
        %7694 = vst.msk [vmem:[#allocation2 + $0xb8] sm:$0xff] %vm3440, %v7669
        %7695 = vst.msk [vmem:[#allocation2 + $0xc0] sm:$0x7f] %vm3638, %v7670
        %v7696 = vld [vmem:[#allocation2] ss:$2 sm:$0xff]
        %v7697 = vld [vmem:[%s5381] ss:$2 sm:$0xff]
        %v7698 = vld [vmem:[%s5383] ss:$2 sm:$0xff]
        %v7699 = vld [vmem:[%s5385] ss:$2 sm:$0xff]
        %v7700 = vld [vmem:[%s5387] ss:$2 sm:$0xff]
        %v7701 = vld [vmem:[%s5389] ss:$2 sm:$0xff]
        %v7702 = vld [vmem:[%s5391] ss:$2 sm:$0xff]
        %v7703 = vld [vmem:[%s5393] ss:$2 sm:$0xff]
        %v7704 = vld [vmem:[%s5395] ss:$2 sm:$0xff]
        %v7705 = vld [vmem:[%s5397] ss:$2 sm:$0xff]
        %v7706 = vld [vmem:[%s5399] ss:$2 sm:$0xff]
        %v7707 = vld [vmem:[%s5401] ss:$2 sm:$0xff]
        %v7708 = vld [vmem:[%s5403] ss:$2 sm:$0x7]
        %v7709 = vld [vmem:[%s5479] ss:$2 sm:$0xff]
        %v7710 = vld [vmem:[%s5481] ss:$2 sm:$0xff]
        %v7711 = vld [vmem:[%s5483] ss:$2 sm:$0xff]
        %v7712 = vld [vmem:[%s5485] ss:$2 sm:$0xff]
        %v7713 = vld [vmem:[%s5487] ss:$2 sm:$0xff]
        %v7714 = vld [vmem:[%s5489] ss:$2 sm:$0xff]
        %v7715 = vld [vmem:[%s5491] ss:$2 sm:$0xff]
        %v7716 = vld [vmem:[%s5493] ss:$2 sm:$0xff]
        %v7717 = vld [vmem:[%s5495] ss:$2 sm:$0xff]
        %v7718 = vld [vmem:[%s5497] ss:$2 sm:$0xff]
        %v7719 = vld [vmem:[%s5499] ss:$2 sm:$0xff]
        %v7720 = vld [vmem:[%s5501] ss:$2 sm:$0xff]
        %v7721 = vld [vmem:[%s5503] ss:$2 sm:$0x7]
        %7735 = vrot.lane.b32.xlu0 %v7709, 32
        %v7736 = vpop.permute.xlu0 %7735
        %7737 = vrot.lane.b32.xlu0 %v7710, 32
        %v7738 = vpop.permute.xlu0 %7737
        %7739 = vrot.lane.b32.xlu0 %v7711, 32
        %v7740 = vpop.permute.xlu0 %7739
        %7741 = vrot.lane.b32.xlu0 %v7712, 32
        %v7742 = vpop.permute.xlu0 %7741
        %7743 = vrot.lane.b32.xlu0 %v7713, 32
        %v7744 = vpop.permute.xlu0 %7743
        %7745 = vrot.lane.b32.xlu0 %v7714, 32
        %v7746 = vpop.permute.xlu0 %7745
        %7747 = vrot.lane.b32.xlu0 %v7715, 32
        %v7748 = vpop.permute.xlu0 %7747
        %7749 = vrot.lane.b32.xlu0 %v7716, 32
        %v7750 = vpop.permute.xlu0 %7749
        %7751 = vrot.lane.b32.xlu0 %v7717, 32
        %v7752 = vpop.permute.xlu0 %7751
        %7753 = vrot.lane.b32.xlu0 %v7718, 32
        %v7754 = vpop.permute.xlu0 %7753
        %7755 = vrot.lane.b32.xlu0 %v7719, 32
        %v7756 = vpop.permute.xlu0 %7755
        %7757 = vrot.lane.b32.xlu0 %v7720, 32
        %v7758 = vpop.permute.xlu0 %7757
        %7759 = vrot.lane.b32.xlu0 %v7721, 32
        %v7760 = vpop.permute.xlu0 %7759
        %v7774 = vsel %vm3440, %v7696, %v7736
        %v7775 = vsel %vm3440, %v7697, %v7738
        %v7776 = vsel %vm3440, %v7698, %v7740
        %v7777 = vsel %vm3440, %v7699, %v7742
        %v7778 = vsel %vm3440, %v7700, %v7744
        %v7779 = vsel %vm3440, %v7701, %v7746
        %v7780 = vsel %vm3440, %v7702, %v7748
        %v7781 = vsel %vm3440, %v7703, %v7750
        %v7782 = vsel %vm3440, %v7704, %v7752
        %v7783 = vsel %vm3440, %v7705, %v7754
        %v7784 = vsel %vm3440, %v7706, %v7756
        %v7785 = vsel %vm3440, %v7707, %v7758
        %v7786 = vsel %vm3440, %v7708, %v7760
        %v7787 = vpack.c.bf16 %v7775, %v7774
        %v7788 = vpack.c.bf16 %v7777, %v7776
        %v7789 = vpack.c.bf16 %v7779, %v7778
        %v7790 = vpack.c.bf16 %v7781, %v7780
        %v7791 = vpack.c.bf16 %v7783, %v7782
        %v7792 = vpack.c.bf16 %v7785, %v7784
        %v7793 = vpack.c.bf16 %v7786, %v7786
        %s7794 = scalar_lea.vmem %s5, 64
        %v7795 = vld [vmem:[%s7794] sm:$0xf]
        %v7796 = vld [vmem:[%s7794 + $0x4] sm:$0xf]
        %v7797 = vld [vmem:[%s7794 + $0x8] sm:$0xf]
        %v7798 = vld [vmem:[%s7794 + $0xc] sm:$0xf]
        %v7799 = vld [vmem:[%s7794 + $0x10] sm:$0xf]
        %v7800 = vld [vmem:[%s7794 + $0x14] sm:$0xf]
        %v7801 = vld [vmem:[%s7794 + $0x18] sm:$0xf]
        %v7802 = vld [vmem:[%s7794 + $0x1c] sm:$0xf]
        %v7803 = vld [vmem:[%s5862] ss:$2 sm:$0xff]
        %v7804 = vld [vmem:[%s5864] ss:$2 sm:$0xff]
        %v7805 = vld [vmem:[%s5866] ss:$2 sm:$0xff]
        %v7806 = vld [vmem:[%s5868] ss:$2 sm:$0xff]
        %v7807 = vld [vmem:[%s5870] ss:$2 sm:$0xff]
        %v7808 = vld [vmem:[%s5872] ss:$2 sm:$0xff]
        %v7809 = vld [vmem:[%s5874] ss:$2 sm:$0xff]
        %v7810 = vld [vmem:[%s5876] ss:$2 sm:$0xff]
        %v7811 = vld [vmem:[%s5878] ss:$2 sm:$0xff]
        %v7812 = vld [vmem:[%s5880] ss:$2 sm:$0xff]
        %v7813 = vld [vmem:[%s5882] ss:$2 sm:$0xff]
        %v7814 = vld [vmem:[%s5884] ss:$2 sm:$0xff]
        %v7815 = vld [vmem:[%s5886] ss:$2 sm:$0x7]
        %v7816 = vpack.c.bf16 %v7804, %v7803
        %v7817 = vpack.c.bf16 %v7806, %v7805
        %v7818 = vpack.c.bf16 %v7808, %v7807
        %v7819 = vpack.c.bf16 %v7810, %v7809
        %v7820 = vpack.c.bf16 %v7812, %v7811
        %v7821 = vpack.c.bf16 %v7814, %v7813
        %v7822 = vpack.c.bf16 %v7815, %v7815
        %s7823 = scalar_lea.vmem %s6, 32
        %v7824 = vld [vmem:[%s7823] sm:$0xf]
        %v7825 = vld [vmem:[%s7823 + $0x4] sm:$0xf]
        %v7826 = vld [vmem:[%s7823 + $0x8] sm:$0xf]
        %v7827 = vld [vmem:[%s7823 + $0xc] sm:$0xf]
        %v7832 = vunpack.c.l.b16 %v7824
        %v7833 = vunpack.c.l.b16 %v7825
        %v7834 = vunpack.c.l.b16 %v7826
        %v7835 = vunpack.c.l.b16 %v7827
        %v7836 = vpack.c.b16 %v7833, %v7832
        %v7837 = vpack.c.b16 %v7835, %v7834
        %v7841 = vsel %vm3440, %v7816, 0
        %v7844 = vsel %vm3440, %v7817, 0
        %v7847 = vsel %vm3440, %v7818, 0
        %v7850 = vsel %vm3440, %v7819, 0
        %v7853 = vsel %vm3440, %v7820, 0
        %v7856 = vsel %vm3440, %v7821, 0
        %v7859 = vsel %vm3440, %v7822, 0
        %7861 = vmatpush.bf16.msra.mxu0 0
        %7862 = vmatpush.bf16.msra.mxu0 0
        %7863 = vmatpush.bf16.msra.mxu0 0
        %7864 = vmatpush.bf16.msra.mxu0 0
        %7865 = vmatpush.bf16.msra.mxu0 0
        %7866 = vmatpush.bf16.msra.mxu0 0
        %7867 = vmatpush.bf16.msra.mxu0 %v7837
        %7868 = vmatpush.bf16.msra.mxu0 %v7836
        %7869 = vmatmul.bf16.gmra.mxu0 %v7841
        %v7870 = vpop.f32.mrf.mxu0
        %v7871 = vadd.f32 0.0, %v7870
        %v7872 = vpop.f32.mrf.mxu0
        %v7873 = vadd.f32 0.0, %v7872
        %7874 = vmatmul.bf16.gmra.mxu0 %v7844
        %v7875 = vpop.f32.mrf.mxu0
        %v7876 = vadd.f32 0.0, %v7875
        %v7877 = vpop.f32.mrf.mxu0
        %v7878 = vadd.f32 0.0, %v7877
        %7879 = vmatmul.bf16.gmra.mxu0 %v7847
        %v7880 = vpop.f32.mrf.mxu0
        %v7881 = vadd.f32 0.0, %v7880
        %v7882 = vpop.f32.mrf.mxu0
        %v7883 = vadd.f32 0.0, %v7882
        %7884 = vmatmul.bf16.gmra.mxu0 %v7850
        %v7885 = vpop.f32.mrf.mxu0
        %v7886 = vadd.f32 0.0, %v7885
        %v7887 = vpop.f32.mrf.mxu0
        %v7888 = vadd.f32 0.0, %v7887
        %7889 = vmatmul.bf16.gmra.mxu0 %v7853
        %v7890 = vpop.f32.mrf.mxu0
        %v7891 = vadd.f32 0.0, %v7890
        %v7892 = vpop.f32.mrf.mxu0
        %v7893 = vadd.f32 0.0, %v7892
        %7894 = vmatmul.bf16.gmra.mxu0 %v7856
        %v7895 = vpop.f32.mrf.mxu0
        %v7896 = vadd.f32 0.0, %v7895
        %v7897 = vpop.f32.mrf.mxu0
        %v7898 = vadd.f32 0.0, %v7897
        %7899 = vmatmul.bf16.gmra.mxu0 %v7859
        %v7900 = vpop.f32.mrf.mxu0
        %v7901 = vadd.f32 0.0, %v7900
        %v7902 = vpop.f32.mrf.mxu0
        %7903 = vdwg.mxu0
        %v7912 = vunpack.c.l.b16 %v7795
        %v7913 = vunpack.c.l.b16 %v7796
        %v7914 = vunpack.c.l.b16 %v7797
        %v7915 = vunpack.c.l.b16 %v7798
        %v7916 = vunpack.c.l.b16 %v7799
        %v7917 = vunpack.c.l.b16 %v7800
        %v7918 = vunpack.c.l.b16 %v7801
        %v7919 = vunpack.c.l.b16 %v7802
        %v7920 = vpack.c.b16 %v7913, %v7912
        %v7921 = vpack.c.b16 %v7915, %v7914
        %v7922 = vpack.c.b16 %v7917, %v7916
        %v7923 = vpack.c.b16 %v7919, %v7918
        %v7929 = vsel %vm6236, %v7787, 0
        %v7932 = vsel %vm6236, %v7788, 0
        %v7935 = vsel %vm6236, %v7789, 0
        %v7938 = vsel %vm6236, %v7790, 0
        %v7941 = vsel %vm6236, %v7791, 0
        %v7944 = vsel %vm6236, %v7792, 0
        %v7947 = vsel %vm6236, %v7793, 0
        %7949 = vmatpush.bf16.msra.mxu0 0
        %7950 = vmatpush.bf16.msra.mxu0 0
        %7951 = vmatpush.bf16.msra.mxu0 0
        %7952 = vmatpush.bf16.msra.mxu0 0
        %7953 = vmatpush.bf16.msra.mxu0 %v7923
        %7954 = vmatpush.bf16.msra.mxu0 %v7922
        %7955 = vmatpush.bf16.msra.mxu0 %v7921
        %7956 = vmatpush.bf16.msra.mxu0 %v7920
        %7957 = vmatmul.bf16.gmra.mxu0 %v7929
        %v7958 = vpop.f32.mrf.mxu0
        %v7959 = vadd.f32 %v7871, %v7958
        %v7960 = vpop.f32.mrf.mxu0
        %v7961 = vadd.f32 %v7873, %v7960
        %7962 = vmatmul.bf16.gmra.mxu0 %v7932
        %v7963 = vpop.f32.mrf.mxu0
        %v7964 = vadd.f32 %v7876, %v7963
        %v7965 = vpop.f32.mrf.mxu0
        %v7966 = vadd.f32 %v7878, %v7965
        %7967 = vmatmul.bf16.gmra.mxu0 %v7935
        %v7968 = vpop.f32.mrf.mxu0
        %v7969 = vadd.f32 %v7881, %v7968
        %v7970 = vpop.f32.mrf.mxu0
        %v7971 = vadd.f32 %v7883, %v7970
        %7972 = vmatmul.bf16.gmra.mxu0 %v7938
        %v7973 = vpop.f32.mrf.mxu0
        %v7974 = vadd.f32 %v7886, %v7973
        %v7975 = vpop.f32.mrf.mxu0
        %v7976 = vadd.f32 %v7888, %v7975
        %7977 = vmatmul.bf16.gmra.mxu0 %v7941
        %v7978 = vpop.f32.mrf.mxu0
        %v7979 = vadd.f32 %v7891, %v7978
        %v7980 = vpop.f32.mrf.mxu0
        %v7981 = vadd.f32 %v7893, %v7980
        %7982 = vmatmul.bf16.gmra.mxu0 %v7944
        %v7983 = vpop.f32.mrf.mxu0
        %v7984 = vadd.f32 %v7896, %v7983
        %v7985 = vpop.f32.mrf.mxu0
        %v7986 = vadd.f32 %v7898, %v7985
        %7987 = vmatmul.bf16.gmra.mxu0 %v7947
        %v7988 = vpop.f32.mrf.mxu0
        %v7989 = vadd.f32 %v7901, %v7988
        %v7990 = vpop.f32.mrf.mxu0
        %7991 = vdwg.mxu0
        %v7992 = vmul.f32 %v7959, %v7959
        %v7993 = vmul.f32 %v7961, %v7961
        %v7994 = vmul.f32 %v7964, %v7964
        %v7995 = vmul.f32 %v7966, %v7966
        %v7996 = vmul.f32 %v7969, %v7969
        %v7997 = vmul.f32 %v7971, %v7971
        %v7998 = vmul.f32 %v7974, %v7974
        %v7999 = vmul.f32 %v7976, %v7976
        %v8000 = vmul.f32 %v7979, %v7979
        %v8001 = vmul.f32 %v7981, %v7981
        %v8002 = vmul.f32 %v7984, %v7984
        %v8003 = vmul.f32 %v7986, %v7986
        %v8004 = vmul.f32 %v7989, %v7989
        %v8005 = vmul.f32 %v7959, %v7992
        %v8006 = vmul.f32 %v7961, %v7993
        %v8007 = vmul.f32 %v7964, %v7994
        %v8008 = vmul.f32 %v7966, %v7995
        %v8009 = vmul.f32 %v7969, %v7996
        %v8010 = vmul.f32 %v7971, %v7997
        %v8011 = vmul.f32 %v7974, %v7998
        %v8012 = vmul.f32 %v7976, %v7999
        %v8013 = vmul.f32 %v7979, %v8000
        %v8014 = vmul.f32 %v7981, %v8001
        %v8015 = vmul.f32 %v7984, %v8002
        %v8016 = vmul.f32 %v7986, %v8003
        %v8017 = vmul.f32 %v7989, %v8004
        %v8018 = vmul.f32 %v8005, 0.044715
        %v8019 = vmul.f32 %v8006, 0.044715
        %v8020 = vmul.f32 %v8007, 0.044715
        %v8021 = vmul.f32 %v8008, 0.044715
        %v8022 = vmul.f32 %v8009, 0.044715
        %v8023 = vmul.f32 %v8010, 0.044715
        %v8024 = vmul.f32 %v8011, 0.044715
        %v8025 = vmul.f32 %v8012, 0.044715
        %v8026 = vmul.f32 %v8013, 0.044715
        %v8027 = vmul.f32 %v8014, 0.044715
        %v8028 = vmul.f32 %v8015, 0.044715
        %v8029 = vmul.f32 %v8016, 0.044715
        %v8030 = vmul.f32 %v8017, 0.044715
        %v8031 = vadd.f32 %v7959, %v8018
        %v8032 = vadd.f32 %v7961, %v8019
        %v8033 = vadd.f32 %v7964, %v8020
        %v8034 = vadd.f32 %v7966, %v8021
        %v8035 = vadd.f32 %v7969, %v8022
        %v8036 = vadd.f32 %v7971, %v8023
        %v8037 = vadd.f32 %v7974, %v8024
        %v8038 = vadd.f32 %v7976, %v8025
        %v8039 = vadd.f32 %v7979, %v8026
        %v8040 = vadd.f32 %v7981, %v8027
        %v8041 = vadd.f32 %v7984, %v8028
        %v8042 = vadd.f32 %v7986, %v8029
        %v8043 = vadd.f32 %v7989, %v8030
        %v8044 = vmul.f32 %v8031, 0.7978846
        %v8045 = vmul.f32 %v8032, 0.7978846
        %v8046 = vmul.f32 %v8033, 0.7978846
        %v8047 = vmul.f32 %v8034, 0.7978846
        %v8048 = vmul.f32 %v8035, 0.7978846
        %v8049 = vmul.f32 %v8036, 0.7978846
        %v8050 = vmul.f32 %v8037, 0.7978846
        %v8051 = vmul.f32 %v8038, 0.7978846
        %v8052 = vmul.f32 %v8039, 0.7978846
        %v8053 = vmul.f32 %v8040, 0.7978846
        %v8054 = vmul.f32 %v8041, 0.7978846
        %v8055 = vmul.f32 %v8042, 0.7978846
        %v8056 = vmul.f32 %v8043, 0.7978846
        %v8057 = vtanh.pop %v8044
        %v8058 = vtanh.pop %v8045
        %v8059 = vtanh.pop %v8046
        %v8060 = vtanh.pop %v8047
        %v8061 = vtanh.pop %v8048
        %v8062 = vtanh.pop %v8049
        %v8063 = vtanh.pop %v8050
        %v8064 = vtanh.pop %v8051
        %v8065 = vtanh.pop %v8052
        %v8066 = vtanh.pop %v8053
        %v8067 = vtanh.pop %v8054
        %v8068 = vtanh.pop %v8055
        %v8069 = vtanh.pop %v8056
        %v8070 = vadd.f32 %v8057, 1.0
        %v8071 = vadd.f32 %v8058, 1.0
        %v8072 = vadd.f32 %v8059, 1.0
        %v8073 = vadd.f32 %v8060, 1.0
        %v8074 = vadd.f32 %v8061, 1.0
        %v8075 = vadd.f32 %v8062, 1.0
        %v8076 = vadd.f32 %v8063, 1.0
        %v8077 = vadd.f32 %v8064, 1.0
        %v8078 = vadd.f32 %v8065, 1.0
        %v8079 = vadd.f32 %v8066, 1.0
        %v8080 = vadd.f32 %v8067, 1.0
        %v8081 = vadd.f32 %v8068, 1.0
        %v8082 = vadd.f32 %v8069, 1.0
        %v8083 = vmul.f32 %v8070, 0.5
        %v8084 = vmul.f32 %v8071, 0.5
        %v8085 = vmul.f32 %v8072, 0.5
        %v8086 = vmul.f32 %v8073, 0.5
        %v8087 = vmul.f32 %v8074, 0.5
        %v8088 = vmul.f32 %v8075, 0.5
        %v8089 = vmul.f32 %v8076, 0.5
        %v8090 = vmul.f32 %v8077, 0.5
        %v8091 = vmul.f32 %v8078, 0.5
        %v8092 = vmul.f32 %v8079, 0.5
        %v8093 = vmul.f32 %v8080, 0.5
        %v8094 = vmul.f32 %v8081, 0.5
        %v8095 = vmul.f32 %v8082, 0.5
        %v8096 = vmul.f32 %v7959, %v8083
        %v8097 = vmul.f32 %v7961, %v8084
        %v8098 = vmul.f32 %v7964, %v8085
        %v8099 = vmul.f32 %v7966, %v8086
        %v8100 = vmul.f32 %v7969, %v8087
        %v8101 = vmul.f32 %v7971, %v8088
        %v8102 = vmul.f32 %v7974, %v8089
        %v8103 = vmul.f32 %v7976, %v8090
        %v8104 = vmul.f32 %v7979, %v8091
        %v8105 = vmul.f32 %v7981, %v8092
        %v8106 = vmul.f32 %v7984, %v8093
        %v8107 = vmul.f32 %v7986, %v8094
        %v8108 = vmul.f32 %v7989, %v8095
        %8109 = vst.msk [vmem:[#allocation2] sm:$0xff] %vm3440, %v8096
        %8110 = vst.msk [vmem:[#allocation2 + $0x8] sm:$0xff] %vm3440, %v8097
        %8111 = vst.msk [vmem:[#allocation2 + $0x10] sm:$0xff] %vm3440, %v8098
        %8112 = vst.msk [vmem:[#allocation2 + $0x18] sm:$0xff] %vm3440, %v8099
        %8113 = vst.msk [vmem:[#allocation2 + $0x20] sm:$0xff] %vm3440, %v8100
        %8114 = vst.msk [vmem:[#allocation2 + $0x28] sm:$0xff] %vm3440, %v8101
        %8115 = vst.msk [vmem:[#allocation2 + $0x30] sm:$0xff] %vm3440, %v8102
        %8116 = vst.msk [vmem:[#allocation2 + $0x38] sm:$0xff] %vm3440, %v8103
        %8117 = vst.msk [vmem:[#allocation2 + $0x40] sm:$0xff] %vm3440, %v8104
        %8118 = vst.msk [vmem:[#allocation2 + $0x48] sm:$0xff] %vm3440, %v8105
        %8119 = vst.msk [vmem:[#allocation2 + $0x50] sm:$0xff] %vm3440, %v8106
        %8120 = vst.msk [vmem:[#allocation2 + $0x58] sm:$0xff] %vm3440, %v8107
        %vm8121 = vcmask 256000
        %8122 = vst.msk [vmem:[#allocation2 + $0x60] sm:$0x7] %vm8121, %v8108
        %v8123 = vld [vmem:[#allocation2] ss:$2 sm:$0xff]
        %v8124 = vld [vmem:[%s5381] ss:$2 sm:$0xff]
        %v8125 = vld [vmem:[%s5383] ss:$2 sm:$0xff]
        %v8126 = vld [vmem:[%s5385] ss:$2 sm:$0xff]
        %v8127 = vld [vmem:[%s5387] ss:$2 sm:$0xff]
        %v8128 = vld [vmem:[%s5389] ss:$2 sm:$0xff]
        %v8129 = vld [vmem:[%s5391] ss:$2 sm:$0x1]
        %v8130 = vld [vmem:[%s5479] ss:$2 sm:$0xff]
        %v8131 = vld [vmem:[%s5481] ss:$2 sm:$0xff]
        %v8132 = vld [vmem:[%s5483] ss:$2 sm:$0xff]
        %v8133 = vld [vmem:[%s5485] ss:$2 sm:$0xff]
        %v8134 = vld [vmem:[%s5487] ss:$2 sm:$0xff]
        %v8135 = vld [vmem:[%s5489] ss:$2 sm:$0xff]
        %v8136 = vld [vmem:[%s5491] ss:$2 sm:$0x1]
        %8144 = vrot.lane.b32.xlu0 %v8130, 32
        %v8145 = vpop.permute.xlu0 %8144
        %8146 = vrot.lane.b32.xlu0 %v8131, 32
        %v8147 = vpop.permute.xlu0 %8146
        %8148 = vrot.lane.b32.xlu0 %v8132, 32
        %v8149 = vpop.permute.xlu0 %8148
        %8150 = vrot.lane.b32.xlu0 %v8133, 32
        %v8151 = vpop.permute.xlu0 %8150
        %8152 = vrot.lane.b32.xlu0 %v8134, 32
        %v8153 = vpop.permute.xlu0 %8152
        %8154 = vrot.lane.b32.xlu0 %v8135, 32
        %v8155 = vpop.permute.xlu0 %8154
        %8156 = vrot.lane.b32.xlu0 %v8136, 32
        %v8157 = vpop.permute.xlu0 %8156
        %v8165 = vsel %vm3440, %v8123, %v8145
        %v8166 = vsel %vm3440, %v8124, %v8147
        %v8167 = vsel %vm3440, %v8125, %v8149
        %v8168 = vsel %vm3440, %v8126, %v8151
        %v8169 = vsel %vm3440, %v8127, %v8153
        %v8170 = vsel %vm3440, %v8128, %v8155
        %v8171 = vsel %vm3440, %v8129, %v8157
        %v8172 = vpack.c.bf16 %v8166, %v8165
        %v8173 = vpack.c.bf16 %v8168, %v8167
        %v8174 = vpack.c.bf16 %v8170, %v8169
        %v8175 = vpack.c.bf16 %v8171, %v8171
        %s8176 = scalar_lea.vmem %s5, 96
        %v8177 = vld [vmem:[%s8176] sm:$0xf]
        %v8178 = vld [vmem:[%s8176 + $0x4] sm:$0xf]
        %v8179 = vld [vmem:[%s8176 + $0x8] sm:$0xf]
        %v8180 = vld [vmem:[%s8176 + $0xc] sm:$0xf]
        %v8181 = vld [vmem:[%s8176 + $0x10] sm:$0xf]
        %v8182 = vld [vmem:[%s8176 + $0x14] sm:$0xf]
        %v8183 = vld [vmem:[%s8176 + $0x18] sm:$0xf]
        %v8184 = vld [vmem:[%s8176 + $0x1c] sm:$0xf]
        %v8185 = vld [vmem:[%s5862] ss:$2 sm:$0xff]
        %v8186 = vld [vmem:[%s5864] ss:$2 sm:$0xff]
        %v8187 = vld [vmem:[%s5866] ss:$2 sm:$0xff]
        %v8188 = vld [vmem:[%s5868] ss:$2 sm:$0xff]
        %v8189 = vld [vmem:[%s5870] ss:$2 sm:$0xff]
        %v8190 = vld [vmem:[%s5872] ss:$2 sm:$0xff]
        %v8191 = vld [vmem:[%s5874] ss:$2 sm:$0x1]
        %v8192 = vpack.c.bf16 %v8186, %v8185
        %v8193 = vpack.c.bf16 %v8188, %v8187
        %v8194 = vpack.c.bf16 %v8190, %v8189
        %v8195 = vpack.c.bf16 %v8191, %v8191
        %s8196 = scalar_lea.vmem %s6, 48
        %v8197 = vld [vmem:[%s8196] sm:$0xf]
        %v8198 = vld [vmem:[%s8196 + $0x4] sm:$0xf]
        %v8199 = vld [vmem:[%s8196 + $0x8] sm:$0xf]
        %v8200 = vld [vmem:[%s8196 + $0xc] sm:$0xf]
        %v8205 = vunpack.c.l.b16 %v8197
        %v8206 = vunpack.c.l.b16 %v8198
        %v8207 = vunpack.c.l.b16 %v8199
        %v8208 = vunpack.c.l.b16 %v8200
        %v8209 = vpack.c.b16 %v8206, %v8205
        %v8210 = vpack.c.b16 %v8208, %v8207
        %v8214 = vsel %vm3440, %v8192, 0
        %v8217 = vsel %vm3440, %v8193, 0
        %v8220 = vsel %vm3440, %v8194, 0
        %v8223 = vsel %vm3440, %v8195, 0
        %8225 = vmatpush.bf16.msra.mxu0 0
        %8226 = vmatpush.bf16.msra.mxu0 0
        %8227 = vmatpush.bf16.msra.mxu0 0
        %8228 = vmatpush.bf16.msra.mxu0 0
        %8229 = vmatpush.bf16.msra.mxu0 0
        %8230 = vmatpush.bf16.msra.mxu0 0
        %8231 = vmatpush.bf16.msra.mxu0 %v8210
        %8232 = vmatpush.bf16.msra.mxu0 %v8209
        %8233 = vmatmul.bf16.gmra.mxu0 %v8214
        %v8234 = vpop.f32.mrf.mxu0
        %v8235 = vadd.f32 0.0, %v8234
        %v8236 = vpop.f32.mrf.mxu0
        %v8237 = vadd.f32 0.0, %v8236
        %8238 = vmatmul.bf16.gmra.mxu0 %v8217
        %v8239 = vpop.f32.mrf.mxu0
        %v8240 = vadd.f32 0.0, %v8239
        %v8241 = vpop.f32.mrf.mxu0
        %v8242 = vadd.f32 0.0, %v8241
        %8243 = vmatmul.bf16.gmra.mxu0 %v8220
        %v8244 = vpop.f32.mrf.mxu0
        %v8245 = vadd.f32 0.0, %v8244
        %v8246 = vpop.f32.mrf.mxu0
        %v8247 = vadd.f32 0.0, %v8246
        %8248 = vmatmul.bf16.gmra.mxu0 %v8223
        %v8249 = vpop.f32.mrf.mxu0
        %v8250 = vadd.f32 0.0, %v8249
        %v8251 = vpop.f32.mrf.mxu0
        %8252 = vdwg.mxu0
        %v8261 = vunpack.c.l.b16 %v8177
        %v8262 = vunpack.c.l.b16 %v8178
        %v8263 = vunpack.c.l.b16 %v8179
        %v8264 = vunpack.c.l.b16 %v8180
        %v8265 = vunpack.c.l.b16 %v8181
        %v8266 = vunpack.c.l.b16 %v8182
        %v8267 = vunpack.c.l.b16 %v8183
        %v8268 = vunpack.c.l.b16 %v8184
        %v8269 = vpack.c.b16 %v8262, %v8261
        %v8270 = vpack.c.b16 %v8264, %v8263
        %v8271 = vpack.c.b16 %v8266, %v8265
        %v8272 = vpack.c.b16 %v8268, %v8267
        %v8278 = vsel %vm6236, %v8172, 0
        %v8281 = vsel %vm6236, %v8173, 0
        %v8284 = vsel %vm6236, %v8174, 0
        %v8287 = vsel %vm6236, %v8175, 0
        %8289 = vmatpush.bf16.msra.mxu0 0
        %8290 = vmatpush.bf16.msra.mxu0 0
        %8291 = vmatpush.bf16.msra.mxu0 0
        %8292 = vmatpush.bf16.msra.mxu0 0
        %8293 = vmatpush.bf16.msra.mxu0 %v8272
        %8294 = vmatpush.bf16.msra.mxu0 %v8271
        %8295 = vmatpush.bf16.msra.mxu0 %v8270
        %8296 = vmatpush.bf16.msra.mxu0 %v8269
        %8297 = vmatmul.bf16.gmra.mxu0 %v8278
        %v8298 = vpop.f32.mrf.mxu0
        %v8299 = vadd.f32 %v8235, %v8298
        %v8300 = vpop.f32.mrf.mxu0
        %v8301 = vadd.f32 %v8237, %v8300
        %8302 = vmatmul.bf16.gmra.mxu0 %v8281
        %v8303 = vpop.f32.mrf.mxu0
        %v8304 = vadd.f32 %v8240, %v8303
        %v8305 = vpop.f32.mrf.mxu0
        %v8306 = vadd.f32 %v8242, %v8305
        %8307 = vmatmul.bf16.gmra.mxu0 %v8284
        %v8308 = vpop.f32.mrf.mxu0
        %v8309 = vadd.f32 %v8245, %v8308
        %v8310 = vpop.f32.mrf.mxu0
        %v8311 = vadd.f32 %v8247, %v8310
        %8312 = vmatmul.bf16.gmra.mxu0 %v8287
        %v8313 = vpop.f32.mrf.mxu0
        %v8314 = vadd.f32 %v8250, %v8313
        %v8315 = vpop.f32.mrf.mxu0
        %8316 = vdwg.mxu0
        %v8317 = vmul.f32 %v8299, %v8299
        %v8318 = vmul.f32 %v8301, %v8301
        %v8319 = vmul.f32 %v8304, %v8304
        %v8320 = vmul.f32 %v8306, %v8306
        %v8321 = vmul.f32 %v8309, %v8309
        %v8322 = vmul.f32 %v8311, %v8311
        %v8323 = vmul.f32 %v8314, %v8314
        %v8324 = vmul.f32 %v8299, %v8317
        %v8325 = vmul.f32 %v8301, %v8318
        %v8326 = vmul.f32 %v8304, %v8319
        %v8327 = vmul.f32 %v8306, %v8320
        %v8328 = vmul.f32 %v8309, %v8321
        %v8329 = vmul.f32 %v8311, %v8322
        %v8330 = vmul.f32 %v8314, %v8323
        %v8331 = vmul.f32 %v8324, 0.044715
        %v8332 = vmul.f32 %v8325, 0.044715
        %v8333 = vmul.f32 %v8326, 0.044715
        %v8334 = vmul.f32 %v8327, 0.044715
        %v8335 = vmul.f32 %v8328, 0.044715
        %v8336 = vmul.f32 %v8329, 0.044715
        %v8337 = vmul.f32 %v8330, 0.044715
        %v8338 = vadd.f32 %v8299, %v8331
        %v8339 = vadd.f32 %v8301, %v8332
        %v8340 = vadd.f32 %v8304, %v8333
        %v8341 = vadd.f32 %v8306, %v8334
        %v8342 = vadd.f32 %v8309, %v8335
        %v8343 = vadd.f32 %v8311, %v8336
        %v8344 = vadd.f32 %v8314, %v8337
        %v8345 = vmul.f32 %v8338, 0.7978846
        %v8346 = vmul.f32 %v8339, 0.7978846
        %v8347 = vmul.f32 %v8340, 0.7978846
        %v8348 = vmul.f32 %v8341, 0.7978846
        %v8349 = vmul.f32 %v8342, 0.7978846
        %v8350 = vmul.f32 %v8343, 0.7978846
        %v8351 = vmul.f32 %v8344, 0.7978846
        %v8352 = vtanh.pop %v8345
        %v8353 = vtanh.pop %v8346
        %v8354 = vtanh.pop %v8347
        %v8355 = vtanh.pop %v8348
        %v8356 = vtanh.pop %v8349
        %v8357 = vtanh.pop %v8350
        %v8358 = vtanh.pop %v8351
        %v8359 = vadd.f32 %v8352, 1.0
        %v8360 = vadd.f32 %v8353, 1.0
        %v8361 = vadd.f32 %v8354, 1.0
        %v8362 = vadd.f32 %v8355, 1.0
        %v8363 = vadd.f32 %v8356, 1.0
        %v8364 = vadd.f32 %v8357, 1.0
        %v8365 = vadd.f32 %v8358, 1.0
        %v8366 = vmul.f32 %v8359, 0.5
        %v8367 = vmul.f32 %v8360, 0.5
        %v8368 = vmul.f32 %v8361, 0.5
        %v8369 = vmul.f32 %v8362, 0.5
        %v8370 = vmul.f32 %v8363, 0.5
        %v8371 = vmul.f32 %v8364, 0.5
        %v8372 = vmul.f32 %v8365, 0.5
        %v8373 = vmul.f32 %v8299, %v8366
        %v8374 = vmul.f32 %v8301, %v8367
        %v8375 = vmul.f32 %v8304, %v8368
        %v8376 = vmul.f32 %v8306, %v8369
        %v8377 = vmul.f32 %v8309, %v8370
        %v8378 = vmul.f32 %v8311, %v8371
        %v8379 = vmul.f32 %v8314, %v8372
        %8380 = vst.msk [vmem:[#allocation2] sm:$0xff] %vm3440, %v8373
        %8381 = vst.msk [vmem:[#allocation2 + $0x8] sm:$0xff] %vm3440, %v8374
        %8382 = vst.msk [vmem:[#allocation2 + $0x10] sm:$0xff] %vm3440, %v8375
        %8383 = vst.msk [vmem:[#allocation2 + $0x18] sm:$0xff] %vm3440, %v8376
        %8384 = vst.msk [vmem:[#allocation2 + $0x20] sm:$0xff] %vm3440, %v8377
        %8385 = vst.msk [vmem:[#allocation2 + $0x28] sm:$0xff] %vm3440, %v8378
        %vm8386 = vcmask 253952
        %8387 = vst.msk [vmem:[#allocation2 + $0x30] sm:$0x1] %vm8386, %v8379
        %v8388 = vld [vmem:[#allocation2] ss:$2 sm:$0xff]
        %v8389 = vld [vmem:[%s5381] ss:$2 sm:$0xff]
        %v8390 = vld [vmem:[%s5383] ss:$2 sm:$0xff]
        %v8391 = vld [vmem:[%s5479] ss:$2 sm:$0xff]
        %v8392 = vld [vmem:[%s5481] ss:$2 sm:$0xff]
        %v8393 = vld [vmem:[%s5483] ss:$2 sm:$0xff]
        %8397 = vrot.lane.b32.xlu0 %v8391, 32
        %v8398 = vpop.permute.xlu0 %8397
        %8399 = vrot.lane.b32.xlu0 %v8392, 32
        %v8400 = vpop.permute.xlu0 %8399
        %8401 = vrot.lane.b32.xlu0 %v8393, 32
        %v8402 = vpop.permute.xlu0 %8401
        %v8406 = vsel %vm3440, %v8388, %v8398
        %v8407 = vsel %vm3440, %v8389, %v8400
        %v8408 = vsel %vm3440, %v8390, %v8402
        %v8409 = vpack.c.bf16 %v8407, %v8406
        %v8410 = vpack.c.bf16 %v8408, %v8408
        %v8411 = vld [vmem:[%s7] sm:$0xf]
        %v8412 = vld [vmem:[%s7 + $0x4] sm:$0xf]
        %v8413 = vld [vmem:[%s7 + $0x8] sm:$0xf]
        %v8414 = vld [vmem:[%s7 + $0xc] sm:$0xf]
        %v8415 = vld [vmem:[%s7 + $0x10] sm:$0xf]
        %v8416 = vld [vmem:[%s7 + $0x14] sm:$0xf]
        %v8417 = vld [vmem:[%s7 + $0x18] sm:$0xf]
        %v8418 = vld [vmem:[%s7 + $0x1c] sm:$0xf]
        %v8427 = vunpack.c.l.b16 %v8411
        %v8428 = vunpack.c.l.b16 %v8412
        %v8429 = vunpack.c.l.b16 %v8413
        %v8430 = vunpack.c.l.b16 %v8414
        %v8431 = vunpack.c.l.b16 %v8415
        %v8432 = vunpack.c.l.b16 %v8416
        %v8433 = vunpack.c.l.b16 %v8417
        %v8434 = vunpack.c.l.b16 %v8418
        %v8435 = vpack.c.b16 %v8428, %v8427
        %v8436 = vpack.c.b16 %v8430, %v8429
        %v8437 = vpack.c.b16 %v8432, %v8431
        %v8438 = vpack.c.b16 %v8434, %v8433
        %v8444 = vsel %vm6236, %v8409, 0
        %v8447 = vsel %vm6236, %v8410, 0
        %8449 = vmatpush.bf16.msra.mxu0 0
        %8450 = vmatpush.bf16.msra.mxu0 0
        %8451 = vmatpush.bf16.msra.mxu0 0
        %8452 = vmatpush.bf16.msra.mxu0 0
        %8453 = vmatpush.bf16.msra.mxu0 %v8438
        %8454 = vmatpush.bf16.msra.mxu0 %v8437
        %8455 = vmatpush.bf16.msra.mxu0 %v8436
        %8456 = vmatpush.bf16.msra.mxu0 %v8435
        %8457 = vmatmul.bf16.gmra.mxu0 %v8444
        %v8458 = vpop.f32.mrf.mxu0
        %v8459 = vadd.f32 0.0, %v8458
        %v8460 = vpop.f32.mrf.mxu0
        %v8461 = vadd.f32 0.0, %v8460
        %8462 = vmatmul.bf16.gmra.mxu0 %v8447
        %v8463 = vpop.f32.mrf.mxu0
        %v8464 = vadd.f32 0.0, %v8463
        %v8465 = vpop.f32.mrf.mxu0
        %8466 = vdwg.mxu0
        %v8467 = vmul.f32 %v8459, %v8459
        %v8468 = vmul.f32 %v8461, %v8461
        %v8469 = vmul.f32 %v8464, %v8464
        %v8470 = vmul.f32 %v8459, %v8467
        %v8471 = vmul.f32 %v8461, %v8468
        %v8472 = vmul.f32 %v8464, %v8469
        %v8473 = vmul.f32 %v8470, 0.044715
        %v8474 = vmul.f32 %v8471, 0.044715
        %v8475 = vmul.f32 %v8472, 0.044715
        %v8476 = vadd.f32 %v8459, %v8473
        %v8477 = vadd.f32 %v8461, %v8474
        %v8478 = vadd.f32 %v8464, %v8475
        %v8479 = vmul.f32 %v8476, 0.7978846
        %v8480 = vmul.f32 %v8477, 0.7978846
        %v8481 = vmul.f32 %v8478, 0.7978846
        %v8482 = vtanh.pop %v8479
        %v8483 = vtanh.pop %v8480
        %v8484 = vtanh.pop %v8481
        %v8485 = vadd.f32 %v8482, 1.0
        %v8486 = vadd.f32 %v8483, 1.0
        %v8487 = vadd.f32 %v8484, 1.0
        %v8488 = vmul.f32 %v8485, 0.5
        %v8489 = vmul.f32 %v8486, 0.5
        %v8490 = vmul.f32 %v8487, 0.5
        %v8491 = vmul.f32 %v8459, %v8488
        %v8492 = vmul.f32 %v8461, %v8489
        %v8493 = vmul.f32 %v8464, %v8490
        %8494 = vst.msk [vmem:[#allocation2] sm:$0xff] %vm3440, %v8491
        %8495 = vst.msk [vmem:[#allocation2 + $0x8] sm:$0xff] %vm3440, %v8492
        %8496 = vst.msk [vmem:[#allocation2 + $0x10] sm:$0xff] %vm3440, %v8493
        %v8497 = vld [vmem:[#allocation2] ss:$2 sm:$0xff]
        %v8498 = vld [vmem:[%s5381] ss:$2 sm:$0xf]
        %v8499 = vld [vmem:[%s5479] ss:$2 sm:$0xff]
        %v8500 = vld [vmem:[%s5481] ss:$2 sm:$0xf]
        %8503 = vrot.lane.b32.xlu0 %v8499, 32
        %v8504 = vpop.permute.xlu0 %8503
        %8505 = vrot.lane.b32.xlu0 %v8500, 32
        %v8506 = vpop.permute.xlu0 %8505
        %v8509 = vsel %vm3440, %v8497, %v8504
        %v8510 = vsel %vm3440, %v8498, %v8506
        %v8511 = vpack.c.bf16 %v8510, %v8509
        %s8512 = scalar_lea.vmem %s7, 32
        %v8513 = vld [vmem:[%s8512] sm:$0xf]
        %v8514 = vld [vmem:[%s8512 + $0x4] sm:$0xf]
        %v8515 = vld [vmem:[%s8512 + $0x8] sm:$0xf]
        %v8516 = vld [vmem:[%s8512 + $0xc] sm:$0xf]
        %v8517 = vld [vmem:[%s8512 + $0x10] sm:$0xf]
        %v8518 = vld [vmem:[%s8512 + $0x14] sm:$0xf]
        %v8519 = vld [vmem:[%s8512 + $0x18] sm:$0xf]
        %v8520 = vld [vmem:[%s8512 + $0x1c] sm:$0xf]
        %v8529 = vunpack.c.l.b16 %v8513
        %v8530 = vunpack.c.l.b16 %v8514
        %v8531 = vunpack.c.l.b16 %v8515
        %v8532 = vunpack.c.l.b16 %v8516
        %v8533 = vunpack.c.l.b16 %v8517
        %v8534 = vunpack.c.l.b16 %v8518
        %v8535 = vunpack.c.l.b16 %v8519
        %v8536 = vunpack.c.l.b16 %v8520
        %v8537 = vpack.c.b16 %v8530, %v8529
        %v8538 = vpack.c.b16 %v8532, %v8531
        %v8539 = vpack.c.b16 %v8534, %v8533
        %v8540 = vpack.c.b16 %v8536, %v8535
        %v8546 = vsel %vm6236, %v8511, 0
        %8548 = vmatpush.bf16.msra.mxu0 0
        %8549 = vmatpush.bf16.msra.mxu0 0
        %8550 = vmatpush.bf16.msra.mxu0 0
        %8551 = vmatpush.bf16.msra.mxu0 0
        %8552 = vmatpush.bf16.msra.mxu0 %v8540
        %8553 = vmatpush.bf16.msra.mxu0 %v8539
        %8554 = vmatpush.bf16.msra.mxu0 %v8538
        %8555 = vmatpush.bf16.msra.mxu0 %v8537
        %8556 = vmatmul.bf16.gmra.mxu0 %v8546
        %v8557 = vpop.f32.mrf.mxu0
        %v8558 = vadd.f32 0.0, %v8557
        %v8559 = vpop.f32.mrf.mxu0
        %v8560 = vadd.f32 0.0, %v8559
        %8561 = vdwg.mxu0
        %v8562 = vmul.f32 %v8558, %v8558
        %v8563 = vmul.f32 %v8560, %v8560
        %v8564 = vmul.f32 %v8558, %v8562
        %v8565 = vmul.f32 %v8560, %v8563
        %v8566 = vmul.f32 %v8564, 0.044715
        %v8567 = vmul.f32 %v8565, 0.044715
        %v8568 = vadd.f32 %v8558, %v8566
        %v8569 = vadd.f32 %v8560, %v8567
        %v8570 = vmul.f32 %v8568, 0.7978846
        %v8571 = vmul.f32 %v8569, 0.7978846
        %v8572 = vtanh.pop %v8570
        %v8573 = vtanh.pop %v8571
        %v8574 = vadd.f32 %v8572, 1.0
        %v8575 = vadd.f32 %v8573, 1.0
        %v8576 = vmul.f32 %v8574, 0.5
        %v8577 = vmul.f32 %v8575, 0.5
        %v8578 = vmul.f32 %v8558, %v8576
        %v8579 = vmul.f32 %v8560, %v8577
        %vm8580 = vcmask 1043456
        %v8581 = vsel %vm8580, %v8579, 0.0
        %8582 = vst.msk [vmem:[%s313] sm:$0xff] %vm3440, %v8578
        %8583 = vst.msk [vmem:[%s313 + $0x8] sm:$0xff] %vm3440, %v8581
        %s8584 = sand.u32 %s208, 1
        %s8585 = scalar_lea.sflag [#allocation4], %s8584
        %s8586 = sand.u32 %s208, 1
        %s8587 = smul.addr %s8586, 16
        %s8588 = scalar_lea.vmem [#allocation3], %s8587
        // Predicated region
        $region53: #{tpu_custom_call.1} parent=51 // pred_check
          %p8589 = pneg %p218
        $region54: #{tpu_custom_call.1} parent=51 // pred_check_branch
          %8591 = sbr.rel (%p8589) target = $region56
        $region55: #{tpu_custom_call.1} parent=51 // pred_region
          %8593 = vsyncadd %s8585, 0
          %s8594 = smul.addr %s22, 2
          %s8595 = smul.addr %s8594, 8
          %s8596 = scalar_lea.hbm %s8, %s8595
          %s8597 = sshll.u32 %s8588, 4
          %s8598 = int_to_ptr.vmem [resolvable:$true] %s8597
          %s8599 = sshll.u32 %s8596, 4
          %s8600 = int_to_ptr.hbm [resolvable:$true] %s8599
          %8605 = dma.vmem_to_hbm [thread:$0]  %s8598, 256, %s8600, %s8585, 128, 128, 8
        $region56: #{tpu_custom_call.1} parent=51 // pred_fallthru
          _
      $region52: #{tpu_custom_call.1} parent=5 // pred_fallthru
        _
      %p8606 = scmp.le.s32.totalorder 2, %s17
      // Predicated region
      $region57: #{tpu_custom_call.1} parent=5 // pred_check
        %p8607 = pneg %p8606
      $region58: #{tpu_custom_call.1} parent=5 // pred_check_branch
        %8609 = sbr.rel (%p8607) target = $region60
      $region59: #{tpu_custom_call.1} parent=5 // pred_region
        %s8610 = ssub.s32 %s17, 2
        // Predicated region
        $region61: #{tpu_custom_call.1} parent=59 // pred_check
          %p8611 = pneg %p224
        $region62: #{tpu_custom_call.1} parent=59 // pred_check_branch
          %8613 = sbr.rel (%p8611) target = $region64
        $region63: #{tpu_custom_call.1} parent=59 // pred_region
          %s8614 = sand.u32 %s209, 1
          %s8615 = scalar_lea.sflag [#allocation4], %s8614
          %s8616 = sand.u32 %s209, 1
          %s8617 = smul.addr %s8616, 16
          %s8618 = scalar_lea.vmem [#allocation3], %s8617
          %8620 = dma.done %s8615, 256
        $region64: #{tpu_custom_call.1} parent=59 // pred_fallthru
          _
      $region60: #{tpu_custom_call.1} parent=5 // pred_fallthru
        _
    $region6: #{tpu_custom_call.1} parent=1 // loop_footer
      %s21 = sadd.s32 1, %s17
    $region7: #{tpu_custom_call.1} parent=1 // loop_footer_branch
      %16 = sbr.rel target = $region3
    $region8: #{tpu_custom_call.1} parent=1 // loop_exit
      _
    %8621 = vsyncpa [#allocation4], 1
    %s8622 = scalar_lea.sflag [#allocation4], 1
    %8623 = vsyncpa %s8622, 1

</llo_original>
